<compile_context>
chip_gen: v6e
topology: v6e:2x2x1
jax: 0.10.0
libtpu: 0.0.40
codegen_flags: <defaults>
</compile_context>

<pallas_src>
import functools
import numpy as np

import jax
import jax.numpy as jnp
from jax.experimental import pallas as pl
from jax.experimental.pallas import tpu as pltpu

# ----------------------- "cfg" (synthetic, DFormer-Tiny + MLPDecoder) -----------------
CHANNELS = [32, 64, 128, 256]     # DFormer-Tiny
STRIDES = [4, 2, 2, 2]            # feature pyramid at 1/4, 1/8, 1/16, 1/32
EMBED_DIM = 64                    # cfg.decoder_embed_dim
NUM_CLASSES = 8                   # cfg.num_classes
BN_EPS = 1e-5
IN_CH = 6                         # concat(rgb(3), modal_x(3))


def _round_up(x, m):
    return ((x + m - 1) // m) * m


def _pick_tm(m, cap=1024, min_steps=8):
    """Row tile for pixel-major matmuls: large, but aim for >= min_steps grid steps."""
    if m <= 8:
        return m
    return max(8, min(cap, _round_up(-(-m // min_steps), 8), _round_up(m, 8)))


def _pick_tp(p, cap=512, min_steps=8):
    """Lane (pixel) tile for channel-major kernels: full extent when small, otherwise a
    multiple of 128 (lane-dense stores) giving >= min_steps grid steps."""
    if p <= cap:
        return p
    return max(128, min(cap, _round_up(-(-p // min_steps), 128)))


def _pick_rows(r, ww, target_px=1024, min_steps=8):
    """Row-group tile for the in-kernel patchify (each group is ww output pixels)."""
    t = max(1, min(max(1, target_px // max(ww, 1)), -(-r // min_steps)))
    return min(t, r)


# --------------------------------- Pallas kernels ---------------------------------------
def _patch_embed_kernel(x_ref, w_ref, s_ref, b_ref, o_ref, *, stride):
    # x_ref: (t, s, ww, s*C) raw NHWC rows; w_ref: (s, s*C, cout).
    # Patchify happens in VMEM: for each dy the (t, ww, s*C) slice collapses (free,
    # sublane-aligned) to (t*ww, s*C) and contributes one MXU dot; summed over dy.
    t, s, ww, sc = x_ref.shape
    xb = x_ref[...]
    acc = jnp.dot(xb[:, 0].reshape(t * ww, sc), w_ref[0],
                  preferred_element_type=jnp.float32)
    for dy in range(1, stride):
        acc = acc + jnp.dot(xb[:, dy].reshape(t * ww, sc), w_ref[dy],
                            preferred_element_type=jnp.float32)
    y = jnp.maximum(acc * s_ref[...] + b_ref[...], 0.0)       # folded BN + ReLU
    o_ref[...] = y.astype(o_ref.dtype)


def _mm_affine_kernel(x_ref, w_ref, s_ref, b_ref, o_ref, *, act):
    # pixel-major: y = act((x @ w) * scale + shift)
    y = jnp.dot(x_ref[...], w_ref[...], preferred_element_type=jnp.float32)
    y = y * s_ref[...] + b_ref[...]
    if act == "relu":
        y = jnp.maximum(y, 0.0)
    o_ref[...] = y.astype(o_ref.dtype)


def _cm_affine_kernel(x_ref, w_ref, s_ref, b_ref, o_ref, *, act):
    # channel-major: y = act((w @ x) * scale + shift); pixels on lanes (dense stores)
    y = jnp.dot(w_ref[...], x_ref[0], preferred_element_type=jnp.float32)
    y = y * s_ref[...] + b_ref[...]
    if act == "relu":
        y = jnp.maximum(y, 0.0)
    o_ref[0] = y.astype(o_ref.dtype)


def _resize_cm_kernel(x_ref, ah_ref, awt_ref, o_ref):
    # per (batch, channel) separable bilinear (align_corners=False): Y = (Ah @ X) @ Aw^T
    t = jnp.dot(ah_ref[...], x_ref[0, 0], preferred_element_type=jnp.float32)
    y = jnp.dot(t.astype(awt_ref.dtype), awt_ref[...], preferred_element_type=jnp.float32)
    o_ref[0, 0] = y.astype(o_ref.dtype)


def _decoder_tail_kernel(e1_ref, e2_ref, e3_ref, e4_ref, wf_ref, fs_ref, fb_ref,
                         wp_ref, pb_ref, o_ref):
    # channel-major fused tail: linear_fuse (1x1, no bias) as a 4-way split-weight
    # accumulation over the virtual concat [_c4,_c3,_c2,_c1], then BN(eval)+ReLU
    # (dropout = identity), then linear_pred (+bias) in f32.  Output lanes = pixels.
    acc = jnp.dot(wf_ref[0], e1_ref[0], preferred_element_type=jnp.float32)
    acc = acc + jnp.dot(wf_ref[1], e2_ref[0], preferred_element_type=jnp.float32)
    acc = acc + jnp.dot(wf_ref[2], e3_ref[0], preferred_element_type=jnp.float32)
    acc = acc + jnp.dot(wf_ref[3], e4_ref[0], preferred_element_type=jnp.float32)
    fused = jnp.maximum(acc * fs_ref[...] + fb_ref[...], 0.0)
    logits = jnp.dot(wp_ref[...], fused, preferred_element_type=jnp.float32) + pb_ref[...]
    o_ref[0] = logits.astype(o_ref.dtype)


# --------------------------------- kernel wrappers --------------------------------------
def matmul_affine_pm(x, w, scale, shift, act="none", out_dtype=jnp.bfloat16):
    """Pixel-major y = act((x @ w) * scale + shift); only the row axis is tiled."""
    M, K = x.shape
    N = w.shape[1]
    tm = _pick_tm(M)
    return pl.pallas_call(
        functools.partial(_mm_affine_kernel, act=act),
        out_shape=jax.ShapeDtypeStruct((M, N), out_dtype),
        grid=(pl.cdiv(M, tm),),
        in_specs=[
            pl.BlockSpec((tm, K), lambda i: (i, 0)),
            pl.BlockSpec((K, N), lambda i: (0, 0)),
            pl.BlockSpec((1, N), lambda i: (0, 0)),
            pl.BlockSpec((1, N), lambda i: (0, 0)),
        ],
        out_specs=pl.BlockSpec((tm, N), lambda i: (i, 0)),
        compiler_params=pltpu.CompilerParams(dimension_semantics=("parallel",)),
    )(x.astype(jnp.bfloat16), w, scale, shift)


def patch_embed_bn_relu(x, p, stride):
    """Conv2d(k=s, s=s, bias=False)+BN+ReLU.  x: (B,h,w,Cin) NHWC bf16 -> (B,h/s,w/s,Cout)."""
    B, h, w, C = x.shape
    s = stride
    hh, ww = h // s, w // s
    cout = p["w"].shape[-1]
    if ww % 8 == 0:
        # In-kernel patchify path: only a free XLA reshape, no HBM transpose.
        x5 = x.reshape(B * hh, s, ww, s * C)
        R = B * hh
        t = _pick_rows(R, ww)
        y = pl.pallas_call(
            functools.partial(_patch_embed_kernel, stride=s),
            out_shape=jax.ShapeDtypeStruct((R * ww, cout), jnp.bfloat16),
            grid=(pl.cdiv(R, t),),
            in_specs=[
                pl.BlockSpec((t, s, ww, s * C), lambda i: (i, 0, 0, 0)),
                pl.BlockSpec((s, s * C, cout), lambda i: (0, 0, 0)),
                pl.BlockSpec((1, cout), lambda i: (0, 0)),
                pl.BlockSpec((1, cout), lambda i: (0, 0)),
            ],
            out_specs=pl.BlockSpec((t * ww, cout), lambda i: (i, 0)),
            compiler_params=pltpu.CompilerParams(dimension_semantics=("parallel",)),
        )(x5, p["w"], p["scale"], p["shift"])
        return y.reshape(B, hh, ww, cout)
    # TODO(synk): ww not sublane-aligned (tiny late stages / odd sizes) -> keep the
    # small XLA patchify instead of a layout-crossing in-kernel reshape.
    patches = x.reshape(B, hh, s, ww, s, C)
    patches = jnp.transpose(patches, (0, 1, 3, 2, 4, 5)).reshape(B * hh * ww, s * s * C)
    y = matmul_affine_pm(patches, p["w"].reshape(s * s * C, cout),
                         p["scale"], p["shift"], act="relu")
    return y.reshape(B, hh, ww, cout)


def project_cm(x_cm, p):
    """Channel-major 1x1-conv / Linear: (B, Cin, P) -> (B, E, P), pixels on lanes."""
    B, C, P = x_cm.shape
    E = p["wT"].shape[0]
    tp = _pick_tp(P)
    return pl.pallas_call(
        functools.partial(_cm_affine_kernel, act="none"),
        out_shape=jax.ShapeDtypeStruct((B, E, P), jnp.bfloat16),
        grid=(B, pl.cdiv(P, tp)),
        in_specs=[
            pl.BlockSpec((1, C, tp), lambda b, i: (b, 0, i)),
            pl.BlockSpec((E, C), lambda b, i: (0, 0)),
            pl.BlockSpec((E, 1), lambda b, i: (0, 0)),
            pl.BlockSpec((E, 1), lambda b, i: (0, 0)),
        ],
        out_specs=pl.BlockSpec((1, E, tp), lambda b, i: (b, 0, i)),
        compiler_params=pltpu.CompilerParams(dimension_semantics=("parallel", "parallel")),
    )(x_cm.astype(jnp.bfloat16), p["wT"], p["scale"], p["shift"])


def _bilinear_matrix(out_size, in_size):
    """A (out,in):  A @ x == F.interpolate(..., 'bilinear', align_corners=False)."""
    if in_size == 1:
        return np.ones((out_size, 1), np.float32)
    o = np.arange(out_size, dtype=np.float64)
    src = np.clip((o + 0.5) * (in_size / out_size) - 0.5, 0.0, in_size - 1)
    i0 = np.floor(src).astype(np.int64)
    i1 = np.minimum(i0 + 1, in_size - 1)
    w1 = src - i0
    A = np.zeros((out_size, in_size), np.float64)
    A[np.arange(out_size), i0] += 1.0 - w1
    A[np.arange(out_size), i1] += w1
    return A.astype(np.float32)


def resize_bilinear_cm(x_cm, oh, ow, out_dtype=jnp.bfloat16, toh_cap=256):
    """Channel-major separable bilinear resize: (B, C, h, w) -> (B, C, oh, ow).
    Per (batch, channel[, oh-tile]): Y = (Ah @ X) @ Aw^T — no kron matrix, tiny blocks,
    lane-dense (ow) stores, grid (B, C, oh-tiles) for pipelining on all generations."""
    B, C, h, w = x_cm.shape
    if (h, w) == (oh, ow):
        return x_cm.astype(out_dtype)
    if h == 1 and w == 1:
        # bilinear upsample of a 1x1 map is a pure spatial broadcast
        return jnp.broadcast_to(x_cm.astype(out_dtype), (B, C, oh, ow))
    Ah = jnp.asarray(_bilinear_matrix(oh, h))
    AwT = jnp.asarray(_bilinear_matrix(ow, w).T)
    if out_dtype == jnp.bfloat16:
        Ah, AwT = Ah.astype(jnp.bfloat16), AwT.astype(jnp.bfloat16)
        xk = x_cm.astype(jnp.bfloat16)
    else:
        xk = x_cm.astype(jnp.float32)
    toh = oh if oh <= toh_cap else toh_cap
    return pl.pallas_call(
        _resize_cm_kernel,
        out_shape=jax.ShapeDtypeStruct((B, C, oh, ow), out_dtype),
        grid=(B, C, pl.cdiv(oh, toh)),
        in_specs=[
            pl.BlockSpec((1, 1, h, w), lambda b, c, t: (b, c, 0, 0)),
            pl.BlockSpec((toh, h), lambda b, c, t: (t, 0)),
            pl.BlockSpec((w, ow), lambda b, c, t: (0, 0)),
        ],
        out_specs=pl.BlockSpec((1, 1, toh, ow), lambda b, c, t: (b, c, t, 0)),
        compiler_params=pltpu.CompilerParams(
            dimension_semantics=("parallel", "parallel", "parallel")),
    )(xk, Ah, AwT)


def decoder_tail_cm(embs, p):
    """Fused linear_fuse(1x1,noBias)+BN+ReLU -> linear_pred(1x1+bias), channel-major.
    embs: 4 x (B, E, P) bf16 -> logits (B, NC, P) f32 with pixels on lanes."""
    e1, e2, e3, e4 = embs
    B, E, P = e1.shape
    NC = p["wpT"].shape[0]
    tp = _pick_tp(P)
    emb_spec = pl.BlockSpec((1, E, tp), lambda b, i: (b, 0, i))
    return pl.pallas_call(
        _decoder_tail_kernel,
        out_shape=jax.ShapeDtypeStruct((B, NC, P), jnp.float32),
        grid=(B, pl.cdiv(P, tp)),
        in_specs=[
            emb_spec, emb_spec, emb_spec, emb_spec,
            pl.BlockSpec((4, E, E), lambda b, i: (0, 0, 0)),   # W_fuse^T split per scale
            pl.BlockSpec((E, 1), lambda b, i: (0, 0)),         # BN scale (f32)
            pl.BlockSpec((E, 1), lambda b, i: (0, 0)),         # BN shift (f32)
            pl.BlockSpec((NC, E), lambda b, i: (0, 0)),        # W_pred^T (f32)
            pl.BlockSpec((NC, 1), lambda b, i: (0, 0)),        # pred bias (f32)
        ],
        out_specs=pl.BlockSpec((1, NC, tp), lambda b, i: (b, 0, i)),
        compiler_params=pltpu.CompilerParams(dimension_semantics=("parallel", "parallel")),
    )(e1, e2, e3, e4, p["wfT"], p["fscale"], p["fshift"], p["wpT"], p["pshift"])


# ----------------------------- EncoderDecoder forward -----------------------------------
def forward(prm, rgb, modal_x):
    """rgb, modal_x: (B, 3, H, W) NCHW.  Returns logits (B, num_classes, H, W)."""
    B, _, H, W = rgb.shape
    total_stride = int(np.prod(STRIDES))
    assert H % total_stride == 0 and W % total_stride == 0, \
        "H, W must be divisible by the cumulative backbone stride (32)"
    # reference forward: text_embed defaults to zeros(B, 512); unused by this backbone.
    _text_embed = jnp.zeros((B, 512), jnp.float32)

    # bf16 BEFORE the full-resolution NCHW->NHWC relayout (halves the biggest XLA copy)
    x = jnp.concatenate([rgb.astype(jnp.bfloat16), modal_x.astype(jnp.bfloat16)], axis=1)
    x = jnp.transpose(x, (0, 2, 3, 1))                          # (B, H, W, 6) bf16

    # ---- backbone stand-in: 4 strided patch-embed stages -> feature pyramid
    feats = []
    for i, s in enumerate(STRIDES):
        x = patch_embed_bn_relu(x, prm[f"stage{i}"], s)
        feats.append(x)
    c1, c2, c3, c4 = feats                                      # 1/4, 1/8, 1/16, 1/32
    th, tw = c1.shape[1], c1.shape[2]
    P = th * tw

    # ---- MLPDecoder (channel-major): per-scale linear_c, resize to the 1/4 grid.
    #      The only relayouts are tiny (<=1/4-res) feature transposes; full-res tensors
    #      are never transposed.
    embs = []
    for i, c in enumerate([c1, c2, c3, c4]):
        Bc, h, w, Cc = c.shape
        c_cm = jnp.transpose(c, (0, 3, 1, 2)).reshape(Bc, Cc, h * w)
        e = project_cm(c_cm, prm[f"linear_c{i + 1}"])           # (B, E, h*w)
        e = e.reshape(Bc, EMBED_DIM, h, w)
        e = resize_bilinear_cm(e, th, tw, out_dtype=jnp.bfloat16)
        embs.append(e.reshape(Bc, EMBED_DIM, P))
    # TODO(synk): the 4 embeddings could be packed into one (B, 4E, P) buffer via
    # aliased out_specs to make the fuse a single K=256 dot; kept as a 4-way split here.

    # ---- fused linear_fuse + BN + ReLU + linear_pred (pixels on lanes, f32 logits)
    logits = decoder_tail_cm(embs, prm["tail"]).reshape(B, NUM_CLASSES, th, tw)

    # ---- F.interpolate(out, size=(H, W), 'bilinear', align_corners=False) per
    #      (batch, class): output is natively NCHW, no final transpose, no kron matrix.
    out = resize_bilinear_cm(logits, H, W, out_dtype=jnp.float32)
    return out                                                  # (B, NC, H, W) f32


# ----------------------------------- parameters ------------------------------------------
def init_params(key):
    """Raw PyTorch-like parameters (conv/linear weights + eval-mode BN stats)."""
    params = {}
    keys = jax.random.split(key, 16)
    ki = 0

    cin = IN_CH
    for i, (s, cout) in enumerate(zip(STRIDES, CHANNELS)):
        fan_in = s * s * cin
        w = jax.random.normal(keys[ki], (fan_in, cout), jnp.float32) * np.sqrt(2.0 / fan_in)
        ki += 1
        params[f"stage{i}"] = dict(
            w=w,
            bn_gamma=jnp.ones((cout,), jnp.float32),
            bn_beta=jnp.zeros((cout,), jnp.float32),
            bn_mean=jnp.zeros((cout,), jnp.float32),
            bn_var=jnp.ones((cout,), jnp.float32),
        )
        cin = cout

    for i, c in enumerate(CHANNELS):
        w = jax.random.normal(keys[ki], (c, EMBED_DIM), jnp.float32) * np.sqrt(2.0 / c)
        ki += 1
        params[f"linear_c{i + 1}"] = dict(w=w, b=jnp.zeros((EMBED_DIM,), jnp.float32))

    w = jax.random.normal(keys[ki], (4 * EMBED_DIM, EMBED_DIM), jnp.float32) * np.sqrt(
        2.0 / (4 * EMBED_DIM))
    ki += 1
    params["linear_fuse"] = dict(
        w=w,                               # rows ordered for cat([_c4, _c3, _c2, _c1])
        bn_gamma=jnp.ones((EMBED_DIM,), jnp.float32),
        bn_beta=jnp.zeros((EMBED_DIM,), jnp.float32),
        bn_mean=jnp.zeros((EMBED_DIM,), jnp.float32),
        bn_var=jnp.ones((EMBED_DIM,), jnp.float32),
    )

    w = jax.random.normal(keys[ki], (EMBED_DIM, NUM_CLASSES), jnp.float32) * np.sqrt(
        2.0 / EMBED_DIM)
    ki += 1
    params["linear_pred"] = dict(w=w, b=jnp.zeros((NUM_CLASSES,), jnp.float32))
    return params


def prepare_params(raw):
    """One-time, outside the hot path: fold eval-mode BN + biases into f32 (scale, shift),
    cast matmul weights to bf16, pre-transpose / pre-split weights for the channel-major
    decoder and the in-kernel patchify layout."""
    def _fold(p):
        scale = p["bn_gamma"] / jnp.sqrt(p["bn_var"] + BN_EPS)
        shift = p["bn_beta"] - p["bn_mean"] * scale
        return scale.astype(jnp.float32), shift.astype(jnp.float32)

    prm = {}
    cin = IN_CH
    for i, (s, cout) in enumerate(zip(STRIDES, CHANNELS)):
        p = raw[f"stage{i}"]
        scale, shift = _fold(p)
        prm[f"stage{i}"] = dict(
            w=p["w"].reshape(s, s * cin, cout).astype(jnp.bfloat16),  # rows (dy, dx, c)
            scale=scale.reshape(1, cout),
            shift=shift.reshape(1, cout),
        )
        cin = cout

    E = EMBED_DIM
    for i in range(4):
        p = raw[f"linear_c{i + 1}"]
        prm[f"linear_c{i + 1}"] = dict(
            wT=p["w"].T.astype(jnp.bfloat16),                   # (E, C)
            scale=jnp.ones((E, 1), jnp.float32),
            shift=p["b"].reshape(E, 1).astype(jnp.float32),
        )

    pf = raw["linear_fuse"]
    fscale, fshift = _fold(pf)
    wf = pf["w"]                      # (4E, E); rows [0:E]->_c4, ..., [3E:4E]->_c1
    wfT = jnp.stack(                  # slot k pairs with emb_{k+1} (c1..c4)
        [wf[3 * E:4 * E].T, wf[2 * E:3 * E].T, wf[1 * E:2 * E].T, wf[0 * E:1 * E].T],
        axis=0)
    pp = raw["linear_pred"]
    prm["tail"] = dict(
        wfT=wfT.astype(jnp.bfloat16),                           # (4, E, E)
        fscale=fscale.reshape(E, 1),
        fshift=fshift.reshape(E, 1),
        wpT=pp["w"].T.astype(jnp.float32),                      # (NC, E), pred kept f32
        pshift=pp["b"].reshape(NUM_CLASSES, 1).astype(jnp.float32),
    )
    return prm


# ----------------------------------------- main ------------------------------------------
if __name__ == "__main__":
    key = jax.random.PRNGKey(0)
    kp, kr, km = jax.random.split(key, 3)

    params = prepare_params(init_params(kp))

    B, H, W = 2, 32, 32
    rgb = jax.random.normal(kr, (B, 3, H, W), jnp.float32)
    modal_x = jax.random.normal(km, (B, 3, H, W), jnp.float32)

    out = jax.jit(forward)(params, rgb, modal_x)
    out = jax.block_until_ready(out)

    assert out.shape == (B, NUM_CLASSES, H, W), out.shape
    assert bool(jnp.all(jnp.isfinite(out)))
    print("KERNEL_OK")
</pallas_src>

<mosaic_0001>
module attributes {stable_mosaic.version = 11 : i64} {
  func.func @_patch_embed_kernel(%arg0: i32, %arg1: memref<2x4x8x24xbf16, #tpu.memory_space<vmem>>, %arg2: memref<4x24x32xbf16, #tpu.memory_space<vmem>>, %arg3: memref<1x32xf32, #tpu.memory_space<vmem>>, %arg4: memref<1x32xf32, #tpu.memory_space<vmem>>, %arg5: memref<16x32xbf16, #tpu.memory_space<vmem>>) attributes {dimension_semantics = [#tpu.dimension_semantics<parallel>], iteration_bounds = array<i64: 8>, scalar_prefetch = 0 : i64, scratch_operands = 0 : i64, tpu.core_type = #tpu.core_type<tc>, window_params = [{transform_indices = @transform_0, window_bounds = array<i64: 2, 4, 8, 24>}, {pipeline_mode = #tpu.pipeline_mode<synchronous>, transform_indices = @transform_1, window_bounds = array<i64: 4, 24, 32>}, {pipeline_mode = #tpu.pipeline_mode<synchronous>, transform_indices = @transform_2, window_bounds = array<i64: 1, 32>}, {pipeline_mode = #tpu.pipeline_mode<synchronous>, transform_indices = @transform_3, window_bounds = array<i64: 1, 32>}, {transform_indices = @transform_4, window_bounds = array<i64: 16, 32>}]} {
    %c0 = arith.constant 0 : index
    %c0_0 = arith.constant 0 : index
    %c0_1 = arith.constant 0 : index
    %c0_2 = arith.constant 0 : index
    %0 = vector.load %arg1[%c0, %c0_0, %c0_1, %c0_2] : memref<2x4x8x24xbf16, #tpu.memory_space<vmem>>, vector<2x4x8x24xbf16>
    %1 = vector.extract_strided_slice %0 {offsets = [0, 0, 0, 0], sizes = [2, 1, 8, 24], strides = [1, 1, 1, 1]} : vector<2x4x8x24xbf16> to vector<2x1x8x24xbf16>
    %2 = vector.shape_cast %1 : vector<2x1x8x24xbf16> to vector<2x8x24xbf16>
    %3 = vector.shape_cast %2 : vector<2x8x24xbf16> to vector<16x24xbf16>
    %c0_3 = arith.constant 0 : index
    %c0_4 = arith.constant 0 : index
    %c0_5 = arith.constant 0 : index
    %4 = vector.load %arg2[%c0_3, %c0_4, %c0_5] : memref<4x24x32xbf16, #tpu.memory_space<vmem>>, vector<1x24x32xbf16>
    %5 = vector.shape_cast %4 : vector<1x24x32xbf16> to vector<24x32xbf16>
    %cst = arith.constant dense<0.000000e+00> : vector<16x32xf32>
    %6 = tpu.matmul %3, %5, %cst {dimension_numbers = #tpu.dot_dimension_numbers<[1], [0], [0], [1], [0, 0, 1, 1], [], []>} : vector<16x24xbf16>, vector<24x32xbf16>, vector<16x32xf32> -> vector<16x32xf32>
    %7 = vector.extract_strided_slice %0 {offsets = [0, 1, 0, 0], sizes = [2, 1, 8, 24], strides = [1, 1, 1, 1]} : vector<2x4x8x24xbf16> to vector<2x1x8x24xbf16>
    %8 = vector.shape_cast %7 : vector<2x1x8x24xbf16> to vector<2x8x24xbf16>
    %9 = vector.shape_cast %8 : vector<2x8x24xbf16> to vector<16x24xbf16>
    %c1 = arith.constant 1 : index
    %c0_6 = arith.constant 0 : index
    %c0_7 = arith.constant 0 : index
    %10 = vector.load %arg2[%c1, %c0_6, %c0_7] : memref<4x24x32xbf16, #tpu.memory_space<vmem>>, vector<1x24x32xbf16>
    %11 = vector.shape_cast %10 : vector<1x24x32xbf16> to vector<24x32xbf16>
    %cst_8 = arith.constant dense<0.000000e+00> : vector<16x32xf32>
    %12 = tpu.matmul %9, %11, %cst_8 {dimension_numbers = #tpu.dot_dimension_numbers<[1], [0], [0], [1], [0, 0, 1, 1], [], []>} : vector<16x24xbf16>, vector<24x32xbf16>, vector<16x32xf32> -> vector<16x32xf32>
    %13 = arith.addf %6, %12 : vector<16x32xf32>
    %14 = vector.extract_strided_slice %0 {offsets = [0, 2, 0, 0], sizes = [2, 1, 8, 24], strides = [1, 1, 1, 1]} : vector<2x4x8x24xbf16> to vector<2x1x8x24xbf16>
    %15 = vector.shape_cast %14 : vector<2x1x8x24xbf16> to vector<2x8x24xbf16>
    %16 = vector.shape_cast %15 : vector<2x8x24xbf16> to vector<16x24xbf16>
    %c2 = arith.constant 2 : index
    %c0_9 = arith.constant 0 : index
    %c0_10 = arith.constant 0 : index
    %17 = vector.load %arg2[%c2, %c0_9, %c0_10] : memref<4x24x32xbf16, #tpu.memory_space<vmem>>, vector<1x24x32xbf16>
    %18 = vector.shape_cast %17 : vector<1x24x32xbf16> to vector<24x32xbf16>
    %cst_11 = arith.constant dense<0.000000e+00> : vector<16x32xf32>
    %19 = tpu.matmul %16, %18, %cst_11 {dimension_numbers = #tpu.dot_dimension_numbers<[1], [0], [0], [1], [0, 0, 1, 1], [], []>} : vector<16x24xbf16>, vector<24x32xbf16>, vector<16x32xf32> -> vector<16x32xf32>
    %20 = arith.addf %13, %19 : vector<16x32xf32>
    %21 = vector.extract_strided_slice %0 {offsets = [0, 3, 0, 0], sizes = [2, 1, 8, 24], strides = [1, 1, 1, 1]} : vector<2x4x8x24xbf16> to vector<2x1x8x24xbf16>
    %22 = vector.shape_cast %21 : vector<2x1x8x24xbf16> to vector<2x8x24xbf16>
    %23 = vector.shape_cast %22 : vector<2x8x24xbf16> to vector<16x24xbf16>
    %c3 = arith.constant 3 : index
    %c0_12 = arith.constant 0 : index
    %c0_13 = arith.constant 0 : index
    %24 = vector.load %arg2[%c3, %c0_12, %c0_13] : memref<4x24x32xbf16, #tpu.memory_space<vmem>>, vector<1x24x32xbf16>
    %25 = vector.shape_cast %24 : vector<1x24x32xbf16> to vector<24x32xbf16>
    %cst_14 = arith.constant dense<0.000000e+00> : vector<16x32xf32>
    %26 = tpu.matmul %23, %25, %cst_14 {dimension_numbers = #tpu.dot_dimension_numbers<[1], [0], [0], [1], [0, 0, 1, 1], [], []>} : vector<16x24xbf16>, vector<24x32xbf16>, vector<16x32xf32> -> vector<16x32xf32>
    %27 = arith.addf %20, %26 : vector<16x32xf32>
    %c0_15 = arith.constant 0 : index
    %c0_16 = arith.constant 0 : index
    %28 = vector.load %arg3[%c0_15, %c0_16] : memref<1x32xf32, #tpu.memory_space<vmem>>, vector<1x32xf32>
    %29 = vector.broadcast %28 : vector<1x32xf32> to vector<16x32xf32>
    %30 = arith.mulf %27, %29 : vector<16x32xf32>
    %c0_17 = arith.constant 0 : index
    %c0_18 = arith.constant 0 : index
    %31 = vector.load %arg4[%c0_17, %c0_18] : memref<1x32xf32, #tpu.memory_space<vmem>>, vector<1x32xf32>
    %32 = vector.broadcast %31 : vector<1x32xf32> to vector<16x32xf32>
    %33 = arith.addf %30, %32 : vector<16x32xf32>
    %cst_19 = arith.constant 0.000000e+00 : f32
    %34 = vector.broadcast %cst_19 : f32 to vector<16x32xf32>
    %35 = arith.maximumf %33, %34 : vector<16x32xf32>
    %36 = arith.truncf %35 : vector<16x32xf32> to vector<16x32xbf16>
    %c0_20 = arith.constant 0 : index
    %c0_21 = arith.constant 0 : index
    %37 = vector.load %arg5[%c0_20, %c0_21] : memref<16x32xbf16, #tpu.memory_space<vmem>>, vector<16x32xbf16>
    tpu.vector_store %arg5[%c0_20, %c0_21], %36 {strides = array<i32>} : memref<16x32xbf16, #tpu.memory_space<vmem>>, vector<16x32xbf16>,
    return
  }
  func.func @transform_0(%arg0: i32) -> (i32, i32, i32, i32) {
    %c0_i32 = arith.constant 0 : i32
    %c0_i32_0 = arith.constant 0 : i32
    %c0_i32_1 = arith.constant 0 : i32
    %c0_i32_2 = arith.constant 0 : i32
    return %arg0, %c0_i32, %c0_i32_0, %c0_i32_1 : i32, i32, i32, i32
  }
  func.func @transform_1(%arg0: i32) -> (i32, i32, i32) {
    %c0_i32 = arith.constant 0 : i32
    %c0_i32_0 = arith.constant 0 : i32
    %c0_i32_1 = arith.constant 0 : i32
    %c0_i32_2 = arith.constant 0 : i32
    return %c0_i32, %c0_i32_0, %c0_i32_1 : i32, i32, i32
  }
  func.func @transform_2(%arg0: i32) -> (i32, i32) {
    %c0_i32 = arith.constant 0 : i32
    %c0_i32_0 = arith.constant 0 : i32
    %c0_i32_1 = arith.constant 0 : i32
    return %c0_i32, %c0_i32_0 : i32, i32
  }
  func.func @transform_3(%arg0: i32) -> (i32, i32) {
    %c0_i32 = arith.constant 0 : i32
    %c0_i32_0 = arith.constant 0 : i32
    %c0_i32_1 = arith.constant 0 : i32
    return %c0_i32, %c0_i32_0 : i32, i32
  }
  func.func @transform_4(%arg0: i32) -> (i32, i32) {
    %c0_i32 = arith.constant 0 : i32
    %c0_i32_0 = arith.constant 0 : i32
    return %arg0, %c0_i32 : i32, i32
  }
}

module attributes {stable_mosaic.version = 11 : i64} {
  func.func @_mm_affine_kernel(%arg0: i32, %arg1: memref<8x128xbf16, #tpu.memory_space<vmem>>, %arg2: memref<128x64xbf16, #tpu.memory_space<vmem>>, %arg3: memref<1x64xf32, #tpu.memory_space<vmem>>, %arg4: memref<1x64xf32, #tpu.memory_space<vmem>>, %arg5: memref<8x64xbf16, #tpu.memory_space<vmem>>) attributes {dimension_semantics = [#tpu.dimension_semantics<parallel>], iteration_bounds = array<i64: 4>, scalar_prefetch = 0 : i64, scratch_operands = 0 : i64, tpu.core_type = #tpu.core_type<tc>, window_params = [{transform_indices = @transform_0, window_bounds = array<i64: 8, 128>}, {pipeline_mode = #tpu.pipeline_mode<synchronous>, transform_indices = @transform_1, window_bounds = array<i64: 128, 64>}, {pipeline_mode = #tpu.pipeline_mode<synchronous>, transform_indices = @transform_2, window_bounds = array<i64: 1, 64>}, {pipeline_mode = #tpu.pipeline_mode<synchronous>, transform_indices = @transform_3, window_bounds = array<i64: 1, 64>}, {transform_indices = @transform_4, window_bounds = array<i64: 8, 64>}]} {
    %c0 = arith.constant 0 : index
    %c0_0 = arith.constant 0 : index
    %0 = vector.load %arg1[%c0, %c0_0] : memref<8x128xbf16, #tpu.memory_space<vmem>>, vector<8x128xbf16>
    %c0_1 = arith.constant 0 : index
    %c0_2 = arith.constant 0 : index
    %1 = vector.load %arg2[%c0_1, %c0_2] : memref<128x64xbf16, #tpu.memory_space<vmem>>, vector<128x64xbf16>
    %cst = arith.constant dense<0.000000e+00> : vector<8x64xf32>
    %2 = tpu.matmul %0, %1, %cst {dimension_numbers = #tpu.dot_dimension_numbers<[1], [0], [0], [1], [0, 0, 1, 1], [], []>} : vector<8x128xbf16>, vector<128x64xbf16>, vector<8x64xf32> -> vector<8x64xf32>
    %c0_3 = arith.constant 0 : index
    %c0_4 = arith.constant 0 : index
    %3 = vector.load %arg3[%c0_3, %c0_4] : memref<1x64xf32, #tpu.memory_space<vmem>>, vector<1x64xf32>
    %4 = vector.broadcast %3 : vector<1x64xf32> to vector<8x64xf32>
    %5 = arith.mulf %2, %4 : vector<8x64xf32>
    %c0_5 = arith.constant 0 : index
    %c0_6 = arith.constant 0 : index
    %6 = vector.load %arg4[%c0_5, %c0_6] : memref<1x64xf32, #tpu.memory_space<vmem>>, vector<1x64xf32>
    %7 = vector.broadcast %6 : vector<1x64xf32> to vector<8x64xf32>
    %8 = arith.addf %5, %7 : vector<8x64xf32>
    %cst_7 = arith.constant 0.000000e+00 : f32
    %9 = vector.broadcast %cst_7 : f32 to vector<8x64xf32>
    %10 = arith.maximumf %8, %9 : vector<8x64xf32>
    %11 = arith.truncf %10 : vector<8x64xf32> to vector<8x64xbf16>
    %c0_8 = arith.constant 0 : index
    %c0_9 = arith.constant 0 : index
    %12 = vector.load %arg5[%c0_8, %c0_9] : memref<8x64xbf16, #tpu.memory_space<vmem>>, vector<8x64xbf16>
    tpu.vector_store %arg5[%c0_8, %c0_9], %11 {strides = array<i32>} : memref<8x64xbf16, #tpu.memory_space<vmem>>, vector<8x64xbf16>,
    return
  }
  func.func @transform_0(%arg0: i32) -> (i32, i32) {
    %c0_i32 = arith.constant 0 : i32
    %c0_i32_0 = arith.constant 0 : i32
    return %arg0, %c0_i32 : i32, i32
  }
  func.func @transform_1(%arg0: i32) -> (i32, i32) {
    %c0_i32 = arith.constant 0 : i32
    %c0_i32_0 = arith.constant 0 : i32
    %c0_i32_1 = arith.constant 0 : i32
    return %c0_i32, %c0_i32_0 : i32, i32
  }
  func.func @transform_2(%arg0: i32) -> (i32, i32) {
    %c0_i32 = arith.constant 0 : i32
    %c0_i32_0 = arith.constant 0 : i32
    %c0_i32_1 = arith.constant 0 : i32
    return %c0_i32, %c0_i32_0 : i32, i32
  }
  func.func @transform_3(%arg0: i32) -> (i32, i32) {
    %c0_i32 = arith.constant 0 : i32
    %c0_i32_0 = arith.constant 0 : i32
    %c0_i32_1 = arith.constant 0 : i32
    return %c0_i32, %c0_i32_0 : i32, i32
  }
  func.func @transform_4(%arg0: i32) -> (i32, i32) {
    %c0_i32 = arith.constant 0 : i32
    %c0_i32_0 = arith.constant 0 : i32
    return %arg0, %c0_i32 : i32, i32
  }
}

module attributes {stable_mosaic.version = 11 : i64} {
  func.func @_resize_cm_kernel(%arg0: i32, %arg1: i32, %arg2: i32, %arg3: memref<1x1x2x2xbf16, #tpu.memory_space<vmem>>, %arg4: memref<8x2xbf16, #tpu.memory_space<vmem>>, %arg5: memref<2x8xbf16, #tpu.memory_space<vmem>>, %arg6: memref<1x1x8x8xbf16, #tpu.memory_space<vmem>>) attributes {dimension_semantics = [#tpu.dimension_semantics<parallel>, #tpu.dimension_semantics<parallel>, #tpu.dimension_semantics<parallel>], iteration_bounds = array<i64: 2, 64, 1>, scalar_prefetch = 0 : i64, scratch_operands = 0 : i64, tpu.core_type = #tpu.core_type<tc>, window_params = [{transform_indices = @transform_0, window_bounds = array<i64: 1, 1, 2, 2>}, {transform_indices = @transform_1, window_bounds = array<i64: 8, 2>}, {pipeline_mode = #tpu.pipeline_mode<synchronous>, transform_indices = @transform_2, window_bounds = array<i64: 2, 8>}, {transform_indices = @transform_3, window_bounds = array<i64: 1, 1, 8, 8>}]} {
    %c0 = arith.constant 0 : index
    %c0_0 = arith.constant 0 : index
    %0 = vector.load %arg4[%c0, %c0_0] : memref<8x2xbf16, #tpu.memory_space<vmem>>, vector<8x2xbf16>
    %c0_1 = arith.constant 0 : index
    %c0_2 = arith.constant 0 : index
    %c0_3 = arith.constant 0 : index
    %c0_4 = arith.constant 0 : index
    %1 = vector.load %arg3[%c0_1, %c0_2, %c0_3, %c0_4] : memref<1x1x2x2xbf16, #tpu.memory_space<vmem>>, vector<1x1x2x2xbf16>
    %2 = vector.shape_cast %1 : vector<1x1x2x2xbf16> to vector<2x2xbf16>
    %cst = arith.constant dense<0.000000e+00> : vector<8x2xf32>
    %3 = tpu.matmul %0, %2, %cst {dimension_numbers = #tpu.dot_dimension_numbers<[1], [0], [0], [1], [0, 0, 1, 1], [], []>} : vector<8x2xbf16>, vector<2x2xbf16>, vector<8x2xf32> -> vector<8x2xf32>
    %4 = arith.truncf %3 : vector<8x2xf32> to vector<8x2xbf16>
    %c0_5 = arith.constant 0 : index
    %c0_6 = arith.constant 0 : index
    %5 = vector.load %arg5[%c0_5, %c0_6] : memref<2x8xbf16, #tpu.memory_space<vmem>>, vector<2x8xbf16>
    %cst_7 = arith.constant dense<0.000000e+00> : vector<8x8xf32>
    %6 = tpu.matmul %4, %5, %cst_7 {dimension_numbers = #tpu.dot_dimension_numbers<[1], [0], [0], [1], [0, 0, 1, 1], [], []>} : vector<8x2xbf16>, vector<2x8xbf16>, vector<8x8xf32> -> vector<8x8xf32>
    %7 = arith.truncf %6 : vector<8x8xf32> to vector<8x8xbf16>
    %c0_8 = arith.constant 0 : index
    %c0_9 = arith.constant 0 : index
    %c0_10 = arith.constant 0 : index
    %c0_11 = arith.constant 0 : index
    %8 = vector.load %arg6[%c0_8, %c0_9, %c0_10, %c0_11] : memref<1x1x8x8xbf16, #tpu.memory_space<vmem>>, vector<1x1x8x8xbf16>
    %9 = vector.shape_cast %8 : vector<1x1x8x8xbf16> to vector<8x8xbf16>
    %10 = vector.shape_cast %7 : vector<8x8xbf16> to vector<1x1x8x8xbf16>
    tpu.vector_store %arg6[%c0_8, %c0_9, %c0_10, %c0_11], %10 {strides = array<i32>} : memref<1x1x8x8xbf16, #tpu.memory_space<vmem>>, vector<1x1x8x8xbf16>,
    return
  }
  func.func @transform_0(%arg0: i32, %arg1: i32, %arg2: i32) -> (i32, i32, i32, i32) {
    %c0_i32 = arith.constant 0 : i32
    %c0_i32_0 = arith.constant 0 : i32
    %c0_i32_1 = arith.constant 0 : i32
    return %arg0, %arg1, %c0_i32, %c0_i32_0 : i32, i32, i32, i32
  }
  func.func @transform_1(%arg0: i32, %arg1: i32, %arg2: i32) -> (i32, i32) {
    %c0_i32 = arith.constant 0 : i32
    %c0_i32_0 = arith.constant 0 : i32
    return %arg2, %c0_i32 : i32, i32
  }
  func.func @transform_2(%arg0: i32, %arg1: i32, %arg2: i32) -> (i32, i32) {
    %c0_i32 = arith.constant 0 : i32
    %c0_i32_0 = arith.constant 0 : i32
    %c0_i32_1 = arith.constant 0 : i32
    return %c0_i32, %c0_i32_0 : i32, i32
  }
  func.func @transform_3(%arg0: i32, %arg1: i32, %arg2: i32) -> (i32, i32, i32, i32) {
    %c0_i32 = arith.constant 0 : i32
    %c0_i32_0 = arith.constant 0 : i32
    return %arg0, %arg1, %arg2, %c0_i32 : i32, i32, i32, i32
  }
}

module attributes {stable_mosaic.version = 11 : i64} {
  func.func @_mm_affine_kernel(%arg0: i32, %arg1: memref<8x256xbf16, #tpu.memory_space<vmem>>, %arg2: memref<256x128xbf16, #tpu.memory_space<vmem>>, %arg3: memref<1x128xf32, #tpu.memory_space<vmem>>, %arg4: memref<1x128xf32, #tpu.memory_space<vmem>>, %arg5: memref<8x128xbf16, #tpu.memory_space<vmem>>) attributes {dimension_semantics = [#tpu.dimension_semantics<parallel>], iteration_bounds = array<i64: 1>, scalar_prefetch = 0 : i64, scratch_operands = 0 : i64, tpu.core_type = #tpu.core_type<tc>, window_params = [{transform_indices = @transform_0, window_bounds = array<i64: 8, 256>}, {pipeline_mode = #tpu.pipeline_mode<synchronous>, transform_indices = @transform_1, window_bounds = array<i64: 256, 128>}, {pipeline_mode = #tpu.pipeline_mode<synchronous>, transform_indices = @transform_2, window_bounds = array<i64: 1, 128>}, {pipeline_mode = #tpu.pipeline_mode<synchronous>, transform_indices = @transform_3, window_bounds = array<i64: 1, 128>}, {transform_indices = @transform_4, window_bounds = array<i64: 8, 128>}]} {
    %c0 = arith.constant 0 : index
    %c0_0 = arith.constant 0 : index
    %0 = vector.load %arg1[%c0, %c0_0] : memref<8x256xbf16, #tpu.memory_space<vmem>>, vector<8x256xbf16>
    %c0_1 = arith.constant 0 : index
    %c0_2 = arith.constant 0 : index
    %1 = vector.load %arg2[%c0_1, %c0_2] : memref<256x128xbf16, #tpu.memory_space<vmem>>, vector<256x128xbf16>
    %cst = arith.constant dense<0.000000e+00> : vector<8x128xf32>
    %2 = tpu.matmul %0, %1, %cst {dimension_numbers = #tpu.dot_dimension_numbers<[1], [0], [0], [1], [0, 0, 1, 1], [], []>} : vector<8x256xbf16>, vector<256x128xbf16>, vector<8x128xf32> -> vector<8x128xf32>
    %c0_3 = arith.constant 0 : index
    %c0_4 = arith.constant 0 : index
    %3 = vector.load %arg3[%c0_3, %c0_4] : memref<1x128xf32, #tpu.memory_space<vmem>>, vector<1x128xf32>
    %4 = vector.broadcast %3 : vector<1x128xf32> to vector<8x128xf32>
    %5 = arith.mulf %2, %4 : vector<8x128xf32>
    %c0_5 = arith.constant 0 : index
    %c0_6 = arith.constant 0 : index
    %6 = vector.load %arg4[%c0_5, %c0_6] : memref<1x128xf32, #tpu.memory_space<vmem>>, vector<1x128xf32>
    %7 = vector.broadcast %6 : vector<1x128xf32> to vector<8x128xf32>
    %8 = arith.addf %5, %7 : vector<8x128xf32>
    %cst_7 = arith.constant 0.000000e+00 : f32
    %9 = vector.broadcast %cst_7 : f32 to vector<8x128xf32>
    %10 = arith.maximumf %8, %9 : vector<8x128xf32>
    %11 = arith.truncf %10 : vector<8x128xf32> to vector<8x128xbf16>
    %c0_8 = arith.constant 0 : index
    %c0_9 = arith.constant 0 : index
    %12 = vector.load %arg5[%c0_8, %c0_9] : memref<8x128xbf16, #tpu.memory_space<vmem>>, vector<8x128xbf16>
    tpu.vector_store %arg5[%c0_8, %c0_9], %11 {strides = array<i32>} : memref<8x128xbf16, #tpu.memory_space<vmem>>, vector<8x128xbf16>,
    return
  }
  func.func @transform_0(%arg0: i32) -> (i32, i32) {
    %c0_i32 = arith.constant 0 : i32
    %c0_i32_0 = arith.constant 0 : i32
    return %arg0, %c0_i32 : i32, i32
  }
  func.func @transform_1(%arg0: i32) -> (i32, i32) {
    %c0_i32 = arith.constant 0 : i32
    %c0_i32_0 = arith.constant 0 : i32
    %c0_i32_1 = arith.constant 0 : i32
    return %c0_i32, %c0_i32_0 : i32, i32
  }
  func.func @transform_2(%arg0: i32) -> (i32, i32) {
    %c0_i32 = arith.constant 0 : i32
    %c0_i32_0 = arith.constant 0 : i32
    %c0_i32_1 = arith.constant 0 : i32
    return %c0_i32, %c0_i32_0 : i32, i32
  }
  func.func @transform_3(%arg0: i32) -> (i32, i32) {
    %c0_i32 = arith.constant 0 : i32
    %c0_i32_0 = arith.constant 0 : i32
    %c0_i32_1 = arith.constant 0 : i32
    return %c0_i32, %c0_i32_0 : i32, i32
  }
  func.func @transform_4(%arg0: i32) -> (i32, i32) {
    %c0_i32 = arith.constant 0 : i32
    %c0_i32_0 = arith.constant 0 : i32
    return %arg0, %c0_i32 : i32, i32
  }
}

module attributes {stable_mosaic.version = 11 : i64} {
  func.func @_cm_affine_kernel(%arg0: i32, %arg1: i32, %arg2: memref<1x128x4xbf16, #tpu.memory_space<vmem>>, %arg3: memref<64x128xbf16, #tpu.memory_space<vmem>>, %arg4: memref<64x1xf32, #tpu.memory_space<vmem>>, %arg5: memref<64x1xf32, #tpu.memory_space<vmem>>, %arg6: memref<1x64x4xbf16, #tpu.memory_space<vmem>>) attributes {dimension_semantics = [#tpu.dimension_semantics<parallel>, #tpu.dimension_semantics<parallel>], iteration_bounds = array<i64: 2, 1>, scalar_prefetch = 0 : i64, scratch_operands = 0 : i64, tpu.core_type = #tpu.core_type<tc>, window_params = [{transform_indices = @transform_0, window_bounds = array<i64: 1, 128, 4>}, {pipeline_mode = #tpu.pipeline_mode<synchronous>, transform_indices = @transform_1, window_bounds = array<i64: 64, 128>}, {pipeline_mode = #tpu.pipeline_mode<synchronous>, transform_indices = @transform_2, window_bounds = array<i64: 64, 1>}, {pipeline_mode = #tpu.pipeline_mode<synchronous>, transform_indices = @transform_3, window_bounds = array<i64: 64, 1>}, {transform_indices = @transform_4, window_bounds = array<i64: 1, 64, 4>}]} {
    %c0 = arith.constant 0 : index
    %c0_0 = arith.constant 0 : index
    %0 = vector.load %arg3[%c0, %c0_0] : memref<64x128xbf16, #tpu.memory_space<vmem>>, vector<64x128xbf16>
    %c0_1 = arith.constant 0 : index
    %c0_2 = arith.constant 0 : index
    %c0_3 = arith.constant 0 : index
    %1 = vector.load %arg2[%c0_1, %c0_2, %c0_3] : memref<1x128x4xbf16, #tpu.memory_space<vmem>>, vector<1x128x4xbf16>
    %2 = vector.shape_cast %1 : vector<1x128x4xbf16> to vector<128x4xbf16>
    %cst = arith.constant dense<0.000000e+00> : vector<64x4xf32>
    %3 = tpu.matmul %0, %2, %cst {dimension_numbers = #tpu.dot_dimension_numbers<[1], [0], [0], [1], [0, 0, 1, 1], [], []>} : vector<64x128xbf16>, vector<128x4xbf16>, vector<64x4xf32> -> vector<64x4xf32>
    %c0_4 = arith.constant 0 : index
    %c0_5 = arith.constant 0 : index
    %4 = vector.load %arg4[%c0_4, %c0_5] : memref<64x1xf32, #tpu.memory_space<vmem>>, vector<64x1xf32>
    %5 = vector.broadcast %4 : vector<64x1xf32> to vector<64x4xf32>
    %6 = arith.mulf %3, %5 : vector<64x4xf32>
    %c0_6 = arith.constant 0 : index
    %c0_7 = arith.constant 0 : index
    %7 = vector.load %arg5[%c0_6, %c0_7] : memref<64x1xf32, #tpu.memory_space<vmem>>, vector<64x1xf32>
    %8 = vector.broadcast %7 : vector<64x1xf32> to vector<64x4xf32>
    %9 = arith.addf %6, %8 : vector<64x4xf32>
    %10 = arith.truncf %9 : vector<64x4xf32> to vector<64x4xbf16>
    %c0_8 = arith.constant 0 : index
    %c0_9 = arith.constant 0 : index
    %c0_10 = arith.constant 0 : index
    %11 = vector.load %arg6[%c0_8, %c0_9, %c0_10] : memref<1x64x4xbf16, #tpu.memory_space<vmem>>, vector<1x64x4xbf16>
    %12 = vector.shape_cast %11 : vector<1x64x4xbf16> to vector<64x4xbf16>
    %13 = vector.shape_cast %10 : vector<64x4xbf16> to vector<1x64x4xbf16>
    tpu.vector_store %arg6[%c0_8, %c0_9, %c0_10], %13 {strides = array<i32>} : memref<1x64x4xbf16, #tpu.memory_space<vmem>>, vector<1x64x4xbf16>,
    return
  }
  func.func @transform_0(%arg0: i32, %arg1: i32) -> (i32, i32, i32) {
    %c0_i32 = arith.constant 0 : i32
    %c0_i32_0 = arith.constant 0 : i32
    return %arg0, %c0_i32, %arg1 : i32, i32, i32
  }
  func.func @transform_1(%arg0: i32, %arg1: i32) -> (i32, i32) {
    %c0_i32 = arith.constant 0 : i32
    %c0_i32_0 = arith.constant 0 : i32
    %c0_i32_1 = arith.constant 0 : i32
    return %c0_i32, %c0_i32_0 : i32, i32
  }
  func.func @transform_2(%arg0: i32, %arg1: i32) -> (i32, i32) {
    %c0_i32 = arith.constant 0 : i32
    %c0_i32_0 = arith.constant 0 : i32
    %c0_i32_1 = arith.constant 0 : i32
    return %c0_i32, %c0_i32_0 : i32, i32
  }
  func.func @transform_3(%arg0: i32, %arg1: i32) -> (i32, i32) {
    %c0_i32 = arith.constant 0 : i32
    %c0_i32_0 = arith.constant 0 : i32
    %c0_i32_1 = arith.constant 0 : i32
    return %c0_i32, %c0_i32_0 : i32, i32
  }
  func.func @transform_4(%arg0: i32, %arg1: i32) -> (i32, i32, i32) {
    %c0_i32 = arith.constant 0 : i32
    %c0_i32_0 = arith.constant 0 : i32
    return %arg0, %c0_i32, %arg1 : i32, i32, i32
  }
}

module attributes {stable_mosaic.version = 11 : i64} {
  func.func @_mm_affine_kernel(%arg0: i32, %arg1: memref<2x512xbf16, #tpu.memory_space<vmem>>, %arg2: memref<512x256xbf16, #tpu.memory_space<vmem>>, %arg3: memref<1x256xf32, #tpu.memory_space<vmem>>, %arg4: memref<1x256xf32, #tpu.memory_space<vmem>>, %arg5: memref<2x256xbf16, #tpu.memory_space<vmem>>) attributes {dimension_semantics = [#tpu.dimension_semantics<parallel>], iteration_bounds = array<i64: 1>, scalar_prefetch = 0 : i64, scratch_operands = 0 : i64, tpu.core_type = #tpu.core_type<tc>, window_params = [{transform_indices = @transform_0, window_bounds = array<i64: 2, 512>}, {pipeline_mode = #tpu.pipeline_mode<synchronous>, transform_indices = @transform_1, window_bounds = array<i64: 512, 256>}, {pipeline_mode = #tpu.pipeline_mode<synchronous>, transform_indices = @transform_2, window_bounds = array<i64: 1, 256>}, {pipeline_mode = #tpu.pipeline_mode<synchronous>, transform_indices = @transform_3, window_bounds = array<i64: 1, 256>}, {transform_indices = @transform_4, window_bounds = array<i64: 2, 256>}]} {
    %c0 = arith.constant 0 : index
    %c0_0 = arith.constant 0 : index
    %0 = vector.load %arg1[%c0, %c0_0] : memref<2x512xbf16, #tpu.memory_space<vmem>>, vector<2x512xbf16>
    %c0_1 = arith.constant 0 : index
    %c0_2 = arith.constant 0 : index
    %1 = vector.load %arg2[%c0_1, %c0_2] : memref<512x256xbf16, #tpu.memory_space<vmem>>, vector<512x256xbf16>
    %cst = arith.constant dense<0.000000e+00> : vector<2x256xf32>
    %2 = tpu.matmul %0, %1, %cst {dimension_numbers = #tpu.dot_dimension_numbers<[1], [0], [0], [1], [0, 0, 1, 1], [], []>} : vector<2x512xbf16>, vector<512x256xbf16>, vector<2x256xf32> -> vector<2x256xf32>
    %c0_3 = arith.constant 0 : index
    %c0_4 = arith.constant 0 : index
    %3 = vector.load %arg3[%c0_3, %c0_4] : memref<1x256xf32, #tpu.memory_space<vmem>>, vector<1x256xf32>
    %4 = vector.broadcast %3 : vector<1x256xf32> to vector<2x256xf32>
    %5 = arith.mulf %2, %4 : vector<2x256xf32>
    %c0_5 = arith.constant 0 : index
    %c0_6 = arith.constant 0 : index
    %6 = vector.load %arg4[%c0_5, %c0_6] : memref<1x256xf32, #tpu.memory_space<vmem>>, vector<1x256xf32>
    %7 = vector.broadcast %6 : vector<1x256xf32> to vector<2x256xf32>
    %8 = arith.addf %5, %7 : vector<2x256xf32>
    %cst_7 = arith.constant 0.000000e+00 : f32
    %9 = vector.broadcast %cst_7 : f32 to vector<2x256xf32>
    %10 = arith.maximumf %8, %9 : vector<2x256xf32>
    %11 = arith.truncf %10 : vector<2x256xf32> to vector<2x256xbf16>
    %c0_8 = arith.constant 0 : index
    %c0_9 = arith.constant 0 : index
    %12 = vector.load %arg5[%c0_8, %c0_9] : memref<2x256xbf16, #tpu.memory_space<vmem>>, vector<2x256xbf16>
    tpu.vector_store %arg5[%c0_8, %c0_9], %11 {strides = array<i32>} : memref<2x256xbf16, #tpu.memory_space<vmem>>, vector<2x256xbf16>,
    return
  }
  func.func @transform_0(%arg0: i32) -> (i32, i32) {
    %c0_i32 = arith.constant 0 : i32
    %c0_i32_0 = arith.constant 0 : i32
    return %arg0, %c0_i32 : i32, i32
  }
  func.func @transform_1(%arg0: i32) -> (i32, i32) {
    %c0_i32 = arith.constant 0 : i32
    %c0_i32_0 = arith.constant 0 : i32
    %c0_i32_1 = arith.constant 0 : i32
    return %c0_i32, %c0_i32_0 : i32, i32
  }
  func.func @transform_2(%arg0: i32) -> (i32, i32) {
    %c0_i32 = arith.constant 0 : i32
    %c0_i32_0 = arith.constant 0 : i32
    %c0_i32_1 = arith.constant 0 : i32
    return %c0_i32, %c0_i32_0 : i32, i32
  }
  func.func @transform_3(%arg0: i32) -> (i32, i32) {
    %c0_i32 = arith.constant 0 : i32
    %c0_i32_0 = arith.constant 0 : i32
    %c0_i32_1 = arith.constant 0 : i32
    return %c0_i32, %c0_i32_0 : i32, i32
  }
  func.func @transform_4(%arg0: i32) -> (i32, i32) {
    %c0_i32 = arith.constant 0 : i32
    %c0_i32_0 = arith.constant 0 : i32
    return %arg0, %c0_i32 : i32, i32
  }
}

module attributes {stable_mosaic.version = 11 : i64} {
  func.func @_cm_affine_kernel(%arg0: i32, %arg1: i32, %arg2: memref<1x256x1xbf16, #tpu.memory_space<vmem>>, %arg3: memref<64x256xbf16, #tpu.memory_space<vmem>>, %arg4: memref<64x1xf32, #tpu.memory_space<vmem>>, %arg5: memref<64x1xf32, #tpu.memory_space<vmem>>, %arg6: memref<1x64x1xbf16, #tpu.memory_space<vmem>>) attributes {dimension_semantics = [#tpu.dimension_semantics<parallel>, #tpu.dimension_semantics<parallel>], iteration_bounds = array<i64: 2, 1>, scalar_prefetch = 0 : i64, scratch_operands = 0 : i64, tpu.core_type = #tpu.core_type<tc>, window_params = [{transform_indices = @transform_0, window_bounds = array<i64: 1, 256, 1>}, {pipeline_mode = #tpu.pipeline_mode<synchronous>, transform_indices = @transform_1, window_bounds = array<i64: 64, 256>}, {pipeline_mode = #tpu.pipeline_mode<synchronous>, transform_indices = @transform_2, window_bounds = array<i64: 64, 1>}, {pipeline_mode = #tpu.pipeline_mode<synchronous>, transform_indices = @transform_3, window_bounds = array<i64: 64, 1>}, {transform_indices = @transform_4, window_bounds = array<i64: 1, 64, 1>}]} {
    %c0 = arith.constant 0 : index
    %c0_0 = arith.constant 0 : index
    %0 = vector.load %arg3[%c0, %c0_0] : memref<64x256xbf16, #tpu.memory_space<vmem>>, vector<64x256xbf16>
    %c0_1 = arith.constant 0 : index
    %c0_2 = arith.constant 0 : index
    %c0_3 = arith.constant 0 : index
    %1 = vector.load %arg2[%c0_1, %c0_2, %c0_3] : memref<1x256x1xbf16, #tpu.memory_space<vmem>>, vector<1x256x1xbf16>
    %2 = vector.shape_cast %1 : vector<1x256x1xbf16> to vector<256x1xbf16>
    %cst = arith.constant dense<0.000000e+00> : vector<64x1xf32>
    %3 = tpu.matmul %0, %2, %cst {dimension_numbers = #tpu.dot_dimension_numbers<[1], [0], [0], [1], [0, 0, 1, 1], [], []>} : vector<64x256xbf16>, vector<256x1xbf16>, vector<64x1xf32> -> vector<64x1xf32>
    %c0_4 = arith.constant 0 : index
    %c0_5 = arith.constant 0 : index
    %4 = vector.load %arg4[%c0_4, %c0_5] : memref<64x1xf32, #tpu.memory_space<vmem>>, vector<64x1xf32>
    %5 = arith.mulf %3, %4 : vector<64x1xf32>
    %c0_6 = arith.constant 0 : index
    %c0_7 = arith.constant 0 : index
    %6 = vector.load %arg5[%c0_6, %c0_7] : memref<64x1xf32, #tpu.memory_space<vmem>>, vector<64x1xf32>
    %7 = arith.addf %5, %6 : vector<64x1xf32>
    %8 = arith.truncf %7 : vector<64x1xf32> to vector<64x1xbf16>
    %c0_8 = arith.constant 0 : index
    %c0_9 = arith.constant 0 : index
    %c0_10 = arith.constant 0 : index
    %9 = vector.load %arg6[%c0_8, %c0_9, %c0_10] : memref<1x64x1xbf16, #tpu.memory_space<vmem>>, vector<1x64x1xbf16>
    %10 = vector.shape_cast %9 : vector<1x64x1xbf16> to vector<64x1xbf16>
    %11 = vector.shape_cast %8 : vector<64x1xbf16> to vector<1x64x1xbf16>
    tpu.vector_store %arg6[%c0_8, %c0_9, %c0_10], %11 {strides = array<i32>} : memref<1x64x1xbf16, #tpu.memory_space<vmem>>, vector<1x64x1xbf16>,
    return
  }
  func.func @transform_0(%arg0: i32, %arg1: i32) -> (i32, i32, i32) {
    %c0_i32 = arith.constant 0 : i32
    %c0_i32_0 = arith.constant 0 : i32
    return %arg0, %c0_i32, %arg1 : i32, i32, i32
  }
  func.func @transform_1(%arg0: i32, %arg1: i32) -> (i32, i32) {
    %c0_i32 = arith.constant 0 : i32
    %c0_i32_0 = arith.constant 0 : i32
    %c0_i32_1 = arith.constant 0 : i32
    return %c0_i32, %c0_i32_0 : i32, i32
  }
  func.func @transform_2(%arg0: i32, %arg1: i32) -> (i32, i32) {
    %c0_i32 = arith.constant 0 : i32
    %c0_i32_0 = arith.constant 0 : i32
    %c0_i32_1 = arith.constant 0 : i32
    return %c0_i32, %c0_i32_0 : i32, i32
  }
  func.func @transform_3(%arg0: i32, %arg1: i32) -> (i32, i32) {
    %c0_i32 = arith.constant 0 : i32
    %c0_i32_0 = arith.constant 0 : i32
    %c0_i32_1 = arith.constant 0 : i32
    return %c0_i32, %c0_i32_0 : i32, i32
  }
  func.func @transform_4(%arg0: i32, %arg1: i32) -> (i32, i32, i32) {
    %c0_i32 = arith.constant 0 : i32
    %c0_i32_0 = arith.constant 0 : i32
    return %arg0, %c0_i32, %arg1 : i32, i32, i32
  }
}

module attributes {stable_mosaic.version = 11 : i64} {
  func.func @_cm_affine_kernel(%arg0: i32, %arg1: i32, %arg2: memref<1x64x16xbf16, #tpu.memory_space<vmem>>, %arg3: memref<64x64xbf16, #tpu.memory_space<vmem>>, %arg4: memref<64x1xf32, #tpu.memory_space<vmem>>, %arg5: memref<64x1xf32, #tpu.memory_space<vmem>>, %arg6: memref<1x64x16xbf16, #tpu.memory_space<vmem>>) attributes {dimension_semantics = [#tpu.dimension_semantics<parallel>, #tpu.dimension_semantics<parallel>], iteration_bounds = array<i64: 2, 1>, scalar_prefetch = 0 : i64, scratch_operands = 0 : i64, tpu.core_type = #tpu.core_type<tc>, window_params = [{transform_indices = @transform_0, window_bounds = array<i64: 1, 64, 16>}, {pipeline_mode = #tpu.pipeline_mode<synchronous>, transform_indices = @transform_1, window_bounds = array<i64: 64, 64>}, {pipeline_mode = #tpu.pipeline_mode<synchronous>, transform_indices = @transform_2, window_bounds = array<i64: 64, 1>}, {pipeline_mode = #tpu.pipeline_mode<synchronous>, transform_indices = @transform_3, window_bounds = array<i64: 64, 1>}, {transform_indices = @transform_4, window_bounds = array<i64: 1, 64, 16>}]} {
    %c0 = arith.constant 0 : index
    %c0_0 = arith.constant 0 : index
    %0 = vector.load %arg3[%c0, %c0_0] : memref<64x64xbf16, #tpu.memory_space<vmem>>, vector<64x64xbf16>
    %c0_1 = arith.constant 0 : index
    %c0_2 = arith.constant 0 : index
    %c0_3 = arith.constant 0 : index
    %1 = vector.load %arg2[%c0_1, %c0_2, %c0_3] : memref<1x64x16xbf16, #tpu.memory_space<vmem>>, vector<1x64x16xbf16>
    %2 = vector.shape_cast %1 : vector<1x64x16xbf16> to vector<64x16xbf16>
    %cst = arith.constant dense<0.000000e+00> : vector<64x16xf32>
    %3 = tpu.matmul %0, %2, %cst {dimension_numbers = #tpu.dot_dimension_numbers<[1], [0], [0], [1], [0, 0, 1, 1], [], []>} : vector<64x64xbf16>, vector<64x16xbf16>, vector<64x16xf32> -> vector<64x16xf32>
    %c0_4 = arith.constant 0 : index
    %c0_5 = arith.constant 0 : index
    %4 = vector.load %arg4[%c0_4, %c0_5] : memref<64x1xf32, #tpu.memory_space<vmem>>, vector<64x1xf32>
    %5 = vector.broadcast %4 : vector<64x1xf32> to vector<64x16xf32>
    %6 = arith.mulf %3, %5 : vector<64x16xf32>
    %c0_6 = arith.constant 0 : index
    %c0_7 = arith.constant 0 : index
    %7 = vector.load %arg5[%c0_6, %c0_7] : memref<64x1xf32, #tpu.memory_space<vmem>>, vector<64x1xf32>
    %8 = vector.broadcast %7 : vector<64x1xf32> to vector<64x16xf32>
    %9 = arith.addf %6, %8 : vector<64x16xf32>
    %10 = arith.truncf %9 : vector<64x16xf32> to vector<64x16xbf16>
    %c0_8 = arith.constant 0 : index
    %c0_9 = arith.constant 0 : index
    %c0_10 = arith.constant 0 : index
    %11 = vector.load %arg6[%c0_8, %c0_9, %c0_10] : memref<1x64x16xbf16, #tpu.memory_space<vmem>>, vector<1x64x16xbf16>
    %12 = vector.shape_cast %11 : vector<1x64x16xbf16> to vector<64x16xbf16>
    %13 = vector.shape_cast %10 : vector<64x16xbf16> to vector<1x64x16xbf16>
    tpu.vector_store %arg6[%c0_8, %c0_9, %c0_10], %13 {strides = array<i32>} : memref<1x64x16xbf16, #tpu.memory_space<vmem>>, vector<1x64x16xbf16>,
    return
  }
  func.func @transform_0(%arg0: i32, %arg1: i32) -> (i32, i32, i32) {
    %c0_i32 = arith.constant 0 : i32
    %c0_i32_0 = arith.constant 0 : i32
    return %arg0, %c0_i32, %arg1 : i32, i32, i32
  }
  func.func @transform_1(%arg0: i32, %arg1: i32) -> (i32, i32) {
    %c0_i32 = arith.constant 0 : i32
    %c0_i32_0 = arith.constant 0 : i32
    %c0_i32_1 = arith.constant 0 : i32
    return %c0_i32, %c0_i32_0 : i32, i32
  }
  func.func @transform_2(%arg0: i32, %arg1: i32) -> (i32, i32) {
    %c0_i32 = arith.constant 0 : i32
    %c0_i32_0 = arith.constant 0 : i32
    %c0_i32_1 = arith.constant 0 : i32
    return %c0_i32, %c0_i32_0 : i32, i32
  }
  func.func @transform_3(%arg0: i32, %arg1: i32) -> (i32, i32) {
    %c0_i32 = arith.constant 0 : i32
    %c0_i32_0 = arith.constant 0 : i32
    %c0_i32_1 = arith.constant 0 : i32
    return %c0_i32, %c0_i32_0 : i32, i32
  }
  func.func @transform_4(%arg0: i32, %arg1: i32) -> (i32, i32, i32) {
    %c0_i32 = arith.constant 0 : i32
    %c0_i32_0 = arith.constant 0 : i32
    return %arg0, %c0_i32, %arg1 : i32, i32, i32
  }
}

module attributes {stable_mosaic.version = 11 : i64} {
  func.func @_resize_cm_kernel(%arg0: i32, %arg1: i32, %arg2: i32, %arg3: memref<1x1x4x4xbf16, #tpu.memory_space<vmem>>, %arg4: memref<8x4xbf16, #tpu.memory_space<vmem>>, %arg5: memref<4x8xbf16, #tpu.memory_space<vmem>>, %arg6: memref<1x1x8x8xbf16, #tpu.memory_space<vmem>>) attributes {dimension_semantics = [#tpu.dimension_semantics<parallel>, #tpu.dimension_semantics<parallel>, #tpu.dimension_semantics<parallel>], iteration_bounds = array<i64: 2, 64, 1>, scalar_prefetch = 0 : i64, scratch_operands = 0 : i64, tpu.core_type = #tpu.core_type<tc>, window_params = [{transform_indices = @transform_0, window_bounds = array<i64: 1, 1, 4, 4>}, {transform_indices = @transform_1, window_bounds = array<i64: 8, 4>}, {pipeline_mode = #tpu.pipeline_mode<synchronous>, transform_indices = @transform_2, window_bounds = array<i64: 4, 8>}, {transform_indices = @transform_3, window_bounds = array<i64: 1, 1, 8, 8>}]} {
    %c0 = arith.constant 0 : index
    %c0_0 = arith.constant 0 : index
    %0 = vector.load %arg4[%c0, %c0_0] : memref<8x4xbf16, #tpu.memory_space<vmem>>, vector<8x4xbf16>
    %c0_1 = arith.constant 0 : index
    %c0_2 = arith.constant 0 : index
    %c0_3 = arith.constant 0 : index
    %c0_4 = arith.constant 0 : index
    %1 = vector.load %arg3[%c0_1, %c0_2, %c0_3, %c0_4] : memref<1x1x4x4xbf16, #tpu.memory_space<vmem>>, vector<1x1x4x4xbf16>
    %2 = vector.shape_cast %1 : vector<1x1x4x4xbf16> to vector<4x4xbf16>
    %cst = arith.constant dense<0.000000e+00> : vector<8x4xf32>
    %3 = tpu.matmul %0, %2, %cst {dimension_numbers = #tpu.dot_dimension_numbers<[1], [0], [0], [1], [0, 0, 1, 1], [], []>} : vector<8x4xbf16>, vector<4x4xbf16>, vector<8x4xf32> -> vector<8x4xf32>
    %4 = arith.truncf %3 : vector<8x4xf32> to vector<8x4xbf16>
    %c0_5 = arith.constant 0 : index
    %c0_6 = arith.constant 0 : index
    %5 = vector.load %arg5[%c0_5, %c0_6] : memref<4x8xbf16, #tpu.memory_space<vmem>>, vector<4x8xbf16>
    %cst_7 = arith.constant dense<0.000000e+00> : vector<8x8xf32>
    %6 = tpu.matmul %4, %5, %cst_7 {dimension_numbers = #tpu.dot_dimension_numbers<[1], [0], [0], [1], [0, 0, 1, 1], [], []>} : vector<8x4xbf16>, vector<4x8xbf16>, vector<8x8xf32> -> vector<8x8xf32>
    %7 = arith.truncf %6 : vector<8x8xf32> to vector<8x8xbf16>
    %c0_8 = arith.constant 0 : index
    %c0_9 = arith.constant 0 : index
    %c0_10 = arith.constant 0 : index
    %c0_11 = arith.constant 0 : index
    %8 = vector.load %arg6[%c0_8, %c0_9, %c0_10, %c0_11] : memref<1x1x8x8xbf16, #tpu.memory_space<vmem>>, vector<1x1x8x8xbf16>
    %9 = vector.shape_cast %8 : vector<1x1x8x8xbf16> to vector<8x8xbf16>
    %10 = vector.shape_cast %7 : vector<8x8xbf16> to vector<1x1x8x8xbf16>
    tpu.vector_store %arg6[%c0_8, %c0_9, %c0_10, %c0_11], %10 {strides = array<i32>} : memref<1x1x8x8xbf16, #tpu.memory_space<vmem>>, vector<1x1x8x8xbf16>,
    return
  }
  func.func @transform_0(%arg0: i32, %arg1: i32, %arg2: i32) -> (i32, i32, i32, i32) {
    %c0_i32 = arith.constant 0 : i32
    %c0_i32_0 = arith.constant 0 : i32
    %c0_i32_1 = arith.constant 0 : i32
    return %arg0, %arg1, %c0_i32, %c0_i32_0 : i32, i32, i32, i32
  }
  func.func @transform_1(%arg0: i32, %arg1: i32, %arg2: i32) -> (i32, i32) {
    %c0_i32 = arith.constant 0 : i32
    %c0_i32_0 = arith.constant 0 : i32
    return %arg2, %c0_i32 : i32, i32
  }
  func.func @transform_2(%arg0: i32, %arg1: i32, %arg2: i32) -> (i32, i32) {
    %c0_i32 = arith.constant 0 : i32
    %c0_i32_0 = arith.constant 0 : i32
    %c0_i32_1 = arith.constant 0 : i32
    return %c0_i32, %c0_i32_0 : i32, i32
  }
  func.func @transform_3(%arg0: i32, %arg1: i32, %arg2: i32) -> (i32, i32, i32, i32) {
    %c0_i32 = arith.constant 0 : i32
    %c0_i32_0 = arith.constant 0 : i32
    return %arg0, %arg1, %arg2, %c0_i32 : i32, i32, i32, i32
  }
}

module attributes {stable_mosaic.version = 11 : i64} {
  func.func @_cm_affine_kernel(%arg0: i32, %arg1: i32, %arg2: memref<1x32x64xbf16, #tpu.memory_space<vmem>>, %arg3: memref<64x32xbf16, #tpu.memory_space<vmem>>, %arg4: memref<64x1xf32, #tpu.memory_space<vmem>>, %arg5: memref<64x1xf32, #tpu.memory_space<vmem>>, %arg6: memref<1x64x64xbf16, #tpu.memory_space<vmem>>) attributes {dimension_semantics = [#tpu.dimension_semantics<parallel>, #tpu.dimension_semantics<parallel>], iteration_bounds = array<i64: 2, 1>, scalar_prefetch = 0 : i64, scratch_operands = 0 : i64, tpu.core_type = #tpu.core_type<tc>, window_params = [{transform_indices = @transform_0, window_bounds = array<i64: 1, 32, 64>}, {pipeline_mode = #tpu.pipeline_mode<synchronous>, transform_indices = @transform_1, window_bounds = array<i64: 64, 32>}, {pipeline_mode = #tpu.pipeline_mode<synchronous>, transform_indices = @transform_2, window_bounds = array<i64: 64, 1>}, {pipeline_mode = #tpu.pipeline_mode<synchronous>, transform_indices = @transform_3, window_bounds = array<i64: 64, 1>}, {transform_indices = @transform_4, window_bounds = array<i64: 1, 64, 64>}]} {
    %c0 = arith.constant 0 : index
    %c0_0 = arith.constant 0 : index
    %0 = vector.load %arg3[%c0, %c0_0] : memref<64x32xbf16, #tpu.memory_space<vmem>>, vector<64x32xbf16>
    %c0_1 = arith.constant 0 : index
    %c0_2 = arith.constant 0 : index
    %c0_3 = arith.constant 0 : index
    %1 = vector.load %arg2[%c0_1, %c0_2, %c0_3] : memref<1x32x64xbf16, #tpu.memory_space<vmem>>, vector<1x32x64xbf16>
    %2 = vector.shape_cast %1 : vector<1x32x64xbf16> to vector<32x64xbf16>
    %cst = arith.constant dense<0.000000e+00> : vector<64x64xf32>
    %3 = tpu.matmul %0, %2, %cst {dimension_numbers = #tpu.dot_dimension_numbers<[1], [0], [0], [1], [0, 0, 1, 1], [], []>} : vector<64x32xbf16>, vector<32x64xbf16>, vector<64x64xf32> -> vector<64x64xf32>
    %c0_4 = arith.constant 0 : index
    %c0_5 = arith.constant 0 : index
    %4 = vector.load %arg4[%c0_4, %c0_5] : memref<64x1xf32, #tpu.memory_space<vmem>>, vector<64x1xf32>
    %5 = vector.broadcast %4 : vector<64x1xf32> to vector<64x64xf32>
    %6 = arith.mulf %3, %5 : vector<64x64xf32>
    %c0_6 = arith.constant 0 : index
    %c0_7 = arith.constant 0 : index
    %7 = vector.load %arg5[%c0_6, %c0_7] : memref<64x1xf32, #tpu.memory_space<vmem>>, vector<64x1xf32>
    %8 = vector.broadcast %7 : vector<64x1xf32> to vector<64x64xf32>
    %9 = arith.addf %6, %8 : vector<64x64xf32>
    %10 = arith.truncf %9 : vector<64x64xf32> to vector<64x64xbf16>
    %c0_8 = arith.constant 0 : index
    %c0_9 = arith.constant 0 : index
    %c0_10 = arith.constant 0 : index
    %11 = vector.load %arg6[%c0_8, %c0_9, %c0_10] : memref<1x64x64xbf16, #tpu.memory_space<vmem>>, vector<1x64x64xbf16>
    %12 = vector.shape_cast %11 : vector<1x64x64xbf16> to vector<64x64xbf16>
    %13 = vector.shape_cast %10 : vector<64x64xbf16> to vector<1x64x64xbf16>
    tpu.vector_store %arg6[%c0_8, %c0_9, %c0_10], %13 {strides = array<i32>} : memref<1x64x64xbf16, #tpu.memory_space<vmem>>, vector<1x64x64xbf16>,
    return
  }
  func.func @transform_0(%arg0: i32, %arg1: i32) -> (i32, i32, i32) {
    %c0_i32 = arith.constant 0 : i32
    %c0_i32_0 = arith.constant 0 : i32
    return %arg0, %c0_i32, %arg1 : i32, i32, i32
  }
  func.func @transform_1(%arg0: i32, %arg1: i32) -> (i32, i32) {
    %c0_i32 = arith.constant 0 : i32
    %c0_i32_0 = arith.constant 0 : i32
    %c0_i32_1 = arith.constant 0 : i32
    return %c0_i32, %c0_i32_0 : i32, i32
  }
  func.func @transform_2(%arg0: i32, %arg1: i32) -> (i32, i32) {
    %c0_i32 = arith.constant 0 : i32
    %c0_i32_0 = arith.constant 0 : i32
    %c0_i32_1 = arith.constant 0 : i32
    return %c0_i32, %c0_i32_0 : i32, i32
  }
  func.func @transform_3(%arg0: i32, %arg1: i32) -> (i32, i32) {
    %c0_i32 = arith.constant 0 : i32
    %c0_i32_0 = arith.constant 0 : i32
    %c0_i32_1 = arith.constant 0 : i32
    return %c0_i32, %c0_i32_0 : i32, i32
  }
  func.func @transform_4(%arg0: i32, %arg1: i32) -> (i32, i32, i32) {
    %c0_i32 = arith.constant 0 : i32
    %c0_i32_0 = arith.constant 0 : i32
    return %arg0, %c0_i32, %arg1 : i32, i32, i32
  }
}

module attributes {stable_mosaic.version = 11 : i64} {
  func.func @_resize_cm_kernel(%arg0: i32, %arg1: i32, %arg2: i32, %arg3: memref<1x1x8x8xf32, #tpu.memory_space<vmem>>, %arg4: memref<32x8xf32, #tpu.memory_space<vmem>>, %arg5: memref<8x32xf32, #tpu.memory_space<vmem>>, %arg6: memref<1x1x32x32xf32, #tpu.memory_space<vmem>>) attributes {dimension_semantics = [#tpu.dimension_semantics<parallel>, #tpu.dimension_semantics<parallel>, #tpu.dimension_semantics<parallel>], iteration_bounds = array<i64: 2, 8, 1>, scalar_prefetch = 0 : i64, scratch_operands = 0 : i64, tpu.core_type = #tpu.core_type<tc>, window_params = [{transform_indices = @transform_0, window_bounds = array<i64: 1, 1, 8, 8>}, {transform_indices = @transform_1, window_bounds = array<i64: 32, 8>}, {pipeline_mode = #tpu.pipeline_mode<synchronous>, transform_indices = @transform_2, window_bounds = array<i64: 8, 32>}, {transform_indices = @transform_3, window_bounds = array<i64: 1, 1, 32, 32>}]} {
    %c0 = arith.constant 0 : index
    %c0_0 = arith.constant 0 : index
    %0 = vector.load %arg4[%c0, %c0_0] : memref<32x8xf32, #tpu.memory_space<vmem>>, vector<32x8xf32>
    %c0_1 = arith.constant 0 : index
    %c0_2 = arith.constant 0 : index
    %c0_3 = arith.constant 0 : index
    %c0_4 = arith.constant 0 : index
    %1 = vector.load %arg3[%c0_1, %c0_2, %c0_3, %c0_4] : memref<1x1x8x8xf32, #tpu.memory_space<vmem>>, vector<1x1x8x8xf32>
    %2 = vector.shape_cast %1 : vector<1x1x8x8xf32> to vector<8x8xf32>
    %cst = arith.constant dense<0.000000e+00> : vector<32x8xf32>
    %3 = tpu.matmul %0, %2, %cst {dimension_numbers = #tpu.dot_dimension_numbers<[1], [0], [0], [1], [0, 0, 1, 1], [], []>} : vector<32x8xf32>, vector<8x8xf32>, vector<32x8xf32> -> vector<32x8xf32>
    %c0_5 = arith.constant 0 : index
    %c0_6 = arith.constant 0 : index
    %4 = vector.load %arg5[%c0_5, %c0_6] : memref<8x32xf32, #tpu.memory_space<vmem>>, vector<8x32xf32>
    %cst_7 = arith.constant dense<0.000000e+00> : vector<32x32xf32>
    %5 = tpu.matmul %3, %4, %cst_7 {dimension_numbers = #tpu.dot_dimension_numbers<[1], [0], [0], [1], [0, 0, 1, 1], [], []>} : vector<32x8xf32>, vector<8x32xf32>, vector<32x32xf32> -> vector<32x32xf32>
    %c0_8 = arith.constant 0 : index
    %c0_9 = arith.constant 0 : index
    %c0_10 = arith.constant 0 : index
    %c0_11 = arith.constant 0 : index
    %6 = vector.load %arg6[%c0_8, %c0_9, %c0_10, %c0_11] : memref<1x1x32x32xf32, #tpu.memory_space<vmem>>, vector<1x1x32x32xf32>
    %7 = vector.shape_cast %6 : vector<1x1x32x32xf32> to vector<32x32xf32>
    %8 = vector.shape_cast %5 : vector<32x32xf32> to vector<1x1x32x32xf32>
    tpu.vector_store %arg6[%c0_8, %c0_9, %c0_10, %c0_11], %8 {strides = array<i32>} : memref<1x1x32x32xf32, #tpu.memory_space<vmem>>, vector<1x1x32x32xf32>,
    return
  }
  func.func @transform_0(%arg0: i32, %arg1: i32, %arg2: i32) -> (i32, i32, i32, i32) {
    %c0_i32 = arith.constant 0 : i32
    %c0_i32_0 = arith.constant 0 : i32
    %c0_i32_1 = arith.constant 0 : i32
    return %arg0, %arg1, %c0_i32, %c0_i32_0 : i32, i32, i32, i32
  }
  func.func @transform_1(%arg0: i32, %arg1: i32, %arg2: i32) -> (i32, i32) {
    %c0_i32 = arith.constant 0 : i32
    %c0_i32_0 = arith.constant 0 : i32
    return %arg2, %c0_i32 : i32, i32
  }
  func.func @transform_2(%arg0: i32, %arg1: i32, %arg2: i32) -> (i32, i32) {
    %c0_i32 = arith.constant 0 : i32
    %c0_i32_0 = arith.constant 0 : i32
    %c0_i32_1 = arith.constant 0 : i32
    return %c0_i32, %c0_i32_0 : i32, i32
  }
  func.func @transform_3(%arg0: i32, %arg1: i32, %arg2: i32) -> (i32, i32, i32, i32) {
    %c0_i32 = arith.constant 0 : i32
    %c0_i32_0 = arith.constant 0 : i32
    return %arg0, %arg1, %arg2, %c0_i32 : i32, i32, i32, i32
  }
}

module attributes {stable_mosaic.version = 11 : i64} {
  func.func @_decoder_tail_kernel(%arg0: i32, %arg1: i32, %arg2: memref<1x64x64xbf16, #tpu.memory_space<vmem>>, %arg3: memref<1x64x64xbf16, #tpu.memory_space<vmem>>, %arg4: memref<1x64x64xbf16, #tpu.memory_space<vmem>>, %arg5: memref<1x64x64xbf16, #tpu.memory_space<vmem>>, %arg6: memref<4x64x64xbf16, #tpu.memory_space<vmem>>, %arg7: memref<64x1xf32, #tpu.memory_space<vmem>>, %arg8: memref<64x1xf32, #tpu.memory_space<vmem>>, %arg9: memref<8x64xf32, #tpu.memory_space<vmem>>, %arg10: memref<8x1xf32, #tpu.memory_space<vmem>>, %arg11: memref<1x8x64xf32, #tpu.memory_space<vmem>>) attributes {dimension_semantics = [#tpu.dimension_semantics<parallel>, #tpu.dimension_semantics<parallel>], iteration_bounds = array<i64: 2, 1>, scalar_prefetch = 0 : i64, scratch_operands = 0 : i64, tpu.core_type = #tpu.core_type<tc>, window_params = [{transform_indices = @transform_0, window_bounds = array<i64: 1, 64, 64>}, {transform_indices = @transform_1, window_bounds = array<i64: 1, 64, 64>}, {transform_indices = @transform_2, window_bounds = array<i64: 1, 64, 64>}, {transform_indices = @transform_3, window_bounds = array<i64: 1, 64, 64>}, {pipeline_mode = #tpu.pipeline_mode<synchronous>, transform_indices = @transform_4, window_bounds = array<i64: 4, 64, 64>}, {pipeline_mode = #tpu.pipeline_mode<synchronous>, transform_indices = @transform_5, window_bounds = array<i64: 64, 1>}, {pipeline_mode = #tpu.pipeline_mode<synchronous>, transform_indices = @transform_6, window_bounds = array<i64: 64, 1>}, {pipeline_mode = #tpu.pipeline_mode<synchronous>, transform_indices = @transform_7, window_bounds = array<i64: 8, 64>}, {pipeline_mode = #tpu.pipeline_mode<synchronous>, transform_indices = @transform_8, window_bounds = array<i64: 8, 1>}, {transform_indices = @transform_9, window_bounds = array<i64: 1, 8, 64>}]} {
    %c0 = arith.constant 0 : index
    %c0_0 = arith.constant 0 : index
    %c0_1 = arith.constant 0 : index
    %0 = vector.load %arg6[%c0, %c0_0, %c0_1] : memref<4x64x64xbf16, #tpu.memory_space<vmem>>, vector<1x64x64xbf16>
    %1 = vector.shape_cast %0 : vector<1x64x64xbf16> to vector<64x64xbf16>
    %c0_2 = arith.constant 0 : index
    %c0_3 = arith.constant 0 : index
    %c0_4 = arith.constant 0 : index
    %2 = vector.load %arg2[%c0_2, %c0_3, %c0_4] : memref<1x64x64xbf16, #tpu.memory_space<vmem>>, vector<1x64x64xbf16>
    %3 = vector.shape_cast %2 : vector<1x64x64xbf16> to vector<64x64xbf16>
    %cst = arith.constant dense<0.000000e+00> : vector<64x64xf32>
    %4 = tpu.matmul %1, %3, %cst {dimension_numbers = #tpu.dot_dimension_numbers<[1], [0], [0], [1], [0, 0, 1, 1], [], []>} : vector<64x64xbf16>, vector<64x64xbf16>, vector<64x64xf32> -> vector<64x64xf32>
    %c1 = arith.constant 1 : index
    %c0_5 = arith.constant 0 : index
    %c0_6 = arith.constant 0 : index
    %5 = vector.load %arg6[%c1, %c0_5, %c0_6] : memref<4x64x64xbf16, #tpu.memory_space<vmem>>, vector<1x64x64xbf16>
    %6 = vector.shape_cast %5 : vector<1x64x64xbf16> to vector<64x64xbf16>
    %c0_7 = arith.constant 0 : index
    %c0_8 = arith.constant 0 : index
    %c0_9 = arith.constant 0 : index
    %7 = vector.load %arg3[%c0_7, %c0_8, %c0_9] : memref<1x64x64xbf16, #tpu.memory_space<vmem>>, vector<1x64x64xbf16>
    %8 = vector.shape_cast %7 : vector<1x64x64xbf16> to vector<64x64xbf16>
    %cst_10 = arith.constant dense<0.000000e+00> : vector<64x64xf32>
    %9 = tpu.matmul %6, %8, %cst_10 {dimension_numbers = #tpu.dot_dimension_numbers<[1], [0], [0], [1], [0, 0, 1, 1], [], []>} : vector<64x64xbf16>, vector<64x64xbf16>, vector<64x64xf32> -> vector<64x64xf32>
    %10 = arith.addf %4, %9 : vector<64x64xf32>
    %c2 = arith.constant 2 : index
    %c0_11 = arith.constant 0 : index
    %c0_12 = arith.constant 0 : index
    %11 = vector.load %arg6[%c2, %c0_11, %c0_12] : memref<4x64x64xbf16, #tpu.memory_space<vmem>>, vector<1x64x64xbf16>
    %12 = vector.shape_cast %11 : vector<1x64x64xbf16> to vector<64x64xbf16>
    %c0_13 = arith.constant 0 : index
    %c0_14 = arith.constant 0 : index
    %c0_15 = arith.constant 0 : index
    %13 = vector.load %arg4[%c0_13, %c0_14, %c0_15] : memref<1x64x64xbf16, #tpu.memory_space<vmem>>, vector<1x64x64xbf16>
    %14 = vector.shape_cast %13 : vector<1x64x64xbf16> to vector<64x64xbf16>
    %cst_16 = arith.constant dense<0.000000e+00> : vector<64x64xf32>
    %15 = tpu.matmul %12, %14, %cst_16 {dimension_numbers = #tpu.dot_dimension_numbers<[1], [0], [0], [1], [0, 0, 1, 1], [], []>} : vector<64x64xbf16>, vector<64x64xbf16>, vector<64x64xf32> -> vector<64x64xf32>
    %16 = arith.addf %10, %15 : vector<64x64xf32>
    %c3 = arith.constant 3 : index
    %c0_17 = arith.constant 0 : index
    %c0_18 = arith.constant 0 : index
    %17 = vector.load %arg6[%c3, %c0_17, %c0_18] : memref<4x64x64xbf16, #tpu.memory_space<vmem>>, vector<1x64x64xbf16>
    %18 = vector.shape_cast %17 : vector<1x64x64xbf16> to vector<64x64xbf16>
    %c0_19 = arith.constant 0 : index
    %c0_20 = arith.constant 0 : index
    %c0_21 = arith.constant 0 : index
    %19 = vector.load %arg5[%c0_19, %c0_20, %c0_21] : memref<1x64x64xbf16, #tpu.memory_space<vmem>>, vector<1x64x64xbf16>
    %20 = vector.shape_cast %19 : vector<1x64x64xbf16> to vector<64x64xbf16>
    %cst_22 = arith.constant dense<0.000000e+00> : vector<64x64xf32>
    %21 = tpu.matmul %18, %20, %cst_22 {dimension_numbers = #tpu.dot_dimension_numbers<[1], [0], [0], [1], [0, 0, 1, 1], [], []>} : vector<64x64xbf16>, vector<64x64xbf16>, vector<64x64xf32> -> vector<64x64xf32>
    %22 = arith.addf %16, %21 : vector<64x64xf32>
    %c0_23 = arith.constant 0 : index
    %c0_24 = arith.constant 0 : index
    %23 = vector.load %arg7[%c0_23, %c0_24] : memref<64x1xf32, #tpu.memory_space<vmem>>, vector<64x1xf32>
    %24 = vector.broadcast %23 : vector<64x1xf32> to vector<64x64xf32>
    %25 = arith.mulf %22, %24 : vector<64x64xf32>
    %c0_25 = arith.constant 0 : index
    %c0_26 = arith.constant 0 : index
    %26 = vector.load %arg8[%c0_25, %c0_26] : memref<64x1xf32, #tpu.memory_space<vmem>>, vector<64x1xf32>
    %27 = vector.broadcast %26 : vector<64x1xf32> to vector<64x64xf32>
    %28 = arith.addf %25, %27 : vector<64x64xf32>
    %cst_27 = arith.constant 0.000000e+00 : f32
    %29 = vector.broadcast %cst_27 : f32 to vector<64x64xf32>
    %30 = arith.maximumf %28, %29 : vector<64x64xf32>
    %c0_28 = arith.constant 0 : index
    %c0_29 = arith.constant 0 : index
    %31 = vector.load %arg9[%c0_28, %c0_29] : memref<8x64xf32, #tpu.memory_space<vmem>>, vector<8x64xf32>
    %cst_30 = arith.constant dense<0.000000e+00> : vector<8x64xf32>
    %32 = tpu.matmul %31, %30, %cst_30 {dimension_numbers = #tpu.dot_dimension_numbers<[1], [0], [0], [1], [0, 0, 1, 1], [], []>} : vector<8x64xf32>, vector<64x64xf32>, vector<8x64xf32> -> vector<8x64xf32>
    %c0_31 = arith.constant 0 : index
    %c0_32 = arith.constant 0 : index
    %33 = vector.load %arg10[%c0_31, %c0_32] : memref<8x1xf32, #tpu.memory_space<vmem>>, vector<8x1xf32>
    %34 = vector.broadcast %33 : vector<8x1xf32> to vector<8x64xf32>
    %35 = arith.addf %32, %34 : vector<8x64xf32>
    %c0_33 = arith.constant 0 : index
    %c0_34 = arith.constant 0 : index
    %c0_35 = arith.constant 0 : index
    %36 = vector.load %arg11[%c0_33, %c0_34, %c0_35] : memref<1x8x64xf32, #tpu.memory_space<vmem>>, vector<1x8x64xf32>
    %37 = vector.shape_cast %36 : vector<1x8x64xf32> to vector<8x64xf32>
    %38 = vector.shape_cast %35 : vector<8x64xf32> to vector<1x8x64xf32>
    tpu.vector_store %arg11[%c0_33, %c0_34, %c0_35], %38 {strides = array<i32>} : memref<1x8x64xf32, #tpu.memory_space<vmem>>, vector<1x8x64xf32>,
    return
  }
  func.func @transform_0(%arg0: i32, %arg1: i32) -> (i32, i32, i32) {
    %c0_i32 = arith.constant 0 : i32
    %c0_i32_0 = arith.constant 0 : i32
    return %arg0, %c0_i32, %arg1 : i32, i32, i32
  }
  func.func @transform_1(%arg0: i32, %arg1: i32) -> (i32, i32, i32) {
    %c0_i32 = arith.constant 0 : i32
    %c0_i32_0 = arith.constant 0 : i32
    return %arg0, %c0_i32, %arg1 : i32, i32, i32
  }
  func.func @transform_2(%arg0: i32, %arg1: i32) -> (i32, i32, i32) {
    %c0_i32 = arith.constant 0 : i32
    %c0_i32_0 = arith.constant 0 : i32
    return %arg0, %c0_i32, %arg1 : i32, i32, i32
  }
  func.func @transform_3(%arg0: i32, %arg1: i32) -> (i32, i32, i32) {
    %c0_i32 = arith.constant 0 : i32
    %c0_i32_0 = arith.constant 0 : i32
    return %arg0, %c0_i32, %arg1 : i32, i32, i32
  }
  func.func @transform_4(%arg0: i32, %arg1: i32) -> (i32, i32, i32) {
    %c0_i32 = arith.constant 0 : i32
    %c0_i32_0 = arith.constant 0 : i32
    %c0_i32_1 = arith.constant 0 : i32
    %c0_i32_2 = arith.constant 0 : i32
    return %c0_i32, %c0_i32_0, %c0_i32_1 : i32, i32, i32
  }
  func.func @transform_5(%arg0: i32, %arg1: i32) -> (i32, i32) {
    %c0_i32 = arith.constant 0 : i32
    %c0_i32_0 = arith.constant 0 : i32
    %c0_i32_1 = arith.constant 0 : i32
    return %c0_i32, %c0_i32_0 : i32, i32
  }
  func.func @transform_6(%arg0: i32, %arg1: i32) -> (i32, i32) {
    %c0_i32 = arith.constant 0 : i32
    %c0_i32_0 = arith.constant 0 : i32
    %c0_i32_1 = arith.constant 0 : i32
    return %c0_i32, %c0_i32_0 : i32, i32
  }
  func.func @transform_7(%arg0: i32, %arg1: i32) -> (i32, i32) {
    %c0_i32 = arith.constant 0 : i32
    %c0_i32_0 = arith.constant 0 : i32
    %c0_i32_1 = arith.constant 0 : i32
    return %c0_i32, %c0_i32_0 : i32, i32
  }
  func.func @transform_8(%arg0: i32, %arg1: i32) -> (i32, i32) {
    %c0_i32 = arith.constant 0 : i32
    %c0_i32_0 = arith.constant 0 : i32
    %c0_i32_1 = arith.constant 0 : i32
    return %c0_i32, %c0_i32_0 : i32, i32
  }
  func.func @transform_9(%arg0: i32, %arg1: i32) -> (i32, i32, i32) {
    %c0_i32 = arith.constant 0 : i32
    %c0_i32_0 = arith.constant 0 : i32
    return %arg0, %c0_i32, %arg1 : i32, i32, i32
  }
}

</mosaic_0001>

<llo_original>
// kernel: forward.12
$region0: #{forward.12}
  #allocation0 [shape = 'u32[]', space=smem, size = 0x4, offset = 0x4, fixed_abs, tag = 'smem constant byte address 0x4 - core index']
  #allocation1 [shape = 'u32[144,128]{1,0:T(1,128)}', space=vmem, size = 0x12000, scoped, tag = 'internal scratch']
  %s0 = inlined_call_operand.vmem [shape: bf16[16,4,8,24], index: 0, kind: input, shape index: {}]
  %s1 = inlined_call_operand.vmem [shape: bf16[4,24,32], index: 1, kind: input, shape index: {}]
  %s2 = inlined_call_operand.vmem [shape: f32[1,32], index: 2, kind: input, shape index: {}]
  %s3 = inlined_call_operand.vmem [shape: f32[1,32], index: 3, kind: input, shape index: {}]
  %s4 = inlined_call_operand.vmem [shape: bf16[128,32], index: 4, kind: output, shape index: {}]
  %s5 = sld [smem:[#allocation0]]
  $region49: #{forward.12} parent=0
    _
  %s7 = ssub.s32 1, %s5
  %s8 = scalar_select 0, %s7, %s5
  loop: start=0, step=1, limit=10
  $region2: #{forward.12} parent=0 // loop_pre_header
    _
  $region3: #{forward.12} parent=0 // loop_header
    %s10 = sphi 0, %s14
    %p11 = scmp.ge.s32.totalorder %s10, 10
    %s20 = sphi 0, %s22
    %s23 = sphi 0, %s20
    %s24 = sphi 0, %s23
    %s40 = sphi 0, %s24
    %s44 = sphi 0, %s44
    %s46 = sphi 0, %s44
    %s47 = sphi 0, %s46
    %s61 = sphi 0, %s47
    %s65 = sphi 0, %s65
    %s67 = sphi 0, %s65
    %s68 = sphi 0, %s67
    %s82 = sphi 0, %s68
    %s86 = sphi 0, %s86
    %s88 = sphi 0, %s86
    %s89 = sphi 0, %s88
    %s103 = sphi 0, %s89
    %s109 = sphi 0, %s111
    %s112 = sphi 0, %s109
    %s113 = sphi 0, %s112
    %s129 = sphi 0, %s113
  $region4: #{forward.12} parent=0 // loop_header_branch
    %13 = sbr.rel (%p11) target = $region8
  $region5: #{forward.12} parent=0 // loop_body
    %s15 = ssub.s32 %s10, 1
    %s16 = ssub.s32 %s10, 2
    %s17 = sadd.s32 %s10, 1
    %s18 = ssub.s32 %s10, %s17
    %p19 = scmp.eq.s32.totalorder %s18, 0
    %s21 = sadd.s32 %s20, 1
    %s22 = scalar_select %p19, %s20, %s21
    %p25 = pneg %p19
    %p26 = scmp.eq.s32.totalorder %s10, 7
    %p27 = por %p25, %p26
    %p28 = scmp.ne.s32.totalorder %s20, %s23
    %p29 = scmp.eq.s32.totalorder %s10, 0
    %p30 = por %p28, %p29
    %p31 = scmp.ne.s32.totalorder %s20, %s23
    %p32 = scmp.eq.s32.totalorder %s15, 7
    %p33 = por %p31, %p32
    %p34 = scmp.ne.s32.totalorder %s23, %s24
    %p35 = scmp.eq.s32.totalorder %s15, 0
    %p36 = por %p34, %p35
    %p37 = scmp.ne.s32.totalorder %s23, %s24
    %p38 = scmp.eq.s32.totalorder %s16, 7
    %p39 = por %p37, %p38
    %p41 = scmp.ne.s32.totalorder %s24, %s40
    %p42 = scmp.eq.s32.totalorder %s16, 0
    %p43 = por %p41, %p42
    %s45 = sadd.s32 %s44, 1
    %p48 = scmp.eq.s32.totalorder %s10, 7
    %p49 = scmp.ne.s32.totalorder %s44, %s46
    %p50 = scmp.eq.s32.totalorder %s10, 0
    %p51 = por %p49, %p50
    %p52 = scmp.ne.s32.totalorder %s44, %s46
    %p53 = scmp.eq.s32.totalorder %s15, 7
    %p54 = por %p52, %p53
    %p55 = scmp.ne.s32.totalorder %s46, %s47
    %p56 = scmp.eq.s32.totalorder %s15, 0
    %p57 = por %p55, %p56
    %p58 = scmp.ne.s32.totalorder %s46, %s47
    %p59 = scmp.eq.s32.totalorder %s16, 7
    %p60 = por %p58, %p59
    %p62 = scmp.ne.s32.totalorder %s47, %s61
    %p63 = scmp.eq.s32.totalorder %s16, 0
    %p64 = por %p62, %p63
    %s66 = sadd.s32 %s65, 1
    %p69 = scmp.eq.s32.totalorder %s10, 7
    %p70 = scmp.ne.s32.totalorder %s65, %s67
    %p71 = scmp.eq.s32.totalorder %s10, 0
    %p72 = por %p70, %p71
    %p73 = scmp.ne.s32.totalorder %s65, %s67
    %p74 = scmp.eq.s32.totalorder %s15, 7
    %p75 = por %p73, %p74
    %p76 = scmp.ne.s32.totalorder %s67, %s68
    %p77 = scmp.eq.s32.totalorder %s15, 0
    %p78 = por %p76, %p77
    %p79 = scmp.ne.s32.totalorder %s67, %s68
    %p80 = scmp.eq.s32.totalorder %s16, 7
    %p81 = por %p79, %p80
    %p83 = scmp.ne.s32.totalorder %s68, %s82
    %p84 = scmp.eq.s32.totalorder %s16, 0
    %p85 = por %p83, %p84
    %s87 = sadd.s32 %s86, 1
    %p90 = scmp.eq.s32.totalorder %s10, 7
    %p91 = scmp.ne.s32.totalorder %s86, %s88
    %p92 = scmp.eq.s32.totalorder %s10, 0
    %p93 = por %p91, %p92
    %p94 = scmp.ne.s32.totalorder %s86, %s88
    %p95 = scmp.eq.s32.totalorder %s15, 7
    %p96 = por %p94, %p95
    %p97 = scmp.ne.s32.totalorder %s88, %s89
    %p98 = scmp.eq.s32.totalorder %s15, 0
    %p99 = por %p97, %p98
    %p100 = scmp.ne.s32.totalorder %s88, %s89
    %p101 = scmp.eq.s32.totalorder %s16, 7
    %p102 = por %p100, %p101
    %p104 = scmp.ne.s32.totalorder %s89, %s103
    %p105 = scmp.eq.s32.totalorder %s16, 0
    %p106 = por %p104, %p105
    %s107 = ssub.s32 %s10, %s17
    %p108 = scmp.eq.s32.totalorder %s107, 0
    %s110 = sadd.s32 %s109, 1
    %s111 = scalar_select %p108, %s109, %s110
    %p114 = pneg %p108
    %p115 = scmp.eq.s32.totalorder %s10, 7
    %p116 = por %p114, %p115
    %p117 = scmp.ne.s32.totalorder %s109, %s112
    %p118 = scmp.eq.s32.totalorder %s10, 0
    %p119 = por %p117, %p118
    %p120 = scmp.ne.s32.totalorder %s109, %s112
    %p121 = scmp.eq.s32.totalorder %s15, 7
    %p122 = por %p120, %p121
    %p123 = scmp.ne.s32.totalorder %s112, %s113
    %p124 = scmp.eq.s32.totalorder %s15, 0
    %p125 = por %p123, %p124
    %p126 = scmp.ne.s32.totalorder %s112, %s113
    %p127 = scmp.eq.s32.totalorder %s16, 7
    %p128 = por %p126, %p127
    %p130 = scmp.ne.s32.totalorder %s113, %s129
    %p131 = scmp.eq.s32.totalorder %s16, 0
    %p132 = por %p130, %p131
    %p133 = scmp.le.s32.totalorder 1, %s10
    %p134 = scmp.lt.s32.totalorder %s10, 9
    %p135 = pnand %p133, %p134
    %p136 = pneg %p135
    // Predicated region
    $region9: #{forward.12} parent=5 // pred_check
      _
    $region10: #{forward.12} parent=5 // pred_check_branch
      %138 = sbr.rel (%p135) target = $region12
    $region11: #{forward.12} parent=5 // pred_region
      %s139 = ssub.s32 %s10, 1
      // Predicated region
      $region13: #{forward.12} parent=11 // pred_check
        %p140 = pneg %p57
      $region14: #{forward.12} parent=11 // pred_check_branch
        %142 = sbr.rel (%p140) target = $region16
      $region15: #{forward.12} parent=11 // pred_region
        _
      $region16: #{forward.12} parent=11 // pred_fallthru
        _
      // Predicated region
      $region17: #{forward.12} parent=11 // pred_check
        %p143 = pneg %p78
      $region18: #{forward.12} parent=11 // pred_check_branch
        %145 = sbr.rel (%p143) target = $region20
      $region19: #{forward.12} parent=11 // pred_region
        _
      $region20: #{forward.12} parent=11 // pred_fallthru
        _
      // Predicated region
      $region21: #{forward.12} parent=11 // pred_check
        %p146 = pneg %p99
      $region22: #{forward.12} parent=11 // pred_check_branch
        %148 = sbr.rel (%p146) target = $region24
      $region23: #{forward.12} parent=11 // pred_region
        _
      $region24: #{forward.12} parent=11 // pred_fallthru
        _
    $region12: #{forward.12} parent=5 // pred_fallthru
      _
    %p149 = scmp.lt.s32.totalorder %s10, 8
    // Predicated region
    $region25: #{forward.12} parent=5 // pred_check
      %p150 = pneg %p149
    $region26: #{forward.12} parent=5 // pred_check_branch
      %152 = sbr.rel (%p150) target = $region28
    $region27: #{forward.12} parent=5 // pred_region
      // Predicated region
      $region29: #{forward.12} parent=27 // pred_check
        %p153 = pneg %p30
      $region30: #{forward.12} parent=27 // pred_check_branch
        %155 = sbr.rel (%p153) target = $region32
      $region31: #{forward.12} parent=27 // pred_region
        %s156 = smul.u32 2, %s10
        %p157 = scmp.lt.s32.totalorder %s156, 15
        %s158 = scalar_select %p157, %s156, 15
        %s159 = smul.addr %s158, 4
        %s160 = smul.addr %s159, 4
        %s161 = scalar_lea.vmem %s0, %s160
        %s162 = smul.u32 2, %s10
      $region32: #{forward.12} parent=27 // pred_fallthru
        _
    $region28: #{forward.12} parent=5 // pred_fallthru
      _
    %p163 = scmp.le.s32.totalorder 1, %s10
    %p164 = scmp.lt.s32.totalorder %s10, 9
    %p165 = pnand %p163, %p164
    %p166 = pneg %p165
    // Predicated region
    $region33: #{forward.12} parent=5 // pred_check
      _
    $region34: #{forward.12} parent=5 // pred_check_branch
      %168 = sbr.rel (%p165) target = $region36
    $region35: #{forward.12} parent=5 // pred_region
      %s169 = ssub.s32 %s10, 1
      %s170 = smul.u32 2, %s15
      %p171 = scmp.lt.s32.totalorder %s170, 15
      %s172 = scalar_select %p171, %s170, 15
      %s173 = smul.addr %s172, 4
      %s174 = smul.addr %s173, 4
      %s175 = scalar_lea.vmem %s0, %s174
      %p176 = pneg %p36
      %p177 = pneg %p33
      %p178 = pneg %p57
      %p179 = pneg %p54
      %p180 = pneg %p78
      %p181 = pneg %p75
      %p182 = pneg %p99
      %p183 = pneg %p96
      %p184 = pneg %p125
      %p185 = pneg %p122
      %s186 = smul.u32 2, %s15
      %p187 = scmp.lt.s32.totalorder %s186, 15
      %s188 = scalar_select %p187, %s186, 15
      %s189 = smul.addr %s188, 4
      %s190 = scalar_lea.vmem %s4, %s189
      %s191 = smul.u32 2, %s15
      %p192 = scmp.lt.s32.totalorder %s191, 15
      %s193 = scalar_select %p192, %s191, 15
      %s194 = smul.addr %s193, 4
      %s195 = smul.addr %s194, 4
      %s196 = scalar_lea.vmem %s0, %s195
      %s197 = smul.u32 2, %s15
      %s198 = smul.u32 2, %s15
      %p199 = scmp.lt.s32.totalorder %s198, 15
      %s200 = scalar_select %p199, %s198, 15
      %s201 = smul.addr %s200, 4
      %s202 = scalar_lea.vmem %s4, %s201
      %s203 = smul.u32 2, %s15
      %v205 = vld [vmem:[%s196] sm:$0xf]
      %v206 = vld [vmem:[%s196 + $0x4] sm:$0xf]
      %v207 = vld [vmem:[%s196 + $0x8] sm:$0xf]
      %v208 = vld [vmem:[%s196 + $0xc] sm:$0xf]
      %v209 = vld [vmem:[%s196 + $0x10] sm:$0xf]
      %v210 = vld [vmem:[%s196 + $0x14] sm:$0xf]
      %v211 = vld [vmem:[%s196 + $0x18] sm:$0xf]
      %v212 = vld [vmem:[%s196 + $0x1c] sm:$0xf]
      %v213 = vld [vmem:[%s1] sm:$0xf]
      %v214 = vld [vmem:[%s1 + $0x4] sm:$0xf]
      %v215 = vld [vmem:[%s1 + $0x8] sm:$0xf]
      %s216 = scalar_lea.vmem %s1, 12
      %v217 = vld [vmem:[%s216] sm:$0xf]
      %v218 = vld [vmem:[%s216 + $0x4] sm:$0xf]
      %v219 = vld [vmem:[%s216 + $0x8] sm:$0xf]
      %v222 = vunpack.c.l.b16 %v206
      %v223 = vunpack.c.l.b16 %v210
      %v224 = vpack.c.b16 %v223, %v222
      %v228 = vunpack.c.l.b16 %v217
      %v229 = vunpack.c.l.b16 %v218
      %v230 = vunpack.c.l.b16 %v219
      %v231 = vpack.c.b16 %v229, %v228
      %v232 = vpack.c.b16 %v230, %v230
      %vm234 = vcmask 195584
      %v236 = vsel %vm234, %v224, 0
      %vm238 = vcmask 1043456
      %v240 = vsel %vm238, %v232, 0
      %242 = vmatprep.subr.bf16.mxu0 0
      %243 = vmatpush1.bf16.msra.mxu0 0
      %244 = vmatprep.subr.bf16.mxu0 0
      %245 = vmatpush1.bf16.msra.mxu0 0
      %246 = vmatprep.subr.bf16.mxu0 0
      %247 = vmatpush1.bf16.msra.mxu0 0
      %248 = vmatprep.subr.bf16.mxu0 0
      %249 = vmatpush1.bf16.msra.mxu0 0
      %250 = vmatprep.subr.bf16.mxu0 0
      %251 = vmatpush1.bf16.msra.mxu0 0
      %252 = vmatprep.subr.bf16.mxu0 0
      %253 = vmatpush1.bf16.msra.mxu0 0
      %254 = vmatprep.subr.bf16.mxu0 0
      %255 = vmatpush1.bf16.msra.mxu0 %v240
      %256 = vmatprep.subr.bf16.mxu0 0
      %257 = vmatpush1.bf16.msra.mxu0 %v231
      %258 = vmatprep.subr.bf16.mxu0 0
      %259 = vmatpush2.bf16.msra.mxu0 0
      %260 = vmatprep.subr.bf16.mxu0 0
      %261 = vmatpush2.bf16.msra.mxu0 0
      %262 = vmatprep.subr.bf16.mxu0 0
      %263 = vmatpush2.bf16.msra.mxu0 0
      %264 = vmatprep.subr.bf16.mxu0 0
      %265 = vmatpush2.bf16.msra.mxu0 0
      %266 = vmatprep.subr.bf16.mxu0 0
      %267 = vmatpush2.bf16.msra.mxu0 0
      %268 = vmatprep.subr.bf16.mxu0 0
      %269 = vmatpush2.bf16.msra.mxu0 0
      %270 = vmatprep.subr.bf16.mxu0 0
      %271 = vmatpush2.bf16.msra.mxu0 0
      %272 = vmatprep.subr.bf16.mxu0 0
      %273 = vmatpush2.bf16.msra.mxu0 0
      %274 = vmatprep.mubr.bf16.mxu0 0
      %275 = vmatmul.mubr.bf16.gmra.mxu0 %v236
      %v276 = vpop.f32.mrf.mxu0
      %v277 = vadd.f32 0.0, %v276
      %v278 = vpop.f32.mrf.mxu0
      %v279 = vpop.f32.mrf.mxu0
      %v280 = vadd.f32 0.0, %v279
      %v281 = vpop.f32.mrf.mxu0
      %282 = vdwg.mxu0
      %v285 = vunpack.c.l.b16 %v205
      %v286 = vunpack.c.l.b16 %v209
      %v287 = vpack.c.b16 %v286, %v285
      %v291 = vunpack.c.l.b16 %v213
      %v292 = vunpack.c.l.b16 %v214
      %v293 = vunpack.c.l.b16 %v215
      %v294 = vpack.c.b16 %v292, %v291
      %v295 = vpack.c.b16 %v293, %v293
      %v298 = vsel %vm234, %v287, 0
      %v301 = vsel %vm238, %v295, 0
      %303 = vmatprep.subr.bf16.mxu0 0
      %304 = vmatpush1.bf16.msra.mxu0 0
      %305 = vmatprep.subr.bf16.mxu0 0
      %306 = vmatpush1.bf16.msra.mxu0 0
      %307 = vmatprep.subr.bf16.mxu0 0
      %308 = vmatpush1.bf16.msra.mxu0 0
      %309 = vmatprep.subr.bf16.mxu0 0
      %310 = vmatpush1.bf16.msra.mxu0 0
      %311 = vmatprep.subr.bf16.mxu0 0
      %312 = vmatpush1.bf16.msra.mxu0 0
      %313 = vmatprep.subr.bf16.mxu0 0
      %314 = vmatpush1.bf16.msra.mxu0 0
      %315 = vmatprep.subr.bf16.mxu0 0
      %316 = vmatpush1.bf16.msra.mxu0 %v301
      %317 = vmatprep.subr.bf16.mxu0 0
      %318 = vmatpush1.bf16.msra.mxu0 %v294
      %319 = vmatprep.subr.bf16.mxu0 0
      %320 = vmatpush2.bf16.msra.mxu0 0
      %321 = vmatprep.subr.bf16.mxu0 0
      %322 = vmatpush2.bf16.msra.mxu0 0
      %323 = vmatprep.subr.bf16.mxu0 0
      %324 = vmatpush2.bf16.msra.mxu0 0
      %325 = vmatprep.subr.bf16.mxu0 0
      %326 = vmatpush2.bf16.msra.mxu0 0
      %327 = vmatprep.subr.bf16.mxu0 0
      %328 = vmatpush2.bf16.msra.mxu0 0
      %329 = vmatprep.subr.bf16.mxu0 0
      %330 = vmatpush2.bf16.msra.mxu0 0
      %331 = vmatprep.subr.bf16.mxu0 0
      %332 = vmatpush2.bf16.msra.mxu0 0
      %333 = vmatprep.subr.bf16.mxu0 0
      %334 = vmatpush2.bf16.msra.mxu0 0
      %335 = vmatprep.mubr.bf16.mxu0 0
      %336 = vmatmul.mubr.bf16.gmra.mxu0 %v298
      %v337 = vpop.f32.mrf.mxu0
      %v338 = vadd.f32 %v277, %v337
      %v339 = vpop.f32.mrf.mxu0
      %v340 = vpop.f32.mrf.mxu0
      %v341 = vadd.f32 %v280, %v340
      %v342 = vpop.f32.mrf.mxu0
      %343 = vdwg.mxu0
      %s344 = scalar_lea.vmem %s1, 24
      %v345 = vld [vmem:[%s344] sm:$0xf]
      %v346 = vld [vmem:[%s344 + $0x4] sm:$0xf]
      %v347 = vld [vmem:[%s344 + $0x8] sm:$0xf]
      %v350 = vunpack.c.l.b16 %v207
      %v351 = vunpack.c.l.b16 %v211
      %v352 = vpack.c.b16 %v351, %v350
      %v356 = vunpack.c.l.b16 %v345
      %v357 = vunpack.c.l.b16 %v346
      %v358 = vunpack.c.l.b16 %v347
      %v359 = vpack.c.b16 %v357, %v356
      %v360 = vpack.c.b16 %v358, %v358
      %v363 = vsel %vm234, %v352, 0
      %v366 = vsel %vm238, %v360, 0
      %368 = vmatprep.subr.bf16.mxu0 0
      %369 = vmatpush1.bf16.msra.mxu0 0
      %370 = vmatprep.subr.bf16.mxu0 0
      %371 = vmatpush1.bf16.msra.mxu0 0
      %372 = vmatprep.subr.bf16.mxu0 0
      %373 = vmatpush1.bf16.msra.mxu0 0
      %374 = vmatprep.subr.bf16.mxu0 0
      %375 = vmatpush1.bf16.msra.mxu0 0
      %376 = vmatprep.subr.bf16.mxu0 0
      %377 = vmatpush1.bf16.msra.mxu0 0
      %378 = vmatprep.subr.bf16.mxu0 0
      %379 = vmatpush1.bf16.msra.mxu0 0
      %380 = vmatprep.subr.bf16.mxu0 0
      %381 = vmatpush1.bf16.msra.mxu0 %v366
      %382 = vmatprep.subr.bf16.mxu0 0
      %383 = vmatpush1.bf16.msra.mxu0 %v359
      %384 = vmatprep.subr.bf16.mxu0 0
      %385 = vmatpush2.bf16.msra.mxu0 0
      %386 = vmatprep.subr.bf16.mxu0 0
      %387 = vmatpush2.bf16.msra.mxu0 0
      %388 = vmatprep.subr.bf16.mxu0 0
      %389 = vmatpush2.bf16.msra.mxu0 0
      %390 = vmatprep.subr.bf16.mxu0 0
      %391 = vmatpush2.bf16.msra.mxu0 0
      %392 = vmatprep.subr.bf16.mxu0 0
      %393 = vmatpush2.bf16.msra.mxu0 0
      %394 = vmatprep.subr.bf16.mxu0 0
      %395 = vmatpush2.bf16.msra.mxu0 0
      %396 = vmatprep.subr.bf16.mxu0 0
      %397 = vmatpush2.bf16.msra.mxu0 0
      %398 = vmatprep.subr.bf16.mxu0 0
      %399 = vmatpush2.bf16.msra.mxu0 0
      %400 = vmatprep.mubr.bf16.mxu0 0
      %401 = vmatmul.mubr.bf16.gmra.mxu0 %v363
      %v402 = vpop.f32.mrf.mxu0
      %v403 = vadd.f32 0.0, %v402
      %v404 = vpop.f32.mrf.mxu0
      %v405 = vpop.f32.mrf.mxu0
      %v406 = vadd.f32 0.0, %v405
      %v407 = vpop.f32.mrf.mxu0
      %408 = vdwg.mxu0
      %v409 = vadd.f32 %v338, %v403
      %v410 = vadd.f32 %v341, %v406
      %s411 = scalar_lea.vmem %s1, 36
      %v412 = vld [vmem:[%s411] sm:$0xf]
      %v413 = vld [vmem:[%s411 + $0x4] sm:$0xf]
      %v414 = vld [vmem:[%s411 + $0x8] sm:$0xf]
      %v417 = vunpack.c.l.b16 %v208
      %v418 = vunpack.c.l.b16 %v212
      %v419 = vpack.c.b16 %v418, %v417
      %v423 = vunpack.c.l.b16 %v412
      %v424 = vunpack.c.l.b16 %v413
      %v425 = vunpack.c.l.b16 %v414
      %v426 = vpack.c.b16 %v424, %v423
      %v427 = vpack.c.b16 %v425, %v425
      %v430 = vsel %vm234, %v419, 0
      %v433 = vsel %vm238, %v427, 0
      %435 = vmatprep.subr.bf16.mxu0 0
      %436 = vmatpush1.bf16.msra.mxu0 0
      %437 = vmatprep.subr.bf16.mxu0 0
      %438 = vmatpush1.bf16.msra.mxu0 0
      %439 = vmatprep.subr.bf16.mxu0 0
      %440 = vmatpush1.bf16.msra.mxu0 0
      %441 = vmatprep.subr.bf16.mxu0 0
      %442 = vmatpush1.bf16.msra.mxu0 0
      %443 = vmatprep.subr.bf16.mxu0 0
      %444 = vmatpush1.bf16.msra.mxu0 0
      %445 = vmatprep.subr.bf16.mxu0 0
      %446 = vmatpush1.bf16.msra.mxu0 0
      %447 = vmatprep.subr.bf16.mxu0 0
      %448 = vmatpush1.bf16.msra.mxu0 %v433
      %449 = vmatprep.subr.bf16.mxu0 0
      %450 = vmatpush1.bf16.msra.mxu0 %v426
      %451 = vmatprep.subr.bf16.mxu0 0
      %452 = vmatpush2.bf16.msra.mxu0 0
      %453 = vmatprep.subr.bf16.mxu0 0
      %454 = vmatpush2.bf16.msra.mxu0 0
      %455 = vmatprep.subr.bf16.mxu0 0
      %456 = vmatpush2.bf16.msra.mxu0 0
      %457 = vmatprep.subr.bf16.mxu0 0
      %458 = vmatpush2.bf16.msra.mxu0 0
      %459 = vmatprep.subr.bf16.mxu0 0
      %460 = vmatpush2.bf16.msra.mxu0 0
      %461 = vmatprep.subr.bf16.mxu0 0
      %462 = vmatpush2.bf16.msra.mxu0 0
      %463 = vmatprep.subr.bf16.mxu0 0
      %464 = vmatpush2.bf16.msra.mxu0 0
      %465 = vmatprep.subr.bf16.mxu0 0
      %466 = vmatpush2.bf16.msra.mxu0 0
      %467 = vmatprep.mubr.bf16.mxu0 0
      %468 = vmatmul.mubr.bf16.gmra.mxu0 %v430
      %v469 = vpop.f32.mrf.mxu0
      %v470 = vadd.f32 0.0, %v469
      %v471 = vpop.f32.mrf.mxu0
      %v472 = vpop.f32.mrf.mxu0
      %v473 = vadd.f32 0.0, %v472
      %v474 = vpop.f32.mrf.mxu0
      %475 = vdwg.mxu0
      %v476 = vadd.f32 %v409, %v470
      %v477 = vadd.f32 %v410, %v473
      %v478 = vld [vmem:[%s2] sm:$0x1]
      %v480 = vlaneseq
      %v481 = vshrl.u32 %v480, 7
      %v482 = vsub.s32 0, %v481
      %v483 = vrot.slane %v478, %v482
      %v485 = vmul.f32 %v476, %v483
      %v486 = vmul.f32 %v477, %v483
      %v487 = vld [vmem:[%s3] sm:$0x1]
      %v489 = vlaneseq
      %v490 = vshrl.u32 %v489, 7
      %v491 = vsub.s32 0, %v490
      %v492 = vrot.slane %v487, %v491
      %v494 = vadd.f32 %v485, %v492
      %v495 = vadd.f32 %v486, %v492
      %v496 = vmax.f32 %v494, 0.0
      %v497 = vmax.f32 %v495, 0.0
      %v498 = vpack.c.bf16 %v497, %v496
      %v500 = vunpack.c.l.b16 %v498
      %v501 = vunpack.c.h.b16 %v498
      %v502 = vpack.c.b16 %v500, %v500
      %v503 = vpack.c.b16 %v501, %v501
      %vm506 = vcmask 257024
      %507 = vst.msk [vmem:[%s202] sm:$0xf] %vm506, %v502
      %508 = vst.msk [vmem:[%s202 + $0x4] sm:$0xf] %vm506, %v503
      %s509 = smul.u32 2, %s15
      %p510 = scmp.lt.s32.totalorder %s509, 15
      %s511 = scalar_select %p510, %s509, 15
      %s512 = smul.addr %s511, 4
      %s513 = scalar_lea.vmem %s4, %s512
      // Predicated region
      $region37: #{forward.12} parent=35 // pred_check
        %p514 = pneg %p122
      $region38: #{forward.12} parent=35 // pred_check_branch
        %516 = sbr.rel (%p514) target = $region40
      $region39: #{forward.12} parent=35 // pred_region
        %s517 = smul.u32 2, %s15
      $region40: #{forward.12} parent=35 // pred_fallthru
        _
    $region36: #{forward.12} parent=5 // pred_fallthru
      _
    %p518 = scmp.le.s32.totalorder 2, %s10
    // Predicated region
    $region41: #{forward.12} parent=5 // pred_check
      %p519 = pneg %p518
    $region42: #{forward.12} parent=5 // pred_check_branch
      %521 = sbr.rel (%p519) target = $region44
    $region43: #{forward.12} parent=5 // pred_region
      %s522 = ssub.s32 %s10, 2
      // Predicated region
      $region45: #{forward.12} parent=43 // pred_check
        %p523 = pneg %p128
      $region46: #{forward.12} parent=43 // pred_check_branch
        %525 = sbr.rel (%p523) target = $region48
      $region47: #{forward.12} parent=43 // pred_region
        %s526 = smul.u32 2, %s16
        %p527 = scmp.lt.s32.totalorder %s526, 15
        %s528 = scalar_select %p527, %s526, 15
        %s529 = smul.addr %s528, 4
        %s530 = scalar_lea.vmem %s4, %s529
      $region48: #{forward.12} parent=43 // pred_fallthru
        _
    $region44: #{forward.12} parent=5 // pred_fallthru
      _
  $region6: #{forward.12} parent=0 // loop_footer
    %s14 = sadd.s32 1, %s10
  $region7: #{forward.12} parent=0 // loop_footer_branch
    %9 = sbr.rel target = $region3
  $region8: #{forward.12} parent=0 // loop_exit
    _

// kernel: forward.13
$region0: #{forward.13}
  #allocation0 [shape = 'u32[]', space=smem, size = 0x4, offset = 0x4, fixed_abs, tag = 'smem constant byte address 0x4 - core index']
  #allocation1 [shape = 'u32[144,128]{1,0:T(1,128)}', space=vmem, size = 0x12000, scoped, tag = 'internal scratch']
  %s0 = inlined_call_operand.vmem [shape: bf16[32,128], index: 0, kind: input, shape index: {}]
  %s1 = inlined_call_operand.vmem [shape: bf16[128,64], index: 1, kind: input, shape index: {}]
  %s2 = inlined_call_operand.vmem [shape: f32[1,64], index: 2, kind: input, shape index: {}]
  %s3 = inlined_call_operand.vmem [shape: f32[1,64], index: 3, kind: input, shape index: {}]
  %s4 = inlined_call_operand.vmem [shape: bf16[32,64], index: 4, kind: output, shape index: {}]
  %s5 = sld [smem:[#allocation0]]
  $region49: #{forward.13} parent=0
    _
  %s7 = ssub.s32 1, %s5
  %s8 = scalar_select 0, %s7, %s5
  loop: start=0, step=1, limit=6
  $region2: #{forward.13} parent=0 // loop_pre_header
    _
  $region3: #{forward.13} parent=0 // loop_header
    %s10 = sphi 0, %s14
    %p11 = scmp.ge.s32.totalorder %s10, 6
    %s20 = sphi 0, %s22
    %s23 = sphi 0, %s20
    %s24 = sphi 0, %s23
    %s40 = sphi 0, %s24
    %s44 = sphi 0, %s44
    %s46 = sphi 0, %s44
    %s47 = sphi 0, %s46
    %s61 = sphi 0, %s47
    %s65 = sphi 0, %s65
    %s67 = sphi 0, %s65
    %s68 = sphi 0, %s67
    %s82 = sphi 0, %s68
    %s86 = sphi 0, %s86
    %s88 = sphi 0, %s86
    %s89 = sphi 0, %s88
    %s103 = sphi 0, %s89
    %s109 = sphi 0, %s111
    %s112 = sphi 0, %s109
    %s113 = sphi 0, %s112
    %s129 = sphi 0, %s113
  $region4: #{forward.13} parent=0 // loop_header_branch
    %13 = sbr.rel (%p11) target = $region8
  $region5: #{forward.13} parent=0 // loop_body
    %s15 = ssub.s32 %s10, 1
    %s16 = ssub.s32 %s10, 2
    %s17 = sadd.s32 %s10, 1
    %s18 = ssub.s32 %s10, %s17
    %p19 = scmp.eq.s32.totalorder %s18, 0
    %s21 = sadd.s32 %s20, 1
    %s22 = scalar_select %p19, %s20, %s21
    %p25 = pneg %p19
    %p26 = scmp.eq.s32.totalorder %s10, 3
    %p27 = por %p25, %p26
    %p28 = scmp.ne.s32.totalorder %s20, %s23
    %p29 = scmp.eq.s32.totalorder %s10, 0
    %p30 = por %p28, %p29
    %p31 = scmp.ne.s32.totalorder %s20, %s23
    %p32 = scmp.eq.s32.totalorder %s15, 3
    %p33 = por %p31, %p32
    %p34 = scmp.ne.s32.totalorder %s23, %s24
    %p35 = scmp.eq.s32.totalorder %s15, 0
    %p36 = por %p34, %p35
    %p37 = scmp.ne.s32.totalorder %s23, %s24
    %p38 = scmp.eq.s32.totalorder %s16, 3
    %p39 = por %p37, %p38
    %p41 = scmp.ne.s32.totalorder %s24, %s40
    %p42 = scmp.eq.s32.totalorder %s16, 0
    %p43 = por %p41, %p42
    %s45 = sadd.s32 %s44, 1
    %p48 = scmp.eq.s32.totalorder %s10, 3
    %p49 = scmp.ne.s32.totalorder %s44, %s46
    %p50 = scmp.eq.s32.totalorder %s10, 0
    %p51 = por %p49, %p50
    %p52 = scmp.ne.s32.totalorder %s44, %s46
    %p53 = scmp.eq.s32.totalorder %s15, 3
    %p54 = por %p52, %p53
    %p55 = scmp.ne.s32.totalorder %s46, %s47
    %p56 = scmp.eq.s32.totalorder %s15, 0
    %p57 = por %p55, %p56
    %p58 = scmp.ne.s32.totalorder %s46, %s47
    %p59 = scmp.eq.s32.totalorder %s16, 3
    %p60 = por %p58, %p59
    %p62 = scmp.ne.s32.totalorder %s47, %s61
    %p63 = scmp.eq.s32.totalorder %s16, 0
    %p64 = por %p62, %p63
    %s66 = sadd.s32 %s65, 1
    %p69 = scmp.eq.s32.totalorder %s10, 3
    %p70 = scmp.ne.s32.totalorder %s65, %s67
    %p71 = scmp.eq.s32.totalorder %s10, 0
    %p72 = por %p70, %p71
    %p73 = scmp.ne.s32.totalorder %s65, %s67
    %p74 = scmp.eq.s32.totalorder %s15, 3
    %p75 = por %p73, %p74
    %p76 = scmp.ne.s32.totalorder %s67, %s68
    %p77 = scmp.eq.s32.totalorder %s15, 0
    %p78 = por %p76, %p77
    %p79 = scmp.ne.s32.totalorder %s67, %s68
    %p80 = scmp.eq.s32.totalorder %s16, 3
    %p81 = por %p79, %p80
    %p83 = scmp.ne.s32.totalorder %s68, %s82
    %p84 = scmp.eq.s32.totalorder %s16, 0
    %p85 = por %p83, %p84
    %s87 = sadd.s32 %s86, 1
    %p90 = scmp.eq.s32.totalorder %s10, 3
    %p91 = scmp.ne.s32.totalorder %s86, %s88
    %p92 = scmp.eq.s32.totalorder %s10, 0
    %p93 = por %p91, %p92
    %p94 = scmp.ne.s32.totalorder %s86, %s88
    %p95 = scmp.eq.s32.totalorder %s15, 3
    %p96 = por %p94, %p95
    %p97 = scmp.ne.s32.totalorder %s88, %s89
    %p98 = scmp.eq.s32.totalorder %s15, 0
    %p99 = por %p97, %p98
    %p100 = scmp.ne.s32.totalorder %s88, %s89
    %p101 = scmp.eq.s32.totalorder %s16, 3
    %p102 = por %p100, %p101
    %p104 = scmp.ne.s32.totalorder %s89, %s103
    %p105 = scmp.eq.s32.totalorder %s16, 0
    %p106 = por %p104, %p105
    %s107 = ssub.s32 %s10, %s17
    %p108 = scmp.eq.s32.totalorder %s107, 0
    %s110 = sadd.s32 %s109, 1
    %s111 = scalar_select %p108, %s109, %s110
    %p114 = pneg %p108
    %p115 = scmp.eq.s32.totalorder %s10, 3
    %p116 = por %p114, %p115
    %p117 = scmp.ne.s32.totalorder %s109, %s112
    %p118 = scmp.eq.s32.totalorder %s10, 0
    %p119 = por %p117, %p118
    %p120 = scmp.ne.s32.totalorder %s109, %s112
    %p121 = scmp.eq.s32.totalorder %s15, 3
    %p122 = por %p120, %p121
    %p123 = scmp.ne.s32.totalorder %s112, %s113
    %p124 = scmp.eq.s32.totalorder %s15, 0
    %p125 = por %p123, %p124
    %p126 = scmp.ne.s32.totalorder %s112, %s113
    %p127 = scmp.eq.s32.totalorder %s16, 3
    %p128 = por %p126, %p127
    %p130 = scmp.ne.s32.totalorder %s113, %s129
    %p131 = scmp.eq.s32.totalorder %s16, 0
    %p132 = por %p130, %p131
    %p133 = scmp.le.s32.totalorder 1, %s10
    %p134 = scmp.lt.s32.totalorder %s10, 5
    %p135 = pnand %p133, %p134
    %p136 = pneg %p135
    // Predicated region
    $region9: #{forward.13} parent=5 // pred_check
      _
    $region10: #{forward.13} parent=5 // pred_check_branch
      %138 = sbr.rel (%p135) target = $region12
    $region11: #{forward.13} parent=5 // pred_region
      %s139 = ssub.s32 %s10, 1
      // Predicated region
      $region13: #{forward.13} parent=11 // pred_check
        %p140 = pneg %p57
      $region14: #{forward.13} parent=11 // pred_check_branch
        %142 = sbr.rel (%p140) target = $region16
      $region15: #{forward.13} parent=11 // pred_region
        _
      $region16: #{forward.13} parent=11 // pred_fallthru
        _
      // Predicated region
      $region17: #{forward.13} parent=11 // pred_check
        %p143 = pneg %p78
      $region18: #{forward.13} parent=11 // pred_check_branch
        %145 = sbr.rel (%p143) target = $region20
      $region19: #{forward.13} parent=11 // pred_region
        _
      $region20: #{forward.13} parent=11 // pred_fallthru
        _
      // Predicated region
      $region21: #{forward.13} parent=11 // pred_check
        %p146 = pneg %p99
      $region22: #{forward.13} parent=11 // pred_check_branch
        %148 = sbr.rel (%p146) target = $region24
      $region23: #{forward.13} parent=11 // pred_region
        _
      $region24: #{forward.13} parent=11 // pred_fallthru
        _
    $region12: #{forward.13} parent=5 // pred_fallthru
      _
    %p149 = scmp.lt.s32.totalorder %s10, 4
    // Predicated region
    $region25: #{forward.13} parent=5 // pred_check
      %p150 = pneg %p149
    $region26: #{forward.13} parent=5 // pred_check_branch
      %152 = sbr.rel (%p150) target = $region28
    $region27: #{forward.13} parent=5 // pred_region
      // Predicated region
      $region29: #{forward.13} parent=27 // pred_check
        %p153 = pneg %p30
      $region30: #{forward.13} parent=27 // pred_check_branch
        %155 = sbr.rel (%p153) target = $region32
      $region31: #{forward.13} parent=27 // pred_region
        %p156 = scmp.lt.s32.totalorder %s10, 3
        %s157 = scalar_select %p156, %s10, 3
        %s158 = smul.addr %s157, 4
        %s159 = scalar_lea.vmem %s0, %s158
      $region32: #{forward.13} parent=27 // pred_fallthru
        _
    $region28: #{forward.13} parent=5 // pred_fallthru
      _
    %p160 = scmp.le.s32.totalorder 1, %s10
    %p161 = scmp.lt.s32.totalorder %s10, 5
    %p162 = pnand %p160, %p161
    %p163 = pneg %p162
    // Predicated region
    $region33: #{forward.13} parent=5 // pred_check
      _
    $region34: #{forward.13} parent=5 // pred_check_branch
      %165 = sbr.rel (%p162) target = $region36
    $region35: #{forward.13} parent=5 // pred_region
      %s166 = ssub.s32 %s10, 1
      %p167 = scmp.lt.s32.totalorder %s15, 3
      %s168 = scalar_select %p167, %s15, 3
      %s169 = smul.addr %s168, 4
      %s170 = scalar_lea.vmem %s0, %s169
      %p171 = pneg %p36
      %p172 = pneg %p33
      %p173 = pneg %p57
      %p174 = pneg %p54
      %p175 = pneg %p78
      %p176 = pneg %p75
      %p177 = pneg %p99
      %p178 = pneg %p96
      %p179 = pneg %p125
      %p180 = pneg %p122
      %p181 = scmp.lt.s32.totalorder %s15, 3
      %s182 = scalar_select %p181, %s15, 3
      %s183 = smul.addr %s182, 4
      %s184 = scalar_lea.vmem %s4, %s183
      %p185 = scmp.lt.s32.totalorder %s15, 3
      %s186 = scalar_select %p185, %s15, 3
      %s187 = smul.addr %s186, 4
      %s188 = scalar_lea.vmem %s0, %s187
      %p189 = scmp.lt.s32.totalorder %s15, 3
      %s190 = scalar_select %p189, %s15, 3
      %s191 = smul.addr %s190, 4
      %s192 = scalar_lea.vmem %s4, %s191
      %v194 = vld [vmem:[%s188] sm:$0xf]
      %v195 = vld [vmem:[%s1] sm:$0xf]
      %v196 = vld [vmem:[%s1 + $0x4] sm:$0xf]
      %v197 = vld [vmem:[%s1 + $0x8] sm:$0xf]
      %v198 = vld [vmem:[%s1 + $0xc] sm:$0xf]
      %v199 = vld [vmem:[%s1 + $0x10] sm:$0xf]
      %v200 = vld [vmem:[%s1 + $0x14] sm:$0xf]
      %v201 = vld [vmem:[%s1 + $0x18] sm:$0xf]
      %v202 = vld [vmem:[%s1 + $0x1c] sm:$0xf]
      %v203 = vld [vmem:[%s1 + $0x20] sm:$0xf]
      %v204 = vld [vmem:[%s1 + $0x24] sm:$0xf]
      %v205 = vld [vmem:[%s1 + $0x28] sm:$0xf]
      %v206 = vld [vmem:[%s1 + $0x2c] sm:$0xf]
      %v207 = vld [vmem:[%s1 + $0x30] sm:$0xf]
      %v208 = vld [vmem:[%s1 + $0x34] sm:$0xf]
      %v209 = vld [vmem:[%s1 + $0x38] sm:$0xf]
      %v210 = vld [vmem:[%s1 + $0x3c] sm:$0xf]
      %v227 = vunpack.c.l.b16 %v195
      %v228 = vunpack.c.l.b16 %v196
      %v229 = vunpack.c.l.b16 %v197
      %v230 = vunpack.c.l.b16 %v198
      %v231 = vunpack.c.l.b16 %v199
      %v232 = vunpack.c.l.b16 %v200
      %v233 = vunpack.c.l.b16 %v201
      %v234 = vunpack.c.l.b16 %v202
      %v235 = vunpack.c.l.b16 %v203
      %v236 = vunpack.c.l.b16 %v204
      %v237 = vunpack.c.l.b16 %v205
      %v238 = vunpack.c.l.b16 %v206
      %v239 = vunpack.c.l.b16 %v207
      %v240 = vunpack.c.l.b16 %v208
      %v241 = vunpack.c.l.b16 %v209
      %v242 = vunpack.c.l.b16 %v210
      %v243 = vpack.c.b16 %v228, %v227
      %v244 = vpack.c.b16 %v230, %v229
      %v245 = vpack.c.b16 %v232, %v231
      %v246 = vpack.c.b16 %v234, %v233
      %v247 = vpack.c.b16 %v236, %v235
      %v248 = vpack.c.b16 %v238, %v237
      %v249 = vpack.c.b16 %v240, %v239
      %v250 = vpack.c.b16 %v242, %v241
      %259 = vmatprep.subr.bf16.mxu0 0
      %260 = vmatpush1.bf16.msra.mxu0 %v250
      %261 = vmatprep.subr.bf16.mxu0 0
      %262 = vmatpush1.bf16.msra.mxu0 %v249
      %263 = vmatprep.subr.bf16.mxu0 0
      %264 = vmatpush1.bf16.msra.mxu0 %v248
      %265 = vmatprep.subr.bf16.mxu0 0
      %266 = vmatpush1.bf16.msra.mxu0 %v247
      %267 = vmatprep.subr.bf16.mxu0 0
      %268 = vmatpush1.bf16.msra.mxu0 %v246
      %269 = vmatprep.subr.bf16.mxu0 0
      %270 = vmatpush1.bf16.msra.mxu0 %v245
      %271 = vmatprep.subr.bf16.mxu0 0
      %272 = vmatpush1.bf16.msra.mxu0 %v244
      %273 = vmatprep.subr.bf16.mxu0 0
      %274 = vmatpush1.bf16.msra.mxu0 %v243
      %275 = vmatprep.subr.bf16.mxu0 0
      %276 = vmatpush2.bf16.msra.mxu0 0
      %277 = vmatprep.subr.bf16.mxu0 0
      %278 = vmatpush2.bf16.msra.mxu0 0
      %279 = vmatprep.subr.bf16.mxu0 0
      %280 = vmatpush2.bf16.msra.mxu0 0
      %281 = vmatprep.subr.bf16.mxu0 0
      %282 = vmatpush2.bf16.msra.mxu0 0
      %283 = vmatprep.subr.bf16.mxu0 0
      %284 = vmatpush2.bf16.msra.mxu0 0
      %285 = vmatprep.subr.bf16.mxu0 0
      %286 = vmatpush2.bf16.msra.mxu0 0
      %287 = vmatprep.subr.bf16.mxu0 0
      %288 = vmatpush2.bf16.msra.mxu0 0
      %289 = vmatprep.subr.bf16.mxu0 0
      %290 = vmatpush2.bf16.msra.mxu0 0
      %291 = vmatprep.mubr.bf16.mxu0 0
      %292 = vmatmul.mubr.bf16.gmra.mxu0 %v194
      %v293 = vpop.f32.mrf.mxu0
      %v294 = vadd.f32 0.0, %v293
      %v295 = vpop.f32.mrf.mxu0
      %v296 = vpop.f32.mrf.mxu0
      %v297 = vpop.f32.mrf.mxu0
      %298 = vdwg.mxu0
      %v299 = vld [vmem:[%s2] sm:$0x1]
      %v301 = vlaneseq
      %v302 = vshrl.u32 %v301, 7
      %v303 = vsub.s32 0, %v302
      %v304 = vrot.slane %v299, %v303
      %v306 = vmul.f32 %v294, %v304
      %v307 = vld [vmem:[%s3] sm:$0x1]
      %v309 = vlaneseq
      %v310 = vshrl.u32 %v309, 7
      %v311 = vsub.s32 0, %v310
      %v312 = vrot.slane %v307, %v311
      %v314 = vadd.f32 %v306, %v312
      %v315 = vmax.f32 %v314, 0.0
      %v316 = vpack.c.bf16 %v315, %v315
      %vm317 = vcmask 519168
      %318 = vst.msk [vmem:[%s192] sm:$0xf] %vm317, %v316
      %p319 = scmp.lt.s32.totalorder %s15, 3
      %s320 = scalar_select %p319, %s15, 3
      %s321 = smul.addr %s320, 4
      %s322 = scalar_lea.vmem %s4, %s321
      // Predicated region
      $region37: #{forward.13} parent=35 // pred_check
        %p323 = pneg %p122
      $region38: #{forward.13} parent=35 // pred_check_branch
        %325 = sbr.rel (%p323) target = $region40
      $region39: #{forward.13} parent=35 // pred_region
        _
      $region40: #{forward.13} parent=35 // pred_fallthru
        _
    $region36: #{forward.13} parent=5 // pred_fallthru
      _
    %p326 = scmp.le.s32.totalorder 2, %s10
    // Predicated region
    $region41: #{forward.13} parent=5 // pred_check
      %p327 = pneg %p326
    $region42: #{forward.13} parent=5 // pred_check_branch
      %329 = sbr.rel (%p327) target = $region44
    $region43: #{forward.13} parent=5 // pred_region
      %s330 = ssub.s32 %s10, 2
      // Predicated region
      $region45: #{forward.13} parent=43 // pred_check
        %p331 = pneg %p128
      $region46: #{forward.13} parent=43 // pred_check_branch
        %333 = sbr.rel (%p331) target = $region48
      $region47: #{forward.13} parent=43 // pred_region
        %p334 = scmp.lt.s32.totalorder %s16, 3
        %s335 = scalar_select %p334, %s16, 3
        %s336 = smul.addr %s335, 4
        %s337 = scalar_lea.vmem %s4, %s336
      $region48: #{forward.13} parent=43 // pred_fallthru
        _
    $region44: #{forward.13} parent=5 // pred_fallthru
      _
  $region6: #{forward.13} parent=0 // loop_footer
    %s14 = sadd.s32 1, %s10
  $region7: #{forward.13} parent=0 // loop_footer_branch
    %9 = sbr.rel target = $region3
  $region8: #{forward.13} parent=0 // loop_exit
    _

// kernel: forward.20
$region0: #{forward.20}
  #allocation0 [shape = 'u32[]', space=smem, size = 0x4, offset = 0x4, fixed_abs, tag = 'smem constant byte address 0x4 - core index']
  #allocation1 [shape = 'u32[144,128]{1,0:T(1,128)}', space=vmem, size = 0x12000, scoped, tag = 'internal scratch']
  %s0 = inlined_call_operand.vmem [shape: bf16[2,64,2,2], index: 0, kind: input, shape index: {}]
  %s1 = inlined_call_operand.vmem [shape: bf16[8,2], index: 1, kind: input, shape index: {}]
  %s2 = inlined_call_operand.vmem [shape: bf16[2,8], index: 2, kind: input, shape index: {}]
  %s3 = inlined_call_operand.vmem [shape: bf16[2,64,8,8], index: 3, kind: output, shape index: {}]
  %s4 = sld [smem:[#allocation0]]
  $region45: #{forward.20} parent=0
    _
  %s6 = ssub.s32 1, %s4
  %s7 = scalar_select 0, %s6, %s4
  loop: start=0, step=1, limit=130
  $region2: #{forward.20} parent=0 // loop_pre_header
    _
  $region3: #{forward.20} parent=0 // loop_header
    %s9 = sphi 0, %s13
    %p10 = scmp.ge.s32.totalorder %s9, 130
    %s16 = sphi 0, %s35
    %s17 = sphi 0, %s31
    %s18 = sphi 0, %s27
    %s19 = sphi 0, %s16
    %s20 = sphi 0, %s17
    %s21 = sphi 0, %s18
    %s22 = sphi 0, %s19
    %s23 = sphi 0, %s20
    %s24 = sphi 0, %s21
    %s40 = sphi 0, %s42
    %s43 = sphi 0, %s40
    %s44 = sphi 0, %s43
    %s60 = sphi 0, %s44
    %s66 = sphi 0, %s68
    %s69 = sphi 0, %s66
    %s70 = sphi 0, %s69
    %s86 = sphi 0, %s70
    %s90 = sphi 0, %s90
    %s92 = sphi 0, %s90
    %s93 = sphi 0, %s92
    %s107 = sphi 0, %s93
    %s117 = sphi 0, %s119
    %s120 = sphi 0, %s117
    %s121 = sphi 0, %s120
    %s137 = sphi 0, %s121
  $region4: #{forward.20} parent=0 // loop_header_branch
    %12 = sbr.rel (%p10) target = $region8
  $region5: #{forward.20} parent=0 // loop_body
    %s14 = ssub.s32 %s9, 1
    %s15 = ssub.s32 %s9, 2
    %s25 = sadd.s32 1, %s18
    %p26 = scmp.ge.s32.totalorder %s25, 1
    %s27 = scalar_select %p26, 0, %s25
    %s28 = sadd.s32 1, %s17
    %s29 = scalar_select %p26, %s28, %s17
    %p30 = scmp.ge.s32.totalorder %s29, 64
    %s31 = scalar_select %p30, 0, %s29
    %s32 = sadd.s32 1, %s16
    %s33 = scalar_select %p30, %s32, %s16
    %p34 = scmp.ge.s32.totalorder %s33, 2
    %s35 = scalar_select %p34, 0, %s33
    %s36 = ssub.s32 %s16, %s35
    %s37 = ssub.s32 %s17, %s31
    %s38 = sor.u32 %s36, %s37
    %p39 = scmp.eq.s32.totalorder %s38, 0
    %s41 = sadd.s32 %s40, 1
    %s42 = scalar_select %p39, %s40, %s41
    %p45 = pneg %p39
    %p46 = scmp.eq.s32.totalorder %s9, 127
    %p47 = por %p45, %p46
    %p48 = scmp.ne.s32.totalorder %s40, %s43
    %p49 = scmp.eq.s32.totalorder %s9, 0
    %p50 = por %p48, %p49
    %p51 = scmp.ne.s32.totalorder %s40, %s43
    %p52 = scmp.eq.s32.totalorder %s14, 127
    %p53 = por %p51, %p52
    %p54 = scmp.ne.s32.totalorder %s43, %s44
    %p55 = scmp.eq.s32.totalorder %s14, 0
    %p56 = por %p54, %p55
    %p57 = scmp.ne.s32.totalorder %s43, %s44
    %p58 = scmp.eq.s32.totalorder %s15, 127
    %p59 = por %p57, %p58
    %p61 = scmp.ne.s32.totalorder %s44, %s60
    %p62 = scmp.eq.s32.totalorder %s15, 0
    %p63 = por %p61, %p62
    %s64 = ssub.s32 %s18, %s27
    %p65 = scmp.eq.s32.totalorder %s64, 0
    %s67 = sadd.s32 %s66, 1
    %s68 = scalar_select %p65, %s66, %s67
    %p71 = pneg %p65
    %p72 = scmp.eq.s32.totalorder %s9, 127
    %p73 = por %p71, %p72
    %p74 = scmp.ne.s32.totalorder %s66, %s69
    %p75 = scmp.eq.s32.totalorder %s9, 0
    %p76 = por %p74, %p75
    %p77 = scmp.ne.s32.totalorder %s66, %s69
    %p78 = scmp.eq.s32.totalorder %s14, 127
    %p79 = por %p77, %p78
    %p80 = scmp.ne.s32.totalorder %s69, %s70
    %p81 = scmp.eq.s32.totalorder %s14, 0
    %p82 = por %p80, %p81
    %p83 = scmp.ne.s32.totalorder %s69, %s70
    %p84 = scmp.eq.s32.totalorder %s15, 127
    %p85 = por %p83, %p84
    %p87 = scmp.ne.s32.totalorder %s70, %s86
    %p88 = scmp.eq.s32.totalorder %s15, 0
    %p89 = por %p87, %p88
    %s91 = sadd.s32 %s90, 1
    %p94 = scmp.eq.s32.totalorder %s9, 127
    %p95 = scmp.ne.s32.totalorder %s90, %s92
    %p96 = scmp.eq.s32.totalorder %s9, 0
    %p97 = por %p95, %p96
    %p98 = scmp.ne.s32.totalorder %s90, %s92
    %p99 = scmp.eq.s32.totalorder %s14, 127
    %p100 = por %p98, %p99
    %p101 = scmp.ne.s32.totalorder %s92, %s93
    %p102 = scmp.eq.s32.totalorder %s14, 0
    %p103 = por %p101, %p102
    %p104 = scmp.ne.s32.totalorder %s92, %s93
    %p105 = scmp.eq.s32.totalorder %s15, 127
    %p106 = por %p104, %p105
    %p108 = scmp.ne.s32.totalorder %s93, %s107
    %p109 = scmp.eq.s32.totalorder %s15, 0
    %p110 = por %p108, %p109
    %s111 = ssub.s32 %s16, %s35
    %s112 = ssub.s32 %s17, %s31
    %s113 = sor.u32 %s111, %s112
    %s114 = ssub.s32 %s18, %s27
    %s115 = sor.u32 %s113, %s114
    %p116 = scmp.eq.s32.totalorder %s115, 0
    %s118 = sadd.s32 %s117, 1
    %s119 = scalar_select %p116, %s117, %s118
    %p122 = pneg %p116
    %p123 = scmp.eq.s32.totalorder %s9, 127
    %p124 = por %p122, %p123
    %p125 = scmp.ne.s32.totalorder %s117, %s120
    %p126 = scmp.eq.s32.totalorder %s9, 0
    %p127 = por %p125, %p126
    %p128 = scmp.ne.s32.totalorder %s117, %s120
    %p129 = scmp.eq.s32.totalorder %s14, 127
    %p130 = por %p128, %p129
    %p131 = scmp.ne.s32.totalorder %s120, %s121
    %p132 = scmp.eq.s32.totalorder %s14, 0
    %p133 = por %p131, %p132
    %p134 = scmp.ne.s32.totalorder %s120, %s121
    %p135 = scmp.eq.s32.totalorder %s15, 127
    %p136 = por %p134, %p135
    %p138 = scmp.ne.s32.totalorder %s121, %s137
    %p139 = scmp.eq.s32.totalorder %s15, 0
    %p140 = por %p138, %p139
    %p141 = scmp.le.s32.totalorder 1, %s9
    %p142 = scmp.lt.s32.totalorder %s9, 129
    %p143 = pnand %p141, %p142
    %p144 = pneg %p143
    // Predicated region
    $region9: #{forward.20} parent=5 // pred_check
      _
    $region10: #{forward.20} parent=5 // pred_check_branch
      %146 = sbr.rel (%p143) target = $region12
    $region11: #{forward.20} parent=5 // pred_region
      %s147 = ssub.s32 %s9, 1
      // Predicated region
      $region13: #{forward.20} parent=11 // pred_check
        %p148 = pneg %p82
      $region14: #{forward.20} parent=11 // pred_check_branch
        %150 = sbr.rel (%p148) target = $region16
      $region15: #{forward.20} parent=11 // pred_region
        %p151 = scmp.lt.s32.totalorder %s21, 0
        %s152 = scalar_select %p151, %s21, 0
        %s153 = smul.addr %s152, 4
        %s154 = scalar_lea.vmem %s1, %s153
      $region16: #{forward.20} parent=11 // pred_fallthru
        _
      // Predicated region
      $region17: #{forward.20} parent=11 // pred_check
        %p155 = pneg %p103
      $region18: #{forward.20} parent=11 // pred_check_branch
        %157 = sbr.rel (%p155) target = $region20
      $region19: #{forward.20} parent=11 // pred_region
        _
      $region20: #{forward.20} parent=11 // pred_fallthru
        _
    $region12: #{forward.20} parent=5 // pred_fallthru
      _
    %p158 = scmp.lt.s32.totalorder %s9, 128
    // Predicated region
    $region21: #{forward.20} parent=5 // pred_check
      %p159 = pneg %p158
    $region22: #{forward.20} parent=5 // pred_check_branch
      %161 = sbr.rel (%p159) target = $region24
    $region23: #{forward.20} parent=5 // pred_region
      // Predicated region
      $region25: #{forward.20} parent=23 // pred_check
        %p162 = pneg %p50
      $region26: #{forward.20} parent=23 // pred_check_branch
        %164 = sbr.rel (%p162) target = $region28
      $region27: #{forward.20} parent=23 // pred_region
        %p165 = scmp.lt.s32.totalorder %s16, 1
        %s166 = scalar_select %p165, %s16, 1
        %p167 = scmp.lt.s32.totalorder %s17, 63
        %s168 = scalar_select %p167, %s17, 63
        %s169 = smul.addr %s166, 64
        %s170 = sadd.s32 %s168, %s169
        %s171 = scalar_lea.vmem %s0, %s170
      $region28: #{forward.20} parent=23 // pred_fallthru
        _
    $region24: #{forward.20} parent=5 // pred_fallthru
      _
    %p172 = scmp.le.s32.totalorder 1, %s9
    %p173 = scmp.lt.s32.totalorder %s9, 129
    %p174 = pnand %p172, %p173
    %p175 = pneg %p174
    // Predicated region
    $region29: #{forward.20} parent=5 // pred_check
      _
    $region30: #{forward.20} parent=5 // pred_check_branch
      %177 = sbr.rel (%p174) target = $region32
    $region31: #{forward.20} parent=5 // pred_region
      %s178 = ssub.s32 %s9, 1
      %p179 = scmp.lt.s32.totalorder %s19, 1
      %s180 = scalar_select %p179, %s19, 1
      %p181 = scmp.lt.s32.totalorder %s20, 63
      %s182 = scalar_select %p181, %s20, 63
      %s183 = smul.addr %s180, 64
      %s184 = sadd.s32 %s182, %s183
      %s185 = scalar_lea.vmem %s0, %s184
      %p186 = pneg %p56
      %p187 = pneg %p53
      %p188 = scmp.lt.s32.totalorder %s21, 0
      %s189 = scalar_select %p188, %s21, 0
      %s190 = smul.addr %s189, 4
      %s191 = scalar_lea.vmem %s1, %s190
      %p192 = pneg %p82
      %p193 = pneg %p79
      %p194 = pneg %p103
      %p195 = pneg %p100
      %p196 = pneg %p133
      %p197 = pneg %p130
      %p198 = scmp.lt.s32.totalorder %s19, 1
      %s199 = scalar_select %p198, %s19, 1
      %p200 = scmp.lt.s32.totalorder %s20, 63
      %s201 = scalar_select %p200, %s20, 63
      %p202 = scmp.lt.s32.totalorder %s21, 0
      %s203 = scalar_select %p202, %s21, 0
      %s204 = sadd.s32 %s203, %s201
      %s205 = smul.addr %s199, 64
      %s206 = sadd.s32 %s204, %s205
      %s207 = smul.addr %s206, 4
      %s208 = scalar_lea.vmem %s3, %s207
      %p209 = scmp.lt.s32.totalorder %s19, 1
      %s210 = scalar_select %p209, %s19, 1
      %p211 = scmp.lt.s32.totalorder %s20, 63
      %s212 = scalar_select %p211, %s20, 63
      %s213 = smul.addr %s210, 64
      %s214 = sadd.s32 %s212, %s213
      %s215 = scalar_lea.vmem %s0, %s214
      %p216 = scmp.lt.s32.totalorder %s21, 0
      %s217 = scalar_select %p216, %s21, 0
      %s218 = smul.addr %s217, 4
      %s219 = scalar_lea.vmem %s1, %s218
      %p220 = scmp.lt.s32.totalorder %s19, 1
      %s221 = scalar_select %p220, %s19, 1
      %p222 = scmp.lt.s32.totalorder %s20, 63
      %s223 = scalar_select %p222, %s20, 63
      %p224 = scmp.lt.s32.totalorder %s21, 0
      %s225 = scalar_select %p224, %s21, 0
      %s226 = sadd.s32 %s225, %s223
      %s227 = smul.addr %s221, 64
      %s228 = sadd.s32 %s226, %s227
      %s229 = smul.addr %s228, 4
      %s230 = scalar_lea.vmem %s3, %s229
      %v232 = vld [vmem:[%s219] sm:$0xf]
      %v233 = vld [vmem:[%s215] sm:$0x1]
      %vm234 = vcmask 15360
      %v236 = vsel %vm234, %v232, 0
      %vm238 = vcmask 1040384
      %v240 = vsel %vm238, %v233, 0
      %242 = vmatprep.subr.bf16.mxu0 0
      %243 = vmatpush1.bf16.msra.mxu0 0
      %244 = vmatprep.subr.bf16.mxu0 0
      %245 = vmatpush1.bf16.msra.mxu0 0
      %246 = vmatprep.subr.bf16.mxu0 0
      %247 = vmatpush1.bf16.msra.mxu0 0
      %248 = vmatprep.subr.bf16.mxu0 0
      %249 = vmatpush1.bf16.msra.mxu0 0
      %250 = vmatprep.subr.bf16.mxu0 0
      %251 = vmatpush1.bf16.msra.mxu0 0
      %252 = vmatprep.subr.bf16.mxu0 0
      %253 = vmatpush1.bf16.msra.mxu0 0
      %254 = vmatprep.subr.bf16.mxu0 0
      %255 = vmatpush1.bf16.msra.mxu0 0
      %256 = vmatprep.subr.bf16.mxu0 0
      %257 = vmatpush1.bf16.msra.mxu0 %v240
      %258 = vmatprep.subr.bf16.mxu0 0
      %259 = vmatpush2.bf16.msra.mxu0 0
      %260 = vmatprep.subr.bf16.mxu0 0
      %261 = vmatpush2.bf16.msra.mxu0 0
      %262 = vmatprep.subr.bf16.mxu0 0
      %263 = vmatpush2.bf16.msra.mxu0 0
      %264 = vmatprep.subr.bf16.mxu0 0
      %265 = vmatpush2.bf16.msra.mxu0 0
      %266 = vmatprep.subr.bf16.mxu0 0
      %267 = vmatpush2.bf16.msra.mxu0 0
      %268 = vmatprep.subr.bf16.mxu0 0
      %269 = vmatpush2.bf16.msra.mxu0 0
      %270 = vmatprep.subr.bf16.mxu0 0
      %271 = vmatpush2.bf16.msra.mxu0 0
      %272 = vmatprep.subr.bf16.mxu0 0
      %273 = vmatpush2.bf16.msra.mxu0 0
      %274 = vmatprep.mubr.bf16.mxu0 0
      %275 = vmatmul.mubr.bf16.gmra.mxu0 %v236
      %v276 = vpop.f32.mrf.mxu0
      %v277 = vadd.f32 0.0, %v276
      %v278 = vpop.f32.mrf.mxu0
      %v279 = vpop.f32.mrf.mxu0
      %v280 = vpop.f32.mrf.mxu0
      %281 = vdwg.mxu0
      %v282 = vpack.c.bf16 %v277, %v277
      %v283 = vld [vmem:[%s2] sm:$0x1]
      %v285 = vsel %vm234, %v282, 0
      %v288 = vsel %vm238, %v283, 0
      %290 = vmatprep.subr.bf16.mxu0 0
      %291 = vmatpush1.bf16.msra.mxu0 0
      %292 = vmatprep.subr.bf16.mxu0 0
      %293 = vmatpush1.bf16.msra.mxu0 0
      %294 = vmatprep.subr.bf16.mxu0 0
      %295 = vmatpush1.bf16.msra.mxu0 0
      %296 = vmatprep.subr.bf16.mxu0 0
      %297 = vmatpush1.bf16.msra.mxu0 0
      %298 = vmatprep.subr.bf16.mxu0 0
      %299 = vmatpush1.bf16.msra.mxu0 0
      %300 = vmatprep.subr.bf16.mxu0 0
      %301 = vmatpush1.bf16.msra.mxu0 0
      %302 = vmatprep.subr.bf16.mxu0 0
      %303 = vmatpush1.bf16.msra.mxu0 0
      %304 = vmatprep.subr.bf16.mxu0 0
      %305 = vmatpush1.bf16.msra.mxu0 %v288
      %306 = vmatprep.subr.bf16.mxu0 0
      %307 = vmatpush2.bf16.msra.mxu0 0
      %308 = vmatprep.subr.bf16.mxu0 0
      %309 = vmatpush2.bf16.msra.mxu0 0
      %310 = vmatprep.subr.bf16.mxu0 0
      %311 = vmatpush2.bf16.msra.mxu0 0
      %312 = vmatprep.subr.bf16.mxu0 0
      %313 = vmatpush2.bf16.msra.mxu0 0
      %314 = vmatprep.subr.bf16.mxu0 0
      %315 = vmatpush2.bf16.msra.mxu0 0
      %316 = vmatprep.subr.bf16.mxu0 0
      %317 = vmatpush2.bf16.msra.mxu0 0
      %318 = vmatprep.subr.bf16.mxu0 0
      %319 = vmatpush2.bf16.msra.mxu0 0
      %320 = vmatprep.subr.bf16.mxu0 0
      %321 = vmatpush2.bf16.msra.mxu0 0
      %322 = vmatprep.mubr.bf16.mxu0 0
      %323 = vmatmul.mubr.bf16.gmra.mxu0 %v285
      %v324 = vpop.f32.mrf.mxu0
      %v325 = vadd.f32 0.0, %v324
      %v326 = vpop.f32.mrf.mxu0
      %v327 = vpop.f32.mrf.mxu0
      %v328 = vpop.f32.mrf.mxu0
      %329 = vdwg.mxu0
      %v330 = vpack.c.bf16 %v325, %v325
      %vm331 = vcmask 60416
      %332 = vst.msk [vmem:[%s230] sm:$0xf] %vm331, %v330
      %p333 = scmp.lt.s32.totalorder %s19, 1
      %s334 = scalar_select %p333, %s19, 1
      %p335 = scmp.lt.s32.totalorder %s20, 63
      %s336 = scalar_select %p335, %s20, 63
      %p337 = scmp.lt.s32.totalorder %s21, 0
      %s338 = scalar_select %p337, %s21, 0
      %s339 = sadd.s32 %s338, %s336
      %s340 = smul.addr %s334, 64
      %s341 = sadd.s32 %s339, %s340
      %s342 = smul.addr %s341, 4
      %s343 = scalar_lea.vmem %s3, %s342
      // Predicated region
      $region33: #{forward.20} parent=31 // pred_check
        %p344 = pneg %p130
      $region34: #{forward.20} parent=31 // pred_check_branch
        %346 = sbr.rel (%p344) target = $region36
      $region35: #{forward.20} parent=31 // pred_region
        _
      $region36: #{forward.20} parent=31 // pred_fallthru
        _
    $region32: #{forward.20} parent=5 // pred_fallthru
      _
    %p347 = scmp.le.s32.totalorder 2, %s9
    // Predicated region
    $region37: #{forward.20} parent=5 // pred_check
      %p348 = pneg %p347
    $region38: #{forward.20} parent=5 // pred_check_branch
      %350 = sbr.rel (%p348) target = $region40
    $region39: #{forward.20} parent=5 // pred_region
      %s351 = ssub.s32 %s9, 2
      // Predicated region
      $region41: #{forward.20} parent=39 // pred_check
        %p352 = pneg %p136
      $region42: #{forward.20} parent=39 // pred_check_branch
        %354 = sbr.rel (%p352) target = $region44
      $region43: #{forward.20} parent=39 // pred_region
        %p355 = scmp.lt.s32.totalorder %s22, 1
        %s356 = scalar_select %p355, %s22, 1
        %p357 = scmp.lt.s32.totalorder %s23, 63
        %s358 = scalar_select %p357, %s23, 63
        %p359 = scmp.lt.s32.totalorder %s24, 0
        %s360 = scalar_select %p359, %s24, 0
        %s361 = sadd.s32 %s360, %s358
        %s362 = smul.addr %s356, 64
        %s363 = sadd.s32 %s361, %s362
        %s364 = smul.addr %s363, 4
        %s365 = scalar_lea.vmem %s3, %s364
      $region44: #{forward.20} parent=39 // pred_fallthru
        _
    $region40: #{forward.20} parent=5 // pred_fallthru
      _
  $region6: #{forward.20} parent=0 // loop_footer
    %s13 = sadd.s32 1, %s9
  $region7: #{forward.20} parent=0 // loop_footer_branch
    %8 = sbr.rel target = $region3
  $region8: #{forward.20} parent=0 // loop_exit
    _

// kernel: forward.14
$region0: #{forward.14}
  #allocation0 [shape = 'u32[]', space=smem, size = 0x4, offset = 0x4, fixed_abs, tag = 'smem constant byte address 0x4 - core index']
  #allocation1 [shape = 'u32[144,128]{1,0:T(1,128)}', space=vmem, size = 0x12000, scoped, tag = 'internal scratch']
  %s0 = inlined_call_operand.vmem [shape: bf16[8,256], index: 0, kind: input, shape index: {}]
  %s1 = inlined_call_operand.vmem [shape: bf16[256,128], index: 1, kind: input, shape index: {}]
  %s2 = inlined_call_operand.vmem [shape: f32[1,128], index: 2, kind: input, shape index: {}]
  %s3 = inlined_call_operand.vmem [shape: f32[1,128], index: 3, kind: input, shape index: {}]
  %s4 = inlined_call_operand.vmem [shape: bf16[8,128], index: 4, kind: output, shape index: {}]
  %s5 = sld [smem:[#allocation0]]
  $region26: #{forward.14} parent=0
    _
  %s7 = ssub.s32 1, %s5
  %s8 = scalar_select 0, %s7, %s5
  // Predicated region
  $region2: #{forward.14} parent=0 // pred_check
    _
  $region3: #{forward.14} parent=0 // pred_check_branch
    %10 = sbr.rel (0) target = $region5
  $region4: #{forward.14} parent=0 // pred_region
    _
  $region5: #{forward.14} parent=0 // pred_fallthru
    _
  // Predicated region
  $region6: #{forward.14} parent=0 // pred_check
    _
  $region7: #{forward.14} parent=0 // pred_check_branch
    %12 = sbr.rel (0) target = $region9
  $region8: #{forward.14} parent=0 // pred_region
    _
  $region9: #{forward.14} parent=0 // pred_fallthru
    _
  // Predicated region
  $region10: #{forward.14} parent=0 // pred_check
    _
  $region11: #{forward.14} parent=0 // pred_check_branch
    %14 = sbr.rel (0) target = $region13
  $region12: #{forward.14} parent=0 // pred_region
    _
  $region13: #{forward.14} parent=0 // pred_fallthru
    _
  // Predicated region
  $region14: #{forward.14} parent=0 // pred_check
    _
  $region15: #{forward.14} parent=0 // pred_check_branch
    %16 = sbr.rel (0) target = $region17
  $region16: #{forward.14} parent=0 // pred_region
    _
  $region17: #{forward.14} parent=0 // pred_fallthru
    _
  %v18 = vld [vmem:[%s0] sm:$0xff]
  %v19 = vld [vmem:[%s1] sm:$0xf]
  %v20 = vld [vmem:[%s1 + $0x4] sm:$0xf]
  %v21 = vld [vmem:[%s1 + $0x8] sm:$0xf]
  %v22 = vld [vmem:[%s1 + $0xc] sm:$0xf]
  %v23 = vld [vmem:[%s1 + $0x10] sm:$0xf]
  %v24 = vld [vmem:[%s1 + $0x14] sm:$0xf]
  %v25 = vld [vmem:[%s1 + $0x18] sm:$0xf]
  %v26 = vld [vmem:[%s1 + $0x1c] sm:$0xf]
  %v27 = vld [vmem:[%s1 + $0x20] sm:$0xf]
  %v28 = vld [vmem:[%s1 + $0x24] sm:$0xf]
  %v29 = vld [vmem:[%s1 + $0x28] sm:$0xf]
  %v30 = vld [vmem:[%s1 + $0x2c] sm:$0xf]
  %v31 = vld [vmem:[%s1 + $0x30] sm:$0xf]
  %v32 = vld [vmem:[%s1 + $0x34] sm:$0xf]
  %v33 = vld [vmem:[%s1 + $0x38] sm:$0xf]
  %v34 = vld [vmem:[%s1 + $0x3c] sm:$0xf]
  %v35 = vld [vmem:[%s1 + $0x40] sm:$0xf]
  %v36 = vld [vmem:[%s1 + $0x44] sm:$0xf]
  %v37 = vld [vmem:[%s1 + $0x48] sm:$0xf]
  %v38 = vld [vmem:[%s1 + $0x4c] sm:$0xf]
  %v39 = vld [vmem:[%s1 + $0x50] sm:$0xf]
  %v40 = vld [vmem:[%s1 + $0x54] sm:$0xf]
  %v41 = vld [vmem:[%s1 + $0x58] sm:$0xf]
  %v42 = vld [vmem:[%s1 + $0x5c] sm:$0xf]
  %v43 = vld [vmem:[%s1 + $0x60] sm:$0xf]
  %v44 = vld [vmem:[%s1 + $0x64] sm:$0xf]
  %v45 = vld [vmem:[%s1 + $0x68] sm:$0xf]
  %v46 = vld [vmem:[%s1 + $0x6c] sm:$0xf]
  %v47 = vld [vmem:[%s1 + $0x70] sm:$0xf]
  %v48 = vld [vmem:[%s1 + $0x74] sm:$0xf]
  %v49 = vld [vmem:[%s1 + $0x78] sm:$0xf]
  %v50 = vld [vmem:[%s1 + $0x7c] sm:$0xf]
  %v52 = vunpack.c.l.b16 %v18
  %v53 = vunpack.c.h.b16 %v18
  %v54 = vpack.c.b16 %v52, %v52
  %v55 = vpack.c.b16 %v53, %v53
  %v90 = vunpack.c.l.b16 %v19
  %v91 = vunpack.c.l.b16 %v20
  %v92 = vunpack.c.l.b16 %v21
  %v93 = vunpack.c.l.b16 %v22
  %v94 = vunpack.c.l.b16 %v23
  %v95 = vunpack.c.l.b16 %v24
  %v96 = vunpack.c.l.b16 %v25
  %v97 = vunpack.c.l.b16 %v26
  %v98 = vunpack.c.l.b16 %v27
  %v99 = vunpack.c.l.b16 %v28
  %v100 = vunpack.c.l.b16 %v29
  %v101 = vunpack.c.l.b16 %v30
  %v102 = vunpack.c.l.b16 %v31
  %v103 = vunpack.c.l.b16 %v32
  %v104 = vunpack.c.l.b16 %v33
  %v105 = vunpack.c.l.b16 %v34
  %v106 = vunpack.c.l.b16 %v35
  %v107 = vunpack.c.l.b16 %v36
  %v108 = vunpack.c.l.b16 %v37
  %v109 = vunpack.c.l.b16 %v38
  %v110 = vunpack.c.l.b16 %v39
  %v111 = vunpack.c.l.b16 %v40
  %v112 = vunpack.c.l.b16 %v41
  %v113 = vunpack.c.l.b16 %v42
  %v114 = vunpack.c.l.b16 %v43
  %v115 = vunpack.c.l.b16 %v44
  %v116 = vunpack.c.l.b16 %v45
  %v117 = vunpack.c.l.b16 %v46
  %v118 = vunpack.c.l.b16 %v47
  %v119 = vunpack.c.l.b16 %v48
  %v120 = vunpack.c.l.b16 %v49
  %v121 = vunpack.c.l.b16 %v50
  %v122 = vpack.c.b16 %v91, %v90
  %v123 = vpack.c.b16 %v93, %v92
  %v124 = vpack.c.b16 %v95, %v94
  %v125 = vpack.c.b16 %v97, %v96
  %v126 = vpack.c.b16 %v99, %v98
  %v127 = vpack.c.b16 %v101, %v100
  %v128 = vpack.c.b16 %v103, %v102
  %v129 = vpack.c.b16 %v105, %v104
  %v130 = vpack.c.b16 %v107, %v106
  %v131 = vpack.c.b16 %v109, %v108
  %v132 = vpack.c.b16 %v111, %v110
  %v133 = vpack.c.b16 %v113, %v112
  %v134 = vpack.c.b16 %v115, %v114
  %v135 = vpack.c.b16 %v117, %v116
  %v136 = vpack.c.b16 %v119, %v118
  %v137 = vpack.c.b16 %v121, %v120
  %154 = vmatprep.subr.bf16.mxu0 0
  %155 = vmatpush1.bf16.msra.mxu0 %v129
  %156 = vmatprep.subr.bf16.mxu0 0
  %157 = vmatpush1.bf16.msra.mxu0 %v128
  %158 = vmatprep.subr.bf16.mxu0 0
  %159 = vmatpush1.bf16.msra.mxu0 %v127
  %160 = vmatprep.subr.bf16.mxu0 0
  %161 = vmatpush1.bf16.msra.mxu0 %v126
  %162 = vmatprep.subr.bf16.mxu0 0
  %163 = vmatpush1.bf16.msra.mxu0 %v125
  %164 = vmatprep.subr.bf16.mxu0 0
  %165 = vmatpush1.bf16.msra.mxu0 %v124
  %166 = vmatprep.subr.bf16.mxu0 0
  %167 = vmatpush1.bf16.msra.mxu0 %v123
  %168 = vmatprep.subr.bf16.mxu0 0
  %169 = vmatpush1.bf16.msra.mxu0 %v122
  %170 = vmatprep.subr.bf16.mxu0 0
  %171 = vmatpush2.bf16.msra.mxu0 %v137
  %172 = vmatprep.subr.bf16.mxu0 0
  %173 = vmatpush2.bf16.msra.mxu0 %v136
  %174 = vmatprep.subr.bf16.mxu0 0
  %175 = vmatpush2.bf16.msra.mxu0 %v135
  %176 = vmatprep.subr.bf16.mxu0 0
  %177 = vmatpush2.bf16.msra.mxu0 %v134
  %178 = vmatprep.subr.bf16.mxu0 0
  %179 = vmatpush2.bf16.msra.mxu0 %v133
  %180 = vmatprep.subr.bf16.mxu0 0
  %181 = vmatpush2.bf16.msra.mxu0 %v132
  %182 = vmatprep.subr.bf16.mxu0 0
  %183 = vmatpush2.bf16.msra.mxu0 %v131
  %184 = vmatprep.subr.bf16.mxu0 0
  %185 = vmatpush2.bf16.msra.mxu0 %v130
  %186 = vmatprep.mubr.bf16.mxu0 %v55
  %187 = vmatmul.mubr.bf16.gmra.mxu0 %v54
  %v188 = vpop.f32.mrf.mxu0
  %v189 = vadd.f32 0.0, %v188
  %v190 = vpop.f32.mrf.mxu0
  %v191 = vpop.f32.mrf.mxu0
  %v192 = vpop.f32.mrf.mxu0
  %193 = vdwg.mxu0
  %v194 = vld [vmem:[%s2] sm:$0x1]
  %v196 = vlaneseq
  %v197 = vshrl.u32 %v196, 7
  %v198 = vsub.s32 0, %v197
  %v199 = vrot.slane %v194, %v198
  %v201 = vmul.f32 %v189, %v199
  %v202 = vld [vmem:[%s3] sm:$0x1]
  %v204 = vlaneseq
  %v205 = vshrl.u32 %v204, 7
  %v206 = vsub.s32 0, %v205
  %v207 = vrot.slane %v202, %v206
  %v209 = vadd.f32 %v201, %v207
  %v210 = vmax.f32 %v209, 0.0
  %v211 = vpack.c.bf16 %v210, %v210
  %212 = vst [vmem:[%s4] sm:$0xf] %v211
  // Predicated region
  $region18: #{forward.14} parent=0 // pred_check
    _
  $region19: #{forward.14} parent=0 // pred_check_branch
    %214 = sbr.rel (0) target = $region21
  $region20: #{forward.14} parent=0 // pred_region
    _
  $region21: #{forward.14} parent=0 // pred_fallthru
    _
  // Predicated region
  $region22: #{forward.14} parent=0 // pred_check
    _
  $region23: #{forward.14} parent=0 // pred_check_branch
    %216 = sbr.rel (0) target = $region25
  $region24: #{forward.14} parent=0 // pred_region
    _
  $region25: #{forward.14} parent=0 // pred_fallthru
    _

// kernel: forward.19
$region0: #{forward.19}
  #allocation0 [shape = 'u32[]', space=smem, size = 0x4, offset = 0x4, fixed_abs, tag = 'smem constant byte address 0x4 - core index']
  #allocation1 [shape = 'u32[144,128]{1,0:T(1,128)}', space=vmem, size = 0x12000, scoped, tag = 'internal scratch']
  %s0 = inlined_call_operand.vmem [shape: bf16[2,128,4], index: 0, kind: input, shape index: {}]
  %s1 = inlined_call_operand.vmem [shape: bf16[64,128], index: 1, kind: input, shape index: {}]
  %s2 = inlined_call_operand.vmem [shape: f32[64,1], index: 2, kind: input, shape index: {}]
  %s3 = inlined_call_operand.vmem [shape: f32[64,1], index: 3, kind: input, shape index: {}]
  %s4 = inlined_call_operand.vmem [shape: bf16[2,64,4], index: 4, kind: output, shape index: {}]
  %s5 = sld [smem:[#allocation0]]
  $region49: #{forward.19} parent=0
    _
  %s7 = ssub.s32 1, %s5
  %s8 = scalar_select 0, %s7, %s5
  loop: start=0, step=1, limit=4
  $region2: #{forward.19} parent=0 // loop_pre_header
    _
  $region3: #{forward.19} parent=0 // loop_header
    %s10 = sphi 0, %s14
    %p11 = scmp.ge.s32.totalorder %s10, 4
    %s17 = sphi 0, %s29
    %s18 = sphi 0, %s25
    %s19 = sphi 0, %s17
    %s20 = sphi 0, %s18
    %s21 = sphi 0, %s19
    %s22 = sphi 0, %s20
    %s34 = sphi 0, %s36
    %s37 = sphi 0, %s34
    %s38 = sphi 0, %s37
    %s54 = sphi 0, %s38
    %s58 = sphi 0, %s58
    %s60 = sphi 0, %s58
    %s61 = sphi 0, %s60
    %s75 = sphi 0, %s61
    %s79 = sphi 0, %s79
    %s81 = sphi 0, %s79
    %s82 = sphi 0, %s81
    %s96 = sphi 0, %s82
    %s100 = sphi 0, %s100
    %s102 = sphi 0, %s100
    %s103 = sphi 0, %s102
    %s117 = sphi 0, %s103
    %s125 = sphi 0, %s127
    %s128 = sphi 0, %s125
    %s129 = sphi 0, %s128
    %s145 = sphi 0, %s129
  $region4: #{forward.19} parent=0 // loop_header_branch
    %13 = sbr.rel (%p11) target = $region8
  $region5: #{forward.19} parent=0 // loop_body
    %s15 = ssub.s32 %s10, 1
    %s16 = ssub.s32 %s10, 2
    %s23 = sadd.s32 1, %s18
    %p24 = scmp.ge.s32.totalorder %s23, 1
    %s25 = scalar_select %p24, 0, %s23
    %s26 = sadd.s32 1, %s17
    %s27 = scalar_select %p24, %s26, %s17
    %p28 = scmp.ge.s32.totalorder %s27, 2
    %s29 = scalar_select %p28, 0, %s27
    %s30 = ssub.s32 %s17, %s29
    %s31 = ssub.s32 %s18, %s25
    %s32 = sor.u32 %s30, %s31
    %p33 = scmp.eq.s32.totalorder %s32, 0
    %s35 = sadd.s32 %s34, 1
    %s36 = scalar_select %p33, %s34, %s35
    %p39 = pneg %p33
    %p40 = scmp.eq.s32.totalorder %s10, 1
    %p41 = por %p39, %p40
    %p42 = scmp.ne.s32.totalorder %s34, %s37
    %p43 = scmp.eq.s32.totalorder %s10, 0
    %p44 = por %p42, %p43
    %p45 = scmp.ne.s32.totalorder %s34, %s37
    %p46 = scmp.eq.s32.totalorder %s15, 1
    %p47 = por %p45, %p46
    %p48 = scmp.ne.s32.totalorder %s37, %s38
    %p49 = scmp.eq.s32.totalorder %s15, 0
    %p50 = por %p48, %p49
    %p51 = scmp.ne.s32.totalorder %s37, %s38
    %p52 = scmp.eq.s32.totalorder %s16, 1
    %p53 = por %p51, %p52
    %p55 = scmp.ne.s32.totalorder %s38, %s54
    %p56 = scmp.eq.s32.totalorder %s16, 0
    %p57 = por %p55, %p56
    %s59 = sadd.s32 %s58, 1
    %p62 = scmp.eq.s32.totalorder %s10, 1
    %p63 = scmp.ne.s32.totalorder %s58, %s60
    %p64 = scmp.eq.s32.totalorder %s10, 0
    %p65 = por %p63, %p64
    %p66 = scmp.ne.s32.totalorder %s58, %s60
    %p67 = scmp.eq.s32.totalorder %s15, 1
    %p68 = por %p66, %p67
    %p69 = scmp.ne.s32.totalorder %s60, %s61
    %p70 = scmp.eq.s32.totalorder %s15, 0
    %p71 = por %p69, %p70
    %p72 = scmp.ne.s32.totalorder %s60, %s61
    %p73 = scmp.eq.s32.totalorder %s16, 1
    %p74 = por %p72, %p73
    %p76 = scmp.ne.s32.totalorder %s61, %s75
    %p77 = scmp.eq.s32.totalorder %s16, 0
    %p78 = por %p76, %p77
    %s80 = sadd.s32 %s79, 1
    %p83 = scmp.eq.s32.totalorder %s10, 1
    %p84 = scmp.ne.s32.totalorder %s79, %s81
    %p85 = scmp.eq.s32.totalorder %s10, 0
    %p86 = por %p84, %p85
    %p87 = scmp.ne.s32.totalorder %s79, %s81
    %p88 = scmp.eq.s32.totalorder %s15, 1
    %p89 = por %p87, %p88
    %p90 = scmp.ne.s32.totalorder %s81, %s82
    %p91 = scmp.eq.s32.totalorder %s15, 0
    %p92 = por %p90, %p91
    %p93 = scmp.ne.s32.totalorder %s81, %s82
    %p94 = scmp.eq.s32.totalorder %s16, 1
    %p95 = por %p93, %p94
    %p97 = scmp.ne.s32.totalorder %s82, %s96
    %p98 = scmp.eq.s32.totalorder %s16, 0
    %p99 = por %p97, %p98
    %s101 = sadd.s32 %s100, 1
    %p104 = scmp.eq.s32.totalorder %s10, 1
    %p105 = scmp.ne.s32.totalorder %s100, %s102
    %p106 = scmp.eq.s32.totalorder %s10, 0
    %p107 = por %p105, %p106
    %p108 = scmp.ne.s32.totalorder %s100, %s102
    %p109 = scmp.eq.s32.totalorder %s15, 1
    %p110 = por %p108, %p109
    %p111 = scmp.ne.s32.totalorder %s102, %s103
    %p112 = scmp.eq.s32.totalorder %s15, 0
    %p113 = por %p111, %p112
    %p114 = scmp.ne.s32.totalorder %s102, %s103
    %p115 = scmp.eq.s32.totalorder %s16, 1
    %p116 = por %p114, %p115
    %p118 = scmp.ne.s32.totalorder %s103, %s117
    %p119 = scmp.eq.s32.totalorder %s16, 0
    %p120 = por %p118, %p119
    %s121 = ssub.s32 %s17, %s29
    %s122 = ssub.s32 %s18, %s25
    %s123 = sor.u32 %s121, %s122
    %p124 = scmp.eq.s32.totalorder %s123, 0
    %s126 = sadd.s32 %s125, 1
    %s127 = scalar_select %p124, %s125, %s126
    %p130 = pneg %p124
    %p131 = scmp.eq.s32.totalorder %s10, 1
    %p132 = por %p130, %p131
    %p133 = scmp.ne.s32.totalorder %s125, %s128
    %p134 = scmp.eq.s32.totalorder %s10, 0
    %p135 = por %p133, %p134
    %p136 = scmp.ne.s32.totalorder %s125, %s128
    %p137 = scmp.eq.s32.totalorder %s15, 1
    %p138 = por %p136, %p137
    %p139 = scmp.ne.s32.totalorder %s128, %s129
    %p140 = scmp.eq.s32.totalorder %s15, 0
    %p141 = por %p139, %p140
    %p142 = scmp.ne.s32.totalorder %s128, %s129
    %p143 = scmp.eq.s32.totalorder %s16, 1
    %p144 = por %p142, %p143
    %p146 = scmp.ne.s32.totalorder %s129, %s145
    %p147 = scmp.eq.s32.totalorder %s16, 0
    %p148 = por %p146, %p147
    %p149 = scmp.le.s32.totalorder 1, %s10
    %p150 = scmp.lt.s32.totalorder %s10, 3
    %p151 = pnand %p149, %p150
    %p152 = pneg %p151
    // Predicated region
    $region9: #{forward.19} parent=5 // pred_check
      _
    $region10: #{forward.19} parent=5 // pred_check_branch
      %154 = sbr.rel (%p151) target = $region12
    $region11: #{forward.19} parent=5 // pred_region
      %s155 = ssub.s32 %s10, 1
      // Predicated region
      $region13: #{forward.19} parent=11 // pred_check
        %p156 = pneg %p71
      $region14: #{forward.19} parent=11 // pred_check_branch
        %158 = sbr.rel (%p156) target = $region16
      $region15: #{forward.19} parent=11 // pred_region
        _
      $region16: #{forward.19} parent=11 // pred_fallthru
        _
      // Predicated region
      $region17: #{forward.19} parent=11 // pred_check
        %p159 = pneg %p92
      $region18: #{forward.19} parent=11 // pred_check_branch
        %161 = sbr.rel (%p159) target = $region20
      $region19: #{forward.19} parent=11 // pred_region
        _
      $region20: #{forward.19} parent=11 // pred_fallthru
        _
      // Predicated region
      $region21: #{forward.19} parent=11 // pred_check
        %p162 = pneg %p113
      $region22: #{forward.19} parent=11 // pred_check_branch
        %164 = sbr.rel (%p162) target = $region24
      $region23: #{forward.19} parent=11 // pred_region
        _
      $region24: #{forward.19} parent=11 // pred_fallthru
        _
    $region12: #{forward.19} parent=5 // pred_fallthru
      _
    %p165 = scmp.lt.s32.totalorder %s10, 2
    // Predicated region
    $region25: #{forward.19} parent=5 // pred_check
      %p166 = pneg %p165
    $region26: #{forward.19} parent=5 // pred_check_branch
      %168 = sbr.rel (%p166) target = $region28
    $region27: #{forward.19} parent=5 // pred_region
      // Predicated region
      $region29: #{forward.19} parent=27 // pred_check
        %p169 = pneg %p44
      $region30: #{forward.19} parent=27 // pred_check_branch
        %171 = sbr.rel (%p169) target = $region32
      $region31: #{forward.19} parent=27 // pred_region
        %p172 = scmp.lt.s32.totalorder %s17, 1
        %s173 = scalar_select %p172, %s17, 1
        %p174 = scmp.lt.s32.totalorder %s18, 0
        %s175 = scalar_select %p174, %s18, 0
        %s176 = smul.addr %s173, 16
        %s177 = sadd.s32 %s175, %s176
        %s178 = smul.addr %s177, 4
        %s179 = scalar_lea.vmem %s0, %s178
      $region32: #{forward.19} parent=27 // pred_fallthru
        _
    $region28: #{forward.19} parent=5 // pred_fallthru
      _
    %p180 = scmp.le.s32.totalorder 1, %s10
    %p181 = scmp.lt.s32.totalorder %s10, 3
    %p182 = pnand %p180, %p181
    %p183 = pneg %p182
    // Predicated region
    $region33: #{forward.19} parent=5 // pred_check
      _
    $region34: #{forward.19} parent=5 // pred_check_branch
      %185 = sbr.rel (%p182) target = $region36
    $region35: #{forward.19} parent=5 // pred_region
      %s186 = ssub.s32 %s10, 1
      %p187 = scmp.lt.s32.totalorder %s19, 1
      %s188 = scalar_select %p187, %s19, 1
      %p189 = scmp.lt.s32.totalorder %s20, 0
      %s190 = scalar_select %p189, %s20, 0
      %s191 = smul.addr %s188, 16
      %s192 = sadd.s32 %s190, %s191
      %s193 = smul.addr %s192, 4
      %s194 = scalar_lea.vmem %s0, %s193
      %p195 = pneg %p50
      %p196 = pneg %p47
      %p197 = pneg %p71
      %p198 = pneg %p68
      %p199 = pneg %p92
      %p200 = pneg %p89
      %p201 = pneg %p113
      %p202 = pneg %p110
      %p203 = pneg %p141
      %p204 = pneg %p138
      %p205 = scmp.lt.s32.totalorder %s19, 1
      %s206 = scalar_select %p205, %s19, 1
      %p207 = scmp.lt.s32.totalorder %s20, 0
      %s208 = scalar_select %p207, %s20, 0
      %s209 = smul.addr %s206, 8
      %s210 = sadd.s32 %s208, %s209
      %s211 = smul.addr %s210, 4
      %s212 = scalar_lea.vmem %s4, %s211
      %p213 = scmp.lt.s32.totalorder %s19, 1
      %s214 = scalar_select %p213, %s19, 1
      %p215 = scmp.lt.s32.totalorder %s20, 0
      %s216 = scalar_select %p215, %s20, 0
      %s217 = smul.addr %s214, 16
      %s218 = sadd.s32 %s216, %s217
      %s219 = smul.addr %s218, 4
      %s220 = scalar_lea.vmem %s0, %s219
      %p221 = scmp.lt.s32.totalorder %s19, 1
      %s222 = scalar_select %p221, %s19, 1
      %p223 = scmp.lt.s32.totalorder %s20, 0
      %s224 = scalar_select %p223, %s20, 0
      %s225 = smul.addr %s222, 8
      %s226 = sadd.s32 %s224, %s225
      %s227 = smul.addr %s226, 4
      %s228 = scalar_lea.vmem %s4, %s227
      %v230 = vld [vmem:[%s1] sm:$0xf]
      %v231 = vld [vmem:[%s1 + $0x4] sm:$0xf]
      %v232 = vld [vmem:[%s1 + $0x8] sm:$0xf]
      %v233 = vld [vmem:[%s1 + $0xc] sm:$0xf]
      %v234 = vld [vmem:[%s1 + $0x10] sm:$0xf]
      %v235 = vld [vmem:[%s1 + $0x14] sm:$0xf]
      %v236 = vld [vmem:[%s1 + $0x18] sm:$0xf]
      %v237 = vld [vmem:[%s1 + $0x1c] sm:$0xf]
      %v238 = vld [vmem:[%s220] sm:$0xf]
      %v239 = vld [vmem:[%s220 + $0x4] sm:$0xf]
      %v240 = vld [vmem:[%s220 + $0x8] sm:$0xf]
      %v241 = vld [vmem:[%s220 + $0xc] sm:$0xf]
      %v242 = vld [vmem:[%s220 + $0x10] sm:$0xf]
      %v243 = vld [vmem:[%s220 + $0x14] sm:$0xf]
      %v244 = vld [vmem:[%s220 + $0x18] sm:$0xf]
      %v245 = vld [vmem:[%s220 + $0x1c] sm:$0xf]
      %v246 = vld [vmem:[%s220 + $0x20] sm:$0xf]
      %v247 = vld [vmem:[%s220 + $0x24] sm:$0xf]
      %v248 = vld [vmem:[%s220 + $0x28] sm:$0xf]
      %v249 = vld [vmem:[%s220 + $0x2c] sm:$0xf]
      %v250 = vld [vmem:[%s220 + $0x30] sm:$0xf]
      %v251 = vld [vmem:[%s220 + $0x34] sm:$0xf]
      %v252 = vld [vmem:[%s220 + $0x38] sm:$0xf]
      %v253 = vld [vmem:[%s220 + $0x3c] sm:$0xf]
      %v262 = vunpack.c.l.b16 %v230
      %v263 = vunpack.c.l.b16 %v231
      %v264 = vunpack.c.l.b16 %v232
      %v265 = vunpack.c.l.b16 %v233
      %v266 = vunpack.c.l.b16 %v234
      %v267 = vunpack.c.l.b16 %v235
      %v268 = vunpack.c.l.b16 %v236
      %v269 = vunpack.c.l.b16 %v237
      %v270 = vpack.c.b16 %v263, %v262
      %v271 = vpack.c.b16 %v265, %v264
      %v272 = vpack.c.b16 %v267, %v266
      %v273 = vpack.c.b16 %v269, %v268
      %v294 = vunpack.c.l.b16 %v238
      %v295 = vunpack.c.l.b16 %v239
      %v296 = vunpack.c.l.b16 %v240
      %v297 = vunpack.c.l.b16 %v241
      %v298 = vunpack.c.l.b16 %v242
      %v299 = vunpack.c.l.b16 %v243
      %v300 = vunpack.c.l.b16 %v244
      %v301 = vunpack.c.l.b16 %v245
      %v302 = vunpack.c.l.b16 %v246
      %v303 = vunpack.c.l.b16 %v247
      %v304 = vunpack.c.l.b16 %v248
      %v305 = vunpack.c.l.b16 %v249
      %v306 = vunpack.c.l.b16 %v250
      %v307 = vunpack.c.l.b16 %v251
      %v308 = vunpack.c.l.b16 %v252
      %v309 = vunpack.c.l.b16 %v253
      %v310 = vpack.c.b16 %v295, %v294
      %v311 = vpack.c.b16 %v297, %v296
      %v312 = vpack.c.b16 %v299, %v298
      %v313 = vpack.c.b16 %v301, %v300
      %v314 = vpack.c.b16 %v303, %v302
      %v315 = vpack.c.b16 %v305, %v304
      %v316 = vpack.c.b16 %v307, %v306
      %v317 = vpack.c.b16 %v309, %v308
      %326 = vmatprep.subr.bf16.mxu0 0
      %327 = vmatpush1.bf16.msra.mxu0 %v317
      %328 = vmatprep.subr.bf16.mxu0 0
      %329 = vmatpush1.bf16.msra.mxu0 %v316
      %330 = vmatprep.subr.bf16.mxu0 0
      %331 = vmatpush1.bf16.msra.mxu0 %v315
      %332 = vmatprep.subr.bf16.mxu0 0
      %333 = vmatpush1.bf16.msra.mxu0 %v314
      %334 = vmatprep.subr.bf16.mxu0 0
      %335 = vmatpush1.bf16.msra.mxu0 %v313
      %336 = vmatprep.subr.bf16.mxu0 0
      %337 = vmatpush1.bf16.msra.mxu0 %v312
      %338 = vmatprep.subr.bf16.mxu0 0
      %339 = vmatpush1.bf16.msra.mxu0 %v311
      %340 = vmatprep.subr.bf16.mxu0 0
      %341 = vmatpush1.bf16.msra.mxu0 %v310
      %342 = vmatprep.subr.bf16.mxu0 0
      %343 = vmatpush2.bf16.msra.mxu0 0
      %344 = vmatprep.subr.bf16.mxu0 0
      %345 = vmatpush2.bf16.msra.mxu0 0
      %346 = vmatprep.subr.bf16.mxu0 0
      %347 = vmatpush2.bf16.msra.mxu0 0
      %348 = vmatprep.subr.bf16.mxu0 0
      %349 = vmatpush2.bf16.msra.mxu0 0
      %350 = vmatprep.subr.bf16.mxu0 0
      %351 = vmatpush2.bf16.msra.mxu0 0
      %352 = vmatprep.subr.bf16.mxu0 0
      %353 = vmatpush2.bf16.msra.mxu0 0
      %354 = vmatprep.subr.bf16.mxu0 0
      %355 = vmatpush2.bf16.msra.mxu0 0
      %356 = vmatprep.subr.bf16.mxu0 0
      %357 = vmatpush2.bf16.msra.mxu0 0
      %358 = vmatprep.mubr.bf16.mxu0 0
      %359 = vmatmul.mubr.bf16.gmra.mxu0 %v270
      %v360 = vpop.f32.mrf.mxu0
      %v361 = vadd.f32 0.0, %v360
      %v362 = vpop.f32.mrf.mxu0
      %v363 = vpop.f32.mrf.mxu0
      %v364 = vadd.f32 0.0, %v363
      %v365 = vpop.f32.mrf.mxu0
      %366 = vmatprep.mubr.bf16.mxu0 0
      %367 = vmatmul.mubr.bf16.gmra.mxu0 %v271
      %v368 = vpop.f32.mrf.mxu0
      %v369 = vadd.f32 0.0, %v368
      %v370 = vpop.f32.mrf.mxu0
      %v371 = vpop.f32.mrf.mxu0
      %v372 = vadd.f32 0.0, %v371
      %v373 = vpop.f32.mrf.mxu0
      %374 = vmatprep.mubr.bf16.mxu0 0
      %375 = vmatmul.mubr.bf16.gmra.mxu0 %v272
      %v376 = vpop.f32.mrf.mxu0
      %v377 = vadd.f32 0.0, %v376
      %v378 = vpop.f32.mrf.mxu0
      %v379 = vpop.f32.mrf.mxu0
      %v380 = vadd.f32 0.0, %v379
      %v381 = vpop.f32.mrf.mxu0
      %382 = vmatprep.mubr.bf16.mxu0 0
      %383 = vmatmul.mubr.bf16.gmra.mxu0 %v273
      %v384 = vpop.f32.mrf.mxu0
      %v385 = vadd.f32 0.0, %v384
      %v386 = vpop.f32.mrf.mxu0
      %v387 = vpop.f32.mrf.mxu0
      %v388 = vadd.f32 0.0, %v387
      %v389 = vpop.f32.mrf.mxu0
      %390 = vdwg.mxu0
      %v391 = vld [vmem:[%s2] sm:$0xff]
      %v392 = vld [vmem:[%s2 + $0x8] sm:$0xff]
      %v393 = vld [vmem:[%s2 + $0x10] sm:$0xff]
      %v394 = vld [vmem:[%s2 + $0x18] sm:$0xff]
      %v395 = vld [vmem:[%s2 + $0x20] sm:$0xff]
      %v396 = vld [vmem:[%s2 + $0x28] sm:$0xff]
      %v397 = vld [vmem:[%s2 + $0x30] sm:$0xff]
      %v398 = vld [vmem:[%s2 + $0x38] sm:$0xff]
      %400 = vset.pattern.permute.xlu0 0
      %401 = vperm.xlu0 %400, %v391
      %v402 = vpop.permute.xlu0 %401
      %405 = vset.pattern.permute.xlu0 0
      %406 = vperm.xlu0 %405, %v392
      %v407 = vpop.permute.xlu0 %406
      %410 = vset.pattern.permute.xlu0 0
      %411 = vperm.xlu0 %410, %v393
      %v412 = vpop.permute.xlu0 %411
      %415 = vset.pattern.permute.xlu0 0
      %416 = vperm.xlu0 %415, %v394
      %v417 = vpop.permute.xlu0 %416
      %420 = vset.pattern.permute.xlu0 0
      %421 = vperm.xlu0 %420, %v395
      %v422 = vpop.permute.xlu0 %421
      %425 = vset.pattern.permute.xlu0 0
      %426 = vperm.xlu0 %425, %v396
      %v427 = vpop.permute.xlu0 %426
      %430 = vset.pattern.permute.xlu0 0
      %431 = vperm.xlu0 %430, %v397
      %v432 = vpop.permute.xlu0 %431
      %435 = vset.pattern.permute.xlu0 0
      %436 = vperm.xlu0 %435, %v398
      %v437 = vpop.permute.xlu0 %436
      %v439 = vmul.f32 %v361, %v402
      %v440 = vmul.f32 %v364, %v407
      %v441 = vmul.f32 %v369, %v412
      %v442 = vmul.f32 %v372, %v417
      %v443 = vmul.f32 %v377, %v422
      %v444 = vmul.f32 %v380, %v427
      %v445 = vmul.f32 %v385, %v432
      %v446 = vmul.f32 %v388, %v437
      %v447 = vld [vmem:[%s3] sm:$0xff]
      %v448 = vld [vmem:[%s3 + $0x8] sm:$0xff]
      %v449 = vld [vmem:[%s3 + $0x10] sm:$0xff]
      %v450 = vld [vmem:[%s3 + $0x18] sm:$0xff]
      %v451 = vld [vmem:[%s3 + $0x20] sm:$0xff]
      %v452 = vld [vmem:[%s3 + $0x28] sm:$0xff]
      %v453 = vld [vmem:[%s3 + $0x30] sm:$0xff]
      %v454 = vld [vmem:[%s3 + $0x38] sm:$0xff]
      %456 = vset.pattern.permute.xlu0 0
      %457 = vperm.xlu0 %456, %v447
      %v458 = vpop.permute.xlu0 %457
      %461 = vset.pattern.permute.xlu0 0
      %462 = vperm.xlu0 %461, %v448
      %v463 = vpop.permute.xlu0 %462
      %466 = vset.pattern.permute.xlu0 0
      %467 = vperm.xlu0 %466, %v449
      %v468 = vpop.permute.xlu0 %467
      %471 = vset.pattern.permute.xlu0 0
      %472 = vperm.xlu0 %471, %v450
      %v473 = vpop.permute.xlu0 %472
      %476 = vset.pattern.permute.xlu0 0
      %477 = vperm.xlu0 %476, %v451
      %v478 = vpop.permute.xlu0 %477
      %481 = vset.pattern.permute.xlu0 0
      %482 = vperm.xlu0 %481, %v452
      %v483 = vpop.permute.xlu0 %482
      %486 = vset.pattern.permute.xlu0 0
      %487 = vperm.xlu0 %486, %v453
      %v488 = vpop.permute.xlu0 %487
      %491 = vset.pattern.permute.xlu0 0
      %492 = vperm.xlu0 %491, %v454
      %v493 = vpop.permute.xlu0 %492
      %v495 = vadd.f32 %v439, %v458
      %v496 = vadd.f32 %v440, %v463
      %v497 = vadd.f32 %v441, %v468
      %v498 = vadd.f32 %v442, %v473
      %v499 = vadd.f32 %v443, %v478
      %v500 = vadd.f32 %v444, %v483
      %v501 = vadd.f32 %v445, %v488
      %v502 = vadd.f32 %v446, %v493
      %v503 = vpack.c.bf16 %v496, %v495
      %v504 = vpack.c.bf16 %v498, %v497
      %v505 = vpack.c.bf16 %v500, %v499
      %v506 = vpack.c.bf16 %v502, %v501
      %v511 = vunpack.c.l.b16 %v503
      %v512 = vunpack.c.h.b16 %v503
      %v513 = vunpack.c.l.b16 %v504
      %v514 = vunpack.c.h.b16 %v504
      %v515 = vunpack.c.l.b16 %v505
      %v516 = vunpack.c.h.b16 %v505
      %v517 = vunpack.c.l.b16 %v506
      %v518 = vunpack.c.h.b16 %v506
      %v519 = vpack.c.b16 %v511, %v511
      %v520 = vpack.c.b16 %v512, %v512
      %v521 = vpack.c.b16 %v513, %v513
      %v522 = vpack.c.b16 %v514, %v514
      %v523 = vpack.c.b16 %v515, %v515
      %v524 = vpack.c.b16 %v516, %v516
      %v525 = vpack.c.b16 %v517, %v517
      %v526 = vpack.c.b16 %v518, %v518
      %vm535 = vcmask 27648
      %536 = vst.msk [vmem:[%s228] sm:$0xf] %vm535, %v519
      %537 = vst.msk [vmem:[%s228 + $0x4] sm:$0xf] %vm535, %v520
      %538 = vst.msk [vmem:[%s228 + $0x8] sm:$0xf] %vm535, %v521
      %539 = vst.msk [vmem:[%s228 + $0xc] sm:$0xf] %vm535, %v522
      %540 = vst.msk [vmem:[%s228 + $0x10] sm:$0xf] %vm535, %v523
      %541 = vst.msk [vmem:[%s228 + $0x14] sm:$0xf] %vm535, %v524
      %542 = vst.msk [vmem:[%s228 + $0x18] sm:$0xf] %vm535, %v525
      %543 = vst.msk [vmem:[%s228 + $0x1c] sm:$0xf] %vm535, %v526
      %p544 = scmp.lt.s32.totalorder %s19, 1
      %s545 = scalar_select %p544, %s19, 1
      %p546 = scmp.lt.s32.totalorder %s20, 0
      %s547 = scalar_select %p546, %s20, 0
      %s548 = smul.addr %s545, 8
      %s549 = sadd.s32 %s547, %s548
      %s550 = smul.addr %s549, 4
      %s551 = scalar_lea.vmem %s4, %s550
      // Predicated region
      $region37: #{forward.19} parent=35 // pred_check
        %p552 = pneg %p138
      $region38: #{forward.19} parent=35 // pred_check_branch
        %554 = sbr.rel (%p552) target = $region40
      $region39: #{forward.19} parent=35 // pred_region
        _
      $region40: #{forward.19} parent=35 // pred_fallthru
        _
    $region36: #{forward.19} parent=5 // pred_fallthru
      _
    %p555 = scmp.le.s32.totalorder 2, %s10
    // Predicated region
    $region41: #{forward.19} parent=5 // pred_check
      %p556 = pneg %p555
    $region42: #{forward.19} parent=5 // pred_check_branch
      %558 = sbr.rel (%p556) target = $region44
    $region43: #{forward.19} parent=5 // pred_region
      %s559 = ssub.s32 %s10, 2
      // Predicated region
      $region45: #{forward.19} parent=43 // pred_check
        %p560 = pneg %p144
      $region46: #{forward.19} parent=43 // pred_check_branch
        %562 = sbr.rel (%p560) target = $region48
      $region47: #{forward.19} parent=43 // pred_region
        %p563 = scmp.lt.s32.totalorder %s21, 1
        %s564 = scalar_select %p563, %s21, 1
        %p565 = scmp.lt.s32.totalorder %s22, 0
        %s566 = scalar_select %p565, %s22, 0
        %s567 = smul.addr %s564, 8
        %s568 = sadd.s32 %s566, %s567
        %s569 = smul.addr %s568, 4
        %s570 = scalar_lea.vmem %s4, %s569
      $region48: #{forward.19} parent=43 // pred_fallthru
        _
    $region44: #{forward.19} parent=5 // pred_fallthru
      _
  $region6: #{forward.19} parent=0 // loop_footer
    %s14 = sadd.s32 1, %s10
  $region7: #{forward.19} parent=0 // loop_footer_branch
    %9 = sbr.rel target = $region3
  $region8: #{forward.19} parent=0 // loop_exit
    _

// kernel: forward.15
$region0: #{forward.15}
  #allocation0 [shape = 'u32[]', space=smem, size = 0x4, offset = 0x4, fixed_abs, tag = 'smem constant byte address 0x4 - core index']
  #allocation1 [shape = 'u32[144,128]{1,0:T(1,128)}', space=vmem, size = 0x12000, scoped, tag = 'internal scratch']
  %s0 = inlined_call_operand.vmem [shape: bf16[2,512], index: 0, kind: input, shape index: {}]
  %s1 = inlined_call_operand.vmem [shape: bf16[512,256], index: 1, kind: input, shape index: {}]
  %s2 = inlined_call_operand.vmem [shape: f32[1,256], index: 2, kind: input, shape index: {}]
  %s3 = inlined_call_operand.vmem [shape: f32[1,256], index: 3, kind: input, shape index: {}]
  %s4 = inlined_call_operand.vmem [shape: bf16[2,256], index: 4, kind: output, shape index: {}]
  %s5 = sld [smem:[#allocation0]]
  $region26: #{forward.15} parent=0
    _
  %s7 = ssub.s32 1, %s5
  %s8 = scalar_select 0, %s7, %s5
  // Predicated region
  $region2: #{forward.15} parent=0 // pred_check
    _
  $region3: #{forward.15} parent=0 // pred_check_branch
    %10 = sbr.rel (0) target = $region5
  $region4: #{forward.15} parent=0 // pred_region
    _
  $region5: #{forward.15} parent=0 // pred_fallthru
    _
  // Predicated region
  $region6: #{forward.15} parent=0 // pred_check
    _
  $region7: #{forward.15} parent=0 // pred_check_branch
    %12 = sbr.rel (0) target = $region9
  $region8: #{forward.15} parent=0 // pred_region
    _
  $region9: #{forward.15} parent=0 // pred_fallthru
    _
  // Predicated region
  $region10: #{forward.15} parent=0 // pred_check
    _
  $region11: #{forward.15} parent=0 // pred_check_branch
    %14 = sbr.rel (0) target = $region13
  $region12: #{forward.15} parent=0 // pred_region
    _
  $region13: #{forward.15} parent=0 // pred_fallthru
    _
  // Predicated region
  $region14: #{forward.15} parent=0 // pred_check
    _
  $region15: #{forward.15} parent=0 // pred_check_branch
    %16 = sbr.rel (0) target = $region17
  $region16: #{forward.15} parent=0 // pred_region
    _
  $region17: #{forward.15} parent=0 // pred_fallthru
    _
  %v17 = vld [vmem:[%s0] sm:$0xf]
  %v18 = vld [vmem:[%s1] sm:$0xff]
  %v19 = vld [vmem:[%s1 + $0x8] sm:$0xff]
  %v20 = vld [vmem:[%s1 + $0x10] sm:$0xff]
  %v21 = vld [vmem:[%s1 + $0x18] sm:$0xff]
  %v22 = vld [vmem:[%s1 + $0x20] sm:$0xff]
  %v23 = vld [vmem:[%s1 + $0x28] sm:$0xff]
  %v24 = vld [vmem:[%s1 + $0x30] sm:$0xff]
  %v25 = vld [vmem:[%s1 + $0x38] sm:$0xff]
  %v26 = vld [vmem:[%s1 + $0x40] sm:$0xff]
  %v27 = vld [vmem:[%s1 + $0x48] sm:$0xff]
  %v28 = vld [vmem:[%s1 + $0x50] sm:$0xff]
  %v29 = vld [vmem:[%s1 + $0x58] sm:$0xff]
  %v30 = vld [vmem:[%s1 + $0x60] sm:$0xff]
  %v31 = vld [vmem:[%s1 + $0x68] sm:$0xff]
  %v32 = vld [vmem:[%s1 + $0x70] sm:$0xff]
  %v33 = vld [vmem:[%s1 + $0x78] sm:$0xff]
  %v34 = vld [vmem:[%s1 + $0x80] sm:$0xff]
  %v35 = vld [vmem:[%s1 + $0x88] sm:$0xff]
  %v36 = vld [vmem:[%s1 + $0x90] sm:$0xff]
  %v37 = vld [vmem:[%s1 + $0x98] sm:$0xff]
  %v38 = vld [vmem:[%s1 + $0xa0] sm:$0xff]
  %v39 = vld [vmem:[%s1 + $0xa8] sm:$0xff]
  %v40 = vld [vmem:[%s1 + $0xb0] sm:$0xff]
  %v41 = vld [vmem:[%s1 + $0xb8] sm:$0xff]
  %v42 = vld [vmem:[%s1 + $0xc0] sm:$0xff]
  %v43 = vld [vmem:[%s1 + $0xc8] sm:$0xff]
  %v44 = vld [vmem:[%s1 + $0xd0] sm:$0xff]
  %v45 = vld [vmem:[%s1 + $0xd8] sm:$0xff]
  %v46 = vld [vmem:[%s1 + $0xe0] sm:$0xff]
  %v47 = vld [vmem:[%s1 + $0xe8] sm:$0xff]
  %v48 = vld [vmem:[%s1 + $0xf0] sm:$0xff]
  %v49 = vld [vmem:[%s1 + $0xf8] sm:$0xff]
  %v50 = vld [vmem:[%s1 + $0x100] sm:$0xff]
  %v51 = vld [vmem:[%s1 + $0x108] sm:$0xff]
  %v52 = vld [vmem:[%s1 + $0x110] sm:$0xff]
  %v53 = vld [vmem:[%s1 + $0x118] sm:$0xff]
  %v54 = vld [vmem:[%s1 + $0x120] sm:$0xff]
  %v55 = vld [vmem:[%s1 + $0x128] sm:$0xff]
  %v56 = vld [vmem:[%s1 + $0x130] sm:$0xff]
  %v57 = vld [vmem:[%s1 + $0x138] sm:$0xff]
  %v58 = vld [vmem:[%s1 + $0x140] sm:$0xff]
  %v59 = vld [vmem:[%s1 + $0x148] sm:$0xff]
  %v60 = vld [vmem:[%s1 + $0x150] sm:$0xff]
  %v61 = vld [vmem:[%s1 + $0x158] sm:$0xff]
  %v62 = vld [vmem:[%s1 + $0x160] sm:$0xff]
  %v63 = vld [vmem:[%s1 + $0x168] sm:$0xff]
  %v64 = vld [vmem:[%s1 + $0x170] sm:$0xff]
  %v65 = vld [vmem:[%s1 + $0x178] sm:$0xff]
  %v66 = vld [vmem:[%s1 + $0x180] sm:$0xff]
  %v67 = vld [vmem:[%s1 + $0x188] sm:$0xff]
  %v68 = vld [vmem:[%s1 + $0x190] sm:$0xff]
  %v69 = vld [vmem:[%s1 + $0x198] sm:$0xff]
  %v70 = vld [vmem:[%s1 + $0x1a0] sm:$0xff]
  %v71 = vld [vmem:[%s1 + $0x1a8] sm:$0xff]
  %v72 = vld [vmem:[%s1 + $0x1b0] sm:$0xff]
  %v73 = vld [vmem:[%s1 + $0x1b8] sm:$0xff]
  %v74 = vld [vmem:[%s1 + $0x1c0] sm:$0xff]
  %v75 = vld [vmem:[%s1 + $0x1c8] sm:$0xff]
  %v76 = vld [vmem:[%s1 + $0x1d0] sm:$0xff]
  %v77 = vld [vmem:[%s1 + $0x1d8] sm:$0xff]
  %v78 = vld [vmem:[%s1 + $0x1e0] sm:$0xff]
  %v79 = vld [vmem:[%s1 + $0x1e8] sm:$0xff]
  %v80 = vld [vmem:[%s1 + $0x1f0] sm:$0xff]
  %v81 = vld [vmem:[%s1 + $0x1f8] sm:$0xff]
  %v84 = vunpack.c.l.s4 1966171168
  %v85 = vunpack.c.0.s8 %v84
  %v86 = vlaneseq
  %v87 = vshrl.u32 %v86, 7
  %v88 = vsub.s32 %v85, %v87
  %v89 = vrot.slane %v17, %v88
  %v90 = vcombine.high %v89, %v89
  %v92 = vunpack.c.l.s4 1966171168
  %v93 = vunpack.c.0.s8 %v92
  %v94 = vlaneseq
  %v95 = vshrl.u32 %v94, 7
  %v96 = vsub.s32 %v93, %v95
  %v97 = vrot.slane %v89, %v96
  %v99 = vunpack.c.l.s4 1966171168
  %v100 = vunpack.c.0.s8 %v99
  %v101 = vlaneseq
  %v102 = vshrl.u32 %v101, 7
  %v103 = vsub.s32 %v100, %v102
  %v104 = vrot.slane %v90, %v103
  %v105 = vcombine.high %v97, %v97
  %v106 = vcombine.high %v104, %v104
  %v175 = vunpack.c.l.b16 %v18
  %v176 = vunpack.c.h.b16 %v18
  %v177 = vunpack.c.l.b16 %v19
  %v178 = vunpack.c.h.b16 %v19
  %v179 = vunpack.c.l.b16 %v20
  %v180 = vunpack.c.h.b16 %v20
  %v181 = vunpack.c.l.b16 %v21
  %v182 = vunpack.c.h.b16 %v21
  %v183 = vunpack.c.l.b16 %v22
  %v184 = vunpack.c.h.b16 %v22
  %v185 = vunpack.c.l.b16 %v23
  %v186 = vunpack.c.h.b16 %v23
  %v187 = vunpack.c.l.b16 %v24
  %v188 = vunpack.c.h.b16 %v24
  %v189 = vunpack.c.l.b16 %v25
  %v190 = vunpack.c.h.b16 %v25
  %v191 = vunpack.c.l.b16 %v26
  %v192 = vunpack.c.h.b16 %v26
  %v193 = vunpack.c.l.b16 %v27
  %v194 = vunpack.c.h.b16 %v27
  %v195 = vunpack.c.l.b16 %v28
  %v196 = vunpack.c.h.b16 %v28
  %v197 = vunpack.c.l.b16 %v29
  %v198 = vunpack.c.h.b16 %v29
  %v199 = vunpack.c.l.b16 %v30
  %v200 = vunpack.c.h.b16 %v30
  %v201 = vunpack.c.l.b16 %v31
  %v202 = vunpack.c.h.b16 %v31
  %v203 = vunpack.c.l.b16 %v32
  %v204 = vunpack.c.h.b16 %v32
  %v205 = vunpack.c.l.b16 %v33
  %v206 = vunpack.c.h.b16 %v33
  %v207 = vunpack.c.l.b16 %v34
  %v208 = vunpack.c.h.b16 %v34
  %v209 = vunpack.c.l.b16 %v35
  %v210 = vunpack.c.h.b16 %v35
  %v211 = vunpack.c.l.b16 %v36
  %v212 = vunpack.c.h.b16 %v36
  %v213 = vunpack.c.l.b16 %v37
  %v214 = vunpack.c.h.b16 %v37
  %v215 = vunpack.c.l.b16 %v38
  %v216 = vunpack.c.h.b16 %v38
  %v217 = vunpack.c.l.b16 %v39
  %v218 = vunpack.c.h.b16 %v39
  %v219 = vunpack.c.l.b16 %v40
  %v220 = vunpack.c.h.b16 %v40
  %v221 = vunpack.c.l.b16 %v41
  %v222 = vunpack.c.h.b16 %v41
  %v223 = vunpack.c.l.b16 %v42
  %v224 = vunpack.c.h.b16 %v42
  %v225 = vunpack.c.l.b16 %v43
  %v226 = vunpack.c.h.b16 %v43
  %v227 = vunpack.c.l.b16 %v44
  %v228 = vunpack.c.h.b16 %v44
  %v229 = vunpack.c.l.b16 %v45
  %v230 = vunpack.c.h.b16 %v45
  %v231 = vunpack.c.l.b16 %v46
  %v232 = vunpack.c.h.b16 %v46
  %v233 = vunpack.c.l.b16 %v47
  %v234 = vunpack.c.h.b16 %v47
  %v235 = vunpack.c.l.b16 %v48
  %v236 = vunpack.c.h.b16 %v48
  %v237 = vunpack.c.l.b16 %v49
  %v238 = vunpack.c.h.b16 %v49
  %v239 = vunpack.c.l.b16 %v50
  %v240 = vunpack.c.h.b16 %v50
  %v241 = vunpack.c.l.b16 %v51
  %v242 = vunpack.c.h.b16 %v51
  %v243 = vunpack.c.l.b16 %v52
  %v244 = vunpack.c.h.b16 %v52
  %v245 = vunpack.c.l.b16 %v53
  %v246 = vunpack.c.h.b16 %v53
  %v247 = vunpack.c.l.b16 %v54
  %v248 = vunpack.c.h.b16 %v54
  %v249 = vunpack.c.l.b16 %v55
  %v250 = vunpack.c.h.b16 %v55
  %v251 = vunpack.c.l.b16 %v56
  %v252 = vunpack.c.h.b16 %v56
  %v253 = vunpack.c.l.b16 %v57
  %v254 = vunpack.c.h.b16 %v57
  %v255 = vunpack.c.l.b16 %v58
  %v256 = vunpack.c.h.b16 %v58
  %v257 = vunpack.c.l.b16 %v59
  %v258 = vunpack.c.h.b16 %v59
  %v259 = vunpack.c.l.b16 %v60
  %v260 = vunpack.c.h.b16 %v60
  %v261 = vunpack.c.l.b16 %v61
  %v262 = vunpack.c.h.b16 %v61
  %v263 = vunpack.c.l.b16 %v62
  %v264 = vunpack.c.h.b16 %v62
  %v265 = vunpack.c.l.b16 %v63
  %v266 = vunpack.c.h.b16 %v63
  %v267 = vunpack.c.l.b16 %v64
  %v268 = vunpack.c.h.b16 %v64
  %v269 = vunpack.c.l.b16 %v65
  %v270 = vunpack.c.h.b16 %v65
  %v271 = vunpack.c.l.b16 %v66
  %v272 = vunpack.c.h.b16 %v66
  %v273 = vunpack.c.l.b16 %v67
  %v274 = vunpack.c.h.b16 %v67
  %v275 = vunpack.c.l.b16 %v68
  %v276 = vunpack.c.h.b16 %v68
  %v277 = vunpack.c.l.b16 %v69
  %v278 = vunpack.c.h.b16 %v69
  %v279 = vunpack.c.l.b16 %v70
  %v280 = vunpack.c.h.b16 %v70
  %v281 = vunpack.c.l.b16 %v71
  %v282 = vunpack.c.h.b16 %v71
  %v283 = vunpack.c.l.b16 %v72
  %v284 = vunpack.c.h.b16 %v72
  %v285 = vunpack.c.l.b16 %v73
  %v286 = vunpack.c.h.b16 %v73
  %v287 = vunpack.c.l.b16 %v74
  %v288 = vunpack.c.h.b16 %v74
  %v289 = vunpack.c.l.b16 %v75
  %v290 = vunpack.c.h.b16 %v75
  %v291 = vunpack.c.l.b16 %v76
  %v292 = vunpack.c.h.b16 %v76
  %v293 = vunpack.c.l.b16 %v77
  %v294 = vunpack.c.h.b16 %v77
  %v295 = vunpack.c.l.b16 %v78
  %v296 = vunpack.c.h.b16 %v78
  %v297 = vunpack.c.l.b16 %v79
  %v298 = vunpack.c.h.b16 %v79
  %v299 = vunpack.c.l.b16 %v80
  %v300 = vunpack.c.h.b16 %v80
  %v301 = vunpack.c.l.b16 %v81
  %v302 = vunpack.c.h.b16 %v81
  %v303 = vpack.c.b16 %v177, %v175
  %v304 = vpack.c.b16 %v178, %v176
  %v305 = vpack.c.b16 %v181, %v179
  %v306 = vpack.c.b16 %v182, %v180
  %v307 = vpack.c.b16 %v185, %v183
  %v308 = vpack.c.b16 %v186, %v184
  %v309 = vpack.c.b16 %v189, %v187
  %v310 = vpack.c.b16 %v190, %v188
  %v311 = vpack.c.b16 %v193, %v191
  %v312 = vpack.c.b16 %v194, %v192
  %v313 = vpack.c.b16 %v197, %v195
  %v314 = vpack.c.b16 %v198, %v196
  %v315 = vpack.c.b16 %v201, %v199
  %v316 = vpack.c.b16 %v202, %v200
  %v317 = vpack.c.b16 %v205, %v203
  %v318 = vpack.c.b16 %v206, %v204
  %v319 = vpack.c.b16 %v209, %v207
  %v320 = vpack.c.b16 %v210, %v208
  %v321 = vpack.c.b16 %v213, %v211
  %v322 = vpack.c.b16 %v214, %v212
  %v323 = vpack.c.b16 %v217, %v215
  %v324 = vpack.c.b16 %v218, %v216
  %v325 = vpack.c.b16 %v221, %v219
  %v326 = vpack.c.b16 %v222, %v220
  %v327 = vpack.c.b16 %v225, %v223
  %v328 = vpack.c.b16 %v226, %v224
  %v329 = vpack.c.b16 %v229, %v227
  %v330 = vpack.c.b16 %v230, %v228
  %v331 = vpack.c.b16 %v233, %v231
  %v332 = vpack.c.b16 %v234, %v232
  %v333 = vpack.c.b16 %v237, %v235
  %v334 = vpack.c.b16 %v238, %v236
  %v335 = vpack.c.b16 %v241, %v239
  %v336 = vpack.c.b16 %v242, %v240
  %v337 = vpack.c.b16 %v245, %v243
  %v338 = vpack.c.b16 %v246, %v244
  %v339 = vpack.c.b16 %v249, %v247
  %v340 = vpack.c.b16 %v250, %v248
  %v341 = vpack.c.b16 %v253, %v251
  %v342 = vpack.c.b16 %v254, %v252
  %v343 = vpack.c.b16 %v257, %v255
  %v344 = vpack.c.b16 %v258, %v256
  %v345 = vpack.c.b16 %v261, %v259
  %v346 = vpack.c.b16 %v262, %v260
  %v347 = vpack.c.b16 %v265, %v263
  %v348 = vpack.c.b16 %v266, %v264
  %v349 = vpack.c.b16 %v269, %v267
  %v350 = vpack.c.b16 %v270, %v268
  %v351 = vpack.c.b16 %v273, %v271
  %v352 = vpack.c.b16 %v274, %v272
  %v353 = vpack.c.b16 %v277, %v275
  %v354 = vpack.c.b16 %v278, %v276
  %v355 = vpack.c.b16 %v281, %v279
  %v356 = vpack.c.b16 %v282, %v280
  %v357 = vpack.c.b16 %v285, %v283
  %v358 = vpack.c.b16 %v286, %v284
  %v359 = vpack.c.b16 %v289, %v287
  %v360 = vpack.c.b16 %v290, %v288
  %v361 = vpack.c.b16 %v293, %v291
  %v362 = vpack.c.b16 %v294, %v292
  %v363 = vpack.c.b16 %v297, %v295
  %v364 = vpack.c.b16 %v298, %v296
  %v365 = vpack.c.b16 %v301, %v299
  %v366 = vpack.c.b16 %v302, %v300
  %431 = vmatprep.subr.bf16.mxu0 %v318
  %432 = vmatpush1.bf16.msra.mxu0 %v317
  %433 = vmatprep.subr.bf16.mxu0 %v316
  %434 = vmatpush1.bf16.msra.mxu0 %v315
  %435 = vmatprep.subr.bf16.mxu0 %v314
  %436 = vmatpush1.bf16.msra.mxu0 %v313
  %437 = vmatprep.subr.bf16.mxu0 %v312
  %438 = vmatpush1.bf16.msra.mxu0 %v311
  %439 = vmatprep.subr.bf16.mxu0 %v310
  %440 = vmatpush1.bf16.msra.mxu0 %v309
  %441 = vmatprep.subr.bf16.mxu0 %v308
  %442 = vmatpush1.bf16.msra.mxu0 %v307
  %443 = vmatprep.subr.bf16.mxu0 %v306
  %444 = vmatpush1.bf16.msra.mxu0 %v305
  %445 = vmatprep.subr.bf16.mxu0 %v304
  %446 = vmatpush1.bf16.msra.mxu0 %v303
  %447 = vmatprep.subr.bf16.mxu0 %v334
  %448 = vmatpush2.bf16.msra.mxu0 %v333
  %449 = vmatprep.subr.bf16.mxu0 %v332
  %450 = vmatpush2.bf16.msra.mxu0 %v331
  %451 = vmatprep.subr.bf16.mxu0 %v330
  %452 = vmatpush2.bf16.msra.mxu0 %v329
  %453 = vmatprep.subr.bf16.mxu0 %v328
  %454 = vmatpush2.bf16.msra.mxu0 %v327
  %455 = vmatprep.subr.bf16.mxu0 %v326
  %456 = vmatpush2.bf16.msra.mxu0 %v325
  %457 = vmatprep.subr.bf16.mxu0 %v324
  %458 = vmatpush2.bf16.msra.mxu0 %v323
  %459 = vmatprep.subr.bf16.mxu0 %v322
  %460 = vmatpush2.bf16.msra.mxu0 %v321
  %461 = vmatprep.subr.bf16.mxu0 %v320
  %462 = vmatpush2.bf16.msra.mxu0 %v319
  %463 = vmatprep.mubr.bf16.mxu0 %v104
  %464 = vmatmul.mubr.bf16.gmra.mxu0 %v97
  %v465 = vpop.f32.mrf.mxu0
  %v466 = vadd.f32 0.0, %v465
  %v467 = vpop.f32.mrf.mxu0
  %v468 = vadd.f32 0.0, %v467
  %v469 = vpop.f32.mrf.mxu0
  %v470 = vpop.f32.mrf.mxu0
  %471 = vdwg.mxu0
  %472 = vmatprep.subr.bf16.mxu0 %v350
  %473 = vmatpush1.bf16.msra.mxu0 %v349
  %474 = vmatprep.subr.bf16.mxu0 %v348
  %475 = vmatpush1.bf16.msra.mxu0 %v347
  %476 = vmatprep.subr.bf16.mxu0 %v346
  %477 = vmatpush1.bf16.msra.mxu0 %v345
  %478 = vmatprep.subr.bf16.mxu0 %v344
  %479 = vmatpush1.bf16.msra.mxu0 %v343
  %480 = vmatprep.subr.bf16.mxu0 %v342
  %481 = vmatpush1.bf16.msra.mxu0 %v341
  %482 = vmatprep.subr.bf16.mxu0 %v340
  %483 = vmatpush1.bf16.msra.mxu0 %v339
  %484 = vmatprep.subr.bf16.mxu0 %v338
  %485 = vmatpush1.bf16.msra.mxu0 %v337
  %486 = vmatprep.subr.bf16.mxu0 %v336
  %487 = vmatpush1.bf16.msra.mxu0 %v335
  %488 = vmatprep.subr.bf16.mxu0 %v366
  %489 = vmatpush2.bf16.msra.mxu0 %v365
  %490 = vmatprep.subr.bf16.mxu0 %v364
  %491 = vmatpush2.bf16.msra.mxu0 %v363
  %492 = vmatprep.subr.bf16.mxu0 %v362
  %493 = vmatpush2.bf16.msra.mxu0 %v361
  %494 = vmatprep.subr.bf16.mxu0 %v360
  %495 = vmatpush2.bf16.msra.mxu0 %v359
  %496 = vmatprep.subr.bf16.mxu0 %v358
  %497 = vmatpush2.bf16.msra.mxu0 %v357
  %498 = vmatprep.subr.bf16.mxu0 %v356
  %499 = vmatpush2.bf16.msra.mxu0 %v355
  %500 = vmatprep.subr.bf16.mxu0 %v354
  %501 = vmatpush2.bf16.msra.mxu0 %v353
  %502 = vmatprep.subr.bf16.mxu0 %v352
  %503 = vmatpush2.bf16.msra.mxu0 %v351
  %504 = vmatprep.mubr.bf16.mxu0 %v106
  %505 = vmatmul.mubr.bf16.gmra.mxu0 %v105
  %v506 = vpop.f32.mrf.mxu0
  %v507 = vadd.f32 %v466, %v506
  %v508 = vpop.f32.mrf.mxu0
  %v509 = vadd.f32 %v468, %v508
  %v510 = vpop.f32.mrf.mxu0
  %v511 = vpop.f32.mrf.mxu0
  %512 = vdwg.mxu0
  %v513 = vld [vmem:[%s2] sm:$0x3]
  %v515 = vlaneseq
  %v516 = vshrl.u32 %v515, 7
  %v517 = vsub.s32 0, %v516
  %v518 = vrot.slane %v513, %v517
  %v519 = vlaneseq
  %v520 = vshrl.u32 %v519, 7
  %v521 = vsub.s32 1, %v520
  %v522 = vrot.slane %v513, %v521
  %v525 = vmul.f32 %v507, %v518
  %v526 = vmul.f32 %v509, %v522
  %v527 = vld [vmem:[%s3] sm:$0x3]
  %v529 = vlaneseq
  %v530 = vshrl.u32 %v529, 7
  %v531 = vsub.s32 0, %v530
  %v532 = vrot.slane %v527, %v531
  %v533 = vlaneseq
  %v534 = vshrl.u32 %v533, 7
  %v535 = vsub.s32 1, %v534
  %v536 = vrot.slane %v527, %v535
  %v539 = vadd.f32 %v525, %v532
  %v540 = vadd.f32 %v526, %v536
  %v541 = vmax.f32 %v539, 0.0
  %v542 = vmax.f32 %v540, 0.0
  %v543 = vpack.c.bf16 %v541, %v541
  %v544 = vpack.c.bf16 %v542, %v542
  %v547 = vcombine.low %v543, %v544
  %v549 = vunpack.c.l.s4 1966171168
  %v550 = vunpack.c.0.s8 %v549
  %v551 = vlaneseq
  %v552 = vshrl.u32 %v551, 7
  %v553 = vsub.s32 %v550, %v552
  %v554 = vrot.slane %v547, %v553
  %v556 = vunpack.c.l.s4 1966171168
  %v557 = vunpack.c.0.s8 %v556
  %v558 = vlaneseq
  %v559 = vshrl.u32 %v558, 7
  %v560 = vsub.s32 %v557, %v559
  %v561 = vrot.slane %v554, %v560
  %563 = vst [vmem:[%s4] sm:$0x3] %v561
  // Predicated region
  $region18: #{forward.15} parent=0 // pred_check
    _
  $region19: #{forward.15} parent=0 // pred_check_branch
    %565 = sbr.rel (0) target = $region21
  $region20: #{forward.15} parent=0 // pred_region
    _
  $region21: #{forward.15} parent=0 // pred_fallthru
    _
  // Predicated region
  $region22: #{forward.15} parent=0 // pred_check
    _
  $region23: #{forward.15} parent=0 // pred_check_branch
    %567 = sbr.rel (0) target = $region25
  $region24: #{forward.15} parent=0 // pred_region
    _
  $region25: #{forward.15} parent=0 // pred_fallthru
    _

// kernel: forward.21
$region0: #{forward.21}
  #allocation0 [shape = 'u32[]', space=smem, size = 0x4, offset = 0x4, fixed_abs, tag = 'smem constant byte address 0x4 - core index']
  #allocation1 [shape = 'u32[144,128]{1,0:T(1,128)}', space=vmem, size = 0x12000, scoped, tag = 'internal scratch']
  %s0 = inlined_call_operand.vmem [shape: bf16[2,256,1], index: 0, kind: input, shape index: {}]
  %s1 = inlined_call_operand.vmem [shape: bf16[64,256], index: 1, kind: input, shape index: {}]
  %s2 = inlined_call_operand.vmem [shape: f32[64,1], index: 2, kind: input, shape index: {}]
  %s3 = inlined_call_operand.vmem [shape: f32[64,1], index: 3, kind: input, shape index: {}]
  %s4 = inlined_call_operand.vmem [shape: bf16[2,64,1], index: 4, kind: output, shape index: {}]
  %s5 = sld [smem:[#allocation0]]
  $region49: #{forward.21} parent=0
    _
  %s7 = ssub.s32 1, %s5
  %s8 = scalar_select 0, %s7, %s5
  loop: start=0, step=1, limit=4
  $region2: #{forward.21} parent=0 // loop_pre_header
    _
  $region3: #{forward.21} parent=0 // loop_header
    %s10 = sphi 0, %s14
    %p11 = scmp.ge.s32.totalorder %s10, 4
    %s17 = sphi 0, %s29
    %s18 = sphi 0, %s25
    %s19 = sphi 0, %s17
    %s20 = sphi 0, %s18
    %s21 = sphi 0, %s19
    %s22 = sphi 0, %s20
    %s34 = sphi 0, %s36
    %s37 = sphi 0, %s34
    %s38 = sphi 0, %s37
    %s54 = sphi 0, %s38
    %s58 = sphi 0, %s58
    %s60 = sphi 0, %s58
    %s61 = sphi 0, %s60
    %s75 = sphi 0, %s61
    %s79 = sphi 0, %s79
    %s81 = sphi 0, %s79
    %s82 = sphi 0, %s81
    %s96 = sphi 0, %s82
    %s100 = sphi 0, %s100
    %s102 = sphi 0, %s100
    %s103 = sphi 0, %s102
    %s117 = sphi 0, %s103
    %s125 = sphi 0, %s127
    %s128 = sphi 0, %s125
    %s129 = sphi 0, %s128
    %s145 = sphi 0, %s129
  $region4: #{forward.21} parent=0 // loop_header_branch
    %13 = sbr.rel (%p11) target = $region8
  $region5: #{forward.21} parent=0 // loop_body
    %s15 = ssub.s32 %s10, 1
    %s16 = ssub.s32 %s10, 2
    %s23 = sadd.s32 1, %s18
    %p24 = scmp.ge.s32.totalorder %s23, 1
    %s25 = scalar_select %p24, 0, %s23
    %s26 = sadd.s32 1, %s17
    %s27 = scalar_select %p24, %s26, %s17
    %p28 = scmp.ge.s32.totalorder %s27, 2
    %s29 = scalar_select %p28, 0, %s27
    %s30 = ssub.s32 %s17, %s29
    %s31 = ssub.s32 %s18, %s25
    %s32 = sor.u32 %s30, %s31
    %p33 = scmp.eq.s32.totalorder %s32, 0
    %s35 = sadd.s32 %s34, 1
    %s36 = scalar_select %p33, %s34, %s35
    %p39 = pneg %p33
    %p40 = scmp.eq.s32.totalorder %s10, 1
    %p41 = por %p39, %p40
    %p42 = scmp.ne.s32.totalorder %s34, %s37
    %p43 = scmp.eq.s32.totalorder %s10, 0
    %p44 = por %p42, %p43
    %p45 = scmp.ne.s32.totalorder %s34, %s37
    %p46 = scmp.eq.s32.totalorder %s15, 1
    %p47 = por %p45, %p46
    %p48 = scmp.ne.s32.totalorder %s37, %s38
    %p49 = scmp.eq.s32.totalorder %s15, 0
    %p50 = por %p48, %p49
    %p51 = scmp.ne.s32.totalorder %s37, %s38
    %p52 = scmp.eq.s32.totalorder %s16, 1
    %p53 = por %p51, %p52
    %p55 = scmp.ne.s32.totalorder %s38, %s54
    %p56 = scmp.eq.s32.totalorder %s16, 0
    %p57 = por %p55, %p56
    %s59 = sadd.s32 %s58, 1
    %p62 = scmp.eq.s32.totalorder %s10, 1
    %p63 = scmp.ne.s32.totalorder %s58, %s60
    %p64 = scmp.eq.s32.totalorder %s10, 0
    %p65 = por %p63, %p64
    %p66 = scmp.ne.s32.totalorder %s58, %s60
    %p67 = scmp.eq.s32.totalorder %s15, 1
    %p68 = por %p66, %p67
    %p69 = scmp.ne.s32.totalorder %s60, %s61
    %p70 = scmp.eq.s32.totalorder %s15, 0
    %p71 = por %p69, %p70
    %p72 = scmp.ne.s32.totalorder %s60, %s61
    %p73 = scmp.eq.s32.totalorder %s16, 1
    %p74 = por %p72, %p73
    %p76 = scmp.ne.s32.totalorder %s61, %s75
    %p77 = scmp.eq.s32.totalorder %s16, 0
    %p78 = por %p76, %p77
    %s80 = sadd.s32 %s79, 1
    %p83 = scmp.eq.s32.totalorder %s10, 1
    %p84 = scmp.ne.s32.totalorder %s79, %s81
    %p85 = scmp.eq.s32.totalorder %s10, 0
    %p86 = por %p84, %p85
    %p87 = scmp.ne.s32.totalorder %s79, %s81
    %p88 = scmp.eq.s32.totalorder %s15, 1
    %p89 = por %p87, %p88
    %p90 = scmp.ne.s32.totalorder %s81, %s82
    %p91 = scmp.eq.s32.totalorder %s15, 0
    %p92 = por %p90, %p91
    %p93 = scmp.ne.s32.totalorder %s81, %s82
    %p94 = scmp.eq.s32.totalorder %s16, 1
    %p95 = por %p93, %p94
    %p97 = scmp.ne.s32.totalorder %s82, %s96
    %p98 = scmp.eq.s32.totalorder %s16, 0
    %p99 = por %p97, %p98
    %s101 = sadd.s32 %s100, 1
    %p104 = scmp.eq.s32.totalorder %s10, 1
    %p105 = scmp.ne.s32.totalorder %s100, %s102
    %p106 = scmp.eq.s32.totalorder %s10, 0
    %p107 = por %p105, %p106
    %p108 = scmp.ne.s32.totalorder %s100, %s102
    %p109 = scmp.eq.s32.totalorder %s15, 1
    %p110 = por %p108, %p109
    %p111 = scmp.ne.s32.totalorder %s102, %s103
    %p112 = scmp.eq.s32.totalorder %s15, 0
    %p113 = por %p111, %p112
    %p114 = scmp.ne.s32.totalorder %s102, %s103
    %p115 = scmp.eq.s32.totalorder %s16, 1
    %p116 = por %p114, %p115
    %p118 = scmp.ne.s32.totalorder %s103, %s117
    %p119 = scmp.eq.s32.totalorder %s16, 0
    %p120 = por %p118, %p119
    %s121 = ssub.s32 %s17, %s29
    %s122 = ssub.s32 %s18, %s25
    %s123 = sor.u32 %s121, %s122
    %p124 = scmp.eq.s32.totalorder %s123, 0
    %s126 = sadd.s32 %s125, 1
    %s127 = scalar_select %p124, %s125, %s126
    %p130 = pneg %p124
    %p131 = scmp.eq.s32.totalorder %s10, 1
    %p132 = por %p130, %p131
    %p133 = scmp.ne.s32.totalorder %s125, %s128
    %p134 = scmp.eq.s32.totalorder %s10, 0
    %p135 = por %p133, %p134
    %p136 = scmp.ne.s32.totalorder %s125, %s128
    %p137 = scmp.eq.s32.totalorder %s15, 1
    %p138 = por %p136, %p137
    %p139 = scmp.ne.s32.totalorder %s128, %s129
    %p140 = scmp.eq.s32.totalorder %s15, 0
    %p141 = por %p139, %p140
    %p142 = scmp.ne.s32.totalorder %s128, %s129
    %p143 = scmp.eq.s32.totalorder %s16, 1
    %p144 = por %p142, %p143
    %p146 = scmp.ne.s32.totalorder %s129, %s145
    %p147 = scmp.eq.s32.totalorder %s16, 0
    %p148 = por %p146, %p147
    %p149 = scmp.le.s32.totalorder 1, %s10
    %p150 = scmp.lt.s32.totalorder %s10, 3
    %p151 = pnand %p149, %p150
    %p152 = pneg %p151
    // Predicated region
    $region9: #{forward.21} parent=5 // pred_check
      _
    $region10: #{forward.21} parent=5 // pred_check_branch
      %154 = sbr.rel (%p151) target = $region12
    $region11: #{forward.21} parent=5 // pred_region
      %s155 = ssub.s32 %s10, 1
      // Predicated region
      $region13: #{forward.21} parent=11 // pred_check
        %p156 = pneg %p71
      $region14: #{forward.21} parent=11 // pred_check_branch
        %158 = sbr.rel (%p156) target = $region16
      $region15: #{forward.21} parent=11 // pred_region
        _
      $region16: #{forward.21} parent=11 // pred_fallthru
        _
      // Predicated region
      $region17: #{forward.21} parent=11 // pred_check
        %p159 = pneg %p92
      $region18: #{forward.21} parent=11 // pred_check_branch
        %161 = sbr.rel (%p159) target = $region20
      $region19: #{forward.21} parent=11 // pred_region
        _
      $region20: #{forward.21} parent=11 // pred_fallthru
        _
      // Predicated region
      $region21: #{forward.21} parent=11 // pred_check
        %p162 = pneg %p113
      $region22: #{forward.21} parent=11 // pred_check_branch
        %164 = sbr.rel (%p162) target = $region24
      $region23: #{forward.21} parent=11 // pred_region
        _
      $region24: #{forward.21} parent=11 // pred_fallthru
        _
    $region12: #{forward.21} parent=5 // pred_fallthru
      _
    %p165 = scmp.lt.s32.totalorder %s10, 2
    // Predicated region
    $region25: #{forward.21} parent=5 // pred_check
      %p166 = pneg %p165
    $region26: #{forward.21} parent=5 // pred_check_branch
      %168 = sbr.rel (%p166) target = $region28
    $region27: #{forward.21} parent=5 // pred_region
      // Predicated region
      $region29: #{forward.21} parent=27 // pred_check
        %p169 = pneg %p44
      $region30: #{forward.21} parent=27 // pred_check_branch
        %171 = sbr.rel (%p169) target = $region32
      $region31: #{forward.21} parent=27 // pred_region
        %p172 = scmp.lt.s32.totalorder %s17, 1
        %s173 = scalar_select %p172, %s17, 1
        %p174 = scmp.lt.s32.totalorder %s18, 0
        %s175 = scalar_select %p174, %s18, 0
        %s176 = smul.addr %s173, 32
        %s177 = sadd.s32 %s175, %s176
        %s178 = smul.addr %s177, 4
        %s179 = scalar_lea.vmem %s0, %s178
      $region32: #{forward.21} parent=27 // pred_fallthru
        _
    $region28: #{forward.21} parent=5 // pred_fallthru
      _
    %p180 = scmp.le.s32.totalorder 1, %s10
    %p181 = scmp.lt.s32.totalorder %s10, 3
    %p182 = pnand %p180, %p181
    %p183 = pneg %p182
    // Predicated region
    $region33: #{forward.21} parent=5 // pred_check
      _
    $region34: #{forward.21} parent=5 // pred_check_branch
      %185 = sbr.rel (%p182) target = $region36
    $region35: #{forward.21} parent=5 // pred_region
      %s186 = ssub.s32 %s10, 1
      %p187 = scmp.lt.s32.totalorder %s19, 1
      %s188 = scalar_select %p187, %s19, 1
      %p189 = scmp.lt.s32.totalorder %s20, 0
      %s190 = scalar_select %p189, %s20, 0
      %s191 = smul.addr %s188, 32
      %s192 = sadd.s32 %s190, %s191
      %s193 = smul.addr %s192, 4
      %s194 = scalar_lea.vmem %s0, %s193
      %p195 = pneg %p50
      %p196 = pneg %p47
      %p197 = pneg %p71
      %p198 = pneg %p68
      %p199 = pneg %p92
      %p200 = pneg %p89
      %p201 = pneg %p113
      %p202 = pneg %p110
      %p203 = pneg %p141
      %p204 = pneg %p138
      %p205 = scmp.lt.s32.totalorder %s19, 1
      %s206 = scalar_select %p205, %s19, 1
      %p207 = scmp.lt.s32.totalorder %s20, 0
      %s208 = scalar_select %p207, %s20, 0
      %s209 = smul.addr %s206, 8
      %s210 = sadd.s32 %s208, %s209
      %s211 = smul.addr %s210, 4
      %s212 = scalar_lea.vmem %s4, %s211
      %p213 = scmp.lt.s32.totalorder %s19, 1
      %s214 = scalar_select %p213, %s19, 1
      %p215 = scmp.lt.s32.totalorder %s20, 0
      %s216 = scalar_select %p215, %s20, 0
      %s217 = smul.addr %s214, 32
      %s218 = sadd.s32 %s216, %s217
      %s219 = smul.addr %s218, 4
      %s220 = scalar_lea.vmem %s0, %s219
      %p221 = scmp.lt.s32.totalorder %s19, 1
      %s222 = scalar_select %p221, %s19, 1
      %p223 = scmp.lt.s32.totalorder %s20, 0
      %s224 = scalar_select %p223, %s20, 0
      %s225 = smul.addr %s222, 8
      %s226 = sadd.s32 %s224, %s225
      %s227 = smul.addr %s226, 4
      %s228 = scalar_lea.vmem %s4, %s227
      %v230 = vld [vmem:[%s1] sm:$0xff]
      %v231 = vld [vmem:[%s1 + $0x8] sm:$0xff]
      %v232 = vld [vmem:[%s1 + $0x10] sm:$0xff]
      %v233 = vld [vmem:[%s1 + $0x18] sm:$0xff]
      %v234 = vld [vmem:[%s1 + $0x20] sm:$0xff]
      %v235 = vld [vmem:[%s1 + $0x28] sm:$0xff]
      %v236 = vld [vmem:[%s1 + $0x30] sm:$0xff]
      %v237 = vld [vmem:[%s1 + $0x38] sm:$0xff]
      %v238 = vld [vmem:[%s220] sm:$0xf]
      %v239 = vld [vmem:[%s220 + $0x4] sm:$0xf]
      %v240 = vld [vmem:[%s220 + $0x8] sm:$0xf]
      %v241 = vld [vmem:[%s220 + $0xc] sm:$0xf]
      %v242 = vld [vmem:[%s220 + $0x10] sm:$0xf]
      %v243 = vld [vmem:[%s220 + $0x14] sm:$0xf]
      %v244 = vld [vmem:[%s220 + $0x18] sm:$0xf]
      %v245 = vld [vmem:[%s220 + $0x1c] sm:$0xf]
      %v246 = vld [vmem:[%s220 + $0x20] sm:$0xf]
      %v247 = vld [vmem:[%s220 + $0x24] sm:$0xf]
      %v248 = vld [vmem:[%s220 + $0x28] sm:$0xf]
      %v249 = vld [vmem:[%s220 + $0x2c] sm:$0xf]
      %v250 = vld [vmem:[%s220 + $0x30] sm:$0xf]
      %v251 = vld [vmem:[%s220 + $0x34] sm:$0xf]
      %v252 = vld [vmem:[%s220 + $0x38] sm:$0xf]
      %v253 = vld [vmem:[%s220 + $0x3c] sm:$0xf]
      %v254 = vld [vmem:[%s220 + $0x40] sm:$0xf]
      %v255 = vld [vmem:[%s220 + $0x44] sm:$0xf]
      %v256 = vld [vmem:[%s220 + $0x48] sm:$0xf]
      %v257 = vld [vmem:[%s220 + $0x4c] sm:$0xf]
      %v258 = vld [vmem:[%s220 + $0x50] sm:$0xf]
      %v259 = vld [vmem:[%s220 + $0x54] sm:$0xf]
      %v260 = vld [vmem:[%s220 + $0x58] sm:$0xf]
      %v261 = vld [vmem:[%s220 + $0x5c] sm:$0xf]
      %v262 = vld [vmem:[%s220 + $0x60] sm:$0xf]
      %v263 = vld [vmem:[%s220 + $0x64] sm:$0xf]
      %v264 = vld [vmem:[%s220 + $0x68] sm:$0xf]
      %v265 = vld [vmem:[%s220 + $0x6c] sm:$0xf]
      %v266 = vld [vmem:[%s220 + $0x70] sm:$0xf]
      %v267 = vld [vmem:[%s220 + $0x74] sm:$0xf]
      %v268 = vld [vmem:[%s220 + $0x78] sm:$0xf]
      %v269 = vld [vmem:[%s220 + $0x7c] sm:$0xf]
      %v278 = vunpack.c.l.b16 %v230
      %v279 = vunpack.c.h.b16 %v230
      %v280 = vunpack.c.l.b16 %v231
      %v281 = vunpack.c.h.b16 %v231
      %v282 = vunpack.c.l.b16 %v232
      %v283 = vunpack.c.h.b16 %v232
      %v284 = vunpack.c.l.b16 %v233
      %v285 = vunpack.c.h.b16 %v233
      %v286 = vunpack.c.l.b16 %v234
      %v287 = vunpack.c.h.b16 %v234
      %v288 = vunpack.c.l.b16 %v235
      %v289 = vunpack.c.h.b16 %v235
      %v290 = vunpack.c.l.b16 %v236
      %v291 = vunpack.c.h.b16 %v236
      %v292 = vunpack.c.l.b16 %v237
      %v293 = vunpack.c.h.b16 %v237
      %v294 = vpack.c.b16 %v280, %v278
      %v295 = vpack.c.b16 %v281, %v279
      %v296 = vpack.c.b16 %v284, %v282
      %v297 = vpack.c.b16 %v285, %v283
      %v298 = vpack.c.b16 %v288, %v286
      %v299 = vpack.c.b16 %v289, %v287
      %v300 = vpack.c.b16 %v292, %v290
      %v301 = vpack.c.b16 %v293, %v291
      %v342 = vunpack.c.l.b16 %v238
      %v343 = vunpack.c.l.b16 %v239
      %v344 = vunpack.c.l.b16 %v240
      %v345 = vunpack.c.l.b16 %v241
      %v346 = vunpack.c.l.b16 %v242
      %v347 = vunpack.c.l.b16 %v243
      %v348 = vunpack.c.l.b16 %v244
      %v349 = vunpack.c.l.b16 %v245
      %v350 = vunpack.c.l.b16 %v246
      %v351 = vunpack.c.l.b16 %v247
      %v352 = vunpack.c.l.b16 %v248
      %v353 = vunpack.c.l.b16 %v249
      %v354 = vunpack.c.l.b16 %v250
      %v355 = vunpack.c.l.b16 %v251
      %v356 = vunpack.c.l.b16 %v252
      %v357 = vunpack.c.l.b16 %v253
      %v358 = vunpack.c.l.b16 %v254
      %v359 = vunpack.c.l.b16 %v255
      %v360 = vunpack.c.l.b16 %v256
      %v361 = vunpack.c.l.b16 %v257
      %v362 = vunpack.c.l.b16 %v258
      %v363 = vunpack.c.l.b16 %v259
      %v364 = vunpack.c.l.b16 %v260
      %v365 = vunpack.c.l.b16 %v261
      %v366 = vunpack.c.l.b16 %v262
      %v367 = vunpack.c.l.b16 %v263
      %v368 = vunpack.c.l.b16 %v264
      %v369 = vunpack.c.l.b16 %v265
      %v370 = vunpack.c.l.b16 %v266
      %v371 = vunpack.c.l.b16 %v267
      %v372 = vunpack.c.l.b16 %v268
      %v373 = vunpack.c.l.b16 %v269
      %v374 = vpack.c.b16 %v343, %v342
      %v375 = vpack.c.b16 %v345, %v344
      %v376 = vpack.c.b16 %v347, %v346
      %v377 = vpack.c.b16 %v349, %v348
      %v378 = vpack.c.b16 %v351, %v350
      %v379 = vpack.c.b16 %v353, %v352
      %v380 = vpack.c.b16 %v355, %v354
      %v381 = vpack.c.b16 %v357, %v356
      %v382 = vpack.c.b16 %v359, %v358
      %v383 = vpack.c.b16 %v361, %v360
      %v384 = vpack.c.b16 %v363, %v362
      %v385 = vpack.c.b16 %v365, %v364
      %v386 = vpack.c.b16 %v367, %v366
      %v387 = vpack.c.b16 %v369, %v368
      %v388 = vpack.c.b16 %v371, %v370
      %v389 = vpack.c.b16 %v373, %v372
      %406 = vmatprep.subr.bf16.mxu0 0
      %407 = vmatpush1.bf16.msra.mxu0 %v381
      %408 = vmatprep.subr.bf16.mxu0 0
      %409 = vmatpush1.bf16.msra.mxu0 %v380
      %410 = vmatprep.subr.bf16.mxu0 0
      %411 = vmatpush1.bf16.msra.mxu0 %v379
      %412 = vmatprep.subr.bf16.mxu0 0
      %413 = vmatpush1.bf16.msra.mxu0 %v378
      %414 = vmatprep.subr.bf16.mxu0 0
      %415 = vmatpush1.bf16.msra.mxu0 %v377
      %416 = vmatprep.subr.bf16.mxu0 0
      %417 = vmatpush1.bf16.msra.mxu0 %v376
      %418 = vmatprep.subr.bf16.mxu0 0
      %419 = vmatpush1.bf16.msra.mxu0 %v375
      %420 = vmatprep.subr.bf16.mxu0 0
      %421 = vmatpush1.bf16.msra.mxu0 %v374
      %422 = vmatprep.subr.bf16.mxu0 0
      %423 = vmatpush2.bf16.msra.mxu0 %v389
      %424 = vmatprep.subr.bf16.mxu0 0
      %425 = vmatpush2.bf16.msra.mxu0 %v388
      %426 = vmatprep.subr.bf16.mxu0 0
      %427 = vmatpush2.bf16.msra.mxu0 %v387
      %428 = vmatprep.subr.bf16.mxu0 0
      %429 = vmatpush2.bf16.msra.mxu0 %v386
      %430 = vmatprep.subr.bf16.mxu0 0
      %431 = vmatpush2.bf16.msra.mxu0 %v385
      %432 = vmatprep.subr.bf16.mxu0 0
      %433 = vmatpush2.bf16.msra.mxu0 %v384
      %434 = vmatprep.subr.bf16.mxu0 0
      %435 = vmatpush2.bf16.msra.mxu0 %v383
      %436 = vmatprep.subr.bf16.mxu0 0
      %437 = vmatpush2.bf16.msra.mxu0 %v382
      %438 = vmatprep.mubr.bf16.mxu0 %v295
      %439 = vmatmul.mubr.bf16.gmra.mxu0 %v294
      %v440 = vpop.f32.mrf.mxu0
      %v441 = vadd.f32 0.0, %v440
      %v442 = vpop.f32.mrf.mxu0
      %v443 = vpop.f32.mrf.mxu0
      %v444 = vadd.f32 0.0, %v443
      %v445 = vpop.f32.mrf.mxu0
      %446 = vmatprep.mubr.bf16.mxu0 %v297
      %447 = vmatmul.mubr.bf16.gmra.mxu0 %v296
      %v448 = vpop.f32.mrf.mxu0
      %v449 = vadd.f32 0.0, %v448
      %v450 = vpop.f32.mrf.mxu0
      %v451 = vpop.f32.mrf.mxu0
      %v452 = vadd.f32 0.0, %v451
      %v453 = vpop.f32.mrf.mxu0
      %454 = vmatprep.mubr.bf16.mxu0 %v299
      %455 = vmatmul.mubr.bf16.gmra.mxu0 %v298
      %v456 = vpop.f32.mrf.mxu0
      %v457 = vadd.f32 0.0, %v456
      %v458 = vpop.f32.mrf.mxu0
      %v459 = vpop.f32.mrf.mxu0
      %v460 = vadd.f32 0.0, %v459
      %v461 = vpop.f32.mrf.mxu0
      %462 = vmatprep.mubr.bf16.mxu0 %v301
      %463 = vmatmul.mubr.bf16.gmra.mxu0 %v300
      %v464 = vpop.f32.mrf.mxu0
      %v465 = vadd.f32 0.0, %v464
      %v466 = vpop.f32.mrf.mxu0
      %v467 = vpop.f32.mrf.mxu0
      %v468 = vadd.f32 0.0, %v467
      %v469 = vpop.f32.mrf.mxu0
      %470 = vdwg.mxu0
      %v471 = vld [vmem:[%s2] sm:$0xff]
      %v472 = vld [vmem:[%s2 + $0x8] sm:$0xff]
      %v473 = vld [vmem:[%s2 + $0x10] sm:$0xff]
      %v474 = vld [vmem:[%s2 + $0x18] sm:$0xff]
      %v475 = vld [vmem:[%s2 + $0x20] sm:$0xff]
      %v476 = vld [vmem:[%s2 + $0x28] sm:$0xff]
      %v477 = vld [vmem:[%s2 + $0x30] sm:$0xff]
      %v478 = vld [vmem:[%s2 + $0x38] sm:$0xff]
      %v479 = vmul.f32 %v441, %v471
      %v480 = vmul.f32 %v444, %v472
      %v481 = vmul.f32 %v449, %v473
      %v482 = vmul.f32 %v452, %v474
      %v483 = vmul.f32 %v457, %v475
      %v484 = vmul.f32 %v460, %v476
      %v485 = vmul.f32 %v465, %v477
      %v486 = vmul.f32 %v468, %v478
      %v487 = vld [vmem:[%s3] sm:$0xff]
      %v488 = vld [vmem:[%s3 + $0x8] sm:$0xff]
      %v489 = vld [vmem:[%s3 + $0x10] sm:$0xff]
      %v490 = vld [vmem:[%s3 + $0x18] sm:$0xff]
      %v491 = vld [vmem:[%s3 + $0x20] sm:$0xff]
      %v492 = vld [vmem:[%s3 + $0x28] sm:$0xff]
      %v493 = vld [vmem:[%s3 + $0x30] sm:$0xff]
      %v494 = vld [vmem:[%s3 + $0x38] sm:$0xff]
      %v495 = vadd.f32 %v479, %v487
      %v496 = vadd.f32 %v480, %v488
      %v497 = vadd.f32 %v481, %v489
      %v498 = vadd.f32 %v482, %v490
      %v499 = vadd.f32 %v483, %v491
      %v500 = vadd.f32 %v484, %v492
      %v501 = vadd.f32 %v485, %v493
      %v502 = vadd.f32 %v486, %v494
      %v503 = vpack.c.bf16 %v496, %v495
      %v504 = vpack.c.bf16 %v498, %v497
      %v505 = vpack.c.bf16 %v500, %v499
      %v506 = vpack.c.bf16 %v502, %v501
      %v511 = vunpack.c.l.b16 %v503
      %v512 = vunpack.c.h.b16 %v503
      %v513 = vunpack.c.l.b16 %v504
      %v514 = vunpack.c.h.b16 %v504
      %v515 = vunpack.c.l.b16 %v505
      %v516 = vunpack.c.h.b16 %v505
      %v517 = vunpack.c.l.b16 %v506
      %v518 = vunpack.c.h.b16 %v506
      %v519 = vpack.c.b16 %v511, %v511
      %v520 = vpack.c.b16 %v512, %v512
      %v521 = vpack.c.b16 %v513, %v513
      %v522 = vpack.c.b16 %v514, %v514
      %v523 = vpack.c.b16 %v515, %v515
      %v524 = vpack.c.b16 %v516, %v516
      %v525 = vpack.c.b16 %v517, %v517
      %v526 = vpack.c.b16 %v518, %v518
      %vm535 = vcmask 3072
      %536 = vst.msk [vmem:[%s228] sm:$0xf] %vm535, %v519
      %537 = vst.msk [vmem:[%s228 + $0x4] sm:$0xf] %vm535, %v520
      %538 = vst.msk [vmem:[%s228 + $0x8] sm:$0xf] %vm535, %v521
      %539 = vst.msk [vmem:[%s228 + $0xc] sm:$0xf] %vm535, %v522
      %540 = vst.msk [vmem:[%s228 + $0x10] sm:$0xf] %vm535, %v523
      %541 = vst.msk [vmem:[%s228 + $0x14] sm:$0xf] %vm535, %v524
      %542 = vst.msk [vmem:[%s228 + $0x18] sm:$0xf] %vm535, %v525
      %543 = vst.msk [vmem:[%s228 + $0x1c] sm:$0xf] %vm535, %v526
      %p544 = scmp.lt.s32.totalorder %s19, 1
      %s545 = scalar_select %p544, %s19, 1
      %p546 = scmp.lt.s32.totalorder %s20, 0
      %s547 = scalar_select %p546, %s20, 0
      %s548 = smul.addr %s545, 8
      %s549 = sadd.s32 %s547, %s548
      %s550 = smul.addr %s549, 4
      %s551 = scalar_lea.vmem %s4, %s550
      // Predicated region
      $region37: #{forward.21} parent=35 // pred_check
        %p552 = pneg %p138
      $region38: #{forward.21} parent=35 // pred_check_branch
        %554 = sbr.rel (%p552) target = $region40
      $region39: #{forward.21} parent=35 // pred_region
        _
      $region40: #{forward.21} parent=35 // pred_fallthru
        _
    $region36: #{forward.21} parent=5 // pred_fallthru
      _
    %p555 = scmp.le.s32.totalorder 2, %s10
    // Predicated region
    $region41: #{forward.21} parent=5 // pred_check
      %p556 = pneg %p555
    $region42: #{forward.21} parent=5 // pred_check_branch
      %558 = sbr.rel (%p556) target = $region44
    $region43: #{forward.21} parent=5 // pred_region
      %s559 = ssub.s32 %s10, 2
      // Predicated region
      $region45: #{forward.21} parent=43 // pred_check
        %p560 = pneg %p144
      $region46: #{forward.21} parent=43 // pred_check_branch
        %562 = sbr.rel (%p560) target = $region48
      $region47: #{forward.21} parent=43 // pred_region
        %p563 = scmp.lt.s32.totalorder %s21, 1
        %s564 = scalar_select %p563, %s21, 1
        %p565 = scmp.lt.s32.totalorder %s22, 0
        %s566 = scalar_select %p565, %s22, 0
        %s567 = smul.addr %s564, 8
        %s568 = sadd.s32 %s566, %s567
        %s569 = smul.addr %s568, 4
        %s570 = scalar_lea.vmem %s4, %s569
      $region48: #{forward.21} parent=43 // pred_fallthru
        _
    $region44: #{forward.21} parent=5 // pred_fallthru
      _
  $region6: #{forward.21} parent=0 // loop_footer
    %s14 = sadd.s32 1, %s10
  $region7: #{forward.21} parent=0 // loop_footer_branch
    %9 = sbr.rel target = $region3
  $region8: #{forward.21} parent=0 // loop_exit
    _

// kernel: forward.17
$region0: #{forward.17}
  #allocation0 [shape = 'u32[]', space=smem, size = 0x4, offset = 0x4, fixed_abs, tag = 'smem constant byte address 0x4 - core index']
  #allocation1 [shape = 'u32[144,128]{1,0:T(1,128)}', space=vmem, size = 0x12000, scoped, tag = 'internal scratch']
  %s0 = inlined_call_operand.vmem [shape: bf16[2,64,16], index: 0, kind: input, shape index: {}]
  %s1 = inlined_call_operand.vmem [shape: bf16[64,64], index: 1, kind: input, shape index: {}]
  %s2 = inlined_call_operand.vmem [shape: f32[64,1], index: 2, kind: input, shape index: {}]
  %s3 = inlined_call_operand.vmem [shape: f32[64,1], index: 3, kind: input, shape index: {}]
  %s4 = inlined_call_operand.vmem [shape: bf16[2,64,16], index: 4, kind: output, shape index: {}]
  %s5 = sld [smem:[#allocation0]]
  $region49: #{forward.17} parent=0
    _
  %s7 = ssub.s32 1, %s5
  %s8 = scalar_select 0, %s7, %s5
  loop: start=0, step=1, limit=4
  $region2: #{forward.17} parent=0 // loop_pre_header
    _
  $region3: #{forward.17} parent=0 // loop_header
    %s10 = sphi 0, %s14
    %p11 = scmp.ge.s32.totalorder %s10, 4
    %s17 = sphi 0, %s29
    %s18 = sphi 0, %s25
    %s19 = sphi 0, %s17
    %s20 = sphi 0, %s18
    %s21 = sphi 0, %s19
    %s22 = sphi 0, %s20
    %s34 = sphi 0, %s36
    %s37 = sphi 0, %s34
    %s38 = sphi 0, %s37
    %s54 = sphi 0, %s38
    %s58 = sphi 0, %s58
    %s60 = sphi 0, %s58
    %s61 = sphi 0, %s60
    %s75 = sphi 0, %s61
    %s79 = sphi 0, %s79
    %s81 = sphi 0, %s79
    %s82 = sphi 0, %s81
    %s96 = sphi 0, %s82
    %s100 = sphi 0, %s100
    %s102 = sphi 0, %s100
    %s103 = sphi 0, %s102
    %s117 = sphi 0, %s103
    %s125 = sphi 0, %s127
    %s128 = sphi 0, %s125
    %s129 = sphi 0, %s128
    %s145 = sphi 0, %s129
  $region4: #{forward.17} parent=0 // loop_header_branch
    %13 = sbr.rel (%p11) target = $region8
  $region5: #{forward.17} parent=0 // loop_body
    %s15 = ssub.s32 %s10, 1
    %s16 = ssub.s32 %s10, 2
    %s23 = sadd.s32 1, %s18
    %p24 = scmp.ge.s32.totalorder %s23, 1
    %s25 = scalar_select %p24, 0, %s23
    %s26 = sadd.s32 1, %s17
    %s27 = scalar_select %p24, %s26, %s17
    %p28 = scmp.ge.s32.totalorder %s27, 2
    %s29 = scalar_select %p28, 0, %s27
    %s30 = ssub.s32 %s17, %s29
    %s31 = ssub.s32 %s18, %s25
    %s32 = sor.u32 %s30, %s31
    %p33 = scmp.eq.s32.totalorder %s32, 0
    %s35 = sadd.s32 %s34, 1
    %s36 = scalar_select %p33, %s34, %s35
    %p39 = pneg %p33
    %p40 = scmp.eq.s32.totalorder %s10, 1
    %p41 = por %p39, %p40
    %p42 = scmp.ne.s32.totalorder %s34, %s37
    %p43 = scmp.eq.s32.totalorder %s10, 0
    %p44 = por %p42, %p43
    %p45 = scmp.ne.s32.totalorder %s34, %s37
    %p46 = scmp.eq.s32.totalorder %s15, 1
    %p47 = por %p45, %p46
    %p48 = scmp.ne.s32.totalorder %s37, %s38
    %p49 = scmp.eq.s32.totalorder %s15, 0
    %p50 = por %p48, %p49
    %p51 = scmp.ne.s32.totalorder %s37, %s38
    %p52 = scmp.eq.s32.totalorder %s16, 1
    %p53 = por %p51, %p52
    %p55 = scmp.ne.s32.totalorder %s38, %s54
    %p56 = scmp.eq.s32.totalorder %s16, 0
    %p57 = por %p55, %p56
    %s59 = sadd.s32 %s58, 1
    %p62 = scmp.eq.s32.totalorder %s10, 1
    %p63 = scmp.ne.s32.totalorder %s58, %s60
    %p64 = scmp.eq.s32.totalorder %s10, 0
    %p65 = por %p63, %p64
    %p66 = scmp.ne.s32.totalorder %s58, %s60
    %p67 = scmp.eq.s32.totalorder %s15, 1
    %p68 = por %p66, %p67
    %p69 = scmp.ne.s32.totalorder %s60, %s61
    %p70 = scmp.eq.s32.totalorder %s15, 0
    %p71 = por %p69, %p70
    %p72 = scmp.ne.s32.totalorder %s60, %s61
    %p73 = scmp.eq.s32.totalorder %s16, 1
    %p74 = por %p72, %p73
    %p76 = scmp.ne.s32.totalorder %s61, %s75
    %p77 = scmp.eq.s32.totalorder %s16, 0
    %p78 = por %p76, %p77
    %s80 = sadd.s32 %s79, 1
    %p83 = scmp.eq.s32.totalorder %s10, 1
    %p84 = scmp.ne.s32.totalorder %s79, %s81
    %p85 = scmp.eq.s32.totalorder %s10, 0
    %p86 = por %p84, %p85
    %p87 = scmp.ne.s32.totalorder %s79, %s81
    %p88 = scmp.eq.s32.totalorder %s15, 1
    %p89 = por %p87, %p88
    %p90 = scmp.ne.s32.totalorder %s81, %s82
    %p91 = scmp.eq.s32.totalorder %s15, 0
    %p92 = por %p90, %p91
    %p93 = scmp.ne.s32.totalorder %s81, %s82
    %p94 = scmp.eq.s32.totalorder %s16, 1
    %p95 = por %p93, %p94
    %p97 = scmp.ne.s32.totalorder %s82, %s96
    %p98 = scmp.eq.s32.totalorder %s16, 0
    %p99 = por %p97, %p98
    %s101 = sadd.s32 %s100, 1
    %p104 = scmp.eq.s32.totalorder %s10, 1
    %p105 = scmp.ne.s32.totalorder %s100, %s102
    %p106 = scmp.eq.s32.totalorder %s10, 0
    %p107 = por %p105, %p106
    %p108 = scmp.ne.s32.totalorder %s100, %s102
    %p109 = scmp.eq.s32.totalorder %s15, 1
    %p110 = por %p108, %p109
    %p111 = scmp.ne.s32.totalorder %s102, %s103
    %p112 = scmp.eq.s32.totalorder %s15, 0
    %p113 = por %p111, %p112
    %p114 = scmp.ne.s32.totalorder %s102, %s103
    %p115 = scmp.eq.s32.totalorder %s16, 1
    %p116 = por %p114, %p115
    %p118 = scmp.ne.s32.totalorder %s103, %s117
    %p119 = scmp.eq.s32.totalorder %s16, 0
    %p120 = por %p118, %p119
    %s121 = ssub.s32 %s17, %s29
    %s122 = ssub.s32 %s18, %s25
    %s123 = sor.u32 %s121, %s122
    %p124 = scmp.eq.s32.totalorder %s123, 0
    %s126 = sadd.s32 %s125, 1
    %s127 = scalar_select %p124, %s125, %s126
    %p130 = pneg %p124
    %p131 = scmp.eq.s32.totalorder %s10, 1
    %p132 = por %p130, %p131
    %p133 = scmp.ne.s32.totalorder %s125, %s128
    %p134 = scmp.eq.s32.totalorder %s10, 0
    %p135 = por %p133, %p134
    %p136 = scmp.ne.s32.totalorder %s125, %s128
    %p137 = scmp.eq.s32.totalorder %s15, 1
    %p138 = por %p136, %p137
    %p139 = scmp.ne.s32.totalorder %s128, %s129
    %p140 = scmp.eq.s32.totalorder %s15, 0
    %p141 = por %p139, %p140
    %p142 = scmp.ne.s32.totalorder %s128, %s129
    %p143 = scmp.eq.s32.totalorder %s16, 1
    %p144 = por %p142, %p143
    %p146 = scmp.ne.s32.totalorder %s129, %s145
    %p147 = scmp.eq.s32.totalorder %s16, 0
    %p148 = por %p146, %p147
    %p149 = scmp.le.s32.totalorder 1, %s10
    %p150 = scmp.lt.s32.totalorder %s10, 3
    %p151 = pnand %p149, %p150
    %p152 = pneg %p151
    // Predicated region
    $region9: #{forward.17} parent=5 // pred_check
      _
    $region10: #{forward.17} parent=5 // pred_check_branch
      %154 = sbr.rel (%p151) target = $region12
    $region11: #{forward.17} parent=5 // pred_region
      %s155 = ssub.s32 %s10, 1
      // Predicated region
      $region13: #{forward.17} parent=11 // pred_check
        %p156 = pneg %p71
      $region14: #{forward.17} parent=11 // pred_check_branch
        %158 = sbr.rel (%p156) target = $region16
      $region15: #{forward.17} parent=11 // pred_region
        _
      $region16: #{forward.17} parent=11 // pred_fallthru
        _
      // Predicated region
      $region17: #{forward.17} parent=11 // pred_check
        %p159 = pneg %p92
      $region18: #{forward.17} parent=11 // pred_check_branch
        %161 = sbr.rel (%p159) target = $region20
      $region19: #{forward.17} parent=11 // pred_region
        _
      $region20: #{forward.17} parent=11 // pred_fallthru
        _
      // Predicated region
      $region21: #{forward.17} parent=11 // pred_check
        %p162 = pneg %p113
      $region22: #{forward.17} parent=11 // pred_check_branch
        %164 = sbr.rel (%p162) target = $region24
      $region23: #{forward.17} parent=11 // pred_region
        _
      $region24: #{forward.17} parent=11 // pred_fallthru
        _
    $region12: #{forward.17} parent=5 // pred_fallthru
      _
    %p165 = scmp.lt.s32.totalorder %s10, 2
    // Predicated region
    $region25: #{forward.17} parent=5 // pred_check
      %p166 = pneg %p165
    $region26: #{forward.17} parent=5 // pred_check_branch
      %168 = sbr.rel (%p166) target = $region28
    $region27: #{forward.17} parent=5 // pred_region
      // Predicated region
      $region29: #{forward.17} parent=27 // pred_check
        %p169 = pneg %p44
      $region30: #{forward.17} parent=27 // pred_check_branch
        %171 = sbr.rel (%p169) target = $region32
      $region31: #{forward.17} parent=27 // pred_region
        %p172 = scmp.lt.s32.totalorder %s17, 1
        %s173 = scalar_select %p172, %s17, 1
        %p174 = scmp.lt.s32.totalorder %s18, 0
        %s175 = scalar_select %p174, %s18, 0
        %s176 = smul.addr %s173, 8
        %s177 = sadd.s32 %s175, %s176
        %s178 = smul.addr %s177, 4
        %s179 = scalar_lea.vmem %s0, %s178
      $region32: #{forward.17} parent=27 // pred_fallthru
        _
    $region28: #{forward.17} parent=5 // pred_fallthru
      _
    %p180 = scmp.le.s32.totalorder 1, %s10
    %p181 = scmp.lt.s32.totalorder %s10, 3
    %p182 = pnand %p180, %p181
    %p183 = pneg %p182
    // Predicated region
    $region33: #{forward.17} parent=5 // pred_check
      _
    $region34: #{forward.17} parent=5 // pred_check_branch
      %185 = sbr.rel (%p182) target = $region36
    $region35: #{forward.17} parent=5 // pred_region
      %s186 = ssub.s32 %s10, 1
      %p187 = scmp.lt.s32.totalorder %s19, 1
      %s188 = scalar_select %p187, %s19, 1
      %p189 = scmp.lt.s32.totalorder %s20, 0
      %s190 = scalar_select %p189, %s20, 0
      %s191 = smul.addr %s188, 8
      %s192 = sadd.s32 %s190, %s191
      %s193 = smul.addr %s192, 4
      %s194 = scalar_lea.vmem %s0, %s193
      %p195 = pneg %p50
      %p196 = pneg %p47
      %p197 = pneg %p71
      %p198 = pneg %p68
      %p199 = pneg %p92
      %p200 = pneg %p89
      %p201 = pneg %p113
      %p202 = pneg %p110
      %p203 = pneg %p141
      %p204 = pneg %p138
      %p205 = scmp.lt.s32.totalorder %s19, 1
      %s206 = scalar_select %p205, %s19, 1
      %p207 = scmp.lt.s32.totalorder %s20, 0
      %s208 = scalar_select %p207, %s20, 0
      %s209 = smul.addr %s206, 8
      %s210 = sadd.s32 %s208, %s209
      %s211 = smul.addr %s210, 4
      %s212 = scalar_lea.vmem %s4, %s211
      %p213 = scmp.lt.s32.totalorder %s19, 1
      %s214 = scalar_select %p213, %s19, 1
      %p215 = scmp.lt.s32.totalorder %s20, 0
      %s216 = scalar_select %p215, %s20, 0
      %s217 = smul.addr %s214, 8
      %s218 = sadd.s32 %s216, %s217
      %s219 = smul.addr %s218, 4
      %s220 = scalar_lea.vmem %s0, %s219
      %p221 = scmp.lt.s32.totalorder %s19, 1
      %s222 = scalar_select %p221, %s19, 1
      %p223 = scmp.lt.s32.totalorder %s20, 0
      %s224 = scalar_select %p223, %s20, 0
      %s225 = smul.addr %s222, 8
      %s226 = sadd.s32 %s224, %s225
      %s227 = smul.addr %s226, 4
      %s228 = scalar_lea.vmem %s4, %s227
      %v230 = vld [vmem:[%s1] sm:$0xf]
      %v231 = vld [vmem:[%s1 + $0x4] sm:$0xf]
      %v232 = vld [vmem:[%s1 + $0x8] sm:$0xf]
      %v233 = vld [vmem:[%s1 + $0xc] sm:$0xf]
      %v234 = vld [vmem:[%s1 + $0x10] sm:$0xf]
      %v235 = vld [vmem:[%s1 + $0x14] sm:$0xf]
      %v236 = vld [vmem:[%s1 + $0x18] sm:$0xf]
      %v237 = vld [vmem:[%s1 + $0x1c] sm:$0xf]
      %v238 = vld [vmem:[%s220] sm:$0xf]
      %v239 = vld [vmem:[%s220 + $0x4] sm:$0xf]
      %v240 = vld [vmem:[%s220 + $0x8] sm:$0xf]
      %v241 = vld [vmem:[%s220 + $0xc] sm:$0xf]
      %v242 = vld [vmem:[%s220 + $0x10] sm:$0xf]
      %v243 = vld [vmem:[%s220 + $0x14] sm:$0xf]
      %v244 = vld [vmem:[%s220 + $0x18] sm:$0xf]
      %v245 = vld [vmem:[%s220 + $0x1c] sm:$0xf]
      %v254 = vunpack.c.l.b16 %v230
      %v255 = vunpack.c.l.b16 %v231
      %v256 = vunpack.c.l.b16 %v232
      %v257 = vunpack.c.l.b16 %v233
      %v258 = vunpack.c.l.b16 %v234
      %v259 = vunpack.c.l.b16 %v235
      %v260 = vunpack.c.l.b16 %v236
      %v261 = vunpack.c.l.b16 %v237
      %v262 = vpack.c.b16 %v255, %v254
      %v263 = vpack.c.b16 %v257, %v256
      %v264 = vpack.c.b16 %v259, %v258
      %v265 = vpack.c.b16 %v261, %v260
      %v274 = vunpack.c.l.b16 %v238
      %v275 = vunpack.c.l.b16 %v239
      %v276 = vunpack.c.l.b16 %v240
      %v277 = vunpack.c.l.b16 %v241
      %v278 = vunpack.c.l.b16 %v242
      %v279 = vunpack.c.l.b16 %v243
      %v280 = vunpack.c.l.b16 %v244
      %v281 = vunpack.c.l.b16 %v245
      %v282 = vpack.c.b16 %v275, %v274
      %v283 = vpack.c.b16 %v277, %v276
      %v284 = vpack.c.b16 %v279, %v278
      %v285 = vpack.c.b16 %v281, %v280
      %vm290 = vcmask 523264
      %v292 = vsel %vm290, %v262, 0
      %v295 = vsel %vm290, %v263, 0
      %v298 = vsel %vm290, %v264, 0
      %v301 = vsel %vm290, %v265, 0
      %303 = vmatprep.subr.bf16.mxu0 0
      %304 = vmatpush1.bf16.msra.mxu0 0
      %305 = vmatprep.subr.bf16.mxu0 0
      %306 = vmatpush1.bf16.msra.mxu0 0
      %307 = vmatprep.subr.bf16.mxu0 0
      %308 = vmatpush1.bf16.msra.mxu0 0
      %309 = vmatprep.subr.bf16.mxu0 0
      %310 = vmatpush1.bf16.msra.mxu0 0
      %311 = vmatprep.subr.bf16.mxu0 0
      %312 = vmatpush1.bf16.msra.mxu0 %v285
      %313 = vmatprep.subr.bf16.mxu0 0
      %314 = vmatpush1.bf16.msra.mxu0 %v284
      %315 = vmatprep.subr.bf16.mxu0 0
      %316 = vmatpush1.bf16.msra.mxu0 %v283
      %317 = vmatprep.subr.bf16.mxu0 0
      %318 = vmatpush1.bf16.msra.mxu0 %v282
      %319 = vmatprep.subr.bf16.mxu0 0
      %320 = vmatpush2.bf16.msra.mxu0 0
      %321 = vmatprep.subr.bf16.mxu0 0
      %322 = vmatpush2.bf16.msra.mxu0 0
      %323 = vmatprep.subr.bf16.mxu0 0
      %324 = vmatpush2.bf16.msra.mxu0 0
      %325 = vmatprep.subr.bf16.mxu0 0
      %326 = vmatpush2.bf16.msra.mxu0 0
      %327 = vmatprep.subr.bf16.mxu0 0
      %328 = vmatpush2.bf16.msra.mxu0 0
      %329 = vmatprep.subr.bf16.mxu0 0
      %330 = vmatpush2.bf16.msra.mxu0 0
      %331 = vmatprep.subr.bf16.mxu0 0
      %332 = vmatpush2.bf16.msra.mxu0 0
      %333 = vmatprep.subr.bf16.mxu0 0
      %334 = vmatpush2.bf16.msra.mxu0 0
      %335 = vmatprep.mubr.bf16.mxu0 0
      %336 = vmatmul.mubr.bf16.gmra.mxu0 %v292
      %v337 = vpop.f32.mrf.mxu0
      %v338 = vadd.f32 0.0, %v337
      %v339 = vpop.f32.mrf.mxu0
      %v340 = vpop.f32.mrf.mxu0
      %v341 = vadd.f32 0.0, %v340
      %v342 = vpop.f32.mrf.mxu0
      %343 = vmatprep.mubr.bf16.mxu0 0
      %344 = vmatmul.mubr.bf16.gmra.mxu0 %v295
      %v345 = vpop.f32.mrf.mxu0
      %v346 = vadd.f32 0.0, %v345
      %v347 = vpop.f32.mrf.mxu0
      %v348 = vpop.f32.mrf.mxu0
      %v349 = vadd.f32 0.0, %v348
      %v350 = vpop.f32.mrf.mxu0
      %351 = vmatprep.mubr.bf16.mxu0 0
      %352 = vmatmul.mubr.bf16.gmra.mxu0 %v298
      %v353 = vpop.f32.mrf.mxu0
      %v354 = vadd.f32 0.0, %v353
      %v355 = vpop.f32.mrf.mxu0
      %v356 = vpop.f32.mrf.mxu0
      %v357 = vadd.f32 0.0, %v356
      %v358 = vpop.f32.mrf.mxu0
      %359 = vmatprep.mubr.bf16.mxu0 0
      %360 = vmatmul.mubr.bf16.gmra.mxu0 %v301
      %v361 = vpop.f32.mrf.mxu0
      %v362 = vadd.f32 0.0, %v361
      %v363 = vpop.f32.mrf.mxu0
      %v364 = vpop.f32.mrf.mxu0
      %v365 = vadd.f32 0.0, %v364
      %v366 = vpop.f32.mrf.mxu0
      %367 = vdwg.mxu0
      %v368 = vld [vmem:[%s2] sm:$0xff]
      %v369 = vld [vmem:[%s2 + $0x8] sm:$0xff]
      %v370 = vld [vmem:[%s2 + $0x10] sm:$0xff]
      %v371 = vld [vmem:[%s2 + $0x18] sm:$0xff]
      %v372 = vld [vmem:[%s2 + $0x20] sm:$0xff]
      %v373 = vld [vmem:[%s2 + $0x28] sm:$0xff]
      %v374 = vld [vmem:[%s2 + $0x30] sm:$0xff]
      %v375 = vld [vmem:[%s2 + $0x38] sm:$0xff]
      %377 = vset.pattern.permute.xlu0 0
      %378 = vperm.xlu0 %377, %v368
      %v379 = vpop.permute.xlu0 %378
      %382 = vset.pattern.permute.xlu0 0
      %383 = vperm.xlu0 %382, %v369
      %v384 = vpop.permute.xlu0 %383
      %387 = vset.pattern.permute.xlu0 0
      %388 = vperm.xlu0 %387, %v370
      %v389 = vpop.permute.xlu0 %388
      %392 = vset.pattern.permute.xlu0 0
      %393 = vperm.xlu0 %392, %v371
      %v394 = vpop.permute.xlu0 %393
      %397 = vset.pattern.permute.xlu0 0
      %398 = vperm.xlu0 %397, %v372
      %v399 = vpop.permute.xlu0 %398
      %402 = vset.pattern.permute.xlu0 0
      %403 = vperm.xlu0 %402, %v373
      %v404 = vpop.permute.xlu0 %403
      %407 = vset.pattern.permute.xlu0 0
      %408 = vperm.xlu0 %407, %v374
      %v409 = vpop.permute.xlu0 %408
      %412 = vset.pattern.permute.xlu0 0
      %413 = vperm.xlu0 %412, %v375
      %v414 = vpop.permute.xlu0 %413
      %v416 = vmul.f32 %v338, %v379
      %v417 = vmul.f32 %v341, %v384
      %v418 = vmul.f32 %v346, %v389
      %v419 = vmul.f32 %v349, %v394
      %v420 = vmul.f32 %v354, %v399
      %v421 = vmul.f32 %v357, %v404
      %v422 = vmul.f32 %v362, %v409
      %v423 = vmul.f32 %v365, %v414
      %v424 = vld [vmem:[%s3] sm:$0xff]
      %v425 = vld [vmem:[%s3 + $0x8] sm:$0xff]
      %v426 = vld [vmem:[%s3 + $0x10] sm:$0xff]
      %v427 = vld [vmem:[%s3 + $0x18] sm:$0xff]
      %v428 = vld [vmem:[%s3 + $0x20] sm:$0xff]
      %v429 = vld [vmem:[%s3 + $0x28] sm:$0xff]
      %v430 = vld [vmem:[%s3 + $0x30] sm:$0xff]
      %v431 = vld [vmem:[%s3 + $0x38] sm:$0xff]
      %433 = vset.pattern.permute.xlu0 0
      %434 = vperm.xlu0 %433, %v424
      %v435 = vpop.permute.xlu0 %434
      %438 = vset.pattern.permute.xlu0 0
      %439 = vperm.xlu0 %438, %v425
      %v440 = vpop.permute.xlu0 %439
      %443 = vset.pattern.permute.xlu0 0
      %444 = vperm.xlu0 %443, %v426
      %v445 = vpop.permute.xlu0 %444
      %448 = vset.pattern.permute.xlu0 0
      %449 = vperm.xlu0 %448, %v427
      %v450 = vpop.permute.xlu0 %449
      %453 = vset.pattern.permute.xlu0 0
      %454 = vperm.xlu0 %453, %v428
      %v455 = vpop.permute.xlu0 %454
      %458 = vset.pattern.permute.xlu0 0
      %459 = vperm.xlu0 %458, %v429
      %v460 = vpop.permute.xlu0 %459
      %463 = vset.pattern.permute.xlu0 0
      %464 = vperm.xlu0 %463, %v430
      %v465 = vpop.permute.xlu0 %464
      %468 = vset.pattern.permute.xlu0 0
      %469 = vperm.xlu0 %468, %v431
      %v470 = vpop.permute.xlu0 %469
      %v472 = vadd.f32 %v416, %v435
      %v473 = vadd.f32 %v417, %v440
      %v474 = vadd.f32 %v418, %v445
      %v475 = vadd.f32 %v419, %v450
      %v476 = vadd.f32 %v420, %v455
      %v477 = vadd.f32 %v421, %v460
      %v478 = vadd.f32 %v422, %v465
      %v479 = vadd.f32 %v423, %v470
      %v480 = vpack.c.bf16 %v473, %v472
      %v481 = vpack.c.bf16 %v475, %v474
      %v482 = vpack.c.bf16 %v477, %v476
      %v483 = vpack.c.bf16 %v479, %v478
      %v488 = vunpack.c.l.b16 %v480
      %v489 = vunpack.c.h.b16 %v480
      %v490 = vunpack.c.l.b16 %v481
      %v491 = vunpack.c.h.b16 %v481
      %v492 = vunpack.c.l.b16 %v482
      %v493 = vunpack.c.h.b16 %v482
      %v494 = vunpack.c.l.b16 %v483
      %v495 = vunpack.c.h.b16 %v483
      %v496 = vpack.c.b16 %v488, %v488
      %v497 = vpack.c.b16 %v489, %v489
      %v498 = vpack.c.b16 %v490, %v490
      %v499 = vpack.c.b16 %v491, %v491
      %v500 = vpack.c.b16 %v492, %v492
      %v501 = vpack.c.b16 %v493, %v493
      %v502 = vpack.c.b16 %v494, %v494
      %v503 = vpack.c.b16 %v495, %v495
      %vm512 = vcmask 125952
      %513 = vst.msk [vmem:[%s228] sm:$0xf] %vm512, %v496
      %514 = vst.msk [vmem:[%s228 + $0x4] sm:$0xf] %vm512, %v497
      %515 = vst.msk [vmem:[%s228 + $0x8] sm:$0xf] %vm512, %v498
      %516 = vst.msk [vmem:[%s228 + $0xc] sm:$0xf] %vm512, %v499
      %517 = vst.msk [vmem:[%s228 + $0x10] sm:$0xf] %vm512, %v500
      %518 = vst.msk [vmem:[%s228 + $0x14] sm:$0xf] %vm512, %v501
      %519 = vst.msk [vmem:[%s228 + $0x18] sm:$0xf] %vm512, %v502
      %520 = vst.msk [vmem:[%s228 + $0x1c] sm:$0xf] %vm512, %v503
      %p521 = scmp.lt.s32.totalorder %s19, 1
      %s522 = scalar_select %p521, %s19, 1
      %p523 = scmp.lt.s32.totalorder %s20, 0
      %s524 = scalar_select %p523, %s20, 0
      %s525 = smul.addr %s522, 8
      %s526 = sadd.s32 %s524, %s525
      %s527 = smul.addr %s526, 4
      %s528 = scalar_lea.vmem %s4, %s527
      // Predicated region
      $region37: #{forward.17} parent=35 // pred_check
        %p529 = pneg %p138
      $region38: #{forward.17} parent=35 // pred_check_branch
        %531 = sbr.rel (%p529) target = $region40
      $region39: #{forward.17} parent=35 // pred_region
        _
      $region40: #{forward.17} parent=35 // pred_fallthru
        _
    $region36: #{forward.17} parent=5 // pred_fallthru
      _
    %p532 = scmp.le.s32.totalorder 2, %s10
    // Predicated region
    $region41: #{forward.17} parent=5 // pred_check
      %p533 = pneg %p532
    $region42: #{forward.17} parent=5 // pred_check_branch
      %535 = sbr.rel (%p533) target = $region44
    $region43: #{forward.17} parent=5 // pred_region
      %s536 = ssub.s32 %s10, 2
      // Predicated region
      $region45: #{forward.17} parent=43 // pred_check
        %p537 = pneg %p144
      $region46: #{forward.17} parent=43 // pred_check_branch
        %539 = sbr.rel (%p537) target = $region48
      $region47: #{forward.17} parent=43 // pred_region
        %p540 = scmp.lt.s32.totalorder %s21, 1
        %s541 = scalar_select %p540, %s21, 1
        %p542 = scmp.lt.s32.totalorder %s22, 0
        %s543 = scalar_select %p542, %s22, 0
        %s544 = smul.addr %s541, 8
        %s545 = sadd.s32 %s543, %s544
        %s546 = smul.addr %s545, 4
        %s547 = scalar_lea.vmem %s4, %s546
      $region48: #{forward.17} parent=43 // pred_fallthru
        _
    $region44: #{forward.17} parent=5 // pred_fallthru
      _
  $region6: #{forward.17} parent=0 // loop_footer
    %s14 = sadd.s32 1, %s10
  $region7: #{forward.17} parent=0 // loop_footer_branch
    %9 = sbr.rel target = $region3
  $region8: #{forward.17} parent=0 // loop_exit
    _

// kernel: forward.18
$region0: #{forward.18}
  #allocation0 [shape = 'u32[]', space=smem, size = 0x4, offset = 0x4, fixed_abs, tag = 'smem constant byte address 0x4 - core index']
  #allocation1 [shape = 'u32[144,128]{1,0:T(1,128)}', space=vmem, size = 0x12000, scoped, tag = 'internal scratch']
  %s0 = inlined_call_operand.vmem [shape: bf16[2,64,4,4], index: 0, kind: input, shape index: {}]
  %s1 = inlined_call_operand.vmem [shape: bf16[8,4], index: 1, kind: input, shape index: {}]
  %s2 = inlined_call_operand.vmem [shape: bf16[4,8], index: 2, kind: input, shape index: {}]
  %s3 = inlined_call_operand.vmem [shape: bf16[2,64,8,8], index: 3, kind: output, shape index: {}]
  %s4 = sld [smem:[#allocation0]]
  $region45: #{forward.18} parent=0
    _
  %s6 = ssub.s32 1, %s4
  %s7 = scalar_select 0, %s6, %s4
  loop: start=0, step=1, limit=130
  $region2: #{forward.18} parent=0 // loop_pre_header
    _
  $region3: #{forward.18} parent=0 // loop_header
    %s9 = sphi 0, %s13
    %p10 = scmp.ge.s32.totalorder %s9, 130
    %s16 = sphi 0, %s35
    %s17 = sphi 0, %s31
    %s18 = sphi 0, %s27
    %s19 = sphi 0, %s16
    %s20 = sphi 0, %s17
    %s21 = sphi 0, %s18
    %s22 = sphi 0, %s19
    %s23 = sphi 0, %s20
    %s24 = sphi 0, %s21
    %s40 = sphi 0, %s42
    %s43 = sphi 0, %s40
    %s44 = sphi 0, %s43
    %s60 = sphi 0, %s44
    %s66 = sphi 0, %s68
    %s69 = sphi 0, %s66
    %s70 = sphi 0, %s69
    %s86 = sphi 0, %s70
    %s90 = sphi 0, %s90
    %s92 = sphi 0, %s90
    %s93 = sphi 0, %s92
    %s107 = sphi 0, %s93
    %s117 = sphi 0, %s119
    %s120 = sphi 0, %s117
    %s121 = sphi 0, %s120
    %s137 = sphi 0, %s121
  $region4: #{forward.18} parent=0 // loop_header_branch
    %12 = sbr.rel (%p10) target = $region8
  $region5: #{forward.18} parent=0 // loop_body
    %s14 = ssub.s32 %s9, 1
    %s15 = ssub.s32 %s9, 2
    %s25 = sadd.s32 1, %s18
    %p26 = scmp.ge.s32.totalorder %s25, 1
    %s27 = scalar_select %p26, 0, %s25
    %s28 = sadd.s32 1, %s17
    %s29 = scalar_select %p26, %s28, %s17
    %p30 = scmp.ge.s32.totalorder %s29, 64
    %s31 = scalar_select %p30, 0, %s29
    %s32 = sadd.s32 1, %s16
    %s33 = scalar_select %p30, %s32, %s16
    %p34 = scmp.ge.s32.totalorder %s33, 2
    %s35 = scalar_select %p34, 0, %s33
    %s36 = ssub.s32 %s16, %s35
    %s37 = ssub.s32 %s17, %s31
    %s38 = sor.u32 %s36, %s37
    %p39 = scmp.eq.s32.totalorder %s38, 0
    %s41 = sadd.s32 %s40, 1
    %s42 = scalar_select %p39, %s40, %s41
    %p45 = pneg %p39
    %p46 = scmp.eq.s32.totalorder %s9, 127
    %p47 = por %p45, %p46
    %p48 = scmp.ne.s32.totalorder %s40, %s43
    %p49 = scmp.eq.s32.totalorder %s9, 0
    %p50 = por %p48, %p49
    %p51 = scmp.ne.s32.totalorder %s40, %s43
    %p52 = scmp.eq.s32.totalorder %s14, 127
    %p53 = por %p51, %p52
    %p54 = scmp.ne.s32.totalorder %s43, %s44
    %p55 = scmp.eq.s32.totalorder %s14, 0
    %p56 = por %p54, %p55
    %p57 = scmp.ne.s32.totalorder %s43, %s44
    %p58 = scmp.eq.s32.totalorder %s15, 127
    %p59 = por %p57, %p58
    %p61 = scmp.ne.s32.totalorder %s44, %s60
    %p62 = scmp.eq.s32.totalorder %s15, 0
    %p63 = por %p61, %p62
    %s64 = ssub.s32 %s18, %s27
    %p65 = scmp.eq.s32.totalorder %s64, 0
    %s67 = sadd.s32 %s66, 1
    %s68 = scalar_select %p65, %s66, %s67
    %p71 = pneg %p65
    %p72 = scmp.eq.s32.totalorder %s9, 127
    %p73 = por %p71, %p72
    %p74 = scmp.ne.s32.totalorder %s66, %s69
    %p75 = scmp.eq.s32.totalorder %s9, 0
    %p76 = por %p74, %p75
    %p77 = scmp.ne.s32.totalorder %s66, %s69
    %p78 = scmp.eq.s32.totalorder %s14, 127
    %p79 = por %p77, %p78
    %p80 = scmp.ne.s32.totalorder %s69, %s70
    %p81 = scmp.eq.s32.totalorder %s14, 0
    %p82 = por %p80, %p81
    %p83 = scmp.ne.s32.totalorder %s69, %s70
    %p84 = scmp.eq.s32.totalorder %s15, 127
    %p85 = por %p83, %p84
    %p87 = scmp.ne.s32.totalorder %s70, %s86
    %p88 = scmp.eq.s32.totalorder %s15, 0
    %p89 = por %p87, %p88
    %s91 = sadd.s32 %s90, 1
    %p94 = scmp.eq.s32.totalorder %s9, 127
    %p95 = scmp.ne.s32.totalorder %s90, %s92
    %p96 = scmp.eq.s32.totalorder %s9, 0
    %p97 = por %p95, %p96
    %p98 = scmp.ne.s32.totalorder %s90, %s92
    %p99 = scmp.eq.s32.totalorder %s14, 127
    %p100 = por %p98, %p99
    %p101 = scmp.ne.s32.totalorder %s92, %s93
    %p102 = scmp.eq.s32.totalorder %s14, 0
    %p103 = por %p101, %p102
    %p104 = scmp.ne.s32.totalorder %s92, %s93
    %p105 = scmp.eq.s32.totalorder %s15, 127
    %p106 = por %p104, %p105
    %p108 = scmp.ne.s32.totalorder %s93, %s107
    %p109 = scmp.eq.s32.totalorder %s15, 0
    %p110 = por %p108, %p109
    %s111 = ssub.s32 %s16, %s35
    %s112 = ssub.s32 %s17, %s31
    %s113 = sor.u32 %s111, %s112
    %s114 = ssub.s32 %s18, %s27
    %s115 = sor.u32 %s113, %s114
    %p116 = scmp.eq.s32.totalorder %s115, 0
    %s118 = sadd.s32 %s117, 1
    %s119 = scalar_select %p116, %s117, %s118
    %p122 = pneg %p116
    %p123 = scmp.eq.s32.totalorder %s9, 127
    %p124 = por %p122, %p123
    %p125 = scmp.ne.s32.totalorder %s117, %s120
    %p126 = scmp.eq.s32.totalorder %s9, 0
    %p127 = por %p125, %p126
    %p128 = scmp.ne.s32.totalorder %s117, %s120
    %p129 = scmp.eq.s32.totalorder %s14, 127
    %p130 = por %p128, %p129
    %p131 = scmp.ne.s32.totalorder %s120, %s121
    %p132 = scmp.eq.s32.totalorder %s14, 0
    %p133 = por %p131, %p132
    %p134 = scmp.ne.s32.totalorder %s120, %s121
    %p135 = scmp.eq.s32.totalorder %s15, 127
    %p136 = por %p134, %p135
    %p138 = scmp.ne.s32.totalorder %s121, %s137
    %p139 = scmp.eq.s32.totalorder %s15, 0
    %p140 = por %p138, %p139
    %p141 = scmp.le.s32.totalorder 1, %s9
    %p142 = scmp.lt.s32.totalorder %s9, 129
    %p143 = pnand %p141, %p142
    %p144 = pneg %p143
    // Predicated region
    $region9: #{forward.18} parent=5 // pred_check
      _
    $region10: #{forward.18} parent=5 // pred_check_branch
      %146 = sbr.rel (%p143) target = $region12
    $region11: #{forward.18} parent=5 // pred_region
      %s147 = ssub.s32 %s9, 1
      // Predicated region
      $region13: #{forward.18} parent=11 // pred_check
        %p148 = pneg %p82
      $region14: #{forward.18} parent=11 // pred_check_branch
        %150 = sbr.rel (%p148) target = $region16
      $region15: #{forward.18} parent=11 // pred_region
        %p151 = scmp.lt.s32.totalorder %s21, 0
        %s152 = scalar_select %p151, %s21, 0
        %s153 = smul.addr %s152, 4
        %s154 = scalar_lea.vmem %s1, %s153
      $region16: #{forward.18} parent=11 // pred_fallthru
        _
      // Predicated region
      $region17: #{forward.18} parent=11 // pred_check
        %p155 = pneg %p103
      $region18: #{forward.18} parent=11 // pred_check_branch
        %157 = sbr.rel (%p155) target = $region20
      $region19: #{forward.18} parent=11 // pred_region
        _
      $region20: #{forward.18} parent=11 // pred_fallthru
        _
    $region12: #{forward.18} parent=5 // pred_fallthru
      _
    %p158 = scmp.lt.s32.totalorder %s9, 128
    // Predicated region
    $region21: #{forward.18} parent=5 // pred_check
      %p159 = pneg %p158
    $region22: #{forward.18} parent=5 // pred_check_branch
      %161 = sbr.rel (%p159) target = $region24
    $region23: #{forward.18} parent=5 // pred_region
      // Predicated region
      $region25: #{forward.18} parent=23 // pred_check
        %p162 = pneg %p50
      $region26: #{forward.18} parent=23 // pred_check_branch
        %164 = sbr.rel (%p162) target = $region28
      $region27: #{forward.18} parent=23 // pred_region
        %p165 = scmp.lt.s32.totalorder %s16, 1
        %s166 = scalar_select %p165, %s16, 1
        %p167 = scmp.lt.s32.totalorder %s17, 63
        %s168 = scalar_select %p167, %s17, 63
        %s169 = smul.addr %s166, 64
        %s170 = sadd.s32 %s168, %s169
        %s171 = smul.addr %s170, 2
        %s172 = scalar_lea.vmem %s0, %s171
      $region28: #{forward.18} parent=23 // pred_fallthru
        _
    $region24: #{forward.18} parent=5 // pred_fallthru
      _
    %p173 = scmp.le.s32.totalorder 1, %s9
    %p174 = scmp.lt.s32.totalorder %s9, 129
    %p175 = pnand %p173, %p174
    %p176 = pneg %p175
    // Predicated region
    $region29: #{forward.18} parent=5 // pred_check
      _
    $region30: #{forward.18} parent=5 // pred_check_branch
      %178 = sbr.rel (%p175) target = $region32
    $region31: #{forward.18} parent=5 // pred_region
      %s179 = ssub.s32 %s9, 1
      %p180 = scmp.lt.s32.totalorder %s19, 1
      %s181 = scalar_select %p180, %s19, 1
      %p182 = scmp.lt.s32.totalorder %s20, 63
      %s183 = scalar_select %p182, %s20, 63
      %s184 = smul.addr %s181, 64
      %s185 = sadd.s32 %s183, %s184
      %s186 = smul.addr %s185, 2
      %s187 = scalar_lea.vmem %s0, %s186
      %p188 = pneg %p56
      %p189 = pneg %p53
      %p190 = scmp.lt.s32.totalorder %s21, 0
      %s191 = scalar_select %p190, %s21, 0
      %s192 = smul.addr %s191, 4
      %s193 = scalar_lea.vmem %s1, %s192
      %p194 = pneg %p82
      %p195 = pneg %p79
      %p196 = pneg %p103
      %p197 = pneg %p100
      %p198 = pneg %p133
      %p199 = pneg %p130
      %p200 = scmp.lt.s32.totalorder %s19, 1
      %s201 = scalar_select %p200, %s19, 1
      %p202 = scmp.lt.s32.totalorder %s20, 63
      %s203 = scalar_select %p202, %s20, 63
      %p204 = scmp.lt.s32.totalorder %s21, 0
      %s205 = scalar_select %p204, %s21, 0
      %s206 = sadd.s32 %s205, %s203
      %s207 = smul.addr %s201, 64
      %s208 = sadd.s32 %s206, %s207
      %s209 = smul.addr %s208, 4
      %s210 = scalar_lea.vmem %s3, %s209
      %p211 = scmp.lt.s32.totalorder %s19, 1
      %s212 = scalar_select %p211, %s19, 1
      %p213 = scmp.lt.s32.totalorder %s20, 63
      %s214 = scalar_select %p213, %s20, 63
      %s215 = smul.addr %s212, 64
      %s216 = sadd.s32 %s214, %s215
      %s217 = smul.addr %s216, 2
      %s218 = scalar_lea.vmem %s0, %s217
      %p219 = scmp.lt.s32.totalorder %s21, 0
      %s220 = scalar_select %p219, %s21, 0
      %s221 = smul.addr %s220, 4
      %s222 = scalar_lea.vmem %s1, %s221
      %p223 = scmp.lt.s32.totalorder %s19, 1
      %s224 = scalar_select %p223, %s19, 1
      %p225 = scmp.lt.s32.totalorder %s20, 63
      %s226 = scalar_select %p225, %s20, 63
      %p227 = scmp.lt.s32.totalorder %s21, 0
      %s228 = scalar_select %p227, %s21, 0
      %s229 = sadd.s32 %s228, %s226
      %s230 = smul.addr %s224, 64
      %s231 = sadd.s32 %s229, %s230
      %s232 = smul.addr %s231, 4
      %s233 = scalar_lea.vmem %s3, %s232
      %v235 = vld [vmem:[%s222] sm:$0xf]
      %v236 = vld [vmem:[%s218] sm:$0x3]
      %vm237 = vcmask 31744
      %v239 = vsel %vm237, %v235, 0
      %vm241 = vcmask 1041408
      %v243 = vsel %vm241, %v236, 0
      %245 = vmatprep.subr.bf16.mxu0 0
      %246 = vmatpush1.bf16.msra.mxu0 0
      %247 = vmatprep.subr.bf16.mxu0 0
      %248 = vmatpush1.bf16.msra.mxu0 0
      %249 = vmatprep.subr.bf16.mxu0 0
      %250 = vmatpush1.bf16.msra.mxu0 0
      %251 = vmatprep.subr.bf16.mxu0 0
      %252 = vmatpush1.bf16.msra.mxu0 0
      %253 = vmatprep.subr.bf16.mxu0 0
      %254 = vmatpush1.bf16.msra.mxu0 0
      %255 = vmatprep.subr.bf16.mxu0 0
      %256 = vmatpush1.bf16.msra.mxu0 0
      %257 = vmatprep.subr.bf16.mxu0 0
      %258 = vmatpush1.bf16.msra.mxu0 0
      %259 = vmatprep.subr.bf16.mxu0 0
      %260 = vmatpush1.bf16.msra.mxu0 %v243
      %261 = vmatprep.subr.bf16.mxu0 0
      %262 = vmatpush2.bf16.msra.mxu0 0
      %263 = vmatprep.subr.bf16.mxu0 0
      %264 = vmatpush2.bf16.msra.mxu0 0
      %265 = vmatprep.subr.bf16.mxu0 0
      %266 = vmatpush2.bf16.msra.mxu0 0
      %267 = vmatprep.subr.bf16.mxu0 0
      %268 = vmatpush2.bf16.msra.mxu0 0
      %269 = vmatprep.subr.bf16.mxu0 0
      %270 = vmatpush2.bf16.msra.mxu0 0
      %271 = vmatprep.subr.bf16.mxu0 0
      %272 = vmatpush2.bf16.msra.mxu0 0
      %273 = vmatprep.subr.bf16.mxu0 0
      %274 = vmatpush2.bf16.msra.mxu0 0
      %275 = vmatprep.subr.bf16.mxu0 0
      %276 = vmatpush2.bf16.msra.mxu0 0
      %277 = vmatprep.mubr.bf16.mxu0 0
      %278 = vmatmul.mubr.bf16.gmra.mxu0 %v239
      %v279 = vpop.f32.mrf.mxu0
      %v280 = vadd.f32 0.0, %v279
      %v281 = vpop.f32.mrf.mxu0
      %v282 = vpop.f32.mrf.mxu0
      %v283 = vpop.f32.mrf.mxu0
      %284 = vdwg.mxu0
      %v285 = vpack.c.bf16 %v280, %v280
      %v286 = vld [vmem:[%s2] sm:$0x3]
      %v288 = vsel %vm237, %v285, 0
      %v291 = vsel %vm241, %v286, 0
      %293 = vmatprep.subr.bf16.mxu0 0
      %294 = vmatpush1.bf16.msra.mxu0 0
      %295 = vmatprep.subr.bf16.mxu0 0
      %296 = vmatpush1.bf16.msra.mxu0 0
      %297 = vmatprep.subr.bf16.mxu0 0
      %298 = vmatpush1.bf16.msra.mxu0 0
      %299 = vmatprep.subr.bf16.mxu0 0
      %300 = vmatpush1.bf16.msra.mxu0 0
      %301 = vmatprep.subr.bf16.mxu0 0
      %302 = vmatpush1.bf16.msra.mxu0 0
      %303 = vmatprep.subr.bf16.mxu0 0
      %304 = vmatpush1.bf16.msra.mxu0 0
      %305 = vmatprep.subr.bf16.mxu0 0
      %306 = vmatpush1.bf16.msra.mxu0 0
      %307 = vmatprep.subr.bf16.mxu0 0
      %308 = vmatpush1.bf16.msra.mxu0 %v291
      %309 = vmatprep.subr.bf16.mxu0 0
      %310 = vmatpush2.bf16.msra.mxu0 0
      %311 = vmatprep.subr.bf16.mxu0 0
      %312 = vmatpush2.bf16.msra.mxu0 0
      %313 = vmatprep.subr.bf16.mxu0 0
      %314 = vmatpush2.bf16.msra.mxu0 0
      %315 = vmatprep.subr.bf16.mxu0 0
      %316 = vmatpush2.bf16.msra.mxu0 0
      %317 = vmatprep.subr.bf16.mxu0 0
      %318 = vmatpush2.bf16.msra.mxu0 0
      %319 = vmatprep.subr.bf16.mxu0 0
      %320 = vmatpush2.bf16.msra.mxu0 0
      %321 = vmatprep.subr.bf16.mxu0 0
      %322 = vmatpush2.bf16.msra.mxu0 0
      %323 = vmatprep.subr.bf16.mxu0 0
      %324 = vmatpush2.bf16.msra.mxu0 0
      %325 = vmatprep.mubr.bf16.mxu0 0
      %326 = vmatmul.mubr.bf16.gmra.mxu0 %v288
      %v327 = vpop.f32.mrf.mxu0
      %v328 = vadd.f32 0.0, %v327
      %v329 = vpop.f32.mrf.mxu0
      %v330 = vpop.f32.mrf.mxu0
      %v331 = vpop.f32.mrf.mxu0
      %332 = vdwg.mxu0
      %v333 = vpack.c.bf16 %v328, %v328
      %vm334 = vcmask 60416
      %335 = vst.msk [vmem:[%s233] sm:$0xf] %vm334, %v333
      %p336 = scmp.lt.s32.totalorder %s19, 1
      %s337 = scalar_select %p336, %s19, 1
      %p338 = scmp.lt.s32.totalorder %s20, 63
      %s339 = scalar_select %p338, %s20, 63
      %p340 = scmp.lt.s32.totalorder %s21, 0
      %s341 = scalar_select %p340, %s21, 0
      %s342 = sadd.s32 %s341, %s339
      %s343 = smul.addr %s337, 64
      %s344 = sadd.s32 %s342, %s343
      %s345 = smul.addr %s344, 4
      %s346 = scalar_lea.vmem %s3, %s345
      // Predicated region
      $region33: #{forward.18} parent=31 // pred_check
        %p347 = pneg %p130
      $region34: #{forward.18} parent=31 // pred_check_branch
        %349 = sbr.rel (%p347) target = $region36
      $region35: #{forward.18} parent=31 // pred_region
        _
      $region36: #{forward.18} parent=31 // pred_fallthru
        _
    $region32: #{forward.18} parent=5 // pred_fallthru
      _
    %p350 = scmp.le.s32.totalorder 2, %s9
    // Predicated region
    $region37: #{forward.18} parent=5 // pred_check
      %p351 = pneg %p350
    $region38: #{forward.18} parent=5 // pred_check_branch
      %353 = sbr.rel (%p351) target = $region40
    $region39: #{forward.18} parent=5 // pred_region
      %s354 = ssub.s32 %s9, 2
      // Predicated region
      $region41: #{forward.18} parent=39 // pred_check
        %p355 = pneg %p136
      $region42: #{forward.18} parent=39 // pred_check_branch
        %357 = sbr.rel (%p355) target = $region44
      $region43: #{forward.18} parent=39 // pred_region
        %p358 = scmp.lt.s32.totalorder %s22, 1
        %s359 = scalar_select %p358, %s22, 1
        %p360 = scmp.lt.s32.totalorder %s23, 63
        %s361 = scalar_select %p360, %s23, 63
        %p362 = scmp.lt.s32.totalorder %s24, 0
        %s363 = scalar_select %p362, %s24, 0
        %s364 = sadd.s32 %s363, %s361
        %s365 = smul.addr %s359, 64
        %s366 = sadd.s32 %s364, %s365
        %s367 = smul.addr %s366, 4
        %s368 = scalar_lea.vmem %s3, %s367
      $region44: #{forward.18} parent=39 // pred_fallthru
        _
    $region40: #{forward.18} parent=5 // pred_fallthru
      _
  $region6: #{forward.18} parent=0 // loop_footer
    %s13 = sadd.s32 1, %s9
  $region7: #{forward.18} parent=0 // loop_footer_branch
    %8 = sbr.rel target = $region3
  $region8: #{forward.18} parent=0 // loop_exit
    _

// kernel: forward.16
$region0: #{forward.16}
  #allocation0 [shape = 'u32[]', space=smem, size = 0x4, offset = 0x4, fixed_abs, tag = 'smem constant byte address 0x4 - core index']
  #allocation1 [shape = 'u32[144,128]{1,0:T(1,128)}', space=vmem, size = 0x12000, scoped, tag = 'internal scratch']
  %s0 = inlined_call_operand.vmem [shape: bf16[2,32,64], index: 0, kind: input, shape index: {}]
  %s1 = inlined_call_operand.vmem [shape: bf16[64,32], index: 1, kind: input, shape index: {}]
  %s2 = inlined_call_operand.vmem [shape: f32[64,1], index: 2, kind: input, shape index: {}]
  %s3 = inlined_call_operand.vmem [shape: f32[64,1], index: 3, kind: input, shape index: {}]
  %s4 = inlined_call_operand.vmem [shape: bf16[2,64,64], index: 4, kind: output, shape index: {}]
  %s5 = sld [smem:[#allocation0]]
  $region49: #{forward.16} parent=0
    _
  %s7 = ssub.s32 1, %s5
  %s8 = scalar_select 0, %s7, %s5
  loop: start=0, step=1, limit=4
  $region2: #{forward.16} parent=0 // loop_pre_header
    _
  $region3: #{forward.16} parent=0 // loop_header
    %s10 = sphi 0, %s14
    %p11 = scmp.ge.s32.totalorder %s10, 4
    %s17 = sphi 0, %s29
    %s18 = sphi 0, %s25
    %s19 = sphi 0, %s17
    %s20 = sphi 0, %s18
    %s21 = sphi 0, %s19
    %s22 = sphi 0, %s20
    %s34 = sphi 0, %s36
    %s37 = sphi 0, %s34
    %s38 = sphi 0, %s37
    %s54 = sphi 0, %s38
    %s58 = sphi 0, %s58
    %s60 = sphi 0, %s58
    %s61 = sphi 0, %s60
    %s75 = sphi 0, %s61
    %s79 = sphi 0, %s79
    %s81 = sphi 0, %s79
    %s82 = sphi 0, %s81
    %s96 = sphi 0, %s82
    %s100 = sphi 0, %s100
    %s102 = sphi 0, %s100
    %s103 = sphi 0, %s102
    %s117 = sphi 0, %s103
    %s125 = sphi 0, %s127
    %s128 = sphi 0, %s125
    %s129 = sphi 0, %s128
    %s145 = sphi 0, %s129
  $region4: #{forward.16} parent=0 // loop_header_branch
    %13 = sbr.rel (%p11) target = $region8
  $region5: #{forward.16} parent=0 // loop_body
    %s15 = ssub.s32 %s10, 1
    %s16 = ssub.s32 %s10, 2
    %s23 = sadd.s32 1, %s18
    %p24 = scmp.ge.s32.totalorder %s23, 1
    %s25 = scalar_select %p24, 0, %s23
    %s26 = sadd.s32 1, %s17
    %s27 = scalar_select %p24, %s26, %s17
    %p28 = scmp.ge.s32.totalorder %s27, 2
    %s29 = scalar_select %p28, 0, %s27
    %s30 = ssub.s32 %s17, %s29
    %s31 = ssub.s32 %s18, %s25
    %s32 = sor.u32 %s30, %s31
    %p33 = scmp.eq.s32.totalorder %s32, 0
    %s35 = sadd.s32 %s34, 1
    %s36 = scalar_select %p33, %s34, %s35
    %p39 = pneg %p33
    %p40 = scmp.eq.s32.totalorder %s10, 1
    %p41 = por %p39, %p40
    %p42 = scmp.ne.s32.totalorder %s34, %s37
    %p43 = scmp.eq.s32.totalorder %s10, 0
    %p44 = por %p42, %p43
    %p45 = scmp.ne.s32.totalorder %s34, %s37
    %p46 = scmp.eq.s32.totalorder %s15, 1
    %p47 = por %p45, %p46
    %p48 = scmp.ne.s32.totalorder %s37, %s38
    %p49 = scmp.eq.s32.totalorder %s15, 0
    %p50 = por %p48, %p49
    %p51 = scmp.ne.s32.totalorder %s37, %s38
    %p52 = scmp.eq.s32.totalorder %s16, 1
    %p53 = por %p51, %p52
    %p55 = scmp.ne.s32.totalorder %s38, %s54
    %p56 = scmp.eq.s32.totalorder %s16, 0
    %p57 = por %p55, %p56
    %s59 = sadd.s32 %s58, 1
    %p62 = scmp.eq.s32.totalorder %s10, 1
    %p63 = scmp.ne.s32.totalorder %s58, %s60
    %p64 = scmp.eq.s32.totalorder %s10, 0
    %p65 = por %p63, %p64
    %p66 = scmp.ne.s32.totalorder %s58, %s60
    %p67 = scmp.eq.s32.totalorder %s15, 1
    %p68 = por %p66, %p67
    %p69 = scmp.ne.s32.totalorder %s60, %s61
    %p70 = scmp.eq.s32.totalorder %s15, 0
    %p71 = por %p69, %p70
    %p72 = scmp.ne.s32.totalorder %s60, %s61
    %p73 = scmp.eq.s32.totalorder %s16, 1
    %p74 = por %p72, %p73
    %p76 = scmp.ne.s32.totalorder %s61, %s75
    %p77 = scmp.eq.s32.totalorder %s16, 0
    %p78 = por %p76, %p77
    %s80 = sadd.s32 %s79, 1
    %p83 = scmp.eq.s32.totalorder %s10, 1
    %p84 = scmp.ne.s32.totalorder %s79, %s81
    %p85 = scmp.eq.s32.totalorder %s10, 0
    %p86 = por %p84, %p85
    %p87 = scmp.ne.s32.totalorder %s79, %s81
    %p88 = scmp.eq.s32.totalorder %s15, 1
    %p89 = por %p87, %p88
    %p90 = scmp.ne.s32.totalorder %s81, %s82
    %p91 = scmp.eq.s32.totalorder %s15, 0
    %p92 = por %p90, %p91
    %p93 = scmp.ne.s32.totalorder %s81, %s82
    %p94 = scmp.eq.s32.totalorder %s16, 1
    %p95 = por %p93, %p94
    %p97 = scmp.ne.s32.totalorder %s82, %s96
    %p98 = scmp.eq.s32.totalorder %s16, 0
    %p99 = por %p97, %p98
    %s101 = sadd.s32 %s100, 1
    %p104 = scmp.eq.s32.totalorder %s10, 1
    %p105 = scmp.ne.s32.totalorder %s100, %s102
    %p106 = scmp.eq.s32.totalorder %s10, 0
    %p107 = por %p105, %p106
    %p108 = scmp.ne.s32.totalorder %s100, %s102
    %p109 = scmp.eq.s32.totalorder %s15, 1
    %p110 = por %p108, %p109
    %p111 = scmp.ne.s32.totalorder %s102, %s103
    %p112 = scmp.eq.s32.totalorder %s15, 0
    %p113 = por %p111, %p112
    %p114 = scmp.ne.s32.totalorder %s102, %s103
    %p115 = scmp.eq.s32.totalorder %s16, 1
    %p116 = por %p114, %p115
    %p118 = scmp.ne.s32.totalorder %s103, %s117
    %p119 = scmp.eq.s32.totalorder %s16, 0
    %p120 = por %p118, %p119
    %s121 = ssub.s32 %s17, %s29
    %s122 = ssub.s32 %s18, %s25
    %s123 = sor.u32 %s121, %s122
    %p124 = scmp.eq.s32.totalorder %s123, 0
    %s126 = sadd.s32 %s125, 1
    %s127 = scalar_select %p124, %s125, %s126
    %p130 = pneg %p124
    %p131 = scmp.eq.s32.totalorder %s10, 1
    %p132 = por %p130, %p131
    %p133 = scmp.ne.s32.totalorder %s125, %s128
    %p134 = scmp.eq.s32.totalorder %s10, 0
    %p135 = por %p133, %p134
    %p136 = scmp.ne.s32.totalorder %s125, %s128
    %p137 = scmp.eq.s32.totalorder %s15, 1
    %p138 = por %p136, %p137
    %p139 = scmp.ne.s32.totalorder %s128, %s129
    %p140 = scmp.eq.s32.totalorder %s15, 0
    %p141 = por %p139, %p140
    %p142 = scmp.ne.s32.totalorder %s128, %s129
    %p143 = scmp.eq.s32.totalorder %s16, 1
    %p144 = por %p142, %p143
    %p146 = scmp.ne.s32.totalorder %s129, %s145
    %p147 = scmp.eq.s32.totalorder %s16, 0
    %p148 = por %p146, %p147
    %p149 = scmp.le.s32.totalorder 1, %s10
    %p150 = scmp.lt.s32.totalorder %s10, 3
    %p151 = pnand %p149, %p150
    %p152 = pneg %p151
    // Predicated region
    $region9: #{forward.16} parent=5 // pred_check
      _
    $region10: #{forward.16} parent=5 // pred_check_branch
      %154 = sbr.rel (%p151) target = $region12
    $region11: #{forward.16} parent=5 // pred_region
      %s155 = ssub.s32 %s10, 1
      // Predicated region
      $region13: #{forward.16} parent=11 // pred_check
        %p156 = pneg %p71
      $region14: #{forward.16} parent=11 // pred_check_branch
        %158 = sbr.rel (%p156) target = $region16
      $region15: #{forward.16} parent=11 // pred_region
        _
      $region16: #{forward.16} parent=11 // pred_fallthru
        _
      // Predicated region
      $region17: #{forward.16} parent=11 // pred_check
        %p159 = pneg %p92
      $region18: #{forward.16} parent=11 // pred_check_branch
        %161 = sbr.rel (%p159) target = $region20
      $region19: #{forward.16} parent=11 // pred_region
        _
      $region20: #{forward.16} parent=11 // pred_fallthru
        _
      // Predicated region
      $region21: #{forward.16} parent=11 // pred_check
        %p162 = pneg %p113
      $region22: #{forward.16} parent=11 // pred_check_branch
        %164 = sbr.rel (%p162) target = $region24
      $region23: #{forward.16} parent=11 // pred_region
        _
      $region24: #{forward.16} parent=11 // pred_fallthru
        _
    $region12: #{forward.16} parent=5 // pred_fallthru
      _
    %p165 = scmp.lt.s32.totalorder %s10, 2
    // Predicated region
    $region25: #{forward.16} parent=5 // pred_check
      %p166 = pneg %p165
    $region26: #{forward.16} parent=5 // pred_check_branch
      %168 = sbr.rel (%p166) target = $region28
    $region27: #{forward.16} parent=5 // pred_region
      // Predicated region
      $region29: #{forward.16} parent=27 // pred_check
        %p169 = pneg %p44
      $region30: #{forward.16} parent=27 // pred_check_branch
        %171 = sbr.rel (%p169) target = $region32
      $region31: #{forward.16} parent=27 // pred_region
        %p172 = scmp.lt.s32.totalorder %s17, 1
        %s173 = scalar_select %p172, %s17, 1
        %p174 = scmp.lt.s32.totalorder %s18, 0
        %s175 = scalar_select %p174, %s18, 0
        %s176 = smul.addr %s173, 4
        %s177 = sadd.s32 %s175, %s176
        %s178 = smul.addr %s177, 4
        %s179 = scalar_lea.vmem %s0, %s178
      $region32: #{forward.16} parent=27 // pred_fallthru
        _
    $region28: #{forward.16} parent=5 // pred_fallthru
      _
    %p180 = scmp.le.s32.totalorder 1, %s10
    %p181 = scmp.lt.s32.totalorder %s10, 3
    %p182 = pnand %p180, %p181
    %p183 = pneg %p182
    // Predicated region
    $region33: #{forward.16} parent=5 // pred_check
      _
    $region34: #{forward.16} parent=5 // pred_check_branch
      %185 = sbr.rel (%p182) target = $region36
    $region35: #{forward.16} parent=5 // pred_region
      %s186 = ssub.s32 %s10, 1
      %p187 = scmp.lt.s32.totalorder %s19, 1
      %s188 = scalar_select %p187, %s19, 1
      %p189 = scmp.lt.s32.totalorder %s20, 0
      %s190 = scalar_select %p189, %s20, 0
      %s191 = smul.addr %s188, 4
      %s192 = sadd.s32 %s190, %s191
      %s193 = smul.addr %s192, 4
      %s194 = scalar_lea.vmem %s0, %s193
      %p195 = pneg %p50
      %p196 = pneg %p47
      %p197 = pneg %p71
      %p198 = pneg %p68
      %p199 = pneg %p92
      %p200 = pneg %p89
      %p201 = pneg %p113
      %p202 = pneg %p110
      %p203 = pneg %p141
      %p204 = pneg %p138
      %p205 = scmp.lt.s32.totalorder %s19, 1
      %s206 = scalar_select %p205, %s19, 1
      %p207 = scmp.lt.s32.totalorder %s20, 0
      %s208 = scalar_select %p207, %s20, 0
      %s209 = smul.addr %s206, 8
      %s210 = sadd.s32 %s208, %s209
      %s211 = smul.addr %s210, 4
      %s212 = scalar_lea.vmem %s4, %s211
      %p213 = scmp.lt.s32.totalorder %s19, 1
      %s214 = scalar_select %p213, %s19, 1
      %p215 = scmp.lt.s32.totalorder %s20, 0
      %s216 = scalar_select %p215, %s20, 0
      %s217 = smul.addr %s214, 4
      %s218 = sadd.s32 %s216, %s217
      %s219 = smul.addr %s218, 4
      %s220 = scalar_lea.vmem %s0, %s219
      %p221 = scmp.lt.s32.totalorder %s19, 1
      %s222 = scalar_select %p221, %s19, 1
      %p223 = scmp.lt.s32.totalorder %s20, 0
      %s224 = scalar_select %p223, %s20, 0
      %s225 = smul.addr %s222, 8
      %s226 = sadd.s32 %s224, %s225
      %s227 = smul.addr %s226, 4
      %s228 = scalar_lea.vmem %s4, %s227
      %v230 = vld [vmem:[%s1] sm:$0xf]
      %v231 = vld [vmem:[%s1 + $0x4] sm:$0xf]
      %v232 = vld [vmem:[%s1 + $0x8] sm:$0xf]
      %v233 = vld [vmem:[%s1 + $0xc] sm:$0xf]
      %v234 = vld [vmem:[%s1 + $0x10] sm:$0xf]
      %v235 = vld [vmem:[%s1 + $0x14] sm:$0xf]
      %v236 = vld [vmem:[%s1 + $0x18] sm:$0xf]
      %v237 = vld [vmem:[%s1 + $0x1c] sm:$0xf]
      %v238 = vld [vmem:[%s220] sm:$0xf]
      %v239 = vld [vmem:[%s220 + $0x4] sm:$0xf]
      %v240 = vld [vmem:[%s220 + $0x8] sm:$0xf]
      %v241 = vld [vmem:[%s220 + $0xc] sm:$0xf]
      %v250 = vunpack.c.l.b16 %v230
      %v251 = vunpack.c.l.b16 %v231
      %v252 = vunpack.c.l.b16 %v232
      %v253 = vunpack.c.l.b16 %v233
      %v254 = vunpack.c.l.b16 %v234
      %v255 = vunpack.c.l.b16 %v235
      %v256 = vunpack.c.l.b16 %v236
      %v257 = vunpack.c.l.b16 %v237
      %v258 = vpack.c.b16 %v251, %v250
      %v259 = vpack.c.b16 %v253, %v252
      %v260 = vpack.c.b16 %v255, %v254
      %v261 = vpack.c.b16 %v257, %v256
      %v266 = vunpack.c.l.b16 %v238
      %v267 = vunpack.c.l.b16 %v239
      %v268 = vunpack.c.l.b16 %v240
      %v269 = vunpack.c.l.b16 %v241
      %v270 = vpack.c.b16 %v267, %v266
      %v271 = vpack.c.b16 %v269, %v268
      %vm274 = vcmask 261120
      %v276 = vsel %vm274, %v258, 0
      %v279 = vsel %vm274, %v259, 0
      %v282 = vsel %vm274, %v260, 0
      %v285 = vsel %vm274, %v261, 0
      %287 = vmatprep.subr.bf16.mxu0 0
      %288 = vmatpush1.bf16.msra.mxu0 0
      %289 = vmatprep.subr.bf16.mxu0 0
      %290 = vmatpush1.bf16.msra.mxu0 0
      %291 = vmatprep.subr.bf16.mxu0 0
      %292 = vmatpush1.bf16.msra.mxu0 0
      %293 = vmatprep.subr.bf16.mxu0 0
      %294 = vmatpush1.bf16.msra.mxu0 0
      %295 = vmatprep.subr.bf16.mxu0 0
      %296 = vmatpush1.bf16.msra.mxu0 0
      %297 = vmatprep.subr.bf16.mxu0 0
      %298 = vmatpush1.bf16.msra.mxu0 0
      %299 = vmatprep.subr.bf16.mxu0 0
      %300 = vmatpush1.bf16.msra.mxu0 %v271
      %301 = vmatprep.subr.bf16.mxu0 0
      %302 = vmatpush1.bf16.msra.mxu0 %v270
      %303 = vmatprep.subr.bf16.mxu0 0
      %304 = vmatpush2.bf16.msra.mxu0 0
      %305 = vmatprep.subr.bf16.mxu0 0
      %306 = vmatpush2.bf16.msra.mxu0 0
      %307 = vmatprep.subr.bf16.mxu0 0
      %308 = vmatpush2.bf16.msra.mxu0 0
      %309 = vmatprep.subr.bf16.mxu0 0
      %310 = vmatpush2.bf16.msra.mxu0 0
      %311 = vmatprep.subr.bf16.mxu0 0
      %312 = vmatpush2.bf16.msra.mxu0 0
      %313 = vmatprep.subr.bf16.mxu0 0
      %314 = vmatpush2.bf16.msra.mxu0 0
      %315 = vmatprep.subr.bf16.mxu0 0
      %316 = vmatpush2.bf16.msra.mxu0 0
      %317 = vmatprep.subr.bf16.mxu0 0
      %318 = vmatpush2.bf16.msra.mxu0 0
      %319 = vmatprep.mubr.bf16.mxu0 0
      %320 = vmatmul.mubr.bf16.gmra.mxu0 %v276
      %v321 = vpop.f32.mrf.mxu0
      %v322 = vadd.f32 0.0, %v321
      %v323 = vpop.f32.mrf.mxu0
      %v324 = vpop.f32.mrf.mxu0
      %v325 = vadd.f32 0.0, %v324
      %v326 = vpop.f32.mrf.mxu0
      %327 = vmatprep.mubr.bf16.mxu0 0
      %328 = vmatmul.mubr.bf16.gmra.mxu0 %v279
      %v329 = vpop.f32.mrf.mxu0
      %v330 = vadd.f32 0.0, %v329
      %v331 = vpop.f32.mrf.mxu0
      %v332 = vpop.f32.mrf.mxu0
      %v333 = vadd.f32 0.0, %v332
      %v334 = vpop.f32.mrf.mxu0
      %335 = vmatprep.mubr.bf16.mxu0 0
      %336 = vmatmul.mubr.bf16.gmra.mxu0 %v282
      %v337 = vpop.f32.mrf.mxu0
      %v338 = vadd.f32 0.0, %v337
      %v339 = vpop.f32.mrf.mxu0
      %v340 = vpop.f32.mrf.mxu0
      %v341 = vadd.f32 0.0, %v340
      %v342 = vpop.f32.mrf.mxu0
      %343 = vmatprep.mubr.bf16.mxu0 0
      %344 = vmatmul.mubr.bf16.gmra.mxu0 %v285
      %v345 = vpop.f32.mrf.mxu0
      %v346 = vadd.f32 0.0, %v345
      %v347 = vpop.f32.mrf.mxu0
      %v348 = vpop.f32.mrf.mxu0
      %v349 = vadd.f32 0.0, %v348
      %v350 = vpop.f32.mrf.mxu0
      %351 = vdwg.mxu0
      %v352 = vld [vmem:[%s2] sm:$0xff]
      %v353 = vld [vmem:[%s2 + $0x8] sm:$0xff]
      %v354 = vld [vmem:[%s2 + $0x10] sm:$0xff]
      %v355 = vld [vmem:[%s2 + $0x18] sm:$0xff]
      %v356 = vld [vmem:[%s2 + $0x20] sm:$0xff]
      %v357 = vld [vmem:[%s2 + $0x28] sm:$0xff]
      %v358 = vld [vmem:[%s2 + $0x30] sm:$0xff]
      %v359 = vld [vmem:[%s2 + $0x38] sm:$0xff]
      %361 = vset.pattern.permute.xlu0 0
      %362 = vperm.xlu0 %361, %v352
      %v363 = vpop.permute.xlu0 %362
      %366 = vset.pattern.permute.xlu0 0
      %367 = vperm.xlu0 %366, %v353
      %v368 = vpop.permute.xlu0 %367
      %371 = vset.pattern.permute.xlu0 0
      %372 = vperm.xlu0 %371, %v354
      %v373 = vpop.permute.xlu0 %372
      %376 = vset.pattern.permute.xlu0 0
      %377 = vperm.xlu0 %376, %v355
      %v378 = vpop.permute.xlu0 %377
      %381 = vset.pattern.permute.xlu0 0
      %382 = vperm.xlu0 %381, %v356
      %v383 = vpop.permute.xlu0 %382
      %386 = vset.pattern.permute.xlu0 0
      %387 = vperm.xlu0 %386, %v357
      %v388 = vpop.permute.xlu0 %387
      %391 = vset.pattern.permute.xlu0 0
      %392 = vperm.xlu0 %391, %v358
      %v393 = vpop.permute.xlu0 %392
      %396 = vset.pattern.permute.xlu0 0
      %397 = vperm.xlu0 %396, %v359
      %v398 = vpop.permute.xlu0 %397
      %v400 = vmul.f32 %v322, %v363
      %v401 = vmul.f32 %v325, %v368
      %v402 = vmul.f32 %v330, %v373
      %v403 = vmul.f32 %v333, %v378
      %v404 = vmul.f32 %v338, %v383
      %v405 = vmul.f32 %v341, %v388
      %v406 = vmul.f32 %v346, %v393
      %v407 = vmul.f32 %v349, %v398
      %v408 = vld [vmem:[%s3] sm:$0xff]
      %v409 = vld [vmem:[%s3 + $0x8] sm:$0xff]
      %v410 = vld [vmem:[%s3 + $0x10] sm:$0xff]
      %v411 = vld [vmem:[%s3 + $0x18] sm:$0xff]
      %v412 = vld [vmem:[%s3 + $0x20] sm:$0xff]
      %v413 = vld [vmem:[%s3 + $0x28] sm:$0xff]
      %v414 = vld [vmem:[%s3 + $0x30] sm:$0xff]
      %v415 = vld [vmem:[%s3 + $0x38] sm:$0xff]
      %417 = vset.pattern.permute.xlu0 0
      %418 = vperm.xlu0 %417, %v408
      %v419 = vpop.permute.xlu0 %418
      %422 = vset.pattern.permute.xlu0 0
      %423 = vperm.xlu0 %422, %v409
      %v424 = vpop.permute.xlu0 %423
      %427 = vset.pattern.permute.xlu0 0
      %428 = vperm.xlu0 %427, %v410
      %v429 = vpop.permute.xlu0 %428
      %432 = vset.pattern.permute.xlu0 0
      %433 = vperm.xlu0 %432, %v411
      %v434 = vpop.permute.xlu0 %433
      %437 = vset.pattern.permute.xlu0 0
      %438 = vperm.xlu0 %437, %v412
      %v439 = vpop.permute.xlu0 %438
      %442 = vset.pattern.permute.xlu0 0
      %443 = vperm.xlu0 %442, %v413
      %v444 = vpop.permute.xlu0 %443
      %447 = vset.pattern.permute.xlu0 0
      %448 = vperm.xlu0 %447, %v414
      %v449 = vpop.permute.xlu0 %448
      %452 = vset.pattern.permute.xlu0 0
      %453 = vperm.xlu0 %452, %v415
      %v454 = vpop.permute.xlu0 %453
      %v456 = vadd.f32 %v400, %v419
      %v457 = vadd.f32 %v401, %v424
      %v458 = vadd.f32 %v402, %v429
      %v459 = vadd.f32 %v403, %v434
      %v460 = vadd.f32 %v404, %v439
      %v461 = vadd.f32 %v405, %v444
      %v462 = vadd.f32 %v406, %v449
      %v463 = vadd.f32 %v407, %v454
      %v464 = vpack.c.bf16 %v457, %v456
      %v465 = vpack.c.bf16 %v459, %v458
      %v466 = vpack.c.bf16 %v461, %v460
      %v467 = vpack.c.bf16 %v463, %v462
      %v472 = vunpack.c.l.b16 %v464
      %v473 = vunpack.c.h.b16 %v464
      %v474 = vunpack.c.l.b16 %v465
      %v475 = vunpack.c.h.b16 %v465
      %v476 = vunpack.c.l.b16 %v466
      %v477 = vunpack.c.h.b16 %v466
      %v478 = vunpack.c.l.b16 %v467
      %v479 = vunpack.c.h.b16 %v467
      %v480 = vpack.c.b16 %v472, %v472
      %v481 = vpack.c.b16 %v473, %v473
      %v482 = vpack.c.b16 %v474, %v474
      %v483 = vpack.c.b16 %v475, %v475
      %v484 = vpack.c.b16 %v476, %v476
      %v485 = vpack.c.b16 %v477, %v477
      %v486 = vpack.c.b16 %v478, %v478
      %v487 = vpack.c.b16 %v479, %v479
      %vm496 = vcmask 519168
      %497 = vst.msk [vmem:[%s228] sm:$0xf] %vm496, %v480
      %498 = vst.msk [vmem:[%s228 + $0x4] sm:$0xf] %vm496, %v481
      %499 = vst.msk [vmem:[%s228 + $0x8] sm:$0xf] %vm496, %v482
      %500 = vst.msk [vmem:[%s228 + $0xc] sm:$0xf] %vm496, %v483
      %501 = vst.msk [vmem:[%s228 + $0x10] sm:$0xf] %vm496, %v484
      %502 = vst.msk [vmem:[%s228 + $0x14] sm:$0xf] %vm496, %v485
      %503 = vst.msk [vmem:[%s228 + $0x18] sm:$0xf] %vm496, %v486
      %504 = vst.msk [vmem:[%s228 + $0x1c] sm:$0xf] %vm496, %v487
      %p505 = scmp.lt.s32.totalorder %s19, 1
      %s506 = scalar_select %p505, %s19, 1
      %p507 = scmp.lt.s32.totalorder %s20, 0
      %s508 = scalar_select %p507, %s20, 0
      %s509 = smul.addr %s506, 8
      %s510 = sadd.s32 %s508, %s509
      %s511 = smul.addr %s510, 4
      %s512 = scalar_lea.vmem %s4, %s511
      // Predicated region
      $region37: #{forward.16} parent=35 // pred_check
        %p513 = pneg %p138
      $region38: #{forward.16} parent=35 // pred_check_branch
        %515 = sbr.rel (%p513) target = $region40
      $region39: #{forward.16} parent=35 // pred_region
        _
      $region40: #{forward.16} parent=35 // pred_fallthru
        _
    $region36: #{forward.16} parent=5 // pred_fallthru
      _
    %p516 = scmp.le.s32.totalorder 2, %s10
    // Predicated region
    $region41: #{forward.16} parent=5 // pred_check
      %p517 = pneg %p516
    $region42: #{forward.16} parent=5 // pred_check_branch
      %519 = sbr.rel (%p517) target = $region44
    $region43: #{forward.16} parent=5 // pred_region
      %s520 = ssub.s32 %s10, 2
      // Predicated region
      $region45: #{forward.16} parent=43 // pred_check
        %p521 = pneg %p144
      $region46: #{forward.16} parent=43 // pred_check_branch
        %523 = sbr.rel (%p521) target = $region48
      $region47: #{forward.16} parent=43 // pred_region
        %p524 = scmp.lt.s32.totalorder %s21, 1
        %s525 = scalar_select %p524, %s21, 1
        %p526 = scmp.lt.s32.totalorder %s22, 0
        %s527 = scalar_select %p526, %s22, 0
        %s528 = smul.addr %s525, 8
        %s529 = sadd.s32 %s527, %s528
        %s530 = smul.addr %s529, 4
        %s531 = scalar_lea.vmem %s4, %s530
      $region48: #{forward.16} parent=43 // pred_fallthru
        _
    $region44: #{forward.16} parent=5 // pred_fallthru
      _
  $region6: #{forward.16} parent=0 // loop_footer
    %s14 = sadd.s32 1, %s10
  $region7: #{forward.16} parent=0 // loop_footer_branch
    %9 = sbr.rel target = $region3
  $region8: #{forward.16} parent=0 // loop_exit
    _

// kernel: forward.23
$region0: #{forward.23}
  #allocation0 [shape = 'u32[]', space=smem, size = 0x4, offset = 0x4, fixed_abs, tag = 'smem constant byte address 0x4 - core index']
  #allocation1 [shape = 'u32[144,128]{1,0:T(1,128)}', space=vmem, size = 0x12000, scoped, tag = 'internal scratch']
  %s0 = inlined_call_operand.vmem [shape: f32[2,8,8,8], index: 0, kind: input, shape index: {}]
  %s1 = inlined_call_operand.vmem [shape: f32[32,8], index: 1, kind: input, shape index: {}]
  %s2 = inlined_call_operand.vmem [shape: f32[8,32], index: 2, kind: input, shape index: {}]
  %s3 = inlined_call_operand.hbm [shape: f32[2,8,32,32], index: 3, kind: output, shape index: {}]
  %s4 = sld [smem:[#allocation0]]
  $region45: #{forward.23} parent=0
    _
  %s6 = ssub.s32 1, %s4
  %s7 = scalar_select 0, %s6, %s4
  $region1: #{forward.23} parent=0
    #allocation2 [shape = 'u8[32768]{0}', space=vmem, size = 0x8000, scoped, tag = 'output window, operand 0']
    #allocation3 [shape = 's32[2]{0}', space=sflag, size = 0x8, scoped, tag = 'scoped memory for forward.23']
    %8 = vsyncpa [#allocation3], 0
    %s9 = scalar_lea.sflag [#allocation3], 1
    %10 = vsyncpa %s9, 0
    loop: start=0, step=1, limit=18
    $region2: #{forward.23} parent=1 // loop_pre_header
      _
    $region3: #{forward.23} parent=1 // loop_header
      %s12 = sphi 0, %s16
      %p13 = scmp.ge.s32.totalorder %s12, 18
      %s19 = sphi 0, %s38
      %s20 = sphi 0, %s34
      %s21 = sphi 0, %s30
      %s22 = sphi 0, %s19
      %s23 = sphi 0, %s20
      %s24 = sphi 0, %s21
      %s25 = sphi 0, %s22
      %s26 = sphi 0, %s23
      %s27 = sphi 0, %s24
      %s43 = sphi 0, %s45
      %s46 = sphi 0, %s43
      %s47 = sphi 0, %s46
      %s63 = sphi 0, %s47
      %s69 = sphi 0, %s71
      %s72 = sphi 0, %s69
      %s73 = sphi 0, %s72
      %s89 = sphi 0, %s73
      %s93 = sphi 0, %s93
      %s95 = sphi 0, %s93
      %s96 = sphi 0, %s95
      %s110 = sphi 0, %s96
      %s120 = sphi 0, %s122
      %s123 = sphi 0, %s120
      %s124 = sphi 0, %s123
      %s140 = sphi 0, %s124
    $region4: #{forward.23} parent=1 // loop_header_branch
      %15 = sbr.rel (%p13) target = $region8
    $region5: #{forward.23} parent=1 // loop_body
      %s17 = ssub.s32 %s12, 1
      %s18 = ssub.s32 %s12, 2
      %s28 = sadd.s32 1, %s21
      %p29 = scmp.ge.s32.totalorder %s28, 1
      %s30 = scalar_select %p29, 0, %s28
      %s31 = sadd.s32 1, %s20
      %s32 = scalar_select %p29, %s31, %s20
      %p33 = scmp.ge.s32.totalorder %s32, 8
      %s34 = scalar_select %p33, 0, %s32
      %s35 = sadd.s32 1, %s19
      %s36 = scalar_select %p33, %s35, %s19
      %p37 = scmp.ge.s32.totalorder %s36, 2
      %s38 = scalar_select %p37, 0, %s36
      %s39 = ssub.s32 %s19, %s38
      %s40 = ssub.s32 %s20, %s34
      %s41 = sor.u32 %s39, %s40
      %p42 = scmp.eq.s32.totalorder %s41, 0
      %s44 = sadd.s32 %s43, 1
      %s45 = scalar_select %p42, %s43, %s44
      %p48 = pneg %p42
      %p49 = scmp.eq.s32.totalorder %s12, 15
      %p50 = por %p48, %p49
      %p51 = scmp.ne.s32.totalorder %s43, %s46
      %p52 = scmp.eq.s32.totalorder %s12, 0
      %p53 = por %p51, %p52
      %p54 = scmp.ne.s32.totalorder %s43, %s46
      %p55 = scmp.eq.s32.totalorder %s17, 15
      %p56 = por %p54, %p55
      %p57 = scmp.ne.s32.totalorder %s46, %s47
      %p58 = scmp.eq.s32.totalorder %s17, 0
      %p59 = por %p57, %p58
      %p60 = scmp.ne.s32.totalorder %s46, %s47
      %p61 = scmp.eq.s32.totalorder %s18, 15
      %p62 = por %p60, %p61
      %p64 = scmp.ne.s32.totalorder %s47, %s63
      %p65 = scmp.eq.s32.totalorder %s18, 0
      %p66 = por %p64, %p65
      %s67 = ssub.s32 %s21, %s30
      %p68 = scmp.eq.s32.totalorder %s67, 0
      %s70 = sadd.s32 %s69, 1
      %s71 = scalar_select %p68, %s69, %s70
      %p74 = pneg %p68
      %p75 = scmp.eq.s32.totalorder %s12, 15
      %p76 = por %p74, %p75
      %p77 = scmp.ne.s32.totalorder %s69, %s72
      %p78 = scmp.eq.s32.totalorder %s12, 0
      %p79 = por %p77, %p78
      %p80 = scmp.ne.s32.totalorder %s69, %s72
      %p81 = scmp.eq.s32.totalorder %s17, 15
      %p82 = por %p80, %p81
      %p83 = scmp.ne.s32.totalorder %s72, %s73
      %p84 = scmp.eq.s32.totalorder %s17, 0
      %p85 = por %p83, %p84
      %p86 = scmp.ne.s32.totalorder %s72, %s73
      %p87 = scmp.eq.s32.totalorder %s18, 15
      %p88 = por %p86, %p87
      %p90 = scmp.ne.s32.totalorder %s73, %s89
      %p91 = scmp.eq.s32.totalorder %s18, 0
      %p92 = por %p90, %p91
      %s94 = sadd.s32 %s93, 1
      %p97 = scmp.eq.s32.totalorder %s12, 15
      %p98 = scmp.ne.s32.totalorder %s93, %s95
      %p99 = scmp.eq.s32.totalorder %s12, 0
      %p100 = por %p98, %p99
      %p101 = scmp.ne.s32.totalorder %s93, %s95
      %p102 = scmp.eq.s32.totalorder %s17, 15
      %p103 = por %p101, %p102
      %p104 = scmp.ne.s32.totalorder %s95, %s96
      %p105 = scmp.eq.s32.totalorder %s17, 0
      %p106 = por %p104, %p105
      %p107 = scmp.ne.s32.totalorder %s95, %s96
      %p108 = scmp.eq.s32.totalorder %s18, 15
      %p109 = por %p107, %p108
      %p111 = scmp.ne.s32.totalorder %s96, %s110
      %p112 = scmp.eq.s32.totalorder %s18, 0
      %p113 = por %p111, %p112
      %s114 = ssub.s32 %s19, %s38
      %s115 = ssub.s32 %s20, %s34
      %s116 = sor.u32 %s114, %s115
      %s117 = ssub.s32 %s21, %s30
      %s118 = sor.u32 %s116, %s117
      %p119 = scmp.eq.s32.totalorder %s118, 0
      %s121 = sadd.s32 %s120, 1
      %s122 = scalar_select %p119, %s120, %s121
      %p125 = pneg %p119
      %p126 = scmp.eq.s32.totalorder %s12, 15
      %p127 = por %p125, %p126
      %p128 = scmp.ne.s32.totalorder %s120, %s123
      %p129 = scmp.eq.s32.totalorder %s12, 0
      %p130 = por %p128, %p129
      %p131 = scmp.ne.s32.totalorder %s120, %s123
      %p132 = scmp.eq.s32.totalorder %s17, 15
      %p133 = por %p131, %p132
      %p134 = scmp.ne.s32.totalorder %s123, %s124
      %p135 = scmp.eq.s32.totalorder %s17, 0
      %p136 = por %p134, %p135
      %p137 = scmp.ne.s32.totalorder %s123, %s124
      %p138 = scmp.eq.s32.totalorder %s18, 15
      %p139 = por %p137, %p138
      %p141 = scmp.ne.s32.totalorder %s124, %s140
      %p142 = scmp.eq.s32.totalorder %s18, 0
      %p143 = por %p141, %p142
      %p144 = scmp.le.s32.totalorder 1, %s12
      %p145 = scmp.lt.s32.totalorder %s12, 17
      %p146 = pnand %p144, %p145
      %p147 = pneg %p146
      // Predicated region
      $region9: #{forward.23} parent=5 // pred_check
        _
      $region10: #{forward.23} parent=5 // pred_check_branch
        %149 = sbr.rel (%p146) target = $region12
      $region11: #{forward.23} parent=5 // pred_region
        %s150 = ssub.s32 %s12, 1
        // Predicated region
        $region13: #{forward.23} parent=11 // pred_check
          %p151 = pneg %p85
        $region14: #{forward.23} parent=11 // pred_check_branch
          %153 = sbr.rel (%p151) target = $region16
        $region15: #{forward.23} parent=11 // pred_region
          %s154 = smul.u32 4, %s24
          %p155 = scmp.lt.s32.totalorder %s154, 3
          %s156 = scalar_select %p155, %s154, 3
          %s157 = smul.addr %s156, 8
          %s158 = scalar_lea.vmem %s1, %s157
          %s159 = smul.u32 4, %s24
        $region16: #{forward.23} parent=11 // pred_fallthru
          _
        // Predicated region
        $region17: #{forward.23} parent=11 // pred_check
          %p160 = pneg %p106
        $region18: #{forward.23} parent=11 // pred_check_branch
          %162 = sbr.rel (%p160) target = $region20
        $region19: #{forward.23} parent=11 // pred_region
          _
        $region20: #{forward.23} parent=11 // pred_fallthru
          _
      $region12: #{forward.23} parent=5 // pred_fallthru
        _
      %p163 = scmp.lt.s32.totalorder %s12, 16
      // Predicated region
      $region21: #{forward.23} parent=5 // pred_check
        %p164 = pneg %p163
      $region22: #{forward.23} parent=5 // pred_check_branch
        %166 = sbr.rel (%p164) target = $region24
      $region23: #{forward.23} parent=5 // pred_region
        // Predicated region
        $region25: #{forward.23} parent=23 // pred_check
          %p167 = pneg %p53
        $region26: #{forward.23} parent=23 // pred_check_branch
          %169 = sbr.rel (%p167) target = $region28
        $region27: #{forward.23} parent=23 // pred_region
          %p170 = scmp.lt.s32.totalorder %s19, 1
          %s171 = scalar_select %p170, %s19, 1
          %p172 = scmp.lt.s32.totalorder %s20, 7
          %s173 = scalar_select %p172, %s20, 7
          %s174 = smul.addr %s171, 8
          %s175 = sadd.s32 %s173, %s174
          %s176 = smul.addr %s175, 8
          %s177 = scalar_lea.vmem %s0, %s176
        $region28: #{forward.23} parent=23 // pred_fallthru
          _
      $region24: #{forward.23} parent=5 // pred_fallthru
        _
      %p178 = scmp.le.s32.totalorder 1, %s12
      %p179 = scmp.lt.s32.totalorder %s12, 17
      %p180 = pnand %p178, %p179
      %p181 = pneg %p180
      // Predicated region
      $region29: #{forward.23} parent=5 // pred_check
        _
      $region30: #{forward.23} parent=5 // pred_check_branch
        %183 = sbr.rel (%p180) target = $region32
      $region31: #{forward.23} parent=5 // pred_region
        %s184 = ssub.s32 %s12, 1
        %p185 = scmp.lt.s32.totalorder %s22, 1
        %s186 = scalar_select %p185, %s22, 1
        %p187 = scmp.lt.s32.totalorder %s23, 7
        %s188 = scalar_select %p187, %s23, 7
        %s189 = smul.addr %s186, 8
        %s190 = sadd.s32 %s188, %s189
        %s191 = smul.addr %s190, 8
        %s192 = scalar_lea.vmem %s0, %s191
        %p193 = pneg %p59
        %p194 = pneg %p56
        %s195 = smul.u32 4, %s24
        %p196 = scmp.lt.s32.totalorder %s195, 3
        %s197 = scalar_select %p196, %s195, 3
        %s198 = smul.addr %s197, 8
        %s199 = scalar_lea.vmem %s1, %s198
        %p200 = pneg %p85
        %p201 = pneg %p82
        %p202 = pneg %p106
        %p203 = pneg %p103
        %p204 = pneg %p136
        %p205 = pneg %p133
        %s206 = sand.u32 %s123, 1
        %s207 = scalar_lea.sflag [#allocation3], %s206
        %s208 = sand.u32 %s123, 1
        %s209 = smul.addr %s208, 32
        %s210 = scalar_lea.vmem [#allocation2], %s209
        %p211 = scmp.lt.s32.totalorder %s22, 1
        %s212 = scalar_select %p211, %s22, 1
        %p213 = scmp.lt.s32.totalorder %s23, 7
        %s214 = scalar_select %p213, %s23, 7
        %s215 = smul.addr %s212, 8
        %s216 = sadd.s32 %s214, %s215
        %s217 = smul.addr %s216, 8
        %s218 = scalar_lea.vmem %s0, %s217
        %s219 = smul.u32 4, %s24
        %p220 = scmp.lt.s32.totalorder %s219, 3
        %s221 = scalar_select %p220, %s219, 3
        %s222 = smul.addr %s221, 8
        %s223 = scalar_lea.vmem %s1, %s222
        %s224 = smul.u32 4, %s24
        %s225 = smul.u32 4, %s24
        %v226 = vld [vmem:[%s223] sm:$0xff]
        %v227 = vld [vmem:[%s223 + $0x8] sm:$0xff]
        %v228 = vld [vmem:[%s223 + $0x10] sm:$0xff]
        %v229 = vld [vmem:[%s223 + $0x18] sm:$0xff]
        %v230 = vld [vmem:[%s218] sm:$0xff]
        %vm231 = vcmask 64512
        %v233 = vsel %vm231, %v226, 0
        %v236 = vsel %vm231, %v227, 0
        %v239 = vsel %vm231, %v228, 0
        %v242 = vsel %vm231, %v229, 0
        %244 = vmatprep.subr.mxu0 0.0
        %245 = vmatpush1.msra.mxu0 0.0
        %246 = vmatprep.subr.mxu0 0.0
        %247 = vmatpush1.msra.mxu0 0.0
        %248 = vmatprep.subr.mxu0 0.0
        %249 = vmatpush1.msra.mxu0 0.0
        %250 = vmatprep.subr.mxu0 0.0
        %251 = vmatpush1.msra.mxu0 0.0
        %252 = vmatprep.subr.mxu0 0.0
        %253 = vmatpush1.msra.mxu0 0.0
        %254 = vmatprep.subr.mxu0 0.0
        %255 = vmatpush1.msra.mxu0 0.0
        %256 = vmatprep.subr.mxu0 0.0
        %257 = vmatpush1.msra.mxu0 0.0
        %258 = vmatprep.subr.mxu0 0.0
        %259 = vmatpush1.msra.mxu0 0.0
        %260 = vmatprep.subr.mxu0 0.0
        %261 = vmatpush1.msra.mxu0 0.0
        %262 = vmatprep.subr.mxu0 0.0
        %263 = vmatpush1.msra.mxu0 0.0
        %264 = vmatprep.subr.mxu0 0.0
        %265 = vmatpush1.msra.mxu0 0.0
        %266 = vmatprep.subr.mxu0 0.0
        %267 = vmatpush1.msra.mxu0 0.0
        %268 = vmatprep.subr.mxu0 0.0
        %269 = vmatpush1.msra.mxu0 0.0
        %270 = vmatprep.subr.mxu0 0.0
        %271 = vmatpush1.msra.mxu0 0.0
        %272 = vmatprep.subr.mxu0 0.0
        %273 = vmatpush1.msra.mxu0 0.0
        %274 = vmatprep.subr.mxu0 0.0
        %275 = vmatpush1.msra.mxu0 %v230
        %276 = vmatprep.subr.mxu0 0.0
        %277 = vmatpush2.msra.mxu0 0.0
        %278 = vmatprep.subr.mxu0 0.0
        %279 = vmatpush2.msra.mxu0 0.0
        %280 = vmatprep.subr.mxu0 0.0
        %281 = vmatpush2.msra.mxu0 0.0
        %282 = vmatprep.subr.mxu0 0.0
        %283 = vmatpush2.msra.mxu0 0.0
        %284 = vmatprep.subr.mxu0 0.0
        %285 = vmatpush2.msra.mxu0 0.0
        %286 = vmatprep.subr.mxu0 0.0
        %287 = vmatpush2.msra.mxu0 0.0
        %288 = vmatprep.subr.mxu0 0.0
        %289 = vmatpush2.msra.mxu0 0.0
        %290 = vmatprep.subr.mxu0 0.0
        %291 = vmatpush2.msra.mxu0 0.0
        %292 = vmatprep.subr.mxu0 0.0
        %293 = vmatpush2.msra.mxu0 0.0
        %294 = vmatprep.subr.mxu0 0.0
        %295 = vmatpush2.msra.mxu0 0.0
        %296 = vmatprep.subr.mxu0 0.0
        %297 = vmatpush2.msra.mxu0 0.0
        %298 = vmatprep.subr.mxu0 0.0
        %299 = vmatpush2.msra.mxu0 0.0
        %300 = vmatprep.subr.mxu0 0.0
        %301 = vmatpush2.msra.mxu0 0.0
        %302 = vmatprep.subr.mxu0 0.0
        %303 = vmatpush2.msra.mxu0 0.0
        %304 = vmatprep.subr.mxu0 0.0
        %305 = vmatpush2.msra.mxu0 0.0
        %306 = vmatprep.subr.mxu0 0.0
        %307 = vmatpush2.msra.mxu0 0.0
        %308 = vmatprep.mubr.f32.mxu0 0.0
        %309 = vmatmul.mubr.f32.gmra.mxu0 %v233
        %v310 = vpop.f32.mrf.mxu0
        %v311 = vadd.f32 0.0, %v310
        %v312 = vpop.f32.mrf.mxu0
        %313 = vmatprep.mubr.f32.mxu0 0.0
        %314 = vmatmul.mubr.f32.gmra.mxu0 %v236
        %v315 = vpop.f32.mrf.mxu0
        %v316 = vadd.f32 0.0, %v315
        %v317 = vpop.f32.mrf.mxu0
        %318 = vmatprep.mubr.f32.mxu0 0.0
        %319 = vmatmul.mubr.f32.gmra.mxu0 %v239
        %v320 = vpop.f32.mrf.mxu0
        %v321 = vadd.f32 0.0, %v320
        %v322 = vpop.f32.mrf.mxu0
        %323 = vmatprep.mubr.f32.mxu0 0.0
        %324 = vmatmul.mubr.f32.gmra.mxu0 %v242
        %v325 = vpop.f32.mrf.mxu0
        %v326 = vadd.f32 0.0, %v325
        %v327 = vpop.f32.mrf.mxu0
        %328 = vdwg.mxu0
        %v329 = vld [vmem:[%s2] sm:$0xff]
        %v331 = vsel %vm231, %v311, 0
        %v334 = vsel %vm231, %v316, 0
        %v337 = vsel %vm231, %v321, 0
        %v340 = vsel %vm231, %v326, 0
        %342 = vmatprep.subr.mxu0 0.0
        %343 = vmatpush1.msra.mxu0 0.0
        %344 = vmatprep.subr.mxu0 0.0
        %345 = vmatpush1.msra.mxu0 0.0
        %346 = vmatprep.subr.mxu0 0.0
        %347 = vmatpush1.msra.mxu0 0.0
        %348 = vmatprep.subr.mxu0 0.0
        %349 = vmatpush1.msra.mxu0 0.0
        %350 = vmatprep.subr.mxu0 0.0
        %351 = vmatpush1.msra.mxu0 0.0
        %352 = vmatprep.subr.mxu0 0.0
        %353 = vmatpush1.msra.mxu0 0.0
        %354 = vmatprep.subr.mxu0 0.0
        %355 = vmatpush1.msra.mxu0 0.0
        %356 = vmatprep.subr.mxu0 0.0
        %357 = vmatpush1.msra.mxu0 0.0
        %358 = vmatprep.subr.mxu0 0.0
        %359 = vmatpush1.msra.mxu0 0.0
        %360 = vmatprep.subr.mxu0 0.0
        %361 = vmatpush1.msra.mxu0 0.0
        %362 = vmatprep.subr.mxu0 0.0
        %363 = vmatpush1.msra.mxu0 0.0
        %364 = vmatprep.subr.mxu0 0.0
        %365 = vmatpush1.msra.mxu0 0.0
        %366 = vmatprep.subr.mxu0 0.0
        %367 = vmatpush1.msra.mxu0 0.0
        %368 = vmatprep.subr.mxu0 0.0
        %369 = vmatpush1.msra.mxu0 0.0
        %370 = vmatprep.subr.mxu0 0.0
        %371 = vmatpush1.msra.mxu0 0.0
        %372 = vmatprep.subr.mxu0 0.0
        %373 = vmatpush1.msra.mxu0 %v329
        %374 = vmatprep.subr.mxu0 0.0
        %375 = vmatpush2.msra.mxu0 0.0
        %376 = vmatprep.subr.mxu0 0.0
        %377 = vmatpush2.msra.mxu0 0.0
        %378 = vmatprep.subr.mxu0 0.0
        %379 = vmatpush2.msra.mxu0 0.0
        %380 = vmatprep.subr.mxu0 0.0
        %381 = vmatpush2.msra.mxu0 0.0
        %382 = vmatprep.subr.mxu0 0.0
        %383 = vmatpush2.msra.mxu0 0.0
        %384 = vmatprep.subr.mxu0 0.0
        %385 = vmatpush2.msra.mxu0 0.0
        %386 = vmatprep.subr.mxu0 0.0
        %387 = vmatpush2.msra.mxu0 0.0
        %388 = vmatprep.subr.mxu0 0.0
        %389 = vmatpush2.msra.mxu0 0.0
        %390 = vmatprep.subr.mxu0 0.0
        %391 = vmatpush2.msra.mxu0 0.0
        %392 = vmatprep.subr.mxu0 0.0
        %393 = vmatpush2.msra.mxu0 0.0
        %394 = vmatprep.subr.mxu0 0.0
        %395 = vmatpush2.msra.mxu0 0.0
        %396 = vmatprep.subr.mxu0 0.0
        %397 = vmatpush2.msra.mxu0 0.0
        %398 = vmatprep.subr.mxu0 0.0
        %399 = vmatpush2.msra.mxu0 0.0
        %400 = vmatprep.subr.mxu0 0.0
        %401 = vmatpush2.msra.mxu0 0.0
        %402 = vmatprep.subr.mxu0 0.0
        %403 = vmatpush2.msra.mxu0 0.0
        %404 = vmatprep.subr.mxu0 0.0
        %405 = vmatpush2.msra.mxu0 0.0
        %406 = vmatprep.mubr.f32.mxu0 0.0
        %407 = vmatmul.mubr.f32.gmra.mxu0 %v331
        %v408 = vpop.f32.mrf.mxu0
        %v409 = vadd.f32 0.0, %v408
        %v410 = vpop.f32.mrf.mxu0
        %411 = vmatprep.mubr.f32.mxu0 0.0
        %412 = vmatmul.mubr.f32.gmra.mxu0 %v334
        %v413 = vpop.f32.mrf.mxu0
        %v414 = vadd.f32 0.0, %v413
        %v415 = vpop.f32.mrf.mxu0
        %416 = vmatprep.mubr.f32.mxu0 0.0
        %417 = vmatmul.mubr.f32.gmra.mxu0 %v337
        %v418 = vpop.f32.mrf.mxu0
        %v419 = vadd.f32 0.0, %v418
        %v420 = vpop.f32.mrf.mxu0
        %421 = vmatprep.mubr.f32.mxu0 0.0
        %422 = vmatmul.mubr.f32.gmra.mxu0 %v340
        %v423 = vpop.f32.mrf.mxu0
        %v424 = vadd.f32 0.0, %v423
        %v425 = vpop.f32.mrf.mxu0
        %426 = vdwg.mxu0
        %vm427 = vcmask 261120
        %428 = vst.msk [vmem:[%s210] sm:$0xff] %vm427, %v409
        %429 = vst.msk [vmem:[%s210 + $0x8] sm:$0xff] %vm427, %v414
        %430 = vst.msk [vmem:[%s210 + $0x10] sm:$0xff] %vm427, %v419
        %431 = vst.msk [vmem:[%s210 + $0x18] sm:$0xff] %vm427, %v424
        %s432 = sand.u32 %s123, 1
        %s433 = scalar_lea.sflag [#allocation3], %s432
        %s434 = sand.u32 %s123, 1
        %s435 = smul.addr %s434, 32
        %s436 = scalar_lea.vmem [#allocation2], %s435
        // Predicated region
        $region33: #{forward.23} parent=31 // pred_check
          %p437 = pneg %p133
        $region34: #{forward.23} parent=31 // pred_check_branch
          %439 = sbr.rel (%p437) target = $region36
        $region35: #{forward.23} parent=31 // pred_region
          %s440 = smul.u32 4, %s24
          %s442 = ssub.s32 512, 512
          %443 = vsyncadd %s433, %s442
          %s444 = smul.addr %s23, 4
          %s445 = sadd.s32 %s440, %s444
          %s446 = smul.addr %s22, 32
          %s447 = sadd.s32 %s445, %s446
          %s448 = smul.addr %s447, 128
          %s449 = scalar_lea.hbm %s3, %s448
          %s450 = sshll.u32 %s436, 4
          %s451 = int_to_ptr.vmem [resolvable:$true] %s450
          %456 = dma.vmem_to_hbm [thread:$0]  %s451, 512, %s449, %s433, 128, 128, 8
        $region36: #{forward.23} parent=31 // pred_fallthru
          _
      $region32: #{forward.23} parent=5 // pred_fallthru
        _
      %p457 = scmp.le.s32.totalorder 2, %s12
      // Predicated region
      $region37: #{forward.23} parent=5 // pred_check
        %p458 = pneg %p457
      $region38: #{forward.23} parent=5 // pred_check_branch
        %460 = sbr.rel (%p458) target = $region40
      $region39: #{forward.23} parent=5 // pred_region
        %s461 = ssub.s32 %s12, 2
        // Predicated region
        $region41: #{forward.23} parent=39 // pred_check
          %p462 = pneg %p139
        $region42: #{forward.23} parent=39 // pred_check_branch
          %464 = sbr.rel (%p462) target = $region44
        $region43: #{forward.23} parent=39 // pred_region
          %s465 = sand.u32 %s124, 1
          %s466 = scalar_lea.sflag [#allocation3], %s465
          %s467 = sand.u32 %s124, 1
          %s468 = smul.addr %s467, 32
          %s469 = scalar_lea.vmem [#allocation2], %s468
          %470 = dma.done %s466, 512
        $region44: #{forward.23} parent=39 // pred_fallthru
          _
      $region40: #{forward.23} parent=5 // pred_fallthru
        _
    $region6: #{forward.23} parent=1 // loop_footer
      %s16 = sadd.s32 1, %s12
    $region7: #{forward.23} parent=1 // loop_footer_branch
      %11 = sbr.rel target = $region3
    $region8: #{forward.23} parent=1 // loop_exit
      _
    %471 = vsyncpa [#allocation3], 1
    %s472 = scalar_lea.sflag [#allocation3], 1
    %473 = vsyncpa %s472, 1

// kernel: forward.22
$region0: #{forward.22}
  #allocation0 [shape = 'u32[]', space=smem, size = 0x4, offset = 0x4, fixed_abs, tag = 'smem constant byte address 0x4 - core index']
  #allocation1 [shape = 'u32[144,128]{1,0:T(1,128)}', space=vmem, size = 0x12000, scoped, tag = 'internal scratch']
  %s0 = inlined_call_operand.vmem [shape: bf16[2,64,64], index: 0, kind: input, shape index: {}]
  %s1 = inlined_call_operand.vmem [shape: bf16[2,64,64], index: 1, kind: input, shape index: {}]
  %s2 = inlined_call_operand.vmem [shape: bf16[2,64,64], index: 2, kind: input, shape index: {}]
  %s3 = inlined_call_operand.vmem [shape: bf16[2,64,64], index: 3, kind: input, shape index: {}]
  %s4 = inlined_call_operand.vmem [shape: bf16[4,64,64], index: 4, kind: input, shape index: {}]
  %s5 = inlined_call_operand.vmem [shape: f32[64,1], index: 5, kind: input, shape index: {}]
  %s6 = inlined_call_operand.vmem [shape: f32[64,1], index: 6, kind: input, shape index: {}]
  %s7 = inlined_call_operand.vmem [shape: f32[8,64], index: 7, kind: input, shape index: {}]
  %s8 = inlined_call_operand.vmem [shape: f32[8,1], index: 8, kind: input, shape index: {}]
  %s9 = inlined_call_operand.vmem [shape: f32[2,8,64], index: 9, kind: output, shape index: {}]
  %s10 = sld [smem:[#allocation0]]
  $region69: #{forward.22} parent=0
    _
  %s12 = ssub.s32 1, %s10
  %s13 = scalar_select 0, %s12, %s10
  loop: start=0, step=1, limit=4
  $region2: #{forward.22} parent=0 // loop_pre_header
    _
  $region3: #{forward.22} parent=0 // loop_header
    %s15 = sphi 0, %s19
    %p16 = scmp.ge.s32.totalorder %s15, 4
    %s22 = sphi 0, %s34
    %s23 = sphi 0, %s30
    %s24 = sphi 0, %s22
    %s25 = sphi 0, %s23
    %s26 = sphi 0, %s24
    %s27 = sphi 0, %s25
    %s39 = sphi 0, %s41
    %s42 = sphi 0, %s39
    %s43 = sphi 0, %s42
    %s59 = sphi 0, %s43
    %s67 = sphi 0, %s69
    %s70 = sphi 0, %s67
    %s71 = sphi 0, %s70
    %s87 = sphi 0, %s71
    %s95 = sphi 0, %s97
    %s98 = sphi 0, %s95
    %s99 = sphi 0, %s98
    %s115 = sphi 0, %s99
    %s123 = sphi 0, %s125
    %s126 = sphi 0, %s123
    %s127 = sphi 0, %s126
    %s143 = sphi 0, %s127
    %s147 = sphi 0, %s147
    %s149 = sphi 0, %s147
    %s150 = sphi 0, %s149
    %s164 = sphi 0, %s150
    %s168 = sphi 0, %s168
    %s170 = sphi 0, %s168
    %s171 = sphi 0, %s170
    %s185 = sphi 0, %s171
    %s189 = sphi 0, %s189
    %s191 = sphi 0, %s189
    %s192 = sphi 0, %s191
    %s206 = sphi 0, %s192
    %s210 = sphi 0, %s210
    %s212 = sphi 0, %s210
    %s213 = sphi 0, %s212
    %s227 = sphi 0, %s213
    %s231 = sphi 0, %s231
    %s233 = sphi 0, %s231
    %s234 = sphi 0, %s233
    %s248 = sphi 0, %s234
    %s256 = sphi 0, %s258
    %s259 = sphi 0, %s256
    %s260 = sphi 0, %s259
    %s276 = sphi 0, %s260
  $region4: #{forward.22} parent=0 // loop_header_branch
    %18 = sbr.rel (%p16) target = $region8
  $region5: #{forward.22} parent=0 // loop_body
    %s20 = ssub.s32 %s15, 1
    %s21 = ssub.s32 %s15, 2
    %s28 = sadd.s32 1, %s23
    %p29 = scmp.ge.s32.totalorder %s28, 1
    %s30 = scalar_select %p29, 0, %s28
    %s31 = sadd.s32 1, %s22
    %s32 = scalar_select %p29, %s31, %s22
    %p33 = scmp.ge.s32.totalorder %s32, 2
    %s34 = scalar_select %p33, 0, %s32
    %s35 = ssub.s32 %s22, %s34
    %s36 = ssub.s32 %s23, %s30
    %s37 = sor.u32 %s35, %s36
    %p38 = scmp.eq.s32.totalorder %s37, 0
    %s40 = sadd.s32 %s39, 1
    %s41 = scalar_select %p38, %s39, %s40
    %p44 = pneg %p38
    %p45 = scmp.eq.s32.totalorder %s15, 1
    %p46 = por %p44, %p45
    %p47 = scmp.ne.s32.totalorder %s39, %s42
    %p48 = scmp.eq.s32.totalorder %s15, 0
    %p49 = por %p47, %p48
    %p50 = scmp.ne.s32.totalorder %s39, %s42
    %p51 = scmp.eq.s32.totalorder %s20, 1
    %p52 = por %p50, %p51
    %p53 = scmp.ne.s32.totalorder %s42, %s43
    %p54 = scmp.eq.s32.totalorder %s20, 0
    %p55 = por %p53, %p54
    %p56 = scmp.ne.s32.totalorder %s42, %s43
    %p57 = scmp.eq.s32.totalorder %s21, 1
    %p58 = por %p56, %p57
    %p60 = scmp.ne.s32.totalorder %s43, %s59
    %p61 = scmp.eq.s32.totalorder %s21, 0
    %p62 = por %p60, %p61
    %s63 = ssub.s32 %s22, %s34
    %s64 = ssub.s32 %s23, %s30
    %s65 = sor.u32 %s63, %s64
    %p66 = scmp.eq.s32.totalorder %s65, 0
    %s68 = sadd.s32 %s67, 1
    %s69 = scalar_select %p66, %s67, %s68
    %p72 = pneg %p66
    %p73 = scmp.eq.s32.totalorder %s15, 1
    %p74 = por %p72, %p73
    %p75 = scmp.ne.s32.totalorder %s67, %s70
    %p76 = scmp.eq.s32.totalorder %s15, 0
    %p77 = por %p75, %p76
    %p78 = scmp.ne.s32.totalorder %s67, %s70
    %p79 = scmp.eq.s32.totalorder %s20, 1
    %p80 = por %p78, %p79
    %p81 = scmp.ne.s32.totalorder %s70, %s71
    %p82 = scmp.eq.s32.totalorder %s20, 0
    %p83 = por %p81, %p82
    %p84 = scmp.ne.s32.totalorder %s70, %s71
    %p85 = scmp.eq.s32.totalorder %s21, 1
    %p86 = por %p84, %p85
    %p88 = scmp.ne.s32.totalorder %s71, %s87
    %p89 = scmp.eq.s32.totalorder %s21, 0
    %p90 = por %p88, %p89
    %s91 = ssub.s32 %s22, %s34
    %s92 = ssub.s32 %s23, %s30
    %s93 = sor.u32 %s91, %s92
    %p94 = scmp.eq.s32.totalorder %s93, 0
    %s96 = sadd.s32 %s95, 1
    %s97 = scalar_select %p94, %s95, %s96
    %p100 = pneg %p94
    %p101 = scmp.eq.s32.totalorder %s15, 1
    %p102 = por %p100, %p101
    %p103 = scmp.ne.s32.totalorder %s95, %s98
    %p104 = scmp.eq.s32.totalorder %s15, 0
    %p105 = por %p103, %p104
    %p106 = scmp.ne.s32.totalorder %s95, %s98
    %p107 = scmp.eq.s32.totalorder %s20, 1
    %p108 = por %p106, %p107
    %p109 = scmp.ne.s32.totalorder %s98, %s99
    %p110 = scmp.eq.s32.totalorder %s20, 0
    %p111 = por %p109, %p110
    %p112 = scmp.ne.s32.totalorder %s98, %s99
    %p113 = scmp.eq.s32.totalorder %s21, 1
    %p114 = por %p112, %p113
    %p116 = scmp.ne.s32.totalorder %s99, %s115
    %p117 = scmp.eq.s32.totalorder %s21, 0
    %p118 = por %p116, %p117
    %s119 = ssub.s32 %s22, %s34
    %s120 = ssub.s32 %s23, %s30
    %s121 = sor.u32 %s119, %s120
    %p122 = scmp.eq.s32.totalorder %s121, 0
    %s124 = sadd.s32 %s123, 1
    %s125 = scalar_select %p122, %s123, %s124
    %p128 = pneg %p122
    %p129 = scmp.eq.s32.totalorder %s15, 1
    %p130 = por %p128, %p129
    %p131 = scmp.ne.s32.totalorder %s123, %s126
    %p132 = scmp.eq.s32.totalorder %s15, 0
    %p133 = por %p131, %p132
    %p134 = scmp.ne.s32.totalorder %s123, %s126
    %p135 = scmp.eq.s32.totalorder %s20, 1
    %p136 = por %p134, %p135
    %p137 = scmp.ne.s32.totalorder %s126, %s127
    %p138 = scmp.eq.s32.totalorder %s20, 0
    %p139 = por %p137, %p138
    %p140 = scmp.ne.s32.totalorder %s126, %s127
    %p141 = scmp.eq.s32.totalorder %s21, 1
    %p142 = por %p140, %p141
    %p144 = scmp.ne.s32.totalorder %s127, %s143
    %p145 = scmp.eq.s32.totalorder %s21, 0
    %p146 = por %p144, %p145
    %s148 = sadd.s32 %s147, 1
    %p151 = scmp.eq.s32.totalorder %s15, 1
    %p152 = scmp.ne.s32.totalorder %s147, %s149
    %p153 = scmp.eq.s32.totalorder %s15, 0
    %p154 = por %p152, %p153
    %p155 = scmp.ne.s32.totalorder %s147, %s149
    %p156 = scmp.eq.s32.totalorder %s20, 1
    %p157 = por %p155, %p156
    %p158 = scmp.ne.s32.totalorder %s149, %s150
    %p159 = scmp.eq.s32.totalorder %s20, 0
    %p160 = por %p158, %p159
    %p161 = scmp.ne.s32.totalorder %s149, %s150
    %p162 = scmp.eq.s32.totalorder %s21, 1
    %p163 = por %p161, %p162
    %p165 = scmp.ne.s32.totalorder %s150, %s164
    %p166 = scmp.eq.s32.totalorder %s21, 0
    %p167 = por %p165, %p166
    %s169 = sadd.s32 %s168, 1
    %p172 = scmp.eq.s32.totalorder %s15, 1
    %p173 = scmp.ne.s32.totalorder %s168, %s170
    %p174 = scmp.eq.s32.totalorder %s15, 0
    %p175 = por %p173, %p174
    %p176 = scmp.ne.s32.totalorder %s168, %s170
    %p177 = scmp.eq.s32.totalorder %s20, 1
    %p178 = por %p176, %p177
    %p179 = scmp.ne.s32.totalorder %s170, %s171
    %p180 = scmp.eq.s32.totalorder %s20, 0
    %p181 = por %p179, %p180
    %p182 = scmp.ne.s32.totalorder %s170, %s171
    %p183 = scmp.eq.s32.totalorder %s21, 1
    %p184 = por %p182, %p183
    %p186 = scmp.ne.s32.totalorder %s171, %s185
    %p187 = scmp.eq.s32.totalorder %s21, 0
    %p188 = por %p186, %p187
    %s190 = sadd.s32 %s189, 1
    %p193 = scmp.eq.s32.totalorder %s15, 1
    %p194 = scmp.ne.s32.totalorder %s189, %s191
    %p195 = scmp.eq.s32.totalorder %s15, 0
    %p196 = por %p194, %p195
    %p197 = scmp.ne.s32.totalorder %s189, %s191
    %p198 = scmp.eq.s32.totalorder %s20, 1
    %p199 = por %p197, %p198
    %p200 = scmp.ne.s32.totalorder %s191, %s192
    %p201 = scmp.eq.s32.totalorder %s20, 0
    %p202 = por %p200, %p201
    %p203 = scmp.ne.s32.totalorder %s191, %s192
    %p204 = scmp.eq.s32.totalorder %s21, 1
    %p205 = por %p203, %p204
    %p207 = scmp.ne.s32.totalorder %s192, %s206
    %p208 = scmp.eq.s32.totalorder %s21, 0
    %p209 = por %p207, %p208
    %s211 = sadd.s32 %s210, 1
    %p214 = scmp.eq.s32.totalorder %s15, 1
    %p215 = scmp.ne.s32.totalorder %s210, %s212
    %p216 = scmp.eq.s32.totalorder %s15, 0
    %p217 = por %p215, %p216
    %p218 = scmp.ne.s32.totalorder %s210, %s212
    %p219 = scmp.eq.s32.totalorder %s20, 1
    %p220 = por %p218, %p219
    %p221 = scmp.ne.s32.totalorder %s212, %s213
    %p222 = scmp.eq.s32.totalorder %s20, 0
    %p223 = por %p221, %p222
    %p224 = scmp.ne.s32.totalorder %s212, %s213
    %p225 = scmp.eq.s32.totalorder %s21, 1
    %p226 = por %p224, %p225
    %p228 = scmp.ne.s32.totalorder %s213, %s227
    %p229 = scmp.eq.s32.totalorder %s21, 0
    %p230 = por %p228, %p229
    %s232 = sadd.s32 %s231, 1
    %p235 = scmp.eq.s32.totalorder %s15, 1
    %p236 = scmp.ne.s32.totalorder %s231, %s233
    %p237 = scmp.eq.s32.totalorder %s15, 0
    %p238 = por %p236, %p237
    %p239 = scmp.ne.s32.totalorder %s231, %s233
    %p240 = scmp.eq.s32.totalorder %s20, 1
    %p241 = por %p239, %p240
    %p242 = scmp.ne.s32.totalorder %s233, %s234
    %p243 = scmp.eq.s32.totalorder %s20, 0
    %p244 = por %p242, %p243
    %p245 = scmp.ne.s32.totalorder %s233, %s234
    %p246 = scmp.eq.s32.totalorder %s21, 1
    %p247 = por %p245, %p246
    %p249 = scmp.ne.s32.totalorder %s234, %s248
    %p250 = scmp.eq.s32.totalorder %s21, 0
    %p251 = por %p249, %p250
    %s252 = ssub.s32 %s22, %s34
    %s253 = ssub.s32 %s23, %s30
    %s254 = sor.u32 %s252, %s253
    %p255 = scmp.eq.s32.totalorder %s254, 0
    %s257 = sadd.s32 %s256, 1
    %s258 = scalar_select %p255, %s256, %s257
    %p261 = pneg %p255
    %p262 = scmp.eq.s32.totalorder %s15, 1
    %p263 = por %p261, %p262
    %p264 = scmp.ne.s32.totalorder %s256, %s259
    %p265 = scmp.eq.s32.totalorder %s15, 0
    %p266 = por %p264, %p265
    %p267 = scmp.ne.s32.totalorder %s256, %s259
    %p268 = scmp.eq.s32.totalorder %s20, 1
    %p269 = por %p267, %p268
    %p270 = scmp.ne.s32.totalorder %s259, %s260
    %p271 = scmp.eq.s32.totalorder %s20, 0
    %p272 = por %p270, %p271
    %p273 = scmp.ne.s32.totalorder %s259, %s260
    %p274 = scmp.eq.s32.totalorder %s21, 1
    %p275 = por %p273, %p274
    %p277 = scmp.ne.s32.totalorder %s260, %s276
    %p278 = scmp.eq.s32.totalorder %s21, 0
    %p279 = por %p277, %p278
    %p280 = scmp.le.s32.totalorder 1, %s15
    %p281 = scmp.lt.s32.totalorder %s15, 3
    %p282 = pnand %p280, %p281
    %p283 = pneg %p282
    // Predicated region
    $region9: #{forward.22} parent=5 // pred_check
      _
    $region10: #{forward.22} parent=5 // pred_check_branch
      %285 = sbr.rel (%p282) target = $region12
    $region11: #{forward.22} parent=5 // pred_region
      %s286 = ssub.s32 %s15, 1
      // Predicated region
      $region13: #{forward.22} parent=11 // pred_check
        %p287 = pneg %p160
      $region14: #{forward.22} parent=11 // pred_check_branch
        %289 = sbr.rel (%p287) target = $region16
      $region15: #{forward.22} parent=11 // pred_region
        _
      $region16: #{forward.22} parent=11 // pred_fallthru
        _
      // Predicated region
      $region17: #{forward.22} parent=11 // pred_check
        %p290 = pneg %p181
      $region18: #{forward.22} parent=11 // pred_check_branch
        %292 = sbr.rel (%p290) target = $region20
      $region19: #{forward.22} parent=11 // pred_region
        _
      $region20: #{forward.22} parent=11 // pred_fallthru
        _
      // Predicated region
      $region21: #{forward.22} parent=11 // pred_check
        %p293 = pneg %p202
      $region22: #{forward.22} parent=11 // pred_check_branch
        %295 = sbr.rel (%p293) target = $region24
      $region23: #{forward.22} parent=11 // pred_region
        _
      $region24: #{forward.22} parent=11 // pred_fallthru
        _
      // Predicated region
      $region25: #{forward.22} parent=11 // pred_check
        %p296 = pneg %p223
      $region26: #{forward.22} parent=11 // pred_check_branch
        %298 = sbr.rel (%p296) target = $region28
      $region27: #{forward.22} parent=11 // pred_region
        _
      $region28: #{forward.22} parent=11 // pred_fallthru
        _
      // Predicated region
      $region29: #{forward.22} parent=11 // pred_check
        %p299 = pneg %p244
      $region30: #{forward.22} parent=11 // pred_check_branch
        %301 = sbr.rel (%p299) target = $region32
      $region31: #{forward.22} parent=11 // pred_region
        _
      $region32: #{forward.22} parent=11 // pred_fallthru
        _
    $region12: #{forward.22} parent=5 // pred_fallthru
      _
    %p302 = scmp.lt.s32.totalorder %s15, 2
    // Predicated region
    $region33: #{forward.22} parent=5 // pred_check
      %p303 = pneg %p302
    $region34: #{forward.22} parent=5 // pred_check_branch
      %305 = sbr.rel (%p303) target = $region36
    $region35: #{forward.22} parent=5 // pred_region
      // Predicated region
      $region37: #{forward.22} parent=35 // pred_check
        %p306 = pneg %p49
      $region38: #{forward.22} parent=35 // pred_check_branch
        %308 = sbr.rel (%p306) target = $region40
      $region39: #{forward.22} parent=35 // pred_region
        %p309 = scmp.lt.s32.totalorder %s22, 1
        %s310 = scalar_select %p309, %s22, 1
        %p311 = scmp.lt.s32.totalorder %s23, 0
        %s312 = scalar_select %p311, %s23, 0
        %s313 = smul.addr %s310, 8
        %s314 = sadd.s32 %s312, %s313
        %s315 = smul.addr %s314, 4
        %s316 = scalar_lea.vmem %s0, %s315
      $region40: #{forward.22} parent=35 // pred_fallthru
        _
      // Predicated region
      $region41: #{forward.22} parent=35 // pred_check
        %p317 = pneg %p77
      $region42: #{forward.22} parent=35 // pred_check_branch
        %319 = sbr.rel (%p317) target = $region44
      $region43: #{forward.22} parent=35 // pred_region
        %p320 = scmp.lt.s32.totalorder %s22, 1
        %s321 = scalar_select %p320, %s22, 1
        %p322 = scmp.lt.s32.totalorder %s23, 0
        %s323 = scalar_select %p322, %s23, 0
        %s324 = smul.addr %s321, 8
        %s325 = sadd.s32 %s323, %s324
        %s326 = smul.addr %s325, 4
        %s327 = scalar_lea.vmem %s1, %s326
      $region44: #{forward.22} parent=35 // pred_fallthru
        _
      // Predicated region
      $region45: #{forward.22} parent=35 // pred_check
        %p328 = pneg %p105
      $region46: #{forward.22} parent=35 // pred_check_branch
        %330 = sbr.rel (%p328) target = $region48
      $region47: #{forward.22} parent=35 // pred_region
        %p331 = scmp.lt.s32.totalorder %s22, 1
        %s332 = scalar_select %p331, %s22, 1
        %p333 = scmp.lt.s32.totalorder %s23, 0
        %s334 = scalar_select %p333, %s23, 0
        %s335 = smul.addr %s332, 8
        %s336 = sadd.s32 %s334, %s335
        %s337 = smul.addr %s336, 4
        %s338 = scalar_lea.vmem %s2, %s337
      $region48: #{forward.22} parent=35 // pred_fallthru
        _
      // Predicated region
      $region49: #{forward.22} parent=35 // pred_check
        %p339 = pneg %p133
      $region50: #{forward.22} parent=35 // pred_check_branch
        %341 = sbr.rel (%p339) target = $region52
      $region51: #{forward.22} parent=35 // pred_region
        %p342 = scmp.lt.s32.totalorder %s22, 1
        %s343 = scalar_select %p342, %s22, 1
        %p344 = scmp.lt.s32.totalorder %s23, 0
        %s345 = scalar_select %p344, %s23, 0
        %s346 = smul.addr %s343, 8
        %s347 = sadd.s32 %s345, %s346
        %s348 = smul.addr %s347, 4
        %s349 = scalar_lea.vmem %s3, %s348
      $region52: #{forward.22} parent=35 // pred_fallthru
        _
    $region36: #{forward.22} parent=5 // pred_fallthru
      _
    %p350 = scmp.le.s32.totalorder 1, %s15
    %p351 = scmp.lt.s32.totalorder %s15, 3
    %p352 = pnand %p350, %p351
    %p353 = pneg %p352
    // Predicated region
    $region53: #{forward.22} parent=5 // pred_check
      _
    $region54: #{forward.22} parent=5 // pred_check_branch
      %355 = sbr.rel (%p352) target = $region56
    $region55: #{forward.22} parent=5 // pred_region
      %s356 = ssub.s32 %s15, 1
      %p357 = scmp.lt.s32.totalorder %s24, 1
      %s358 = scalar_select %p357, %s24, 1
      %p359 = scmp.lt.s32.totalorder %s25, 0
      %s360 = scalar_select %p359, %s25, 0
      %s361 = smul.addr %s358, 8
      %s362 = sadd.s32 %s360, %s361
      %s363 = smul.addr %s362, 4
      %s364 = scalar_lea.vmem %s0, %s363
      %p365 = pneg %p55
      %p366 = pneg %p52
      %p367 = scmp.lt.s32.totalorder %s24, 1
      %s368 = scalar_select %p367, %s24, 1
      %p369 = scmp.lt.s32.totalorder %s25, 0
      %s370 = scalar_select %p369, %s25, 0
      %s371 = smul.addr %s368, 8
      %s372 = sadd.s32 %s370, %s371
      %s373 = smul.addr %s372, 4
      %s374 = scalar_lea.vmem %s1, %s373
      %p375 = pneg %p83
      %p376 = pneg %p80
      %p377 = scmp.lt.s32.totalorder %s24, 1
      %s378 = scalar_select %p377, %s24, 1
      %p379 = scmp.lt.s32.totalorder %s25, 0
      %s380 = scalar_select %p379, %s25, 0
      %s381 = smul.addr %s378, 8
      %s382 = sadd.s32 %s380, %s381
      %s383 = smul.addr %s382, 4
      %s384 = scalar_lea.vmem %s2, %s383
      %p385 = pneg %p111
      %p386 = pneg %p108
      %p387 = scmp.lt.s32.totalorder %s24, 1
      %s388 = scalar_select %p387, %s24, 1
      %p389 = scmp.lt.s32.totalorder %s25, 0
      %s390 = scalar_select %p389, %s25, 0
      %s391 = smul.addr %s388, 8
      %s392 = sadd.s32 %s390, %s391
      %s393 = smul.addr %s392, 4
      %s394 = scalar_lea.vmem %s3, %s393
      %p395 = pneg %p139
      %p396 = pneg %p136
      %p397 = pneg %p160
      %p398 = pneg %p157
      %p399 = pneg %p181
      %p400 = pneg %p178
      %p401 = pneg %p202
      %p402 = pneg %p199
      %p403 = pneg %p223
      %p404 = pneg %p220
      %p405 = pneg %p244
      %p406 = pneg %p241
      %p407 = pneg %p272
      %p408 = pneg %p269
      %p409 = scmp.lt.s32.totalorder %s24, 1
      %s410 = scalar_select %p409, %s24, 1
      %p411 = scmp.lt.s32.totalorder %s25, 0
      %s412 = scalar_select %p411, %s25, 0
      %s413 = sadd.s32 %s412, %s410
      %s414 = smul.addr %s413, 8
      %s415 = scalar_lea.vmem %s9, %s414
      %p416 = scmp.lt.s32.totalorder %s24, 1
      %s417 = scalar_select %p416, %s24, 1
      %p418 = scmp.lt.s32.totalorder %s25, 0
      %s419 = scalar_select %p418, %s25, 0
      %s420 = smul.addr %s417, 8
      %s421 = sadd.s32 %s419, %s420
      %s422 = smul.addr %s421, 4
      %s423 = scalar_lea.vmem %s0, %s422
      %p424 = scmp.lt.s32.totalorder %s24, 1
      %s425 = scalar_select %p424, %s24, 1
      %p426 = scmp.lt.s32.totalorder %s25, 0
      %s427 = scalar_select %p426, %s25, 0
      %s428 = smul.addr %s425, 8
      %s429 = sadd.s32 %s427, %s428
      %s430 = smul.addr %s429, 4
      %s431 = scalar_lea.vmem %s1, %s430
      %p432 = scmp.lt.s32.totalorder %s24, 1
      %s433 = scalar_select %p432, %s24, 1
      %p434 = scmp.lt.s32.totalorder %s25, 0
      %s435 = scalar_select %p434, %s25, 0
      %s436 = smul.addr %s433, 8
      %s437 = sadd.s32 %s435, %s436
      %s438 = smul.addr %s437, 4
      %s439 = scalar_lea.vmem %s2, %s438
      %p440 = scmp.lt.s32.totalorder %s24, 1
      %s441 = scalar_select %p440, %s24, 1
      %p442 = scmp.lt.s32.totalorder %s25, 0
      %s443 = scalar_select %p442, %s25, 0
      %s444 = smul.addr %s441, 8
      %s445 = sadd.s32 %s443, %s444
      %s446 = smul.addr %s445, 4
      %s447 = scalar_lea.vmem %s3, %s446
      %p448 = scmp.lt.s32.totalorder %s24, 1
      %s449 = scalar_select %p448, %s24, 1
      %p450 = scmp.lt.s32.totalorder %s25, 0
      %s451 = scalar_select %p450, %s25, 0
      %s452 = sadd.s32 %s451, %s449
      %s453 = smul.addr %s452, 8
      %s454 = scalar_lea.vmem %s9, %s453
      %v456 = vld [vmem:[%s4] sm:$0xf]
      %v457 = vld [vmem:[%s4 + $0x4] sm:$0xf]
      %v458 = vld [vmem:[%s4 + $0x8] sm:$0xf]
      %v459 = vld [vmem:[%s4 + $0xc] sm:$0xf]
      %v460 = vld [vmem:[%s4 + $0x10] sm:$0xf]
      %v461 = vld [vmem:[%s4 + $0x14] sm:$0xf]
      %v462 = vld [vmem:[%s4 + $0x18] sm:$0xf]
      %v463 = vld [vmem:[%s4 + $0x1c] sm:$0xf]
      %v464 = vld [vmem:[%s423] sm:$0xf]
      %v465 = vld [vmem:[%s423 + $0x4] sm:$0xf]
      %v466 = vld [vmem:[%s423 + $0x8] sm:$0xf]
      %v467 = vld [vmem:[%s423 + $0xc] sm:$0xf]
      %v468 = vld [vmem:[%s423 + $0x10] sm:$0xf]
      %v469 = vld [vmem:[%s423 + $0x14] sm:$0xf]
      %v470 = vld [vmem:[%s423 + $0x18] sm:$0xf]
      %v471 = vld [vmem:[%s423 + $0x1c] sm:$0xf]
      %s472 = scalar_lea.vmem %s4, 32
      %v473 = vld [vmem:[%s472] sm:$0xf]
      %v474 = vld [vmem:[%s472 + $0x4] sm:$0xf]
      %v475 = vld [vmem:[%s472 + $0x8] sm:$0xf]
      %v476 = vld [vmem:[%s472 + $0xc] sm:$0xf]
      %v477 = vld [vmem:[%s472 + $0x10] sm:$0xf]
      %v478 = vld [vmem:[%s472 + $0x14] sm:$0xf]
      %v479 = vld [vmem:[%s472 + $0x18] sm:$0xf]
      %v480 = vld [vmem:[%s472 + $0x1c] sm:$0xf]
      %v481 = vld [vmem:[%s431] sm:$0xf]
      %v482 = vld [vmem:[%s431 + $0x4] sm:$0xf]
      %v483 = vld [vmem:[%s431 + $0x8] sm:$0xf]
      %v484 = vld [vmem:[%s431 + $0xc] sm:$0xf]
      %v485 = vld [vmem:[%s431 + $0x10] sm:$0xf]
      %v486 = vld [vmem:[%s431 + $0x14] sm:$0xf]
      %v487 = vld [vmem:[%s431 + $0x18] sm:$0xf]
      %v488 = vld [vmem:[%s431 + $0x1c] sm:$0xf]
      %v497 = vunpack.c.l.b16 %v473
      %v498 = vunpack.c.l.b16 %v474
      %v499 = vunpack.c.l.b16 %v475
      %v500 = vunpack.c.l.b16 %v476
      %v501 = vunpack.c.l.b16 %v477
      %v502 = vunpack.c.l.b16 %v478
      %v503 = vunpack.c.l.b16 %v479
      %v504 = vunpack.c.l.b16 %v480
      %v505 = vpack.c.b16 %v498, %v497
      %v506 = vpack.c.b16 %v500, %v499
      %v507 = vpack.c.b16 %v502, %v501
      %v508 = vpack.c.b16 %v504, %v503
      %v517 = vunpack.c.l.b16 %v481
      %v518 = vunpack.c.l.b16 %v482
      %v519 = vunpack.c.l.b16 %v483
      %v520 = vunpack.c.l.b16 %v484
      %v521 = vunpack.c.l.b16 %v485
      %v522 = vunpack.c.l.b16 %v486
      %v523 = vunpack.c.l.b16 %v487
      %v524 = vunpack.c.l.b16 %v488
      %v525 = vpack.c.b16 %v518, %v517
      %v526 = vpack.c.b16 %v520, %v519
      %v527 = vpack.c.b16 %v522, %v521
      %v528 = vpack.c.b16 %v524, %v523
      %vm533 = vcmask 523264
      %v535 = vsel %vm533, %v505, 0
      %v538 = vsel %vm533, %v506, 0
      %v541 = vsel %vm533, %v507, 0
      %v544 = vsel %vm533, %v508, 0
      %546 = vmatprep.subr.bf16.mxu0 0
      %547 = vmatpush1.bf16.msra.mxu0 0
      %548 = vmatprep.subr.bf16.mxu0 0
      %549 = vmatpush1.bf16.msra.mxu0 0
      %550 = vmatprep.subr.bf16.mxu0 0
      %551 = vmatpush1.bf16.msra.mxu0 0
      %552 = vmatprep.subr.bf16.mxu0 0
      %553 = vmatpush1.bf16.msra.mxu0 0
      %554 = vmatprep.subr.bf16.mxu0 0
      %555 = vmatpush1.bf16.msra.mxu0 %v528
      %556 = vmatprep.subr.bf16.mxu0 0
      %557 = vmatpush1.bf16.msra.mxu0 %v527
      %558 = vmatprep.subr.bf16.mxu0 0
      %559 = vmatpush1.bf16.msra.mxu0 %v526
      %560 = vmatprep.subr.bf16.mxu0 0
      %561 = vmatpush1.bf16.msra.mxu0 %v525
      %562 = vmatprep.subr.bf16.mxu0 0
      %563 = vmatpush2.bf16.msra.mxu0 0
      %564 = vmatprep.subr.bf16.mxu0 0
      %565 = vmatpush2.bf16.msra.mxu0 0
      %566 = vmatprep.subr.bf16.mxu0 0
      %567 = vmatpush2.bf16.msra.mxu0 0
      %568 = vmatprep.subr.bf16.mxu0 0
      %569 = vmatpush2.bf16.msra.mxu0 0
      %570 = vmatprep.subr.bf16.mxu0 0
      %571 = vmatpush2.bf16.msra.mxu0 0
      %572 = vmatprep.subr.bf16.mxu0 0
      %573 = vmatpush2.bf16.msra.mxu0 0
      %574 = vmatprep.subr.bf16.mxu0 0
      %575 = vmatpush2.bf16.msra.mxu0 0
      %576 = vmatprep.subr.bf16.mxu0 0
      %577 = vmatpush2.bf16.msra.mxu0 0
      %578 = vmatprep.mubr.bf16.mxu0 0
      %579 = vmatmul.mubr.bf16.gmra.mxu0 %v535
      %v580 = vpop.f32.mrf.mxu0
      %v581 = vadd.f32 0.0, %v580
      %v582 = vpop.f32.mrf.mxu0
      %v583 = vpop.f32.mrf.mxu0
      %v584 = vadd.f32 0.0, %v583
      %v585 = vpop.f32.mrf.mxu0
      %586 = vmatprep.mubr.bf16.mxu0 0
      %587 = vmatmul.mubr.bf16.gmra.mxu0 %v538
      %v588 = vpop.f32.mrf.mxu0
      %v589 = vadd.f32 0.0, %v588
      %v590 = vpop.f32.mrf.mxu0
      %v591 = vpop.f32.mrf.mxu0
      %v592 = vadd.f32 0.0, %v591
      %v593 = vpop.f32.mrf.mxu0
      %594 = vmatprep.mubr.bf16.mxu0 0
      %595 = vmatmul.mubr.bf16.gmra.mxu0 %v541
      %v596 = vpop.f32.mrf.mxu0
      %v597 = vadd.f32 0.0, %v596
      %v598 = vpop.f32.mrf.mxu0
      %v599 = vpop.f32.mrf.mxu0
      %v600 = vadd.f32 0.0, %v599
      %v601 = vpop.f32.mrf.mxu0
      %602 = vmatprep.mubr.bf16.mxu0 0
      %603 = vmatmul.mubr.bf16.gmra.mxu0 %v544
      %v604 = vpop.f32.mrf.mxu0
      %v605 = vadd.f32 0.0, %v604
      %v606 = vpop.f32.mrf.mxu0
      %v607 = vpop.f32.mrf.mxu0
      %v608 = vadd.f32 0.0, %v607
      %v609 = vpop.f32.mrf.mxu0
      %610 = vdwg.mxu0
      %v619 = vunpack.c.l.b16 %v456
      %v620 = vunpack.c.l.b16 %v457
      %v621 = vunpack.c.l.b16 %v458
      %v622 = vunpack.c.l.b16 %v459
      %v623 = vunpack.c.l.b16 %v460
      %v624 = vunpack.c.l.b16 %v461
      %v625 = vunpack.c.l.b16 %v462
      %v626 = vunpack.c.l.b16 %v463
      %v627 = vpack.c.b16 %v620, %v619
      %v628 = vpack.c.b16 %v622, %v621
      %v629 = vpack.c.b16 %v624, %v623
      %v630 = vpack.c.b16 %v626, %v625
      %v639 = vunpack.c.l.b16 %v464
      %v640 = vunpack.c.l.b16 %v465
      %v641 = vunpack.c.l.b16 %v466
      %v642 = vunpack.c.l.b16 %v467
      %v643 = vunpack.c.l.b16 %v468
      %v644 = vunpack.c.l.b16 %v469
      %v645 = vunpack.c.l.b16 %v470
      %v646 = vunpack.c.l.b16 %v471
      %v647 = vpack.c.b16 %v640, %v639
      %v648 = vpack.c.b16 %v642, %v641
      %v649 = vpack.c.b16 %v644, %v643
      %v650 = vpack.c.b16 %v646, %v645
      %v656 = vsel %vm533, %v627, 0
      %v659 = vsel %vm533, %v628, 0
      %v662 = vsel %vm533, %v629, 0
      %v665 = vsel %vm533, %v630, 0
      %667 = vmatprep.subr.bf16.mxu0 0
      %668 = vmatpush1.bf16.msra.mxu0 0
      %669 = vmatprep.subr.bf16.mxu0 0
      %670 = vmatpush1.bf16.msra.mxu0 0
      %671 = vmatprep.subr.bf16.mxu0 0
      %672 = vmatpush1.bf16.msra.mxu0 0
      %673 = vmatprep.subr.bf16.mxu0 0
      %674 = vmatpush1.bf16.msra.mxu0 0
      %675 = vmatprep.subr.bf16.mxu0 0
      %676 = vmatpush1.bf16.msra.mxu0 %v650
      %677 = vmatprep.subr.bf16.mxu0 0
      %678 = vmatpush1.bf16.msra.mxu0 %v649
      %679 = vmatprep.subr.bf16.mxu0 0
      %680 = vmatpush1.bf16.msra.mxu0 %v648
      %681 = vmatprep.subr.bf16.mxu0 0
      %682 = vmatpush1.bf16.msra.mxu0 %v647
      %683 = vmatprep.subr.bf16.mxu0 0
      %684 = vmatpush2.bf16.msra.mxu0 0
      %685 = vmatprep.subr.bf16.mxu0 0
      %686 = vmatpush2.bf16.msra.mxu0 0
      %687 = vmatprep.subr.bf16.mxu0 0
      %688 = vmatpush2.bf16.msra.mxu0 0
      %689 = vmatprep.subr.bf16.mxu0 0
      %690 = vmatpush2.bf16.msra.mxu0 0
      %691 = vmatprep.subr.bf16.mxu0 0
      %692 = vmatpush2.bf16.msra.mxu0 0
      %693 = vmatprep.subr.bf16.mxu0 0
      %694 = vmatpush2.bf16.msra.mxu0 0
      %695 = vmatprep.subr.bf16.mxu0 0
      %696 = vmatpush2.bf16.msra.mxu0 0
      %697 = vmatprep.subr.bf16.mxu0 0
      %698 = vmatpush2.bf16.msra.mxu0 0
      %699 = vmatprep.mubr.bf16.mxu0 0
      %700 = vmatmul.mubr.bf16.gmra.mxu0 %v656
      %v701 = vpop.f32.mrf.mxu0
      %v702 = vadd.f32 %v581, %v701
      %v703 = vpop.f32.mrf.mxu0
      %v704 = vpop.f32.mrf.mxu0
      %v705 = vadd.f32 %v584, %v704
      %v706 = vpop.f32.mrf.mxu0
      %707 = vmatprep.mubr.bf16.mxu0 0
      %708 = vmatmul.mubr.bf16.gmra.mxu0 %v659
      %v709 = vpop.f32.mrf.mxu0
      %v710 = vadd.f32 %v589, %v709
      %v711 = vpop.f32.mrf.mxu0
      %v712 = vpop.f32.mrf.mxu0
      %v713 = vadd.f32 %v592, %v712
      %v714 = vpop.f32.mrf.mxu0
      %715 = vmatprep.mubr.bf16.mxu0 0
      %716 = vmatmul.mubr.bf16.gmra.mxu0 %v662
      %v717 = vpop.f32.mrf.mxu0
      %v718 = vadd.f32 %v597, %v717
      %v719 = vpop.f32.mrf.mxu0
      %v720 = vpop.f32.mrf.mxu0
      %v721 = vadd.f32 %v600, %v720
      %v722 = vpop.f32.mrf.mxu0
      %723 = vmatprep.mubr.bf16.mxu0 0
      %724 = vmatmul.mubr.bf16.gmra.mxu0 %v665
      %v725 = vpop.f32.mrf.mxu0
      %v726 = vadd.f32 %v605, %v725
      %v727 = vpop.f32.mrf.mxu0
      %v728 = vpop.f32.mrf.mxu0
      %v729 = vadd.f32 %v608, %v728
      %v730 = vpop.f32.mrf.mxu0
      %731 = vdwg.mxu0
      %s732 = scalar_lea.vmem %s4, 64
      %v733 = vld [vmem:[%s732] sm:$0xf]
      %v734 = vld [vmem:[%s732 + $0x4] sm:$0xf]
      %v735 = vld [vmem:[%s732 + $0x8] sm:$0xf]
      %v736 = vld [vmem:[%s732 + $0xc] sm:$0xf]
      %v737 = vld [vmem:[%s732 + $0x10] sm:$0xf]
      %v738 = vld [vmem:[%s732 + $0x14] sm:$0xf]
      %v739 = vld [vmem:[%s732 + $0x18] sm:$0xf]
      %v740 = vld [vmem:[%s732 + $0x1c] sm:$0xf]
      %v741 = vld [vmem:[%s439] sm:$0xf]
      %v742 = vld [vmem:[%s439 + $0x4] sm:$0xf]
      %v743 = vld [vmem:[%s439 + $0x8] sm:$0xf]
      %v744 = vld [vmem:[%s439 + $0xc] sm:$0xf]
      %v745 = vld [vmem:[%s439 + $0x10] sm:$0xf]
      %v746 = vld [vmem:[%s439 + $0x14] sm:$0xf]
      %v747 = vld [vmem:[%s439 + $0x18] sm:$0xf]
      %v748 = vld [vmem:[%s439 + $0x1c] sm:$0xf]
      %v757 = vunpack.c.l.b16 %v733
      %v758 = vunpack.c.l.b16 %v734
      %v759 = vunpack.c.l.b16 %v735
      %v760 = vunpack.c.l.b16 %v736
      %v761 = vunpack.c.l.b16 %v737
      %v762 = vunpack.c.l.b16 %v738
      %v763 = vunpack.c.l.b16 %v739
      %v764 = vunpack.c.l.b16 %v740
      %v765 = vpack.c.b16 %v758, %v757
      %v766 = vpack.c.b16 %v760, %v759
      %v767 = vpack.c.b16 %v762, %v761
      %v768 = vpack.c.b16 %v764, %v763
      %v777 = vunpack.c.l.b16 %v741
      %v778 = vunpack.c.l.b16 %v742
      %v779 = vunpack.c.l.b16 %v743
      %v780 = vunpack.c.l.b16 %v744
      %v781 = vunpack.c.l.b16 %v745
      %v782 = vunpack.c.l.b16 %v746
      %v783 = vunpack.c.l.b16 %v747
      %v784 = vunpack.c.l.b16 %v748
      %v785 = vpack.c.b16 %v778, %v777
      %v786 = vpack.c.b16 %v780, %v779
      %v787 = vpack.c.b16 %v782, %v781
      %v788 = vpack.c.b16 %v784, %v783
      %v794 = vsel %vm533, %v765, 0
      %v797 = vsel %vm533, %v766, 0
      %v800 = vsel %vm533, %v767, 0
      %v803 = vsel %vm533, %v768, 0
      %805 = vmatprep.subr.bf16.mxu0 0
      %806 = vmatpush1.bf16.msra.mxu0 0
      %807 = vmatprep.subr.bf16.mxu0 0
      %808 = vmatpush1.bf16.msra.mxu0 0
      %809 = vmatprep.subr.bf16.mxu0 0
      %810 = vmatpush1.bf16.msra.mxu0 0
      %811 = vmatprep.subr.bf16.mxu0 0
      %812 = vmatpush1.bf16.msra.mxu0 0
      %813 = vmatprep.subr.bf16.mxu0 0
      %814 = vmatpush1.bf16.msra.mxu0 %v788
      %815 = vmatprep.subr.bf16.mxu0 0
      %816 = vmatpush1.bf16.msra.mxu0 %v787
      %817 = vmatprep.subr.bf16.mxu0 0
      %818 = vmatpush1.bf16.msra.mxu0 %v786
      %819 = vmatprep.subr.bf16.mxu0 0
      %820 = vmatpush1.bf16.msra.mxu0 %v785
      %821 = vmatprep.subr.bf16.mxu0 0
      %822 = vmatpush2.bf16.msra.mxu0 0
      %823 = vmatprep.subr.bf16.mxu0 0
      %824 = vmatpush2.bf16.msra.mxu0 0
      %825 = vmatprep.subr.bf16.mxu0 0
      %826 = vmatpush2.bf16.msra.mxu0 0
      %827 = vmatprep.subr.bf16.mxu0 0
      %828 = vmatpush2.bf16.msra.mxu0 0
      %829 = vmatprep.subr.bf16.mxu0 0
      %830 = vmatpush2.bf16.msra.mxu0 0
      %831 = vmatprep.subr.bf16.mxu0 0
      %832 = vmatpush2.bf16.msra.mxu0 0
      %833 = vmatprep.subr.bf16.mxu0 0
      %834 = vmatpush2.bf16.msra.mxu0 0
      %835 = vmatprep.subr.bf16.mxu0 0
      %836 = vmatpush2.bf16.msra.mxu0 0
      %837 = vmatprep.mubr.bf16.mxu0 0
      %838 = vmatmul.mubr.bf16.gmra.mxu0 %v794
      %v839 = vpop.f32.mrf.mxu0
      %v840 = vadd.f32 0.0, %v839
      %v841 = vpop.f32.mrf.mxu0
      %v842 = vpop.f32.mrf.mxu0
      %v843 = vadd.f32 0.0, %v842
      %v844 = vpop.f32.mrf.mxu0
      %845 = vmatprep.mubr.bf16.mxu0 0
      %846 = vmatmul.mubr.bf16.gmra.mxu0 %v797
      %v847 = vpop.f32.mrf.mxu0
      %v848 = vadd.f32 0.0, %v847
      %v849 = vpop.f32.mrf.mxu0
      %v850 = vpop.f32.mrf.mxu0
      %v851 = vadd.f32 0.0, %v850
      %v852 = vpop.f32.mrf.mxu0
      %853 = vmatprep.mubr.bf16.mxu0 0
      %854 = vmatmul.mubr.bf16.gmra.mxu0 %v800
      %v855 = vpop.f32.mrf.mxu0
      %v856 = vadd.f32 0.0, %v855
      %v857 = vpop.f32.mrf.mxu0
      %v858 = vpop.f32.mrf.mxu0
      %v859 = vadd.f32 0.0, %v858
      %v860 = vpop.f32.mrf.mxu0
      %861 = vmatprep.mubr.bf16.mxu0 0
      %862 = vmatmul.mubr.bf16.gmra.mxu0 %v803
      %v863 = vpop.f32.mrf.mxu0
      %v864 = vadd.f32 0.0, %v863
      %v865 = vpop.f32.mrf.mxu0
      %v866 = vpop.f32.mrf.mxu0
      %v867 = vadd.f32 0.0, %v866
      %v868 = vpop.f32.mrf.mxu0
      %869 = vdwg.mxu0
      %v870 = vadd.f32 %v702, %v840
      %v871 = vadd.f32 %v705, %v843
      %v872 = vadd.f32 %v710, %v848
      %v873 = vadd.f32 %v713, %v851
      %v874 = vadd.f32 %v718, %v856
      %v875 = vadd.f32 %v721, %v859
      %v876 = vadd.f32 %v726, %v864
      %v877 = vadd.f32 %v729, %v867
      %s878 = scalar_lea.vmem %s4, 96
      %v879 = vld [vmem:[%s878] sm:$0xf]
      %v880 = vld [vmem:[%s878 + $0x4] sm:$0xf]
      %v881 = vld [vmem:[%s878 + $0x8] sm:$0xf]
      %v882 = vld [vmem:[%s878 + $0xc] sm:$0xf]
      %v883 = vld [vmem:[%s878 + $0x10] sm:$0xf]
      %v884 = vld [vmem:[%s878 + $0x14] sm:$0xf]
      %v885 = vld [vmem:[%s878 + $0x18] sm:$0xf]
      %v886 = vld [vmem:[%s878 + $0x1c] sm:$0xf]
      %v887 = vld [vmem:[%s447] sm:$0xf]
      %v888 = vld [vmem:[%s447 + $0x4] sm:$0xf]
      %v889 = vld [vmem:[%s447 + $0x8] sm:$0xf]
      %v890 = vld [vmem:[%s447 + $0xc] sm:$0xf]
      %v891 = vld [vmem:[%s447 + $0x10] sm:$0xf]
      %v892 = vld [vmem:[%s447 + $0x14] sm:$0xf]
      %v893 = vld [vmem:[%s447 + $0x18] sm:$0xf]
      %v894 = vld [vmem:[%s447 + $0x1c] sm:$0xf]
      %v903 = vunpack.c.l.b16 %v879
      %v904 = vunpack.c.l.b16 %v880
      %v905 = vunpack.c.l.b16 %v881
      %v906 = vunpack.c.l.b16 %v882
      %v907 = vunpack.c.l.b16 %v883
      %v908 = vunpack.c.l.b16 %v884
      %v909 = vunpack.c.l.b16 %v885
      %v910 = vunpack.c.l.b16 %v886
      %v911 = vpack.c.b16 %v904, %v903
      %v912 = vpack.c.b16 %v906, %v905
      %v913 = vpack.c.b16 %v908, %v907
      %v914 = vpack.c.b16 %v910, %v909
      %v923 = vunpack.c.l.b16 %v887
      %v924 = vunpack.c.l.b16 %v888
      %v925 = vunpack.c.l.b16 %v889
      %v926 = vunpack.c.l.b16 %v890
      %v927 = vunpack.c.l.b16 %v891
      %v928 = vunpack.c.l.b16 %v892
      %v929 = vunpack.c.l.b16 %v893
      %v930 = vunpack.c.l.b16 %v894
      %v931 = vpack.c.b16 %v924, %v923
      %v932 = vpack.c.b16 %v926, %v925
      %v933 = vpack.c.b16 %v928, %v927
      %v934 = vpack.c.b16 %v930, %v929
      %v940 = vsel %vm533, %v911, 0
      %v943 = vsel %vm533, %v912, 0
      %v946 = vsel %vm533, %v913, 0
      %v949 = vsel %vm533, %v914, 0
      %951 = vmatprep.subr.bf16.mxu0 0
      %952 = vmatpush1.bf16.msra.mxu0 0
      %953 = vmatprep.subr.bf16.mxu0 0
      %954 = vmatpush1.bf16.msra.mxu0 0
      %955 = vmatprep.subr.bf16.mxu0 0
      %956 = vmatpush1.bf16.msra.mxu0 0
      %957 = vmatprep.subr.bf16.mxu0 0
      %958 = vmatpush1.bf16.msra.mxu0 0
      %959 = vmatprep.subr.bf16.mxu0 0
      %960 = vmatpush1.bf16.msra.mxu0 %v934
      %961 = vmatprep.subr.bf16.mxu0 0
      %962 = vmatpush1.bf16.msra.mxu0 %v933
      %963 = vmatprep.subr.bf16.mxu0 0
      %964 = vmatpush1.bf16.msra.mxu0 %v932
      %965 = vmatprep.subr.bf16.mxu0 0
      %966 = vmatpush1.bf16.msra.mxu0 %v931
      %967 = vmatprep.subr.bf16.mxu0 0
      %968 = vmatpush2.bf16.msra.mxu0 0
      %969 = vmatprep.subr.bf16.mxu0 0
      %970 = vmatpush2.bf16.msra.mxu0 0
      %971 = vmatprep.subr.bf16.mxu0 0
      %972 = vmatpush2.bf16.msra.mxu0 0
      %973 = vmatprep.subr.bf16.mxu0 0
      %974 = vmatpush2.bf16.msra.mxu0 0
      %975 = vmatprep.subr.bf16.mxu0 0
      %976 = vmatpush2.bf16.msra.mxu0 0
      %977 = vmatprep.subr.bf16.mxu0 0
      %978 = vmatpush2.bf16.msra.mxu0 0
      %979 = vmatprep.subr.bf16.mxu0 0
      %980 = vmatpush2.bf16.msra.mxu0 0
      %981 = vmatprep.subr.bf16.mxu0 0
      %982 = vmatpush2.bf16.msra.mxu0 0
      %983 = vmatprep.mubr.bf16.mxu0 0
      %984 = vmatmul.mubr.bf16.gmra.mxu0 %v940
      %v985 = vpop.f32.mrf.mxu0
      %v986 = vadd.f32 0.0, %v985
      %v987 = vpop.f32.mrf.mxu0
      %v988 = vpop.f32.mrf.mxu0
      %v989 = vadd.f32 0.0, %v988
      %v990 = vpop.f32.mrf.mxu0
      %991 = vmatprep.mubr.bf16.mxu0 0
      %992 = vmatmul.mubr.bf16.gmra.mxu0 %v943
      %v993 = vpop.f32.mrf.mxu0
      %v994 = vadd.f32 0.0, %v993
      %v995 = vpop.f32.mrf.mxu0
      %v996 = vpop.f32.mrf.mxu0
      %v997 = vadd.f32 0.0, %v996
      %v998 = vpop.f32.mrf.mxu0
      %999 = vmatprep.mubr.bf16.mxu0 0
      %1000 = vmatmul.mubr.bf16.gmra.mxu0 %v946
      %v1001 = vpop.f32.mrf.mxu0
      %v1002 = vadd.f32 0.0, %v1001
      %v1003 = vpop.f32.mrf.mxu0
      %v1004 = vpop.f32.mrf.mxu0
      %v1005 = vadd.f32 0.0, %v1004
      %v1006 = vpop.f32.mrf.mxu0
      %1007 = vmatprep.mubr.bf16.mxu0 0
      %1008 = vmatmul.mubr.bf16.gmra.mxu0 %v949
      %v1009 = vpop.f32.mrf.mxu0
      %v1010 = vadd.f32 0.0, %v1009
      %v1011 = vpop.f32.mrf.mxu0
      %v1012 = vpop.f32.mrf.mxu0
      %v1013 = vadd.f32 0.0, %v1012
      %v1014 = vpop.f32.mrf.mxu0
      %1015 = vdwg.mxu0
      %v1016 = vadd.f32 %v870, %v986
      %v1017 = vadd.f32 %v871, %v989
      %v1018 = vadd.f32 %v872, %v994
      %v1019 = vadd.f32 %v873, %v997
      %v1020 = vadd.f32 %v874, %v1002
      %v1021 = vadd.f32 %v875, %v1005
      %v1022 = vadd.f32 %v876, %v1010
      %v1023 = vadd.f32 %v877, %v1013
      %v1024 = vld [vmem:[%s5] sm:$0xff]
      %v1025 = vld [vmem:[%s5 + $0x8] sm:$0xff]
      %v1026 = vld [vmem:[%s5 + $0x10] sm:$0xff]
      %v1027 = vld [vmem:[%s5 + $0x18] sm:$0xff]
      %v1028 = vld [vmem:[%s5 + $0x20] sm:$0xff]
      %v1029 = vld [vmem:[%s5 + $0x28] sm:$0xff]
      %v1030 = vld [vmem:[%s5 + $0x30] sm:$0xff]
      %v1031 = vld [vmem:[%s5 + $0x38] sm:$0xff]
      %1033 = vset.pattern.permute.xlu0 0
      %1034 = vperm.xlu0 %1033, %v1024
      %v1035 = vpop.permute.xlu0 %1034
      %1038 = vset.pattern.permute.xlu0 0
      %1039 = vperm.xlu0 %1038, %v1025
      %v1040 = vpop.permute.xlu0 %1039
      %1043 = vset.pattern.permute.xlu0 0
      %1044 = vperm.xlu0 %1043, %v1026
      %v1045 = vpop.permute.xlu0 %1044
      %1048 = vset.pattern.permute.xlu0 0
      %1049 = vperm.xlu0 %1048, %v1027
      %v1050 = vpop.permute.xlu0 %1049
      %1053 = vset.pattern.permute.xlu0 0
      %1054 = vperm.xlu0 %1053, %v1028
      %v1055 = vpop.permute.xlu0 %1054
      %1058 = vset.pattern.permute.xlu0 0
      %1059 = vperm.xlu0 %1058, %v1029
      %v1060 = vpop.permute.xlu0 %1059
      %1063 = vset.pattern.permute.xlu0 0
      %1064 = vperm.xlu0 %1063, %v1030
      %v1065 = vpop.permute.xlu0 %1064
      %1068 = vset.pattern.permute.xlu0 0
      %1069 = vperm.xlu0 %1068, %v1031
      %v1070 = vpop.permute.xlu0 %1069
      %v1072 = vmul.f32 %v1016, %v1035
      %v1073 = vmul.f32 %v1017, %v1040
      %v1074 = vmul.f32 %v1018, %v1045
      %v1075 = vmul.f32 %v1019, %v1050
      %v1076 = vmul.f32 %v1020, %v1055
      %v1077 = vmul.f32 %v1021, %v1060
      %v1078 = vmul.f32 %v1022, %v1065
      %v1079 = vmul.f32 %v1023, %v1070
      %v1080 = vld [vmem:[%s6] sm:$0xff]
      %v1081 = vld [vmem:[%s6 + $0x8] sm:$0xff]
      %v1082 = vld [vmem:[%s6 + $0x10] sm:$0xff]
      %v1083 = vld [vmem:[%s6 + $0x18] sm:$0xff]
      %v1084 = vld [vmem:[%s6 + $0x20] sm:$0xff]
      %v1085 = vld [vmem:[%s6 + $0x28] sm:$0xff]
      %v1086 = vld [vmem:[%s6 + $0x30] sm:$0xff]
      %v1087 = vld [vmem:[%s6 + $0x38] sm:$0xff]
      %1089 = vset.pattern.permute.xlu0 0
      %1090 = vperm.xlu0 %1089, %v1080
      %v1091 = vpop.permute.xlu0 %1090
      %1094 = vset.pattern.permute.xlu0 0
      %1095 = vperm.xlu0 %1094, %v1081
      %v1096 = vpop.permute.xlu0 %1095
      %1099 = vset.pattern.permute.xlu0 0
      %1100 = vperm.xlu0 %1099, %v1082
      %v1101 = vpop.permute.xlu0 %1100
      %1104 = vset.pattern.permute.xlu0 0
      %1105 = vperm.xlu0 %1104, %v1083
      %v1106 = vpop.permute.xlu0 %1105
      %1109 = vset.pattern.permute.xlu0 0
      %1110 = vperm.xlu0 %1109, %v1084
      %v1111 = vpop.permute.xlu0 %1110
      %1114 = vset.pattern.permute.xlu0 0
      %1115 = vperm.xlu0 %1114, %v1085
      %v1116 = vpop.permute.xlu0 %1115
      %1119 = vset.pattern.permute.xlu0 0
      %1120 = vperm.xlu0 %1119, %v1086
      %v1121 = vpop.permute.xlu0 %1120
      %1124 = vset.pattern.permute.xlu0 0
      %1125 = vperm.xlu0 %1124, %v1087
      %v1126 = vpop.permute.xlu0 %1125
      %v1128 = vadd.f32 %v1072, %v1091
      %v1129 = vadd.f32 %v1073, %v1096
      %v1130 = vadd.f32 %v1074, %v1101
      %v1131 = vadd.f32 %v1075, %v1106
      %v1132 = vadd.f32 %v1076, %v1111
      %v1133 = vadd.f32 %v1077, %v1116
      %v1134 = vadd.f32 %v1078, %v1121
      %v1135 = vadd.f32 %v1079, %v1126
      %v1136 = vmax.f32 %v1128, 0.0
      %v1137 = vmax.f32 %v1129, 0.0
      %v1138 = vmax.f32 %v1130, 0.0
      %v1139 = vmax.f32 %v1131, 0.0
      %v1140 = vmax.f32 %v1132, 0.0
      %v1141 = vmax.f32 %v1133, 0.0
      %v1142 = vmax.f32 %v1134, 0.0
      %v1143 = vmax.f32 %v1135, 0.0
      %v1144 = vld [vmem:[%s7] sm:$0xff]
      %v1145 = vld [vmem:[%s8] sm:$0xff]
      %1147 = vset.pattern.permute.xlu0 0
      %1148 = vperm.xlu0 %1147, %v1145
      %v1149 = vpop.permute.xlu0 %1148
      %v1152 = vsel %vm533, %v1144, 0
      %1154 = vmatprep.subr.mxu0 0.0
      %1155 = vmatpush1.msra.mxu0 0.0
      %1156 = vmatprep.subr.mxu0 0.0
      %1157 = vmatpush1.msra.mxu0 0.0
      %1158 = vmatprep.subr.mxu0 0.0
      %1159 = vmatpush1.msra.mxu0 0.0
      %1160 = vmatprep.subr.mxu0 0.0
      %1161 = vmatpush1.msra.mxu0 0.0
      %1162 = vmatprep.subr.mxu0 0.0
      %1163 = vmatpush1.msra.mxu0 0.0
      %1164 = vmatprep.subr.mxu0 0.0
      %1165 = vmatpush1.msra.mxu0 0.0
      %1166 = vmatprep.subr.mxu0 0.0
      %1167 = vmatpush1.msra.mxu0 0.0
      %1168 = vmatprep.subr.mxu0 0.0
      %1169 = vmatpush1.msra.mxu0 0.0
      %1170 = vmatprep.subr.mxu0 0.0
      %1171 = vmatpush1.msra.mxu0 %v1143
      %1172 = vmatprep.subr.mxu0 0.0
      %1173 = vmatpush1.msra.mxu0 %v1142
      %1174 = vmatprep.subr.mxu0 0.0
      %1175 = vmatpush1.msra.mxu0 %v1141
      %1176 = vmatprep.subr.mxu0 0.0
      %1177 = vmatpush1.msra.mxu0 %v1140
      %1178 = vmatprep.subr.mxu0 0.0
      %1179 = vmatpush1.msra.mxu0 %v1139
      %1180 = vmatprep.subr.mxu0 0.0
      %1181 = vmatpush1.msra.mxu0 %v1138
      %1182 = vmatprep.subr.mxu0 0.0
      %1183 = vmatpush1.msra.mxu0 %v1137
      %1184 = vmatprep.subr.mxu0 0.0
      %1185 = vmatpush1.msra.mxu0 %v1136
      %1186 = vmatprep.subr.mxu0 0.0
      %1187 = vmatpush2.msra.mxu0 0.0
      %1188 = vmatprep.subr.mxu0 0.0
      %1189 = vmatpush2.msra.mxu0 0.0
      %1190 = vmatprep.subr.mxu0 0.0
      %1191 = vmatpush2.msra.mxu0 0.0
      %1192 = vmatprep.subr.mxu0 0.0
      %1193 = vmatpush2.msra.mxu0 0.0
      %1194 = vmatprep.subr.mxu0 0.0
      %1195 = vmatpush2.msra.mxu0 0.0
      %1196 = vmatprep.subr.mxu0 0.0
      %1197 = vmatpush2.msra.mxu0 0.0
      %1198 = vmatprep.subr.mxu0 0.0
      %1199 = vmatpush2.msra.mxu0 0.0
      %1200 = vmatprep.subr.mxu0 0.0
      %1201 = vmatpush2.msra.mxu0 0.0
      %1202 = vmatprep.subr.mxu0 0.0
      %1203 = vmatpush2.msra.mxu0 0.0
      %1204 = vmatprep.subr.mxu0 0.0
      %1205 = vmatpush2.msra.mxu0 0.0
      %1206 = vmatprep.subr.mxu0 0.0
      %1207 = vmatpush2.msra.mxu0 0.0
      %1208 = vmatprep.subr.mxu0 0.0
      %1209 = vmatpush2.msra.mxu0 0.0
      %1210 = vmatprep.subr.mxu0 0.0
      %1211 = vmatpush2.msra.mxu0 0.0
      %1212 = vmatprep.subr.mxu0 0.0
      %1213 = vmatpush2.msra.mxu0 0.0
      %1214 = vmatprep.subr.mxu0 0.0
      %1215 = vmatpush2.msra.mxu0 0.0
      %1216 = vmatprep.subr.mxu0 0.0
      %1217 = vmatpush2.msra.mxu0 0.0
      %1218 = vmatprep.mubr.f32.mxu0 0.0
      %1219 = vmatmul.mubr.f32.gmra.mxu0 %v1152
      %v1220 = vpop.f32.mrf.mxu0
      %v1221 = vadd.f32 %v1149, %v1220
      %v1222 = vpop.f32.mrf.mxu0
      %1223 = vdwg.mxu0
      %1224 = vst.msk [vmem:[%s454] sm:$0xff] %vm533, %v1221
      %p1225 = scmp.lt.s32.totalorder %s24, 1
      %s1226 = scalar_select %p1225, %s24, 1
      %p1227 = scmp.lt.s32.totalorder %s25, 0
      %s1228 = scalar_select %p1227, %s25, 0
      %s1229 = sadd.s32 %s1228, %s1226
      %s1230 = smul.addr %s1229, 8
      %s1231 = scalar_lea.vmem %s9, %s1230
      // Predicated region
      $region57: #{forward.22} parent=55 // pred_check
        %p1232 = pneg %p269
      $region58: #{forward.22} parent=55 // pred_check_branch
        %1234 = sbr.rel (%p1232) target = $region60
      $region59: #{forward.22} parent=55 // pred_region
        _
      $region60: #{forward.22} parent=55 // pred_fallthru
        _
    $region56: #{forward.22} parent=5 // pred_fallthru
      _
    %p1235 = scmp.le.s32.totalorder 2, %s15
    // Predicated region
    $region61: #{forward.22} parent=5 // pred_check
      %p1236 = pneg %p1235
    $region62: #{forward.22} parent=5 // pred_check_branch
      %1238 = sbr.rel (%p1236) target = $region64
    $region63: #{forward.22} parent=5 // pred_region
      %s1239 = ssub.s32 %s15, 2
      // Predicated region
      $region65: #{forward.22} parent=63 // pred_check
        %p1240 = pneg %p275
      $region66: #{forward.22} parent=63 // pred_check_branch
        %1242 = sbr.rel (%p1240) target = $region68
      $region67: #{forward.22} parent=63 // pred_region
        %p1243 = scmp.lt.s32.totalorder %s26, 1
        %s1244 = scalar_select %p1243, %s26, 1
        %p1245 = scmp.lt.s32.totalorder %s27, 0
        %s1246 = scalar_select %p1245, %s27, 0
        %s1247 = sadd.s32 %s1246, %s1244
        %s1248 = smul.addr %s1247, 8
        %s1249 = scalar_lea.vmem %s9, %s1248
      $region68: #{forward.22} parent=63 // pred_fallthru
        _
    $region64: #{forward.22} parent=5 // pred_fallthru
      _
  $region6: #{forward.22} parent=0 // loop_footer
    %s19 = sadd.s32 1, %s15
  $region7: #{forward.22} parent=0 // loop_footer_branch
    %14 = sbr.rel target = $region3
  $region8: #{forward.22} parent=0 // loop_exit
    _

</llo_original>
